<compile_context>
chip_gen: v7x
topology: tpu7x:2x2x1
jax: 0.10.0
libtpu: 0.0.40
codegen_flags: <defaults>
</compile_context>

<pallas_src>
import jax
import jax.numpy as jnp
from jax.experimental import pallas as pl
from jax.experimental.pallas import tpu as pltpu

# ----------------------------- config (small) --------------------------------
B = 2          # batch
IN_C = 3       # RGB input
IMG = 16       # aug_size (reduced from 250 for the demo)
C1 = 8         # backbone stem channels (logical)
CEXP = 16      # bottleneck expansion channels (logical)
C2 = 16        # pre-GDConv channels (logical)
FEAT = 32      # feat_dim (reduced from 512 for the demo)

CP = 128       # lane-padded channel width used inside every Pallas kernel
FP = 128       # lane-padded feature width (FEAT sliced out at the very end)

_VMEM_LIMIT = 48 * 1024 * 1024   # safe on v5e/v6e (128 MiB) and v7x (64 MiB)


def _round_up(x, m):
    return -(-x // m) * m


# ----------------------------- Pallas kernels --------------------------------
def _mm_body(a_ref, w_ref, s_ref, b_ref, al_ref, o_ref, acc_ref, res_ref=None):
    """K-tiled matmul -> f32 acc; finalize: affine (folded BN) + PReLU (+res)."""
    k = pl.program_id(1)

    @pl.when(k == 0)
    def _init():
        acc_ref[...] = jnp.zeros_like(acc_ref)

    acc_ref[...] += jnp.dot(a_ref[...], w_ref[...],
                            preferred_element_type=jnp.float32)

    @pl.when(k == pl.num_programs(1) - 1)
    def _fin():
        y = acc_ref[...] * s_ref[...] + b_ref[...]
        y = jnp.where(y > 0.0, y, al_ref[...] * y)
        if res_ref is not None:
            y = y + res_ref[...]
        o_ref[...] = y


def _mm_kernel(a_ref, w_ref, s_ref, b_ref, al_ref, o_ref, acc_ref):
    _mm_body(a_ref, w_ref, s_ref, b_ref, al_ref, o_ref, acc_ref)


def _mm_res_kernel(a_ref, w_ref, s_ref, b_ref, al_ref, res_ref, o_ref, acc_ref):
    _mm_body(a_ref, w_ref, s_ref, b_ref, al_ref, o_ref, acc_ref, res_ref)


def pallas_matmul_act(a, w, scale, bias, alpha, res=None, tm_max=512, tk_max=512):
    """Fused (im2col-conv / 1x1-conv / linear) bf16 MXU matmul + folded-BN affine
    + PReLU, optional fused residual add.  N (output channels) must be a
    multiple of 128 so stores are lane-dense."""
    M, K = a.shape
    K2, N = w.shape
    assert K == K2 and N % 128 == 0

    # K tiling (single full-extent block when K is small, 128-aligned tiles else)
    if K <= tk_max:
        Kp = max(16, _round_up(K, 16))
        tk = Kp
    else:
        tk = tk_max
        Kp = _round_up(K, tk)
    nk = Kp // tk

    # M tiling
    Mp0 = max(16, _round_up(M, 16))
    tm = min(tm_max, Mp0)
    Mp = _round_up(Mp0, tm)

    a_p = jnp.pad(a, ((0, Mp - M), (0, Kp - K))).astype(jnp.bfloat16)
    w_p = jnp.pad(w, ((0, Kp - K), (0, 0))).astype(jnp.bfloat16)
    s2 = scale.reshape(1, N).astype(jnp.float32)
    b2 = bias.reshape(1, N).astype(jnp.float32)
    al2 = alpha.reshape(1, N).astype(jnp.float32)

    in_specs = [
        pl.BlockSpec((tm, tk), lambda i, k: (i, k)),
        pl.BlockSpec((tk, N), lambda i, k: (k, 0)),
        pl.BlockSpec((1, N), lambda i, k: (0, 0)),
        pl.BlockSpec((1, N), lambda i, k: (0, 0)),
        pl.BlockSpec((1, N), lambda i, k: (0, 0)),
    ]
    args = [a_p, w_p, s2, b2, al2]
    kernel = _mm_kernel
    if res is not None:
        res_p = jnp.pad(res.astype(jnp.float32), ((0, Mp - M), (0, 0)))
        in_specs.append(pl.BlockSpec((tm, N), lambda i, k: (i, 0)))
        args.append(res_p)
        kernel = _mm_res_kernel

    flops = 2 * Mp * Kp * N
    bytes_acc = (Mp * Kp + Kp * N * (Mp // tm)) * 2 + Mp * N * 4

    out = pl.pallas_call(
        kernel,
        out_shape=jax.ShapeDtypeStruct((Mp, N), jnp.float32),
        grid=(Mp // tm, nk),
        in_specs=in_specs,
        out_specs=pl.BlockSpec((tm, N), lambda i, k: (i, 0)),
        scratch_shapes=[pltpu.VMEM((tm, N), jnp.float32)],
        compiler_params=pltpu.CompilerParams(
            dimension_semantics=("parallel", "arbitrary"),
            vmem_limit_bytes=_VMEM_LIMIT),
        cost_estimate=pl.CostEstimate(flops=flops, transcendentals=0,
                                      bytes_accessed=bytes_acc),
    )(*args)
    return out[:M]


def _dw_kernel(x_ref, w_ref, s_ref, b_ref, al_ref, o_ref):
    """Depthwise conv over stacked taps: o = prelu(sum_k x[k]*w[k] * scale + bias).
    Channel axis is the 128-lane axis (padded), so VPU lanes / stores are full."""
    y = jnp.sum(x_ref[...].astype(jnp.float32) * w_ref[...], axis=0)   # (tm, C)
    y = y * s_ref[...] + b_ref[...]
    o_ref[...] = jnp.where(y > 0.0, y, al_ref[...] * y)


def pallas_depthwise_act(taps, w, scale, bias, alpha, tm_max=512):
    """taps: [KK, M, C] shifted-window taps (C padded to 128), w: [KK, C]."""
    KK, M, C = taps.shape
    assert C % 128 == 0
    Mp0 = max(16, _round_up(M, 16))
    tm = min(tm_max, Mp0)
    Mp = _round_up(Mp0, tm)
    taps_p = jnp.pad(taps, ((0, 0), (0, Mp - M), (0, 0))).astype(jnp.bfloat16)

    out = pl.pallas_call(
        _dw_kernel,
        out_shape=jax.ShapeDtypeStruct((Mp, C), jnp.float32),
        grid=(Mp // tm,),
        in_specs=[
            pl.BlockSpec((KK, tm, C), lambda i: (0, i, 0)),
            pl.BlockSpec((KK, 1, C), lambda i: (0, 0, 0)),
            pl.BlockSpec((1, C), lambda i: (0, 0)),
            pl.BlockSpec((1, C), lambda i: (0, 0)),
            pl.BlockSpec((1, C), lambda i: (0, 0)),
        ],
        out_specs=pl.BlockSpec((tm, C), lambda i: (i, 0)),
        compiler_params=pltpu.CompilerParams(
            dimension_semantics=("parallel",),
            vmem_limit_bytes=_VMEM_LIMIT),
    )(taps_p,
      w.reshape(KK, 1, C).astype(jnp.float32),
      scale.reshape(1, C).astype(jnp.float32),
      bias.reshape(1, C).astype(jnp.float32),
      alpha.reshape(1, C).astype(jnp.float32))
    return out[:M]


def _conv2_gd_lin_kernel(x_ref, w2_ref, s2_ref, b2_ref, a2_ref,
                         gw_ref, gs_ref, gb_ref,
                         lw_ref, ls_ref, lb_ref,
                         o_ref, acc_ref):
    """Fused backbone tail, tiled over HW:
       per tile: y = prelu(x @ w2 * s2 + b2)   (1x1 conv, MXU)
                 acc += sum_hw(y * gd_w)       (global depthwise reduction)
       finalize: g = acc * gs + gb; out = (g @ lw) * ls + lb."""
    t = pl.program_id(0)

    @pl.when(t == 0)
    def _init():
        acc_ref[...] = jnp.zeros_like(acc_ref)

    Bn, thw, C = x_ref.shape
    x2 = x_ref[...].reshape(Bn * thw, C)                          # bf16
    y = jnp.dot(x2, w2_ref[...], preferred_element_type=jnp.float32)
    y = y * s2_ref[...] + b2_ref[...]
    y = jnp.where(y > 0.0, y, a2_ref[...] * y)
    y = y.reshape(Bn, thw, C)
    acc_ref[...] += jnp.sum(y * gw_ref[...][None, :, :], axis=1)  # (B, C)

    @pl.when(t == pl.num_programs(0) - 1)
    def _fin():
        g = acc_ref[...] * gs_ref[...] + gb_ref[...]              # (B, C)
        out = jnp.dot(g.astype(jnp.bfloat16), lw_ref[...],
                      preferred_element_type=jnp.float32)         # (B, FP)
        o_ref[...] = out * ls_ref[...] + lb_ref[...]


def pallas_conv2_gdconv_linear(x, w2, s2, b2, a2, gw, gs, gb, lw, ls, lb,
                               thw_max=512):
    """x: [B, HW, C] (C padded to 128).  Fuses 1x1 conv + BN + PReLU, global
    depthwise conv + BN, and the final linear + BN into one pass over HW."""
    Bn, HW, C = x.shape
    FPn = lw.shape[1]
    assert C % 128 == 0 and FPn % 128 == 0
    HWp0 = max(16, _round_up(HW, 16))
    thw = min(thw_max, HWp0)
    HWp = _round_up(HWp0, thw)
    x_p = jnp.pad(x, ((0, 0), (0, HWp - HW), (0, 0))).astype(jnp.bfloat16)
    gw_p = jnp.pad(gw, ((0, HWp - HW), (0, 0))).astype(jnp.float32)

    return pl.pallas_call(
        _conv2_gd_lin_kernel,
        out_shape=jax.ShapeDtypeStruct((Bn, FPn), jnp.float32),
        grid=(HWp // thw,),
        in_specs=[
            pl.BlockSpec((Bn, thw, C), lambda t: (0, t, 0)),
            pl.BlockSpec((C, C), lambda t: (0, 0)),
            pl.BlockSpec((1, C), lambda t: (0, 0)),
            pl.BlockSpec((1, C), lambda t: (0, 0)),
            pl.BlockSpec((1, C), lambda t: (0, 0)),
            pl.BlockSpec((thw, C), lambda t: (t, 0)),
            pl.BlockSpec((1, C), lambda t: (0, 0)),
            pl.BlockSpec((1, C), lambda t: (0, 0)),
            pl.BlockSpec((C, FPn), lambda t: (0, 0)),
            pl.BlockSpec((1, FPn), lambda t: (0, 0)),
            pl.BlockSpec((1, FPn), lambda t: (0, 0)),
        ],
        out_specs=pl.BlockSpec((Bn, FPn), lambda t: (0, 0)),
        scratch_shapes=[pltpu.VMEM((Bn, C), jnp.float32)],
        compiler_params=pltpu.CompilerParams(
            dimension_semantics=("arbitrary",),
            vmem_limit_bytes=_VMEM_LIMIT),
    )(x_p,
      w2.astype(jnp.bfloat16),
      s2.reshape(1, C).astype(jnp.float32),
      b2.reshape(1, C).astype(jnp.float32),
      a2.reshape(1, C).astype(jnp.float32),
      gw_p,
      gs.reshape(1, C).astype(jnp.float32),
      gb.reshape(1, C).astype(jnp.float32),
      lw.astype(jnp.bfloat16),
      ls.reshape(1, FPn).astype(jnp.float32),
      lb.reshape(1, FPn).astype(jnp.float32))


def _blend_kernel(v_ref, w_ref, o_ref):
    """Bilinear blend of 4 gathered corner values: o = sum_k v[k] * w[k]."""
    o_ref[...] = jnp.sum(v_ref[...] * w_ref[...], axis=0)


def pallas_bilinear_blend(vals, ws, tm_max=512):
    """vals: [4, M, C] gathered corner pixels, ws: [4, M, 1] bilinear weights."""
    _, M, C = vals.shape
    Mp0 = max(16, _round_up(M, 16))
    tm = min(tm_max, Mp0)
    Mp = _round_up(Mp0, tm)
    vals_p = jnp.pad(vals, ((0, 0), (0, Mp - M), (0, 0))).astype(jnp.float32)
    ws_p = jnp.pad(ws, ((0, 0), (0, Mp - M), (0, 0))).astype(jnp.float32)

    out = pl.pallas_call(
        _blend_kernel,
        out_shape=jax.ShapeDtypeStruct((Mp, C), jnp.float32),
        grid=(Mp // tm,),
        in_specs=[
            pl.BlockSpec((4, tm, C), lambda i: (0, i, 0)),
            pl.BlockSpec((4, tm, 1), lambda i: (0, i, 0)),
        ],
        out_specs=pl.BlockSpec((tm, C), lambda i: (i, 0)),
        compiler_params=pltpu.CompilerParams(
            dimension_semantics=("parallel",),
            vmem_limit_bytes=_VMEM_LIMIT),
    )(vals_p, ws_p)
    return out[:M]


# ----------------------------- JAX glue ---------------------------------------
def im2col(x, kh, kw, stride, pad):
    """x: [B,H,W,C] -> patches [B*Ho*Wo, kh*kw*C] (tap-major, channel-minor)."""
    Bn, H, W, C = x.shape
    xp = jnp.pad(x, ((0, 0), (pad, pad), (pad, pad), (0, 0)))
    Ho = (H + 2 * pad - kh) // stride + 1
    Wo = (W + 2 * pad - kw) // stride + 1
    cols = []
    for i in range(kh):
        for j in range(kw):
            cols.append(xp[:, i:i + stride * Ho:stride, j:j + stride * Wo:stride, :])
    patches = jnp.stack(cols, axis=3)                  # [B,Ho,Wo,kh*kw,C]
    return patches.reshape(Bn * Ho * Wo, kh * kw * C), Ho, Wo


def dw_taps(x, kh, kw, stride, pad):
    """x: [B,H,W,C] -> taps [kh*kw, B*Ho*Wo, C] for the depthwise kernel."""
    Bn, H, W, C = x.shape
    xp = jnp.pad(x, ((0, 0), (pad, pad), (pad, pad), (0, 0)))
    Ho = (H + 2 * pad - kh) // stride + 1
    Wo = (W + 2 * pad - kw) // stride + 1
    taps = []
    for i in range(kh):
        for j in range(kw):
            taps.append(
                xp[:, i:i + stride * Ho:stride, j:j + stride * Wo:stride, :]
                .reshape(Bn * Ho * Wo, C))
    return jnp.stack(taps, 0), Ho, Wo


def maxpool2(x):
    """nn.MaxPool2d(2, stride=2) (floor mode), NHWC."""
    Bn, H, W, C = x.shape
    Hc, Wc = (H // 2) * 2, (W // 2) * 2
    x = x[:, :Hc, :Wc, :]
    x = x.reshape(Bn, Hc // 2, 2, Wc // 2, 2, C)
    return x.max(axis=(2, 4))


def affine_grid_sample(x, theta):
    """F.affine_grid + F.grid_sample (bilinear, zeros padding, align_corners=False).

    Corner indices / weights are computed in XLA, the 4 corner pixels are
    gathered (O(HW*C)), and the bilinear blend runs as one batched Pallas
    kernel (no O(HW^2) sampling matrix, no per-batch kernel launches)."""
    Bn, H, W, C = x.shape
    xs = (2.0 * jnp.arange(W, dtype=jnp.float32) + 1.0) / W - 1.0
    ys = (2.0 * jnp.arange(H, dtype=jnp.float32) + 1.0) / H - 1.0
    gx, gy = jnp.meshgrid(xs, ys)                      # [H,W]
    base = jnp.stack([gx, gy, jnp.ones_like(gx)], -1).reshape(-1, 3)   # [HW,3]
    coords = jnp.einsum("bij,pj->bpi", theta, base)    # [B,HW,2] -> (x, y)
    ix = ((coords[..., 0] + 1.0) * W - 1.0) / 2.0
    iy = ((coords[..., 1] + 1.0) * H - 1.0) / 2.0
    ix0, iy0 = jnp.floor(ix), jnp.floor(iy)
    ix1, iy1 = ix0 + 1.0, iy0 + 1.0
    wx1, wy1 = ix - ix0, iy - iy0
    wx0, wy0 = 1.0 - wx1, 1.0 - wy1

    x_flat = x.reshape(Bn, H * W, C)

    def corner(cx, cy):
        valid = ((cx >= 0) & (cx < W) & (cy >= 0) & (cy < H)).astype(jnp.float32)
        idx = (jnp.clip(cy, 0, H - 1) * W + jnp.clip(cx, 0, W - 1)).astype(jnp.int32)
        vals = jnp.take_along_axis(x_flat, idx[..., None], axis=1)      # [B,HW,C]
        return vals, valid

    v00, m00 = corner(ix0, iy0)
    v10, m10 = corner(ix1, iy0)
    v01, m01 = corner(ix0, iy1)
    v11, m11 = corner(ix1, iy1)
    w00 = wx0 * wy0 * m00
    w10 = wx1 * wy0 * m10
    w01 = wx0 * wy1 * m01
    w11 = wx1 * wy1 * m11

    vals = jnp.stack([v00, v10, v01, v11], 0).reshape(4, Bn * H * W, C)
    ws = jnp.stack([w00, w10, w01, w11], 0).reshape(4, Bn * H * W, 1)
    out = pallas_bilinear_blend(vals, ws)              # [B*HW, C]
    return out.reshape(Bn, H, W, C)


# ----------------------------- parameters -------------------------------------
def init_params(key):
    ks = iter(jax.random.split(key, 64))
    n = lambda shape, s=0.1: s * jax.random.normal(next(ks), shape, jnp.float32)
    bn_s = lambda c: 1.0 + 0.01 * jax.random.normal(next(ks), (c,), jnp.float32)
    bn_b = lambda c: 0.01 * jax.random.normal(next(ks), (c,), jnp.float32)
    prelu = lambda c: 0.25 * jnp.ones((c,), jnp.float32)   # nn.PReLU default init

    # zero-padding to the lane-dense width keeps padded channels exactly zero
    # through every layer (zero dot columns / zero biases / zero dw weights).
    pad_c = lambda w, nc: jnp.pad(w, ((0, 0), (0, nc - w.shape[1])))
    pad_rc = lambda w, nr, nc: jnp.pad(w, ((0, nr - w.shape[0]), (0, nc - w.shape[1])))
    pad_v = lambda v, nn, fill=0.0: jnp.pad(v, (0, nn - v.shape[0]), constant_values=fill)

    HW = (IMG // 2) * (IMG // 2)                 # spatial size entering GDConv
    h1 = (IMG - 2) // 2                          # STN: conv3 valid -> pool2
    h2 = (h1 - 2) // 2                           # STN: conv3 valid -> pool2
    stn_flat = 10 * h2 * h2

    p = {}
    # --- STN localization net (convs lane-padded; tiny FCs stay in XLA) ---
    p["stn"] = dict(
        w1=pad_c(n((3 * 3 * IN_C, 8)), CP), b1=jnp.zeros((CP,), jnp.float32),
        w2=pad_c(n((3 * 3 * 8, 10)), CP), b2=jnp.zeros((CP,), jnp.float32),
        fc1_w=n((stn_flat, 32)), fc1_b=jnp.zeros((32,), jnp.float32),
        # last fc initialised to the identity transform (as in the PyTorch STN)
        fc2_w=jnp.zeros((32, 6), jnp.float32),
        fc2_b=jnp.array([1, 0, 0, 0, 1, 0], jnp.float32),
        ones_cp=jnp.ones((CP,), jnp.float32),
        zeros_cp=jnp.zeros((CP,), jnp.float32),
    )
    # --- MobileFaceNet-style backbone (BN folded into scale/bias, lane-padded) ---
    p["bb"] = dict(
        conv1_w=pad_c(n((3 * 3 * IN_C, C1)), CP),
        conv1_s=pad_v(bn_s(C1), CP, 1.0), conv1_b=pad_v(bn_b(C1), CP),
        conv1_a=pad_v(prelu(C1), CP),
        dw1_w=pad_c(n((9, C1)), CP),
        dw1_s=pad_v(bn_s(C1), CP, 1.0), dw1_b=pad_v(bn_b(C1), CP),
        dw1_a=pad_v(prelu(C1), CP),
        bexp_w=pad_rc(n((C1, CEXP)), CP, CP),
        bexp_s=pad_v(bn_s(CEXP), CP, 1.0), bexp_b=pad_v(bn_b(CEXP), CP),
        bexp_a=pad_v(prelu(CEXP), CP),
        bdw_w=pad_c(n((9, CEXP)), CP),
        bdw_s=pad_v(bn_s(CEXP), CP, 1.0), bdw_b=pad_v(bn_b(CEXP), CP),
        bdw_a=pad_v(prelu(CEXP), CP),
        bproj_w=pad_rc(n((CEXP, C1)), CP, CP),
        bproj_s=pad_v(bn_s(C1), CP, 1.0), bproj_b=pad_v(bn_b(C1), CP),
        conv2_w=pad_rc(n((C1, C2)), CP, CP),
        conv2_s=pad_v(bn_s(C2), CP, 1.0), conv2_b=pad_v(bn_b(C2), CP),
        conv2_a=pad_v(prelu(C2), CP),
        gd_w=pad_c(n((HW, C2)), CP),
        gd_s=pad_v(bn_s(C2), CP, 1.0), gd_b=pad_v(bn_b(C2), CP),
        lin_w=pad_rc(n((C2, FEAT)), CP, FP),
        lin_s=pad_v(bn_s(FEAT), FP, 1.0), lin_b=pad_v(bn_b(FEAT), FP),
        ones_cp=jnp.ones((CP,), jnp.float32),
        ones_fp=jnp.ones((FP,), jnp.float32),
    )
    return p


# ----------------------------- forward -----------------------------------------
def stn_forward(p, x):
    """x: [B,H,W,C] NHWC."""
    Bn = x.shape[0]
    # conv(3->8,k3) -> maxpool2 -> relu   (relu fused into conv: max commutes with relu)
    a, Ho, Wo = im2col(x, 3, 3, 1, 0)
    y = pallas_matmul_act(a, p["w1"], p["ones_cp"], p["b1"], p["zeros_cp"])
    y = maxpool2(y[:, :8].reshape(Bn, Ho, Wo, 8))
    # conv(8->10,k3) -> maxpool2 -> relu
    a, Ho, Wo = im2col(y, 3, 3, 1, 0)
    y = pallas_matmul_act(a, p["w2"], p["ones_cp"], p["b2"], p["zeros_cp"])
    y = maxpool2(y[:, :10].reshape(Bn, Ho, Wo, 10))
    # flatten (NCHW ordering to mirror PyTorch .view); FCs are tiny -> plain XLA
    xs = jnp.transpose(y, (0, 3, 1, 2)).reshape(Bn, -1)
    h = jax.nn.relu(xs @ p["fc1_w"] + p["fc1_b"])
    theta = (h @ p["fc2_w"] + p["fc2_b"]).reshape(Bn, 2, 3)
    return affine_grid_sample(x, theta)


def backbone_forward(p, x):
    Bn = x.shape[0]
    # stem conv 3x3 s2 + BN + PReLU
    a, Ho, Wo = im2col(x, 3, 3, 2, 1)
    y = pallas_matmul_act(a, p["conv1_w"], p["conv1_s"], p["conv1_b"], p["conv1_a"])
    y = y.reshape(Bn, Ho, Wo, CP)
    # depthwise conv 3x3 + BN + PReLU (channels lane-padded to 128)
    taps, Ho, Wo = dw_taps(y, 3, 3, 1, 1)
    y = pallas_depthwise_act(taps, p["dw1_w"], p["dw1_s"], p["dw1_b"], p["dw1_a"])
    y = y.reshape(Bn, Ho, Wo, CP)
    # inverted-residual bottleneck (expand 1x1 -> dw 3x3 -> project 1x1, residual)
    res_flat = y.reshape(-1, CP)
    h = pallas_matmul_act(res_flat, p["bexp_w"], p["bexp_s"], p["bexp_b"], p["bexp_a"])
    h = h.reshape(Bn, Ho, Wo, CP)
    taps, _, _ = dw_taps(h, 3, 3, 1, 1)
    h = pallas_depthwise_act(taps, p["bdw_w"], p["bdw_s"], p["bdw_b"], p["bdw_a"])
    # project 1x1 + BN (linear) with the residual add fused into the epilogue
    y = pallas_matmul_act(h, p["bproj_w"], p["bproj_s"], p["bproj_b"],
                          p["ones_cp"], res=res_flat)
    # fused tail: 1x1 conv2 + BN + PReLU -> GDConv (Ho x Wo) + BN -> linear + BN,
    # one pass over HW (no [B*HW, 128] f32 intermediates hit HBM).
    y = pallas_conv2_gdconv_linear(
        y.reshape(Bn, Ho * Wo, CP),
        p["conv2_w"], p["conv2_s"], p["conv2_b"], p["conv2_a"],
        p["gd_w"], p["gd_s"], p["gd_b"],
        p["lin_w"], p["lin_s"], p["lin_b"])
    return y[:, :FEAT]                                               # [B, FEAT]


def stn_mbfn_forward(params, x_nchw):
    x = jnp.transpose(x_nchw, (0, 2, 3, 1))     # NCHW -> NHWC
    x = stn_forward(params["stn"], x)
    return backbone_forward(params["bb"], x)


# ----------------------------- main ---------------------------------------------
if __name__ == "__main__":
    root = jax.random.PRNGKey(0)
    k_param, k_input = jax.random.split(root)
    params = init_params(k_param)
    x = jax.random.normal(k_input, (B, IN_C, IMG, IMG), jnp.float32)   # PyTorch NCHW input

    feats = jax.jit(stn_mbfn_forward)(params, x)
    feats = jax.block_until_ready(feats)
    assert feats.shape == (B, FEAT) and feats.dtype == jnp.float32
    assert bool(jnp.all(jnp.isfinite(feats)))
    print("KERNEL_OK")
</pallas_src>

<mosaic_0001>
module attributes {stable_mosaic.version = 11 : i64} {
  func.func @_mm_kernel(%arg0: i32, %arg1: i32, %arg2: memref<400x32xbf16, #tpu.memory_space<vmem>>, %arg3: memref<32x128xbf16, #tpu.memory_space<vmem>>, %arg4: memref<1x128xf32, #tpu.memory_space<vmem>>, %arg5: memref<1x128xf32, #tpu.memory_space<vmem>>, %arg6: memref<1x128xf32, #tpu.memory_space<vmem>>, %arg7: memref<400x128xf32, #tpu.memory_space<vmem>>, %arg8: memref<400x128xf32, #tpu.memory_space<vmem>>) attributes {dimension_semantics = [#tpu.dimension_semantics<parallel>, #tpu.dimension_semantics<arbitrary>], iteration_bounds = array<i64: 1, 1>, scalar_prefetch = 0 : i64, scratch_operands = 1 : i64, tpu.core_type = #tpu.core_type<tc>, window_params = [{transform_indices = @transform_0, window_bounds = array<i64: 400, 32>}, {transform_indices = @transform_1, window_bounds = array<i64: 32, 128>}, {pipeline_mode = #tpu.pipeline_mode<synchronous>, transform_indices = @transform_2, window_bounds = array<i64: 1, 128>}, {pipeline_mode = #tpu.pipeline_mode<synchronous>, transform_indices = @transform_3, window_bounds = array<i64: 1, 128>}, {pipeline_mode = #tpu.pipeline_mode<synchronous>, transform_indices = @transform_4, window_bounds = array<i64: 1, 128>}, {transform_indices = @transform_5, window_bounds = array<i64: 400, 128>}]} {
    %c0_i32 = arith.constant 0 : i32
    %0 = arith.cmpi eq, %arg1, %c0_i32 : i32
    %1 = arith.extui %0 : i1 to i32
    %c0_i32_0 = arith.constant 0 : i32
    %2 = arith.cmpi ne, %1, %c0_i32_0 : i32
    scf.if %2 {
      %cst_10 = arith.constant 0.000000e+00 : f32
      %12 = vector.broadcast %cst_10 : f32 to vector<400x128xf32>
      %c0_11 = arith.constant 0 : index
      %c0_12 = arith.constant 0 : index
      %13 = vector.load %arg8[%c0_11, %c0_12] : memref<400x128xf32, #tpu.memory_space<vmem>>, vector<400x128xf32>
      tpu.vector_store %arg8[%c0_11, %c0_12], %12 {strides = array<i32>} : memref<400x128xf32, #tpu.memory_space<vmem>>, vector<400x128xf32>,
    } else {
    }
    %c0 = arith.constant 0 : index
    %c0_1 = arith.constant 0 : index
    %3 = vector.load %arg8[%c0, %c0_1] : memref<400x128xf32, #tpu.memory_space<vmem>>, vector<400x128xf32>
    %c0_2 = arith.constant 0 : index
    %c0_3 = arith.constant 0 : index
    %4 = vector.load %arg2[%c0_2, %c0_3] : memref<400x32xbf16, #tpu.memory_space<vmem>>, vector<400x32xbf16>
    %c0_4 = arith.constant 0 : index
    %c0_5 = arith.constant 0 : index
    %5 = vector.load %arg3[%c0_4, %c0_5] : memref<32x128xbf16, #tpu.memory_space<vmem>>, vector<32x128xbf16>
    %cst = arith.constant dense<0.000000e+00> : vector<400x128xf32>
    %6 = tpu.matmul %4, %5, %cst {dimension_numbers = #tpu.dot_dimension_numbers<[1], [0], [0], [1], [0, 0, 1, 1], [], []>} : vector<400x32xbf16>, vector<32x128xbf16>, vector<400x128xf32> -> vector<400x128xf32>
    %7 = arith.addf %3, %6 : vector<400x128xf32>
    %c0_6 = arith.constant 0 : index
    %c0_7 = arith.constant 0 : index
    %8 = vector.load %arg8[%c0_6, %c0_7] : memref<400x128xf32, #tpu.memory_space<vmem>>, vector<400x128xf32>
    tpu.vector_store %arg8[%c0_6, %c0_7], %7 {strides = array<i32>} : memref<400x128xf32, #tpu.memory_space<vmem>>, vector<400x128xf32>,
    %c0_i32_8 = arith.constant 0 : i32
    %9 = arith.cmpi eq, %arg1, %c0_i32_8 : i32
    %10 = arith.extui %9 : i1 to i32
    %c0_i32_9 = arith.constant 0 : i32
    %11 = arith.cmpi ne, %10, %c0_i32_9 : i32
    scf.if %11 {
      %c0_10 = arith.constant 0 : index
      %c0_11 = arith.constant 0 : index
      %12 = vector.load %arg8[%c0_10, %c0_11] : memref<400x128xf32, #tpu.memory_space<vmem>>, vector<400x128xf32>
      %c0_12 = arith.constant 0 : index
      %c0_13 = arith.constant 0 : index
      %13 = vector.load %arg4[%c0_12, %c0_13] : memref<1x128xf32, #tpu.memory_space<vmem>>, vector<1x128xf32>
      %14 = vector.broadcast %13 : vector<1x128xf32> to vector<400x128xf32>
      %15 = arith.mulf %12, %14 : vector<400x128xf32>
      %c0_14 = arith.constant 0 : index
      %c0_15 = arith.constant 0 : index
      %16 = vector.load %arg5[%c0_14, %c0_15] : memref<1x128xf32, #tpu.memory_space<vmem>>, vector<1x128xf32>
      %17 = vector.broadcast %16 : vector<1x128xf32> to vector<400x128xf32>
      %18 = arith.addf %15, %17 : vector<400x128xf32>
      %cst_16 = arith.constant 0.000000e+00 : f32
      %19 = vector.broadcast %cst_16 : f32 to vector<400x128xf32>
      %20 = arith.cmpf ogt, %18, %19 : vector<400x128xf32>
      %c0_17 = arith.constant 0 : index
      %c0_18 = arith.constant 0 : index
      %21 = vector.load %arg6[%c0_17, %c0_18] : memref<1x128xf32, #tpu.memory_space<vmem>>, vector<1x128xf32>
      %22 = vector.broadcast %21 : vector<1x128xf32> to vector<400x128xf32>
      %23 = arith.mulf %22, %18 : vector<400x128xf32>
      %24 = arith.select %20, %18, %23 : vector<400x128xi1>, vector<400x128xf32>
      %c0_19 = arith.constant 0 : index
      %c0_20 = arith.constant 0 : index
      %25 = vector.load %arg7[%c0_19, %c0_20] : memref<400x128xf32, #tpu.memory_space<vmem>>, vector<400x128xf32>
      tpu.vector_store %arg7[%c0_19, %c0_20], %24 {strides = array<i32>} : memref<400x128xf32, #tpu.memory_space<vmem>>, vector<400x128xf32>,
    } else {
    }
    return
  }
  func.func @transform_0(%arg0: i32, %arg1: i32) -> (i32, i32) {
    %c0_i32 = arith.constant 0 : i32
    return %arg0, %arg1 : i32, i32
  }
  func.func @transform_1(%arg0: i32, %arg1: i32) -> (i32, i32) {
    %c0_i32 = arith.constant 0 : i32
    %c0_i32_0 = arith.constant 0 : i32
    return %arg1, %c0_i32 : i32, i32
  }
  func.func @transform_2(%arg0: i32, %arg1: i32) -> (i32, i32) {
    %c0_i32 = arith.constant 0 : i32
    %c0_i32_0 = arith.constant 0 : i32
    %c0_i32_1 = arith.constant 0 : i32
    return %c0_i32, %c0_i32_0 : i32, i32
  }
  func.func @transform_3(%arg0: i32, %arg1: i32) -> (i32, i32) {
    %c0_i32 = arith.constant 0 : i32
    %c0_i32_0 = arith.constant 0 : i32
    %c0_i32_1 = arith.constant 0 : i32
    return %c0_i32, %c0_i32_0 : i32, i32
  }
  func.func @transform_4(%arg0: i32, %arg1: i32) -> (i32, i32) {
    %c0_i32 = arith.constant 0 : i32
    %c0_i32_0 = arith.constant 0 : i32
    %c0_i32_1 = arith.constant 0 : i32
    return %c0_i32, %c0_i32_0 : i32, i32
  }
  func.func @transform_5(%arg0: i32, %arg1: i32) -> (i32, i32) {
    %c0_i32 = arith.constant 0 : i32
    %c0_i32_0 = arith.constant 0 : i32
    return %arg0, %c0_i32 : i32, i32
  }
}

module attributes {stable_mosaic.version = 11 : i64} {
  func.func @_mm_kernel(%arg0: i32, %arg1: i32, %arg2: memref<64x80xbf16, #tpu.memory_space<vmem>>, %arg3: memref<80x128xbf16, #tpu.memory_space<vmem>>, %arg4: memref<1x128xf32, #tpu.memory_space<vmem>>, %arg5: memref<1x128xf32, #tpu.memory_space<vmem>>, %arg6: memref<1x128xf32, #tpu.memory_space<vmem>>, %arg7: memref<64x128xf32, #tpu.memory_space<vmem>>, %arg8: memref<64x128xf32, #tpu.memory_space<vmem>>) attributes {dimension_semantics = [#tpu.dimension_semantics<parallel>, #tpu.dimension_semantics<arbitrary>], iteration_bounds = array<i64: 1, 1>, scalar_prefetch = 0 : i64, scratch_operands = 1 : i64, tpu.core_type = #tpu.core_type<tc>, window_params = [{transform_indices = @transform_0, window_bounds = array<i64: 64, 80>}, {transform_indices = @transform_1, window_bounds = array<i64: 80, 128>}, {pipeline_mode = #tpu.pipeline_mode<synchronous>, transform_indices = @transform_2, window_bounds = array<i64: 1, 128>}, {pipeline_mode = #tpu.pipeline_mode<synchronous>, transform_indices = @transform_3, window_bounds = array<i64: 1, 128>}, {pipeline_mode = #tpu.pipeline_mode<synchronous>, transform_indices = @transform_4, window_bounds = array<i64: 1, 128>}, {transform_indices = @transform_5, window_bounds = array<i64: 64, 128>}]} {
    %c0_i32 = arith.constant 0 : i32
    %0 = arith.cmpi eq, %arg1, %c0_i32 : i32
    %1 = arith.extui %0 : i1 to i32
    %c0_i32_0 = arith.constant 0 : i32
    %2 = arith.cmpi ne, %1, %c0_i32_0 : i32
    scf.if %2 {
      %cst_10 = arith.constant 0.000000e+00 : f32
      %12 = vector.broadcast %cst_10 : f32 to vector<64x128xf32>
      %c0_11 = arith.constant 0 : index
      %c0_12 = arith.constant 0 : index
      %13 = vector.load %arg8[%c0_11, %c0_12] : memref<64x128xf32, #tpu.memory_space<vmem>>, vector<64x128xf32>
      tpu.vector_store %arg8[%c0_11, %c0_12], %12 {strides = array<i32>} : memref<64x128xf32, #tpu.memory_space<vmem>>, vector<64x128xf32>,
    } else {
    }
    %c0 = arith.constant 0 : index
    %c0_1 = arith.constant 0 : index
    %3 = vector.load %arg8[%c0, %c0_1] : memref<64x128xf32, #tpu.memory_space<vmem>>, vector<64x128xf32>
    %c0_2 = arith.constant 0 : index
    %c0_3 = arith.constant 0 : index
    %4 = vector.load %arg2[%c0_2, %c0_3] : memref<64x80xbf16, #tpu.memory_space<vmem>>, vector<64x80xbf16>
    %c0_4 = arith.constant 0 : index
    %c0_5 = arith.constant 0 : index
    %5 = vector.load %arg3[%c0_4, %c0_5] : memref<80x128xbf16, #tpu.memory_space<vmem>>, vector<80x128xbf16>
    %cst = arith.constant dense<0.000000e+00> : vector<64x128xf32>
    %6 = tpu.matmul %4, %5, %cst {dimension_numbers = #tpu.dot_dimension_numbers<[1], [0], [0], [1], [0, 0, 1, 1], [], []>} : vector<64x80xbf16>, vector<80x128xbf16>, vector<64x128xf32> -> vector<64x128xf32>
    %7 = arith.addf %3, %6 : vector<64x128xf32>
    %c0_6 = arith.constant 0 : index
    %c0_7 = arith.constant 0 : index
    %8 = vector.load %arg8[%c0_6, %c0_7] : memref<64x128xf32, #tpu.memory_space<vmem>>, vector<64x128xf32>
    tpu.vector_store %arg8[%c0_6, %c0_7], %7 {strides = array<i32>} : memref<64x128xf32, #tpu.memory_space<vmem>>, vector<64x128xf32>,
    %c0_i32_8 = arith.constant 0 : i32
    %9 = arith.cmpi eq, %arg1, %c0_i32_8 : i32
    %10 = arith.extui %9 : i1 to i32
    %c0_i32_9 = arith.constant 0 : i32
    %11 = arith.cmpi ne, %10, %c0_i32_9 : i32
    scf.if %11 {
      %c0_10 = arith.constant 0 : index
      %c0_11 = arith.constant 0 : index
      %12 = vector.load %arg8[%c0_10, %c0_11] : memref<64x128xf32, #tpu.memory_space<vmem>>, vector<64x128xf32>
      %c0_12 = arith.constant 0 : index
      %c0_13 = arith.constant 0 : index
      %13 = vector.load %arg4[%c0_12, %c0_13] : memref<1x128xf32, #tpu.memory_space<vmem>>, vector<1x128xf32>
      %14 = vector.broadcast %13 : vector<1x128xf32> to vector<64x128xf32>
      %15 = arith.mulf %12, %14 : vector<64x128xf32>
      %c0_14 = arith.constant 0 : index
      %c0_15 = arith.constant 0 : index
      %16 = vector.load %arg5[%c0_14, %c0_15] : memref<1x128xf32, #tpu.memory_space<vmem>>, vector<1x128xf32>
      %17 = vector.broadcast %16 : vector<1x128xf32> to vector<64x128xf32>
      %18 = arith.addf %15, %17 : vector<64x128xf32>
      %cst_16 = arith.constant 0.000000e+00 : f32
      %19 = vector.broadcast %cst_16 : f32 to vector<64x128xf32>
      %20 = arith.cmpf ogt, %18, %19 : vector<64x128xf32>
      %c0_17 = arith.constant 0 : index
      %c0_18 = arith.constant 0 : index
      %21 = vector.load %arg6[%c0_17, %c0_18] : memref<1x128xf32, #tpu.memory_space<vmem>>, vector<1x128xf32>
      %22 = vector.broadcast %21 : vector<1x128xf32> to vector<64x128xf32>
      %23 = arith.mulf %22, %18 : vector<64x128xf32>
      %24 = arith.select %20, %18, %23 : vector<64x128xi1>, vector<64x128xf32>
      %c0_19 = arith.constant 0 : index
      %c0_20 = arith.constant 0 : index
      %25 = vector.load %arg7[%c0_19, %c0_20] : memref<64x128xf32, #tpu.memory_space<vmem>>, vector<64x128xf32>
      tpu.vector_store %arg7[%c0_19, %c0_20], %24 {strides = array<i32>} : memref<64x128xf32, #tpu.memory_space<vmem>>, vector<64x128xf32>,
    } else {
    }
    return
  }
  func.func @transform_0(%arg0: i32, %arg1: i32) -> (i32, i32) {
    %c0_i32 = arith.constant 0 : i32
    return %arg0, %arg1 : i32, i32
  }
  func.func @transform_1(%arg0: i32, %arg1: i32) -> (i32, i32) {
    %c0_i32 = arith.constant 0 : i32
    %c0_i32_0 = arith.constant 0 : i32
    return %arg1, %c0_i32 : i32, i32
  }
  func.func @transform_2(%arg0: i32, %arg1: i32) -> (i32, i32) {
    %c0_i32 = arith.constant 0 : i32
    %c0_i32_0 = arith.constant 0 : i32
    %c0_i32_1 = arith.constant 0 : i32
    return %c0_i32, %c0_i32_0 : i32, i32
  }
  func.func @transform_3(%arg0: i32, %arg1: i32) -> (i32, i32) {
    %c0_i32 = arith.constant 0 : i32
    %c0_i32_0 = arith.constant 0 : i32
    %c0_i32_1 = arith.constant 0 : i32
    return %c0_i32, %c0_i32_0 : i32, i32
  }
  func.func @transform_4(%arg0: i32, %arg1: i32) -> (i32, i32) {
    %c0_i32 = arith.constant 0 : i32
    %c0_i32_0 = arith.constant 0 : i32
    %c0_i32_1 = arith.constant 0 : i32
    return %c0_i32, %c0_i32_0 : i32, i32
  }
  func.func @transform_5(%arg0: i32, %arg1: i32) -> (i32, i32) {
    %c0_i32 = arith.constant 0 : i32
    %c0_i32_0 = arith.constant 0 : i32
    return %arg0, %c0_i32 : i32, i32
  }
}

module attributes {stable_mosaic.version = 11 : i64} {
  func.func @_blend_kernel(%arg0: i32, %arg1: memref<4x512x3xf32, #tpu.memory_space<vmem>>, %arg2: memref<4x512x1xf32, #tpu.memory_space<vmem>>, %arg3: memref<512x3xf32, #tpu.memory_space<vmem>>) attributes {dimension_semantics = [#tpu.dimension_semantics<parallel>], iteration_bounds = array<i64: 1>, scalar_prefetch = 0 : i64, scratch_operands = 0 : i64, tpu.core_type = #tpu.core_type<tc>, window_params = [{transform_indices = @transform_0, window_bounds = array<i64: 4, 512, 3>}, {transform_indices = @transform_1, window_bounds = array<i64: 4, 512, 1>}, {transform_indices = @transform_2, window_bounds = array<i64: 512, 3>}]} {
    %c0 = arith.constant 0 : index
    %c0_0 = arith.constant 0 : index
    %c0_1 = arith.constant 0 : index
    %0 = vector.load %arg1[%c0, %c0_0, %c0_1] : memref<4x512x3xf32, #tpu.memory_space<vmem>>, vector<4x512x3xf32>
    %c0_2 = arith.constant 0 : index
    %c0_3 = arith.constant 0 : index
    %c0_4 = arith.constant 0 : index
    %1 = vector.load %arg2[%c0_2, %c0_3, %c0_4] : memref<4x512x1xf32, #tpu.memory_space<vmem>>, vector<4x512x1xf32>
    %2 = vector.broadcast %1 : vector<4x512x1xf32> to vector<4x512x3xf32>
    %3 = arith.mulf %0, %2 : vector<4x512x3xf32>
    %cst = arith.constant dense<0.000000e+00> : vector<512x3xf32>
    %4 = vector.multi_reduction <add>, %3, %cst [0] : vector<4x512x3xf32> to vector<512x3xf32>
    %c0_5 = arith.constant 0 : index
    %c0_6 = arith.constant 0 : index
    %5 = vector.load %arg3[%c0_5, %c0_6] : memref<512x3xf32, #tpu.memory_space<vmem>>, vector<512x3xf32>
    tpu.vector_store %arg3[%c0_5, %c0_6], %4 {strides = array<i32>} : memref<512x3xf32, #tpu.memory_space<vmem>>, vector<512x3xf32>,
    return
  }
  func.func @transform_0(%arg0: i32) -> (i32, i32, i32) {
    %c0_i32 = arith.constant 0 : i32
    %c0_i32_0 = arith.constant 0 : i32
    %c0_i32_1 = arith.constant 0 : i32
    return %c0_i32, %arg0, %c0_i32_0 : i32, i32, i32
  }
  func.func @transform_1(%arg0: i32) -> (i32, i32, i32) {
    %c0_i32 = arith.constant 0 : i32
    %c0_i32_0 = arith.constant 0 : i32
    %c0_i32_1 = arith.constant 0 : i32
    return %c0_i32, %arg0, %c0_i32_0 : i32, i32, i32
  }
  func.func @transform_2(%arg0: i32) -> (i32, i32) {
    %c0_i32 = arith.constant 0 : i32
    %c0_i32_0 = arith.constant 0 : i32
    return %arg0, %c0_i32 : i32, i32
  }
}

module attributes {stable_mosaic.version = 11 : i64} {
  func.func @_mm_kernel(%arg0: i32, %arg1: i32, %arg2: memref<128x32xbf16, #tpu.memory_space<vmem>>, %arg3: memref<32x128xbf16, #tpu.memory_space<vmem>>, %arg4: memref<1x128xf32, #tpu.memory_space<vmem>>, %arg5: memref<1x128xf32, #tpu.memory_space<vmem>>, %arg6: memref<1x128xf32, #tpu.memory_space<vmem>>, %arg7: memref<128x128xf32, #tpu.memory_space<vmem>>, %arg8: memref<128x128xf32, #tpu.memory_space<vmem>>) attributes {dimension_semantics = [#tpu.dimension_semantics<parallel>, #tpu.dimension_semantics<arbitrary>], iteration_bounds = array<i64: 1, 1>, scalar_prefetch = 0 : i64, scratch_operands = 1 : i64, tpu.core_type = #tpu.core_type<tc>, window_params = [{transform_indices = @transform_0, window_bounds = array<i64: 128, 32>}, {transform_indices = @transform_1, window_bounds = array<i64: 32, 128>}, {pipeline_mode = #tpu.pipeline_mode<synchronous>, transform_indices = @transform_2, window_bounds = array<i64: 1, 128>}, {pipeline_mode = #tpu.pipeline_mode<synchronous>, transform_indices = @transform_3, window_bounds = array<i64: 1, 128>}, {pipeline_mode = #tpu.pipeline_mode<synchronous>, transform_indices = @transform_4, window_bounds = array<i64: 1, 128>}, {transform_indices = @transform_5, window_bounds = array<i64: 128, 128>}]} {
    %c0_i32 = arith.constant 0 : i32
    %0 = arith.cmpi eq, %arg1, %c0_i32 : i32
    %1 = arith.extui %0 : i1 to i32
    %c0_i32_0 = arith.constant 0 : i32
    %2 = arith.cmpi ne, %1, %c0_i32_0 : i32
    scf.if %2 {
      %cst_10 = arith.constant 0.000000e+00 : f32
      %12 = vector.broadcast %cst_10 : f32 to vector<128x128xf32>
      %c0_11 = arith.constant 0 : index
      %c0_12 = arith.constant 0 : index
      %13 = vector.load %arg8[%c0_11, %c0_12] : memref<128x128xf32, #tpu.memory_space<vmem>>, vector<128x128xf32>
      tpu.vector_store %arg8[%c0_11, %c0_12], %12 {strides = array<i32>} : memref<128x128xf32, #tpu.memory_space<vmem>>, vector<128x128xf32>,
    } else {
    }
    %c0 = arith.constant 0 : index
    %c0_1 = arith.constant 0 : index
    %3 = vector.load %arg8[%c0, %c0_1] : memref<128x128xf32, #tpu.memory_space<vmem>>, vector<128x128xf32>
    %c0_2 = arith.constant 0 : index
    %c0_3 = arith.constant 0 : index
    %4 = vector.load %arg2[%c0_2, %c0_3] : memref<128x32xbf16, #tpu.memory_space<vmem>>, vector<128x32xbf16>
    %c0_4 = arith.constant 0 : index
    %c0_5 = arith.constant 0 : index
    %5 = vector.load %arg3[%c0_4, %c0_5] : memref<32x128xbf16, #tpu.memory_space<vmem>>, vector<32x128xbf16>
    %cst = arith.constant dense<0.000000e+00> : vector<128x128xf32>
    %6 = tpu.matmul %4, %5, %cst {dimension_numbers = #tpu.dot_dimension_numbers<[1], [0], [0], [1], [0, 0, 1, 1], [], []>} : vector<128x32xbf16>, vector<32x128xbf16>, vector<128x128xf32> -> vector<128x128xf32>
    %7 = arith.addf %3, %6 : vector<128x128xf32>
    %c0_6 = arith.constant 0 : index
    %c0_7 = arith.constant 0 : index
    %8 = vector.load %arg8[%c0_6, %c0_7] : memref<128x128xf32, #tpu.memory_space<vmem>>, vector<128x128xf32>
    tpu.vector_store %arg8[%c0_6, %c0_7], %7 {strides = array<i32>} : memref<128x128xf32, #tpu.memory_space<vmem>>, vector<128x128xf32>,
    %c0_i32_8 = arith.constant 0 : i32
    %9 = arith.cmpi eq, %arg1, %c0_i32_8 : i32
    %10 = arith.extui %9 : i1 to i32
    %c0_i32_9 = arith.constant 0 : i32
    %11 = arith.cmpi ne, %10, %c0_i32_9 : i32
    scf.if %11 {
      %c0_10 = arith.constant 0 : index
      %c0_11 = arith.constant 0 : index
      %12 = vector.load %arg8[%c0_10, %c0_11] : memref<128x128xf32, #tpu.memory_space<vmem>>, vector<128x128xf32>
      %c0_12 = arith.constant 0 : index
      %c0_13 = arith.constant 0 : index
      %13 = vector.load %arg4[%c0_12, %c0_13] : memref<1x128xf32, #tpu.memory_space<vmem>>, vector<1x128xf32>
      %14 = vector.broadcast %13 : vector<1x128xf32> to vector<128x128xf32>
      %15 = arith.mulf %12, %14 : vector<128x128xf32>
      %c0_14 = arith.constant 0 : index
      %c0_15 = arith.constant 0 : index
      %16 = vector.load %arg5[%c0_14, %c0_15] : memref<1x128xf32, #tpu.memory_space<vmem>>, vector<1x128xf32>
      %17 = vector.broadcast %16 : vector<1x128xf32> to vector<128x128xf32>
      %18 = arith.addf %15, %17 : vector<128x128xf32>
      %cst_16 = arith.constant 0.000000e+00 : f32
      %19 = vector.broadcast %cst_16 : f32 to vector<128x128xf32>
      %20 = arith.cmpf ogt, %18, %19 : vector<128x128xf32>
      %c0_17 = arith.constant 0 : index
      %c0_18 = arith.constant 0 : index
      %21 = vector.load %arg6[%c0_17, %c0_18] : memref<1x128xf32, #tpu.memory_space<vmem>>, vector<1x128xf32>
      %22 = vector.broadcast %21 : vector<1x128xf32> to vector<128x128xf32>
      %23 = arith.mulf %22, %18 : vector<128x128xf32>
      %24 = arith.select %20, %18, %23 : vector<128x128xi1>, vector<128x128xf32>
      %c0_19 = arith.constant 0 : index
      %c0_20 = arith.constant 0 : index
      %25 = vector.load %arg7[%c0_19, %c0_20] : memref<128x128xf32, #tpu.memory_space<vmem>>, vector<128x128xf32>
      tpu.vector_store %arg7[%c0_19, %c0_20], %24 {strides = array<i32>} : memref<128x128xf32, #tpu.memory_space<vmem>>, vector<128x128xf32>,
    } else {
    }
    return
  }
  func.func @transform_0(%arg0: i32, %arg1: i32) -> (i32, i32) {
    %c0_i32 = arith.constant 0 : i32
    return %arg0, %arg1 : i32, i32
  }
  func.func @transform_1(%arg0: i32, %arg1: i32) -> (i32, i32) {
    %c0_i32 = arith.constant 0 : i32
    %c0_i32_0 = arith.constant 0 : i32
    return %arg1, %c0_i32 : i32, i32
  }
  func.func @transform_2(%arg0: i32, %arg1: i32) -> (i32, i32) {
    %c0_i32 = arith.constant 0 : i32
    %c0_i32_0 = arith.constant 0 : i32
    %c0_i32_1 = arith.constant 0 : i32
    return %c0_i32, %c0_i32_0 : i32, i32
  }
  func.func @transform_3(%arg0: i32, %arg1: i32) -> (i32, i32) {
    %c0_i32 = arith.constant 0 : i32
    %c0_i32_0 = arith.constant 0 : i32
    %c0_i32_1 = arith.constant 0 : i32
    return %c0_i32, %c0_i32_0 : i32, i32
  }
  func.func @transform_4(%arg0: i32, %arg1: i32) -> (i32, i32) {
    %c0_i32 = arith.constant 0 : i32
    %c0_i32_0 = arith.constant 0 : i32
    %c0_i32_1 = arith.constant 0 : i32
    return %c0_i32, %c0_i32_0 : i32, i32
  }
  func.func @transform_5(%arg0: i32, %arg1: i32) -> (i32, i32) {
    %c0_i32 = arith.constant 0 : i32
    %c0_i32_0 = arith.constant 0 : i32
    return %arg0, %c0_i32 : i32, i32
  }
}

module attributes {stable_mosaic.version = 11 : i64} {
  func.func @_dw_kernel(%arg0: i32, %arg1: memref<9x128x128xbf16, #tpu.memory_space<vmem>>, %arg2: memref<9x1x128xf32, #tpu.memory_space<vmem>>, %arg3: memref<1x128xf32, #tpu.memory_space<vmem>>, %arg4: memref<1x128xf32, #tpu.memory_space<vmem>>, %arg5: memref<1x128xf32, #tpu.memory_space<vmem>>, %arg6: memref<128x128xf32, #tpu.memory_space<vmem>>) attributes {dimension_semantics = [#tpu.dimension_semantics<parallel>], iteration_bounds = array<i64: 1>, scalar_prefetch = 0 : i64, scratch_operands = 0 : i64, tpu.core_type = #tpu.core_type<tc>, window_params = [{transform_indices = @transform_0, window_bounds = array<i64: 9, 128, 128>}, {pipeline_mode = #tpu.pipeline_mode<synchronous>, transform_indices = @transform_1, window_bounds = array<i64: 9, 1, 128>}, {pipeline_mode = #tpu.pipeline_mode<synchronous>, transform_indices = @transform_2, window_bounds = array<i64: 1, 128>}, {pipeline_mode = #tpu.pipeline_mode<synchronous>, transform_indices = @transform_3, window_bounds = array<i64: 1, 128>}, {pipeline_mode = #tpu.pipeline_mode<synchronous>, transform_indices = @transform_4, window_bounds = array<i64: 1, 128>}, {transform_indices = @transform_5, window_bounds = array<i64: 128, 128>}]} {
    %c0 = arith.constant 0 : index
    %c0_0 = arith.constant 0 : index
    %c0_1 = arith.constant 0 : index
    %0 = vector.load %arg1[%c0, %c0_0, %c0_1] : memref<9x128x128xbf16, #tpu.memory_space<vmem>>, vector<9x128x128xbf16>
    %1 = arith.extf %0 : vector<9x128x128xbf16> to vector<9x128x128xf32>
    %c0_2 = arith.constant 0 : index
    %c0_3 = arith.constant 0 : index
    %c0_4 = arith.constant 0 : index
    %2 = vector.load %arg2[%c0_2, %c0_3, %c0_4] : memref<9x1x128xf32, #tpu.memory_space<vmem>>, vector<9x1x128xf32>
    %3 = vector.broadcast %2 : vector<9x1x128xf32> to vector<9x128x128xf32>
    %4 = arith.mulf %1, %3 : vector<9x128x128xf32>
    %cst = arith.constant dense<0.000000e+00> : vector<128x128xf32>
    %5 = vector.multi_reduction <add>, %4, %cst [0] : vector<9x128x128xf32> to vector<128x128xf32>
    %c0_5 = arith.constant 0 : index
    %c0_6 = arith.constant 0 : index
    %6 = vector.load %arg3[%c0_5, %c0_6] : memref<1x128xf32, #tpu.memory_space<vmem>>, vector<1x128xf32>
    %7 = vector.broadcast %6 : vector<1x128xf32> to vector<128x128xf32>
    %8 = arith.mulf %5, %7 : vector<128x128xf32>
    %c0_7 = arith.constant 0 : index
    %c0_8 = arith.constant 0 : index
    %9 = vector.load %arg4[%c0_7, %c0_8] : memref<1x128xf32, #tpu.memory_space<vmem>>, vector<1x128xf32>
    %10 = vector.broadcast %9 : vector<1x128xf32> to vector<128x128xf32>
    %11 = arith.addf %8, %10 : vector<128x128xf32>
    %cst_9 = arith.constant 0.000000e+00 : f32
    %12 = vector.broadcast %cst_9 : f32 to vector<128x128xf32>
    %13 = arith.cmpf ogt, %11, %12 : vector<128x128xf32>
    %c0_10 = arith.constant 0 : index
    %c0_11 = arith.constant 0 : index
    %14 = vector.load %arg5[%c0_10, %c0_11] : memref<1x128xf32, #tpu.memory_space<vmem>>, vector<1x128xf32>
    %15 = vector.broadcast %14 : vector<1x128xf32> to vector<128x128xf32>
    %16 = arith.mulf %15, %11 : vector<128x128xf32>
    %17 = arith.select %13, %11, %16 : vector<128x128xi1>, vector<128x128xf32>
    %c0_12 = arith.constant 0 : index
    %c0_13 = arith.constant 0 : index
    %18 = vector.load %arg6[%c0_12, %c0_13] : memref<128x128xf32, #tpu.memory_space<vmem>>, vector<128x128xf32>
    tpu.vector_store %arg6[%c0_12, %c0_13], %17 {strides = array<i32>} : memref<128x128xf32, #tpu.memory_space<vmem>>, vector<128x128xf32>,
    return
  }
  func.func @transform_0(%arg0: i32) -> (i32, i32, i32) {
    %c0_i32 = arith.constant 0 : i32
    %c0_i32_0 = arith.constant 0 : i32
    %c0_i32_1 = arith.constant 0 : i32
    return %c0_i32, %arg0, %c0_i32_0 : i32, i32, i32
  }
  func.func @transform_1(%arg0: i32) -> (i32, i32, i32) {
    %c0_i32 = arith.constant 0 : i32
    %c0_i32_0 = arith.constant 0 : i32
    %c0_i32_1 = arith.constant 0 : i32
    %c0_i32_2 = arith.constant 0 : i32
    return %c0_i32, %c0_i32_0, %c0_i32_1 : i32, i32, i32
  }
  func.func @transform_2(%arg0: i32) -> (i32, i32) {
    %c0_i32 = arith.constant 0 : i32
    %c0_i32_0 = arith.constant 0 : i32
    %c0_i32_1 = arith.constant 0 : i32
    return %c0_i32, %c0_i32_0 : i32, i32
  }
  func.func @transform_3(%arg0: i32) -> (i32, i32) {
    %c0_i32 = arith.constant 0 : i32
    %c0_i32_0 = arith.constant 0 : i32
    %c0_i32_1 = arith.constant 0 : i32
    return %c0_i32, %c0_i32_0 : i32, i32
  }
  func.func @transform_4(%arg0: i32) -> (i32, i32) {
    %c0_i32 = arith.constant 0 : i32
    %c0_i32_0 = arith.constant 0 : i32
    %c0_i32_1 = arith.constant 0 : i32
    return %c0_i32, %c0_i32_0 : i32, i32
  }
  func.func @transform_5(%arg0: i32) -> (i32, i32) {
    %c0_i32 = arith.constant 0 : i32
    %c0_i32_0 = arith.constant 0 : i32
    return %arg0, %c0_i32 : i32, i32
  }
}

module attributes {stable_mosaic.version = 11 : i64} {
  func.func @_mm_kernel(%arg0: i32, %arg1: i32, %arg2: memref<128x128xbf16, #tpu.memory_space<vmem>>, %arg3: memref<128x128xbf16, #tpu.memory_space<vmem>>, %arg4: memref<1x128xf32, #tpu.memory_space<vmem>>, %arg5: memref<1x128xf32, #tpu.memory_space<vmem>>, %arg6: memref<1x128xf32, #tpu.memory_space<vmem>>, %arg7: memref<128x128xf32, #tpu.memory_space<vmem>>, %arg8: memref<128x128xf32, #tpu.memory_space<vmem>>) attributes {dimension_semantics = [#tpu.dimension_semantics<parallel>, #tpu.dimension_semantics<arbitrary>], iteration_bounds = array<i64: 1, 1>, scalar_prefetch = 0 : i64, scratch_operands = 1 : i64, tpu.core_type = #tpu.core_type<tc>, window_params = [{transform_indices = @transform_0, window_bounds = array<i64: 128, 128>}, {transform_indices = @transform_1, window_bounds = array<i64: 128, 128>}, {pipeline_mode = #tpu.pipeline_mode<synchronous>, transform_indices = @transform_2, window_bounds = array<i64: 1, 128>}, {pipeline_mode = #tpu.pipeline_mode<synchronous>, transform_indices = @transform_3, window_bounds = array<i64: 1, 128>}, {pipeline_mode = #tpu.pipeline_mode<synchronous>, transform_indices = @transform_4, window_bounds = array<i64: 1, 128>}, {transform_indices = @transform_5, window_bounds = array<i64: 128, 128>}]} {
    %c0_i32 = arith.constant 0 : i32
    %0 = arith.cmpi eq, %arg1, %c0_i32 : i32
    %1 = arith.extui %0 : i1 to i32
    %c0_i32_0 = arith.constant 0 : i32
    %2 = arith.cmpi ne, %1, %c0_i32_0 : i32
    scf.if %2 {
      %cst_10 = arith.constant 0.000000e+00 : f32
      %12 = vector.broadcast %cst_10 : f32 to vector<128x128xf32>
      %c0_11 = arith.constant 0 : index
      %c0_12 = arith.constant 0 : index
      %13 = vector.load %arg8[%c0_11, %c0_12] : memref<128x128xf32, #tpu.memory_space<vmem>>, vector<128x128xf32>
      tpu.vector_store %arg8[%c0_11, %c0_12], %12 {strides = array<i32>} : memref<128x128xf32, #tpu.memory_space<vmem>>, vector<128x128xf32>,
    } else {
    }
    %c0 = arith.constant 0 : index
    %c0_1 = arith.constant 0 : index
    %3 = vector.load %arg8[%c0, %c0_1] : memref<128x128xf32, #tpu.memory_space<vmem>>, vector<128x128xf32>
    %c0_2 = arith.constant 0 : index
    %c0_3 = arith.constant 0 : index
    %4 = vector.load %arg2[%c0_2, %c0_3] : memref<128x128xbf16, #tpu.memory_space<vmem>>, vector<128x128xbf16>
    %c0_4 = arith.constant 0 : index
    %c0_5 = arith.constant 0 : index
    %5 = vector.load %arg3[%c0_4, %c0_5] : memref<128x128xbf16, #tpu.memory_space<vmem>>, vector<128x128xbf16>
    %cst = arith.constant dense<0.000000e+00> : vector<128x128xf32>
    %6 = tpu.matmul %4, %5, %cst {dimension_numbers = #tpu.dot_dimension_numbers<[1], [0], [0], [1], [0, 0, 1, 1], [], []>} : vector<128x128xbf16>, vector<128x128xbf16>, vector<128x128xf32> -> vector<128x128xf32>
    %7 = arith.addf %3, %6 : vector<128x128xf32>
    %c0_6 = arith.constant 0 : index
    %c0_7 = arith.constant 0 : index
    %8 = vector.load %arg8[%c0_6, %c0_7] : memref<128x128xf32, #tpu.memory_space<vmem>>, vector<128x128xf32>
    tpu.vector_store %arg8[%c0_6, %c0_7], %7 {strides = array<i32>} : memref<128x128xf32, #tpu.memory_space<vmem>>, vector<128x128xf32>,
    %c0_i32_8 = arith.constant 0 : i32
    %9 = arith.cmpi eq, %arg1, %c0_i32_8 : i32
    %10 = arith.extui %9 : i1 to i32
    %c0_i32_9 = arith.constant 0 : i32
    %11 = arith.cmpi ne, %10, %c0_i32_9 : i32
    scf.if %11 {
      %c0_10 = arith.constant 0 : index
      %c0_11 = arith.constant 0 : index
      %12 = vector.load %arg8[%c0_10, %c0_11] : memref<128x128xf32, #tpu.memory_space<vmem>>, vector<128x128xf32>
      %c0_12 = arith.constant 0 : index
      %c0_13 = arith.constant 0 : index
      %13 = vector.load %arg4[%c0_12, %c0_13] : memref<1x128xf32, #tpu.memory_space<vmem>>, vector<1x128xf32>
      %14 = vector.broadcast %13 : vector<1x128xf32> to vector<128x128xf32>
      %15 = arith.mulf %12, %14 : vector<128x128xf32>
      %c0_14 = arith.constant 0 : index
      %c0_15 = arith.constant 0 : index
      %16 = vector.load %arg5[%c0_14, %c0_15] : memref<1x128xf32, #tpu.memory_space<vmem>>, vector<1x128xf32>
      %17 = vector.broadcast %16 : vector<1x128xf32> to vector<128x128xf32>
      %18 = arith.addf %15, %17 : vector<128x128xf32>
      %cst_16 = arith.constant 0.000000e+00 : f32
      %19 = vector.broadcast %cst_16 : f32 to vector<128x128xf32>
      %20 = arith.cmpf ogt, %18, %19 : vector<128x128xf32>
      %c0_17 = arith.constant 0 : index
      %c0_18 = arith.constant 0 : index
      %21 = vector.load %arg6[%c0_17, %c0_18] : memref<1x128xf32, #tpu.memory_space<vmem>>, vector<1x128xf32>
      %22 = vector.broadcast %21 : vector<1x128xf32> to vector<128x128xf32>
      %23 = arith.mulf %22, %18 : vector<128x128xf32>
      %24 = arith.select %20, %18, %23 : vector<128x128xi1>, vector<128x128xf32>
      %c0_19 = arith.constant 0 : index
      %c0_20 = arith.constant 0 : index
      %25 = vector.load %arg7[%c0_19, %c0_20] : memref<128x128xf32, #tpu.memory_space<vmem>>, vector<128x128xf32>
      tpu.vector_store %arg7[%c0_19, %c0_20], %24 {strides = array<i32>} : memref<128x128xf32, #tpu.memory_space<vmem>>, vector<128x128xf32>,
    } else {
    }
    return
  }
  func.func @transform_0(%arg0: i32, %arg1: i32) -> (i32, i32) {
    %c0_i32 = arith.constant 0 : i32
    return %arg0, %arg1 : i32, i32
  }
  func.func @transform_1(%arg0: i32, %arg1: i32) -> (i32, i32) {
    %c0_i32 = arith.constant 0 : i32
    %c0_i32_0 = arith.constant 0 : i32
    return %arg1, %c0_i32 : i32, i32
  }
  func.func @transform_2(%arg0: i32, %arg1: i32) -> (i32, i32) {
    %c0_i32 = arith.constant 0 : i32
    %c0_i32_0 = arith.constant 0 : i32
    %c0_i32_1 = arith.constant 0 : i32
    return %c0_i32, %c0_i32_0 : i32, i32
  }
  func.func @transform_3(%arg0: i32, %arg1: i32) -> (i32, i32) {
    %c0_i32 = arith.constant 0 : i32
    %c0_i32_0 = arith.constant 0 : i32
    %c0_i32_1 = arith.constant 0 : i32
    return %c0_i32, %c0_i32_0 : i32, i32
  }
  func.func @transform_4(%arg0: i32, %arg1: i32) -> (i32, i32) {
    %c0_i32 = arith.constant 0 : i32
    %c0_i32_0 = arith.constant 0 : i32
    %c0_i32_1 = arith.constant 0 : i32
    return %c0_i32, %c0_i32_0 : i32, i32
  }
  func.func @transform_5(%arg0: i32, %arg1: i32) -> (i32, i32) {
    %c0_i32 = arith.constant 0 : i32
    %c0_i32_0 = arith.constant 0 : i32
    return %arg0, %c0_i32 : i32, i32
  }
}

module attributes {stable_mosaic.version = 11 : i64} {
  func.func @_mm_res_kernel(%arg0: i32, %arg1: i32, %arg2: memref<128x128xbf16, #tpu.memory_space<vmem>>, %arg3: memref<128x128xbf16, #tpu.memory_space<vmem>>, %arg4: memref<1x128xf32, #tpu.memory_space<vmem>>, %arg5: memref<1x128xf32, #tpu.memory_space<vmem>>, %arg6: memref<1x128xf32, #tpu.memory_space<vmem>>, %arg7: memref<128x128xf32, #tpu.memory_space<vmem>>, %arg8: memref<128x128xf32, #tpu.memory_space<vmem>>, %arg9: memref<128x128xf32, #tpu.memory_space<vmem>>) attributes {dimension_semantics = [#tpu.dimension_semantics<parallel>, #tpu.dimension_semantics<arbitrary>], iteration_bounds = array<i64: 1, 1>, scalar_prefetch = 0 : i64, scratch_operands = 1 : i64, tpu.core_type = #tpu.core_type<tc>, window_params = [{transform_indices = @transform_0, window_bounds = array<i64: 128, 128>}, {transform_indices = @transform_1, window_bounds = array<i64: 128, 128>}, {pipeline_mode = #tpu.pipeline_mode<synchronous>, transform_indices = @transform_2, window_bounds = array<i64: 1, 128>}, {pipeline_mode = #tpu.pipeline_mode<synchronous>, transform_indices = @transform_3, window_bounds = array<i64: 1, 128>}, {pipeline_mode = #tpu.pipeline_mode<synchronous>, transform_indices = @transform_4, window_bounds = array<i64: 1, 128>}, {transform_indices = @transform_5, window_bounds = array<i64: 128, 128>}, {transform_indices = @transform_6, window_bounds = array<i64: 128, 128>}]} {
    %c0_i32 = arith.constant 0 : i32
    %0 = arith.cmpi eq, %arg1, %c0_i32 : i32
    %1 = arith.extui %0 : i1 to i32
    %c0_i32_0 = arith.constant 0 : i32
    %2 = arith.cmpi ne, %1, %c0_i32_0 : i32
    scf.if %2 {
      %cst_10 = arith.constant 0.000000e+00 : f32
      %12 = vector.broadcast %cst_10 : f32 to vector<128x128xf32>
      %c0_11 = arith.constant 0 : index
      %c0_12 = arith.constant 0 : index
      %13 = vector.load %arg9[%c0_11, %c0_12] : memref<128x128xf32, #tpu.memory_space<vmem>>, vector<128x128xf32>
      tpu.vector_store %arg9[%c0_11, %c0_12], %12 {strides = array<i32>} : memref<128x128xf32, #tpu.memory_space<vmem>>, vector<128x128xf32>,
    } else {
    }
    %c0 = arith.constant 0 : index
    %c0_1 = arith.constant 0 : index
    %3 = vector.load %arg9[%c0, %c0_1] : memref<128x128xf32, #tpu.memory_space<vmem>>, vector<128x128xf32>
    %c0_2 = arith.constant 0 : index
    %c0_3 = arith.constant 0 : index
    %4 = vector.load %arg2[%c0_2, %c0_3] : memref<128x128xbf16, #tpu.memory_space<vmem>>, vector<128x128xbf16>
    %c0_4 = arith.constant 0 : index
    %c0_5 = arith.constant 0 : index
    %5 = vector.load %arg3[%c0_4, %c0_5] : memref<128x128xbf16, #tpu.memory_space<vmem>>, vector<128x128xbf16>
    %cst = arith.constant dense<0.000000e+00> : vector<128x128xf32>
    %6 = tpu.matmul %4, %5, %cst {dimension_numbers = #tpu.dot_dimension_numbers<[1], [0], [0], [1], [0, 0, 1, 1], [], []>} : vector<128x128xbf16>, vector<128x128xbf16>, vector<128x128xf32> -> vector<128x128xf32>
    %7 = arith.addf %3, %6 : vector<128x128xf32>
    %c0_6 = arith.constant 0 : index
    %c0_7 = arith.constant 0 : index
    %8 = vector.load %arg9[%c0_6, %c0_7] : memref<128x128xf32, #tpu.memory_space<vmem>>, vector<128x128xf32>
    tpu.vector_store %arg9[%c0_6, %c0_7], %7 {strides = array<i32>} : memref<128x128xf32, #tpu.memory_space<vmem>>, vector<128x128xf32>,
    %c0_i32_8 = arith.constant 0 : i32
    %9 = arith.cmpi eq, %arg1, %c0_i32_8 : i32
    %10 = arith.extui %9 : i1 to i32
    %c0_i32_9 = arith.constant 0 : i32
    %11 = arith.cmpi ne, %10, %c0_i32_9 : i32
    scf.if %11 {
      %c0_10 = arith.constant 0 : index
      %c0_11 = arith.constant 0 : index
      %12 = vector.load %arg9[%c0_10, %c0_11] : memref<128x128xf32, #tpu.memory_space<vmem>>, vector<128x128xf32>
      %c0_12 = arith.constant 0 : index
      %c0_13 = arith.constant 0 : index
      %13 = vector.load %arg4[%c0_12, %c0_13] : memref<1x128xf32, #tpu.memory_space<vmem>>, vector<1x128xf32>
      %14 = vector.broadcast %13 : vector<1x128xf32> to vector<128x128xf32>
      %15 = arith.mulf %12, %14 : vector<128x128xf32>
      %c0_14 = arith.constant 0 : index
      %c0_15 = arith.constant 0 : index
      %16 = vector.load %arg5[%c0_14, %c0_15] : memref<1x128xf32, #tpu.memory_space<vmem>>, vector<1x128xf32>
      %17 = vector.broadcast %16 : vector<1x128xf32> to vector<128x128xf32>
      %18 = arith.addf %15, %17 : vector<128x128xf32>
      %cst_16 = arith.constant 0.000000e+00 : f32
      %19 = vector.broadcast %cst_16 : f32 to vector<128x128xf32>
      %20 = arith.cmpf ogt, %18, %19 : vector<128x128xf32>
      %c0_17 = arith.constant 0 : index
      %c0_18 = arith.constant 0 : index
      %21 = vector.load %arg6[%c0_17, %c0_18] : memref<1x128xf32, #tpu.memory_space<vmem>>, vector<1x128xf32>
      %22 = vector.broadcast %21 : vector<1x128xf32> to vector<128x128xf32>
      %23 = arith.mulf %22, %18 : vector<128x128xf32>
      %24 = arith.select %20, %18, %23 : vector<128x128xi1>, vector<128x128xf32>
      %c0_19 = arith.constant 0 : index
      %c0_20 = arith.constant 0 : index
      %25 = vector.load %arg7[%c0_19, %c0_20] : memref<128x128xf32, #tpu.memory_space<vmem>>, vector<128x128xf32>
      %26 = arith.addf %24, %25 : vector<128x128xf32>
      %c0_21 = arith.constant 0 : index
      %c0_22 = arith.constant 0 : index
      %27 = vector.load %arg8[%c0_21, %c0_22] : memref<128x128xf32, #tpu.memory_space<vmem>>, vector<128x128xf32>
      tpu.vector_store %arg8[%c0_21, %c0_22], %26 {strides = array<i32>} : memref<128x128xf32, #tpu.memory_space<vmem>>, vector<128x128xf32>,
    } else {
    }
    return
  }
  func.func @transform_0(%arg0: i32, %arg1: i32) -> (i32, i32) {
    %c0_i32 = arith.constant 0 : i32
    return %arg0, %arg1 : i32, i32
  }
  func.func @transform_1(%arg0: i32, %arg1: i32) -> (i32, i32) {
    %c0_i32 = arith.constant 0 : i32
    %c0_i32_0 = arith.constant 0 : i32
    return %arg1, %c0_i32 : i32, i32
  }
  func.func @transform_2(%arg0: i32, %arg1: i32) -> (i32, i32) {
    %c0_i32 = arith.constant 0 : i32
    %c0_i32_0 = arith.constant 0 : i32
    %c0_i32_1 = arith.constant 0 : i32
    return %c0_i32, %c0_i32_0 : i32, i32
  }
  func.func @transform_3(%arg0: i32, %arg1: i32) -> (i32, i32) {
    %c0_i32 = arith.constant 0 : i32
    %c0_i32_0 = arith.constant 0 : i32
    %c0_i32_1 = arith.constant 0 : i32
    return %c0_i32, %c0_i32_0 : i32, i32
  }
  func.func @transform_4(%arg0: i32, %arg1: i32) -> (i32, i32) {
    %c0_i32 = arith.constant 0 : i32
    %c0_i32_0 = arith.constant 0 : i32
    %c0_i32_1 = arith.constant 0 : i32
    return %c0_i32, %c0_i32_0 : i32, i32
  }
  func.func @transform_5(%arg0: i32, %arg1: i32) -> (i32, i32) {
    %c0_i32 = arith.constant 0 : i32
    %c0_i32_0 = arith.constant 0 : i32
    return %arg0, %c0_i32 : i32, i32
  }
  func.func @transform_6(%arg0: i32, %arg1: i32) -> (i32, i32) {
    %c0_i32 = arith.constant 0 : i32
    %c0_i32_0 = arith.constant 0 : i32
    return %arg0, %c0_i32 : i32, i32
  }
}

module attributes {stable_mosaic.version = 11 : i64} {
  func.func @_conv2_gd_lin_kernel(%arg0: i32, %arg1: memref<2x64x128xbf16, #tpu.memory_space<vmem>>, %arg2: memref<128x128xbf16, #tpu.memory_space<vmem>>, %arg3: memref<1x128xf32, #tpu.memory_space<vmem>>, %arg4: memref<1x128xf32, #tpu.memory_space<vmem>>, %arg5: memref<1x128xf32, #tpu.memory_space<vmem>>, %arg6: memref<64x128xf32, #tpu.memory_space<vmem>>, %arg7: memref<1x128xf32, #tpu.memory_space<vmem>>, %arg8: memref<1x128xf32, #tpu.memory_space<vmem>>, %arg9: memref<128x128xbf16, #tpu.memory_space<vmem>>, %arg10: memref<1x128xf32, #tpu.memory_space<vmem>>, %arg11: memref<1x128xf32, #tpu.memory_space<vmem>>, %arg12: memref<2x128xf32, #tpu.memory_space<vmem>>, %arg13: memref<2x128xf32, #tpu.memory_space<vmem>>) attributes {dimension_semantics = [#tpu.dimension_semantics<arbitrary>], iteration_bounds = array<i64: 1>, scalar_prefetch = 0 : i64, scratch_operands = 1 : i64, tpu.core_type = #tpu.core_type<tc>, window_params = [{transform_indices = @transform_0, window_bounds = array<i64: 2, 64, 128>}, {pipeline_mode = #tpu.pipeline_mode<synchronous>, transform_indices = @transform_1, window_bounds = array<i64: 128, 128>}, {pipeline_mode = #tpu.pipeline_mode<synchronous>, transform_indices = @transform_2, window_bounds = array<i64: 1, 128>}, {pipeline_mode = #tpu.pipeline_mode<synchronous>, transform_indices = @transform_3, window_bounds = array<i64: 1, 128>}, {pipeline_mode = #tpu.pipeline_mode<synchronous>, transform_indices = @transform_4, window_bounds = array<i64: 1, 128>}, {transform_indices = @transform_5, window_bounds = array<i64: 64, 128>}, {pipeline_mode = #tpu.pipeline_mode<synchronous>, transform_indices = @transform_6, window_bounds = array<i64: 1, 128>}, {pipeline_mode = #tpu.pipeline_mode<synchronous>, transform_indices = @transform_7, window_bounds = array<i64: 1, 128>}, {pipeline_mode = #tpu.pipeline_mode<synchronous>, transform_indices = @transform_8, window_bounds = array<i64: 128, 128>}, {pipeline_mode = #tpu.pipeline_mode<synchronous>, transform_indices = @transform_9, window_bounds = array<i64: 1, 128>}, {pipeline_mode = #tpu.pipeline_mode<synchronous>, transform_indices = @transform_10, window_bounds = array<i64: 1, 128>}, {pipeline_mode = #tpu.pipeline_mode<synchronous>, transform_indices = @transform_11, window_bounds = array<i64: 2, 128>}]} {
    %c0_i32 = arith.constant 0 : i32
    %0 = arith.cmpi eq, %arg0, %c0_i32 : i32
    %1 = arith.extui %0 : i1 to i32
    %c0_i32_0 = arith.constant 0 : i32
    %2 = arith.cmpi ne, %1, %c0_i32_0 : i32
    scf.if %2 {
      %cst_21 = arith.constant 0.000000e+00 : f32
      %31 = vector.broadcast %cst_21 : f32 to vector<2x128xf32>
      %c0_22 = arith.constant 0 : index
      %c0_23 = arith.constant 0 : index
      %32 = vector.load %arg13[%c0_22, %c0_23] : memref<2x128xf32, #tpu.memory_space<vmem>>, vector<2x128xf32>
      tpu.vector_store %arg13[%c0_22, %c0_23], %31 {strides = array<i32>} : memref<2x128xf32, #tpu.memory_space<vmem>>, vector<2x128xf32>,
    } else {
    }
    %c0 = arith.constant 0 : index
    %c0_1 = arith.constant 0 : index
    %c0_2 = arith.constant 0 : index
    %3 = vector.load %arg1[%c0, %c0_1, %c0_2] : memref<2x64x128xbf16, #tpu.memory_space<vmem>>, vector<2x64x128xbf16>
    %4 = vector.shape_cast %3 : vector<2x64x128xbf16> to vector<128x128xbf16>
    %c0_3 = arith.constant 0 : index
    %c0_4 = arith.constant 0 : index
    %5 = vector.load %arg2[%c0_3, %c0_4] : memref<128x128xbf16, #tpu.memory_space<vmem>>, vector<128x128xbf16>
    %cst = arith.constant dense<0.000000e+00> : vector<128x128xf32>
    %6 = tpu.matmul %4, %5, %cst {dimension_numbers = #tpu.dot_dimension_numbers<[1], [0], [0], [1], [0, 0, 1, 1], [], []>} : vector<128x128xbf16>, vector<128x128xbf16>, vector<128x128xf32> -> vector<128x128xf32>
    %c0_5 = arith.constant 0 : index
    %c0_6 = arith.constant 0 : index
    %7 = vector.load %arg3[%c0_5, %c0_6] : memref<1x128xf32, #tpu.memory_space<vmem>>, vector<1x128xf32>
    %8 = vector.broadcast %7 : vector<1x128xf32> to vector<128x128xf32>
    %9 = arith.mulf %6, %8 : vector<128x128xf32>
    %c0_7 = arith.constant 0 : index
    %c0_8 = arith.constant 0 : index
    %10 = vector.load %arg4[%c0_7, %c0_8] : memref<1x128xf32, #tpu.memory_space<vmem>>, vector<1x128xf32>
    %11 = vector.broadcast %10 : vector<1x128xf32> to vector<128x128xf32>
    %12 = arith.addf %9, %11 : vector<128x128xf32>
    %cst_9 = arith.constant 0.000000e+00 : f32
    %13 = vector.broadcast %cst_9 : f32 to vector<128x128xf32>
    %14 = arith.cmpf ogt, %12, %13 : vector<128x128xf32>
    %c0_10 = arith.constant 0 : index
    %c0_11 = arith.constant 0 : index
    %15 = vector.load %arg5[%c0_10, %c0_11] : memref<1x128xf32, #tpu.memory_space<vmem>>, vector<1x128xf32>
    %16 = vector.broadcast %15 : vector<1x128xf32> to vector<128x128xf32>
    %17 = arith.mulf %16, %12 : vector<128x128xf32>
    %18 = arith.select %14, %12, %17 : vector<128x128xi1>, vector<128x128xf32>
    %19 = vector.shape_cast %18 : vector<128x128xf32> to vector<2x64x128xf32>
    %c0_12 = arith.constant 0 : index
    %c0_13 = arith.constant 0 : index
    %20 = vector.load %arg13[%c0_12, %c0_13] : memref<2x128xf32, #tpu.memory_space<vmem>>, vector<2x128xf32>
    %c0_14 = arith.constant 0 : index
    %c0_15 = arith.constant 0 : index
    %21 = vector.load %arg6[%c0_14, %c0_15] : memref<64x128xf32, #tpu.memory_space<vmem>>, vector<64x128xf32>
    %22 = vector.shape_cast %21 : vector<64x128xf32> to vector<1x64x128xf32>
    %23 = vector.broadcast %22 : vector<1x64x128xf32> to vector<2x64x128xf32>
    %24 = arith.mulf %19, %23 : vector<2x64x128xf32>
    %cst_16 = arith.constant dense<0.000000e+00> : vector<2x128xf32>
    %25 = vector.multi_reduction <add>, %24, %cst_16 [1] : vector<2x64x128xf32> to vector<2x128xf32>
    %26 = arith.addf %20, %25 : vector<2x128xf32>
    %c0_17 = arith.constant 0 : index
    %c0_18 = arith.constant 0 : index
    %27 = vector.load %arg13[%c0_17, %c0_18] : memref<2x128xf32, #tpu.memory_space<vmem>>, vector<2x128xf32>
    tpu.vector_store %arg13[%c0_17, %c0_18], %26 {strides = array<i32>} : memref<2x128xf32, #tpu.memory_space<vmem>>, vector<2x128xf32>,
    %c0_i32_19 = arith.constant 0 : i32
    %28 = arith.cmpi eq, %arg0, %c0_i32_19 : i32
    %29 = arith.extui %28 : i1 to i32
    %c0_i32_20 = arith.constant 0 : i32
    %30 = arith.cmpi ne, %29, %c0_i32_20 : i32
    scf.if %30 {
      %c0_21 = arith.constant 0 : index
      %c0_22 = arith.constant 0 : index
      %31 = vector.load %arg13[%c0_21, %c0_22] : memref<2x128xf32, #tpu.memory_space<vmem>>, vector<2x128xf32>
      %c0_23 = arith.constant 0 : index
      %c0_24 = arith.constant 0 : index
      %32 = vector.load %arg7[%c0_23, %c0_24] : memref<1x128xf32, #tpu.memory_space<vmem>>, vector<1x128xf32>
      %33 = vector.broadcast %32 : vector<1x128xf32> to vector<2x128xf32>
      %34 = arith.mulf %31, %33 : vector<2x128xf32>
      %c0_25 = arith.constant 0 : index
      %c0_26 = arith.constant 0 : index
      %35 = vector.load %arg8[%c0_25, %c0_26] : memref<1x128xf32, #tpu.memory_space<vmem>>, vector<1x128xf32>
      %36 = vector.broadcast %35 : vector<1x128xf32> to vector<2x128xf32>
      %37 = arith.addf %34, %36 : vector<2x128xf32>
      %38 = arith.truncf %37 : vector<2x128xf32> to vector<2x128xbf16>
      %c0_27 = arith.constant 0 : index
      %c0_28 = arith.constant 0 : index
      %39 = vector.load %arg9[%c0_27, %c0_28] : memref<128x128xbf16, #tpu.memory_space<vmem>>, vector<128x128xbf16>
      %cst_29 = arith.constant dense<0.000000e+00> : vector<2x128xf32>
      %40 = tpu.matmul %38, %39, %cst_29 {dimension_numbers = #tpu.dot_dimension_numbers<[1], [0], [0], [1], [0, 0, 1, 1], [], []>} : vector<2x128xbf16>, vector<128x128xbf16>, vector<2x128xf32> -> vector<2x128xf32>
      %c0_30 = arith.constant 0 : index
      %c0_31 = arith.constant 0 : index
      %41 = vector.load %arg10[%c0_30, %c0_31] : memref<1x128xf32, #tpu.memory_space<vmem>>, vector<1x128xf32>
      %42 = vector.broadcast %41 : vector<1x128xf32> to vector<2x128xf32>
      %43 = arith.mulf %40, %42 : vector<2x128xf32>
      %c0_32 = arith.constant 0 : index
      %c0_33 = arith.constant 0 : index
      %44 = vector.load %arg11[%c0_32, %c0_33] : memref<1x128xf32, #tpu.memory_space<vmem>>, vector<1x128xf32>
      %45 = vector.broadcast %44 : vector<1x128xf32> to vector<2x128xf32>
      %46 = arith.addf %43, %45 : vector<2x128xf32>
      %c0_34 = arith.constant 0 : index
      %c0_35 = arith.constant 0 : index
      %47 = vector.load %arg12[%c0_34, %c0_35] : memref<2x128xf32, #tpu.memory_space<vmem>>, vector<2x128xf32>
      tpu.vector_store %arg12[%c0_34, %c0_35], %46 {strides = array<i32>} : memref<2x128xf32, #tpu.memory_space<vmem>>, vector<2x128xf32>,
    } else {
    }
    return
  }
  func.func @transform_0(%arg0: i32) -> (i32, i32, i32) {
    %c0_i32 = arith.constant 0 : i32
    %c0_i32_0 = arith.constant 0 : i32
    %c0_i32_1 = arith.constant 0 : i32
    return %c0_i32, %arg0, %c0_i32_0 : i32, i32, i32
  }
  func.func @transform_1(%arg0: i32) -> (i32, i32) {
    %c0_i32 = arith.constant 0 : i32
    %c0_i32_0 = arith.constant 0 : i32
    %c0_i32_1 = arith.constant 0 : i32
    return %c0_i32, %c0_i32_0 : i32, i32
  }
  func.func @transform_2(%arg0: i32) -> (i32, i32) {
    %c0_i32 = arith.constant 0 : i32
    %c0_i32_0 = arith.constant 0 : i32
    %c0_i32_1 = arith.constant 0 : i32
    return %c0_i32, %c0_i32_0 : i32, i32
  }
  func.func @transform_3(%arg0: i32) -> (i32, i32) {
    %c0_i32 = arith.constant 0 : i32
    %c0_i32_0 = arith.constant 0 : i32
    %c0_i32_1 = arith.constant 0 : i32
    return %c0_i32, %c0_i32_0 : i32, i32
  }
  func.func @transform_4(%arg0: i32) -> (i32, i32) {
    %c0_i32 = arith.constant 0 : i32
    %c0_i32_0 = arith.constant 0 : i32
    %c0_i32_1 = arith.constant 0 : i32
    return %c0_i32, %c0_i32_0 : i32, i32
  }
  func.func @transform_5(%arg0: i32) -> (i32, i32) {
    %c0_i32 = arith.constant 0 : i32
    %c0_i32_0 = arith.constant 0 : i32
    return %arg0, %c0_i32 : i32, i32
  }
  func.func @transform_6(%arg0: i32) -> (i32, i32) {
    %c0_i32 = arith.constant 0 : i32
    %c0_i32_0 = arith.constant 0 : i32
    %c0_i32_1 = arith.constant 0 : i32
    return %c0_i32, %c0_i32_0 : i32, i32
  }
  func.func @transform_7(%arg0: i32) -> (i32, i32) {
    %c0_i32 = arith.constant 0 : i32
    %c0_i32_0 = arith.constant 0 : i32
    %c0_i32_1 = arith.constant 0 : i32
    return %c0_i32, %c0_i32_0 : i32, i32
  }
  func.func @transform_8(%arg0: i32) -> (i32, i32) {
    %c0_i32 = arith.constant 0 : i32
    %c0_i32_0 = arith.constant 0 : i32
    %c0_i32_1 = arith.constant 0 : i32
    return %c0_i32, %c0_i32_0 : i32, i32
  }
  func.func @transform_9(%arg0: i32) -> (i32, i32) {
    %c0_i32 = arith.constant 0 : i32
    %c0_i32_0 = arith.constant 0 : i32
    %c0_i32_1 = arith.constant 0 : i32
    return %c0_i32, %c0_i32_0 : i32, i32
  }
  func.func @transform_10(%arg0: i32) -> (i32, i32) {
    %c0_i32 = arith.constant 0 : i32
    %c0_i32_0 = arith.constant 0 : i32
    %c0_i32_1 = arith.constant 0 : i32
    return %c0_i32, %c0_i32_0 : i32, i32
  }
  func.func @transform_11(%arg0: i32) -> (i32, i32) {
    %c0_i32 = arith.constant 0 : i32
    %c0_i32_0 = arith.constant 0 : i32
    %c0_i32_1 = arith.constant 0 : i32
    return %c0_i32, %c0_i32_0 : i32, i32
  }
}

</mosaic_0001>

<llo_original>
// kernel: stn_mbfn_forward.9
$region0: #{stn_mbfn_forward.9}
  #allocation0 [shape = 'u32[]', space=smem, size = 0x4, offset = 0x4, fixed_abs, tag = 'smem constant byte address 0x4 - core index']
  #allocation1 [shape = 'u32[144,128]{1,0:T(1,128)}', space=vmem, size = 0x12000, scoped, tag = 'internal scratch']
  #allocation2 [shape = 'f32[400,128]{1,0:T(8,128)}', space=vmem, size = 0x32000, scoped, tag = 'scratch operand']
  %s0 = inlined_call_operand.vmem [shape: bf16[400,32], index: 0, kind: input, shape index: {}]
  %s1 = inlined_call_operand.vmem [shape: bf16[32,128], index: 1, kind: input, shape index: {}]
  %s2 = inlined_call_operand.vmem [shape: f32[1,128], index: 2, kind: input, shape index: {}]
  %s3 = inlined_call_operand.vmem [shape: f32[1,128], index: 3, kind: input, shape index: {}]
  %s4 = inlined_call_operand.vmem [shape: f32[1,128], index: 4, kind: input, shape index: {}]
  %s5 = inlined_call_operand.vmem [shape: f32[400,128], index: 5, kind: output, shape index: {}]
  %s6 = sld [smem:[#allocation0]]
  $region38: #{stn_mbfn_forward.9} parent=0
    _
  %s8 = ssub.s32 1, %s6
  %s9 = scalar_select 0, %s8, %s6
  // Predicated region
  $region2: #{stn_mbfn_forward.9} parent=0 // pred_check
    _
  $region3: #{stn_mbfn_forward.9} parent=0 // pred_check_branch
    %11 = sbr.rel (0) target = $region5
  $region4: #{stn_mbfn_forward.9} parent=0 // pred_region
    _
  $region5: #{stn_mbfn_forward.9} parent=0 // pred_fallthru
    _
  // Predicated region
  $region6: #{stn_mbfn_forward.9} parent=0 // pred_check
    _
  $region7: #{stn_mbfn_forward.9} parent=0 // pred_check_branch
    %13 = sbr.rel (0) target = $region9
  $region8: #{stn_mbfn_forward.9} parent=0 // pred_region
    _
  $region9: #{stn_mbfn_forward.9} parent=0 // pred_fallthru
    _
  // Predicated region
  $region10: #{stn_mbfn_forward.9} parent=0 // pred_check
    _
  $region11: #{stn_mbfn_forward.9} parent=0 // pred_check_branch
    %15 = sbr.rel (0) target = $region13
  $region12: #{stn_mbfn_forward.9} parent=0 // pred_region
    _
  $region13: #{stn_mbfn_forward.9} parent=0 // pred_fallthru
    _
  // Predicated region
  $region14: #{stn_mbfn_forward.9} parent=0 // pred_check
    _
  $region15: #{stn_mbfn_forward.9} parent=0 // pred_check_branch
    %17 = sbr.rel (0) target = $region17
  $region16: #{stn_mbfn_forward.9} parent=0 // pred_region
    _
  $region17: #{stn_mbfn_forward.9} parent=0 // pred_fallthru
    _
  // Predicated region
  $region18: #{stn_mbfn_forward.9} parent=0 // pred_check
    _
  $region19: #{stn_mbfn_forward.9} parent=0 // pred_check_branch
    %19 = sbr.rel (0) target = $region21
  $region20: #{stn_mbfn_forward.9} parent=0 // pred_region
    _
  $region21: #{stn_mbfn_forward.9} parent=0 // pred_fallthru
    _
  %p21 = scmp.eq.s32.totalorder 0, 0
  // Predicated region
  $region22: #{stn_mbfn_forward.9} parent=0 // pred_check
    %p22 = pneg %p21
  $region23: #{stn_mbfn_forward.9} parent=0 // pred_check_branch
    %24 = sbr.rel (%p22) target = $region25
  $region24: #{stn_mbfn_forward.9} parent=0 // pred_region
    %25 = vst [vmem:[#allocation2] sm:$0xff] 0.0
    %26 = vst [vmem:[#allocation2 + $0x8] sm:$0xff] 0.0
    %27 = vst [vmem:[#allocation2 + $0x10] sm:$0xff] 0.0
    %28 = vst [vmem:[#allocation2 + $0x18] sm:$0xff] 0.0
    %29 = vst [vmem:[#allocation2 + $0x20] sm:$0xff] 0.0
    %30 = vst [vmem:[#allocation2 + $0x28] sm:$0xff] 0.0
    %31 = vst [vmem:[#allocation2 + $0x30] sm:$0xff] 0.0
    %32 = vst [vmem:[#allocation2 + $0x38] sm:$0xff] 0.0
    %33 = vst [vmem:[#allocation2 + $0x40] sm:$0xff] 0.0
    %34 = vst [vmem:[#allocation2 + $0x48] sm:$0xff] 0.0
    %35 = vst [vmem:[#allocation2 + $0x50] sm:$0xff] 0.0
    %36 = vst [vmem:[#allocation2 + $0x58] sm:$0xff] 0.0
    %37 = vst [vmem:[#allocation2 + $0x60] sm:$0xff] 0.0
    %38 = vst [vmem:[#allocation2 + $0x68] sm:$0xff] 0.0
    %39 = vst [vmem:[#allocation2 + $0x70] sm:$0xff] 0.0
    %40 = vst [vmem:[#allocation2 + $0x78] sm:$0xff] 0.0
    %41 = vst [vmem:[#allocation2 + $0x80] sm:$0xff] 0.0
    %42 = vst [vmem:[#allocation2 + $0x88] sm:$0xff] 0.0
    %43 = vst [vmem:[#allocation2 + $0x90] sm:$0xff] 0.0
    %44 = vst [vmem:[#allocation2 + $0x98] sm:$0xff] 0.0
    %45 = vst [vmem:[#allocation2 + $0xa0] sm:$0xff] 0.0
    %46 = vst [vmem:[#allocation2 + $0xa8] sm:$0xff] 0.0
    %47 = vst [vmem:[#allocation2 + $0xb0] sm:$0xff] 0.0
    %48 = vst [vmem:[#allocation2 + $0xb8] sm:$0xff] 0.0
    %49 = vst [vmem:[#allocation2 + $0xc0] sm:$0xff] 0.0
    %50 = vst [vmem:[#allocation2 + $0xc8] sm:$0xff] 0.0
    %51 = vst [vmem:[#allocation2 + $0xd0] sm:$0xff] 0.0
    %52 = vst [vmem:[#allocation2 + $0xd8] sm:$0xff] 0.0
    %53 = vst [vmem:[#allocation2 + $0xe0] sm:$0xff] 0.0
    %54 = vst [vmem:[#allocation2 + $0xe8] sm:$0xff] 0.0
    %55 = vst [vmem:[#allocation2 + $0xf0] sm:$0xff] 0.0
    %56 = vst [vmem:[#allocation2 + $0xf8] sm:$0xff] 0.0
    %57 = vst [vmem:[#allocation2 + $0x100] sm:$0xff] 0.0
    %58 = vst [vmem:[#allocation2 + $0x108] sm:$0xff] 0.0
    %59 = vst [vmem:[#allocation2 + $0x110] sm:$0xff] 0.0
    %60 = vst [vmem:[#allocation2 + $0x118] sm:$0xff] 0.0
    %61 = vst [vmem:[#allocation2 + $0x120] sm:$0xff] 0.0
    %62 = vst [vmem:[#allocation2 + $0x128] sm:$0xff] 0.0
    %63 = vst [vmem:[#allocation2 + $0x130] sm:$0xff] 0.0
    %64 = vst [vmem:[#allocation2 + $0x138] sm:$0xff] 0.0
    %65 = vst [vmem:[#allocation2 + $0x140] sm:$0xff] 0.0
    %66 = vst [vmem:[#allocation2 + $0x148] sm:$0xff] 0.0
    %67 = vst [vmem:[#allocation2 + $0x150] sm:$0xff] 0.0
    %68 = vst [vmem:[#allocation2 + $0x158] sm:$0xff] 0.0
    %69 = vst [vmem:[#allocation2 + $0x160] sm:$0xff] 0.0
    %70 = vst [vmem:[#allocation2 + $0x168] sm:$0xff] 0.0
    %71 = vst [vmem:[#allocation2 + $0x170] sm:$0xff] 0.0
    %72 = vst [vmem:[#allocation2 + $0x178] sm:$0xff] 0.0
    %73 = vst [vmem:[#allocation2 + $0x180] sm:$0xff] 0.0
    %74 = vst [vmem:[#allocation2 + $0x188] sm:$0xff] 0.0
  $region25: #{stn_mbfn_forward.9} parent=0 // pred_fallthru
    _
  %v75 = vld [vmem:[#allocation2] sm:$0xff]
  %v76 = vld [vmem:[#allocation2 + $0x8] sm:$0xff]
  %v77 = vld [vmem:[#allocation2 + $0x10] sm:$0xff]
  %v78 = vld [vmem:[#allocation2 + $0x18] sm:$0xff]
  %v79 = vld [vmem:[#allocation2 + $0x20] sm:$0xff]
  %v80 = vld [vmem:[#allocation2 + $0x28] sm:$0xff]
  %v81 = vld [vmem:[#allocation2 + $0x30] sm:$0xff]
  %v82 = vld [vmem:[#allocation2 + $0x38] sm:$0xff]
  %v83 = vld [vmem:[#allocation2 + $0x40] sm:$0xff]
  %v84 = vld [vmem:[#allocation2 + $0x48] sm:$0xff]
  %v85 = vld [vmem:[#allocation2 + $0x50] sm:$0xff]
  %v86 = vld [vmem:[#allocation2 + $0x58] sm:$0xff]
  %v87 = vld [vmem:[#allocation2 + $0x60] sm:$0xff]
  %v88 = vld [vmem:[#allocation2 + $0x68] sm:$0xff]
  %v89 = vld [vmem:[#allocation2 + $0x70] sm:$0xff]
  %v90 = vld [vmem:[#allocation2 + $0x78] sm:$0xff]
  %v91 = vld [vmem:[#allocation2 + $0x80] sm:$0xff]
  %v92 = vld [vmem:[#allocation2 + $0x88] sm:$0xff]
  %v93 = vld [vmem:[#allocation2 + $0x90] sm:$0xff]
  %v94 = vld [vmem:[#allocation2 + $0x98] sm:$0xff]
  %v95 = vld [vmem:[#allocation2 + $0xa0] sm:$0xff]
  %v96 = vld [vmem:[#allocation2 + $0xa8] sm:$0xff]
  %v97 = vld [vmem:[#allocation2 + $0xb0] sm:$0xff]
  %v98 = vld [vmem:[#allocation2 + $0xb8] sm:$0xff]
  %v99 = vld [vmem:[#allocation2 + $0xc0] sm:$0xff]
  %v100 = vld [vmem:[#allocation2 + $0xc8] sm:$0xff]
  %v101 = vld [vmem:[#allocation2 + $0xd0] sm:$0xff]
  %v102 = vld [vmem:[#allocation2 + $0xd8] sm:$0xff]
  %v103 = vld [vmem:[#allocation2 + $0xe0] sm:$0xff]
  %v104 = vld [vmem:[#allocation2 + $0xe8] sm:$0xff]
  %v105 = vld [vmem:[#allocation2 + $0xf0] sm:$0xff]
  %v106 = vld [vmem:[#allocation2 + $0xf8] sm:$0xff]
  %v107 = vld [vmem:[#allocation2 + $0x100] sm:$0xff]
  %v108 = vld [vmem:[#allocation2 + $0x108] sm:$0xff]
  %v109 = vld [vmem:[#allocation2 + $0x110] sm:$0xff]
  %v110 = vld [vmem:[#allocation2 + $0x118] sm:$0xff]
  %v111 = vld [vmem:[#allocation2 + $0x120] sm:$0xff]
  %v112 = vld [vmem:[#allocation2 + $0x128] sm:$0xff]
  %v113 = vld [vmem:[#allocation2 + $0x130] sm:$0xff]
  %v114 = vld [vmem:[#allocation2 + $0x138] sm:$0xff]
  %v115 = vld [vmem:[#allocation2 + $0x140] sm:$0xff]
  %v116 = vld [vmem:[#allocation2 + $0x148] sm:$0xff]
  %v117 = vld [vmem:[#allocation2 + $0x150] sm:$0xff]
  %v118 = vld [vmem:[#allocation2 + $0x158] sm:$0xff]
  %v119 = vld [vmem:[#allocation2 + $0x160] sm:$0xff]
  %v120 = vld [vmem:[#allocation2 + $0x168] sm:$0xff]
  %v121 = vld [vmem:[#allocation2 + $0x170] sm:$0xff]
  %v122 = vld [vmem:[#allocation2 + $0x178] sm:$0xff]
  %v123 = vld [vmem:[#allocation2 + $0x180] sm:$0xff]
  %v124 = vld [vmem:[#allocation2 + $0x188] sm:$0xff]
  %v125 = vld [vmem:[%s0] sm:$0xf]
  %v126 = vld [vmem:[%s0 + $0x4] sm:$0xf]
  %v127 = vld [vmem:[%s0 + $0x8] sm:$0xf]
  %v128 = vld [vmem:[%s0 + $0xc] sm:$0xf]
  %v129 = vld [vmem:[%s0 + $0x10] sm:$0xf]
  %v130 = vld [vmem:[%s0 + $0x14] sm:$0xf]
  %v131 = vld [vmem:[%s0 + $0x18] sm:$0xf]
  %v132 = vld [vmem:[%s0 + $0x1c] sm:$0xf]
  %v133 = vld [vmem:[%s0 + $0x20] sm:$0xf]
  %v134 = vld [vmem:[%s0 + $0x24] sm:$0xf]
  %v135 = vld [vmem:[%s0 + $0x28] sm:$0xf]
  %v136 = vld [vmem:[%s0 + $0x2c] sm:$0xf]
  %v137 = vld [vmem:[%s0 + $0x30] sm:$0xf]
  %v138 = vld [vmem:[%s0 + $0x34] sm:$0xf]
  %v139 = vld [vmem:[%s0 + $0x38] sm:$0xf]
  %v140 = vld [vmem:[%s0 + $0x3c] sm:$0xf]
  %v141 = vld [vmem:[%s0 + $0x40] sm:$0xf]
  %v142 = vld [vmem:[%s0 + $0x44] sm:$0xf]
  %v143 = vld [vmem:[%s0 + $0x48] sm:$0xf]
  %v144 = vld [vmem:[%s0 + $0x4c] sm:$0xf]
  %v145 = vld [vmem:[%s0 + $0x50] sm:$0xf]
  %v146 = vld [vmem:[%s0 + $0x54] sm:$0xf]
  %v147 = vld [vmem:[%s0 + $0x58] sm:$0xf]
  %v148 = vld [vmem:[%s0 + $0x5c] sm:$0xf]
  %v149 = vld [vmem:[%s0 + $0x60] sm:$0xf]
  %v150 = vld [vmem:[%s0 + $0x64] sm:$0xf]
  %v151 = vld [vmem:[%s0 + $0x68] sm:$0xf]
  %v152 = vld [vmem:[%s0 + $0x6c] sm:$0xf]
  %v153 = vld [vmem:[%s0 + $0x70] sm:$0xf]
  %v154 = vld [vmem:[%s0 + $0x74] sm:$0xf]
  %v155 = vld [vmem:[%s0 + $0x78] sm:$0xf]
  %v156 = vld [vmem:[%s0 + $0x7c] sm:$0xf]
  %v157 = vld [vmem:[%s0 + $0x80] sm:$0xf]
  %v158 = vld [vmem:[%s0 + $0x84] sm:$0xf]
  %v159 = vld [vmem:[%s0 + $0x88] sm:$0xf]
  %v160 = vld [vmem:[%s0 + $0x8c] sm:$0xf]
  %v161 = vld [vmem:[%s0 + $0x90] sm:$0xf]
  %v162 = vld [vmem:[%s0 + $0x94] sm:$0xf]
  %v163 = vld [vmem:[%s0 + $0x98] sm:$0xf]
  %v164 = vld [vmem:[%s0 + $0x9c] sm:$0xf]
  %v165 = vld [vmem:[%s0 + $0xa0] sm:$0xf]
  %v166 = vld [vmem:[%s0 + $0xa4] sm:$0xf]
  %v167 = vld [vmem:[%s0 + $0xa8] sm:$0xf]
  %v168 = vld [vmem:[%s0 + $0xac] sm:$0xf]
  %v169 = vld [vmem:[%s0 + $0xb0] sm:$0xf]
  %v170 = vld [vmem:[%s0 + $0xb4] sm:$0xf]
  %v171 = vld [vmem:[%s0 + $0xb8] sm:$0xf]
  %v172 = vld [vmem:[%s0 + $0xbc] sm:$0xf]
  %v173 = vld [vmem:[%s0 + $0xc0] sm:$0xf]
  %v174 = vld [vmem:[%s0 + $0xc4] sm:$0xf]
  %v175 = vld [vmem:[%s1] sm:$0xf]
  %v176 = vld [vmem:[%s1 + $0x4] sm:$0xf]
  %v177 = vld [vmem:[%s1 + $0x8] sm:$0xf]
  %v178 = vld [vmem:[%s1 + $0xc] sm:$0xf]
  %v229 = vunpack.c.l.b16 %v125
  %v230 = vunpack.c.l.b16 %v126
  %v231 = vunpack.c.l.b16 %v127
  %v232 = vunpack.c.l.b16 %v128
  %v233 = vunpack.c.l.b16 %v129
  %v234 = vunpack.c.l.b16 %v130
  %v235 = vunpack.c.l.b16 %v131
  %v236 = vunpack.c.l.b16 %v132
  %v237 = vunpack.c.l.b16 %v133
  %v238 = vunpack.c.l.b16 %v134
  %v239 = vunpack.c.l.b16 %v135
  %v240 = vunpack.c.l.b16 %v136
  %v241 = vunpack.c.l.b16 %v137
  %v242 = vunpack.c.l.b16 %v138
  %v243 = vunpack.c.l.b16 %v139
  %v244 = vunpack.c.l.b16 %v140
  %v245 = vunpack.c.l.b16 %v141
  %v246 = vunpack.c.l.b16 %v142
  %v247 = vunpack.c.l.b16 %v143
  %v248 = vunpack.c.l.b16 %v144
  %v249 = vunpack.c.l.b16 %v145
  %v250 = vunpack.c.l.b16 %v146
  %v251 = vunpack.c.l.b16 %v147
  %v252 = vunpack.c.l.b16 %v148
  %v253 = vunpack.c.l.b16 %v149
  %v254 = vunpack.c.l.b16 %v150
  %v255 = vunpack.c.l.b16 %v151
  %v256 = vunpack.c.l.b16 %v152
  %v257 = vunpack.c.l.b16 %v153
  %v258 = vunpack.c.l.b16 %v154
  %v259 = vunpack.c.l.b16 %v155
  %v260 = vunpack.c.l.b16 %v156
  %v261 = vunpack.c.l.b16 %v157
  %v262 = vunpack.c.l.b16 %v158
  %v263 = vunpack.c.l.b16 %v159
  %v264 = vunpack.c.l.b16 %v160
  %v265 = vunpack.c.l.b16 %v161
  %v266 = vunpack.c.l.b16 %v162
  %v267 = vunpack.c.l.b16 %v163
  %v268 = vunpack.c.l.b16 %v164
  %v269 = vunpack.c.l.b16 %v165
  %v270 = vunpack.c.l.b16 %v166
  %v271 = vunpack.c.l.b16 %v167
  %v272 = vunpack.c.l.b16 %v168
  %v273 = vunpack.c.l.b16 %v169
  %v274 = vunpack.c.l.b16 %v170
  %v275 = vunpack.c.l.b16 %v171
  %v276 = vunpack.c.l.b16 %v172
  %v277 = vunpack.c.l.b16 %v173
  %v278 = vunpack.c.l.b16 %v174
  %v279 = vpack.c.b16 %v230, %v229
  %v280 = vpack.c.b16 %v232, %v231
  %v281 = vpack.c.b16 %v234, %v233
  %v282 = vpack.c.b16 %v236, %v235
  %v283 = vpack.c.b16 %v238, %v237
  %v284 = vpack.c.b16 %v240, %v239
  %v285 = vpack.c.b16 %v242, %v241
  %v286 = vpack.c.b16 %v244, %v243
  %v287 = vpack.c.b16 %v246, %v245
  %v288 = vpack.c.b16 %v248, %v247
  %v289 = vpack.c.b16 %v250, %v249
  %v290 = vpack.c.b16 %v252, %v251
  %v291 = vpack.c.b16 %v254, %v253
  %v292 = vpack.c.b16 %v256, %v255
  %v293 = vpack.c.b16 %v258, %v257
  %v294 = vpack.c.b16 %v260, %v259
  %v295 = vpack.c.b16 %v262, %v261
  %v296 = vpack.c.b16 %v264, %v263
  %v297 = vpack.c.b16 %v266, %v265
  %v298 = vpack.c.b16 %v268, %v267
  %v299 = vpack.c.b16 %v270, %v269
  %v300 = vpack.c.b16 %v272, %v271
  %v301 = vpack.c.b16 %v274, %v273
  %v302 = vpack.c.b16 %v276, %v275
  %v303 = vpack.c.b16 %v278, %v277
  %v308 = vunpack.c.l.b16 %v175
  %v309 = vunpack.c.l.b16 %v176
  %v310 = vunpack.c.l.b16 %v177
  %v311 = vunpack.c.l.b16 %v178
  %v312 = vpack.c.b16 %v309, %v308
  %v313 = vpack.c.b16 %v311, %v310
  %vm316 = vcmask 261120
  %v318 = vsel %vm316, %v279, 0
  %v321 = vsel %vm316, %v280, 0
  %v324 = vsel %vm316, %v281, 0
  %v327 = vsel %vm316, %v282, 0
  %v330 = vsel %vm316, %v283, 0
  %v333 = vsel %vm316, %v284, 0
  %v336 = vsel %vm316, %v285, 0
  %v339 = vsel %vm316, %v286, 0
  %v342 = vsel %vm316, %v287, 0
  %v345 = vsel %vm316, %v288, 0
  %v348 = vsel %vm316, %v289, 0
  %v351 = vsel %vm316, %v290, 0
  %v354 = vsel %vm316, %v291, 0
  %v357 = vsel %vm316, %v292, 0
  %v360 = vsel %vm316, %v293, 0
  %v363 = vsel %vm316, %v294, 0
  %v366 = vsel %vm316, %v295, 0
  %v369 = vsel %vm316, %v296, 0
  %v372 = vsel %vm316, %v297, 0
  %v375 = vsel %vm316, %v298, 0
  %v378 = vsel %vm316, %v299, 0
  %v381 = vsel %vm316, %v300, 0
  %v384 = vsel %vm316, %v301, 0
  %v387 = vsel %vm316, %v302, 0
  %v390 = vsel %vm316, %v303, 0
  %392 = vmatprep.subr.bf16.mxu0 0
  %393 = vmatpush1.bf16.msra.mxu0 %v312
  %394 = vmatprep.subr.bf16.mxu0 0
  %395 = vmatpush1.bf16.msra.mxu0 %v313
  %396 = vmatprep.subr.bf16.mxu0 0
  %397 = vmatpush1.bf16.msra.mxu0 0
  %398 = vmatprep.subr.bf16.mxu0 0
  %399 = vmatpush1.bf16.msra.mxu0 0
  %400 = vmatprep.subr.bf16.mxu0 0
  %401 = vmatpush1.bf16.msra.mxu0 0
  %402 = vmatprep.subr.bf16.mxu0 0
  %403 = vmatpush1.bf16.msra.mxu0 0
  %404 = vmatprep.subr.bf16.mxu0 0
  %405 = vmatpush1.bf16.msra.mxu0 0
  %406 = vmatprep.subr.bf16.mxu0 0
  %407 = vmatpush1.bf16.msra.mxu0 0
  %408 = vmatprep.subr.bf16.mxu0 0
  %409 = vmatpush1.bf16.msra.mxu0 0
  %410 = vmatprep.subr.bf16.mxu0 0
  %411 = vmatpush1.bf16.msra.mxu0 0
  %412 = vmatprep.subr.bf16.mxu0 0
  %413 = vmatpush1.bf16.msra.mxu0 0
  %414 = vmatprep.subr.bf16.mxu0 0
  %415 = vmatpush1.bf16.msra.mxu0 0
  %416 = vmatprep.subr.bf16.mxu0 0
  %417 = vmatpush1.bf16.msra.mxu0 0
  %418 = vmatprep.subr.bf16.mxu0 0
  %419 = vmatpush1.bf16.msra.mxu0 0
  %420 = vmatprep.subr.bf16.mxu0 0
  %421 = vmatpush1.bf16.msra.mxu0 0
  %422 = vmatprep.subr.bf16.mxu0 0
  %423 = vmatpush1.bf16.msra.mxu0 0
  %424 = vmatprep.mubr.bf16.mxu0 0
  %425 = vmatmul.mubr.bf16.gmra.mrb[0].mxu0 %v318
  %v426 = vpop.f32.mrb[0].mxu0
  %v427 = vadd.f32 0.0, %v426
  %v428 = vpop.f32.mrb[0].mxu0
  %v429 = vpop.f32.mrb[0].mxu0
  %v430 = vadd.f32 0.0, %v429
  %v431 = vpop.f32.mrb[0].mxu0
  %432 = vmatprep.mubr.bf16.mxu0 0
  %433 = vmatmul.mubr.bf16.gmra.mrb[0].mxu0 %v321
  %v434 = vpop.f32.mrb[0].mxu0
  %v435 = vadd.f32 0.0, %v434
  %v436 = vpop.f32.mrb[0].mxu0
  %v437 = vpop.f32.mrb[0].mxu0
  %v438 = vadd.f32 0.0, %v437
  %v439 = vpop.f32.mrb[0].mxu0
  %440 = vmatprep.mubr.bf16.mxu0 0
  %441 = vmatmul.mubr.bf16.gmra.mrb[0].mxu0 %v324
  %v442 = vpop.f32.mrb[0].mxu0
  %v443 = vadd.f32 0.0, %v442
  %v444 = vpop.f32.mrb[0].mxu0
  %v445 = vpop.f32.mrb[0].mxu0
  %v446 = vadd.f32 0.0, %v445
  %v447 = vpop.f32.mrb[0].mxu0
  %448 = vmatprep.mubr.bf16.mxu0 0
  %449 = vmatmul.mubr.bf16.gmra.mrb[0].mxu0 %v327
  %v450 = vpop.f32.mrb[0].mxu0
  %v451 = vadd.f32 0.0, %v450
  %v452 = vpop.f32.mrb[0].mxu0
  %v453 = vpop.f32.mrb[0].mxu0
  %v454 = vadd.f32 0.0, %v453
  %v455 = vpop.f32.mrb[0].mxu0
  %456 = vmatprep.mubr.bf16.mxu0 0
  %457 = vmatmul.mubr.bf16.gmra.mrb[0].mxu0 %v330
  %v458 = vpop.f32.mrb[0].mxu0
  %v459 = vadd.f32 0.0, %v458
  %v460 = vpop.f32.mrb[0].mxu0
  %v461 = vpop.f32.mrb[0].mxu0
  %v462 = vadd.f32 0.0, %v461
  %v463 = vpop.f32.mrb[0].mxu0
  %464 = vmatprep.mubr.bf16.mxu0 0
  %465 = vmatmul.mubr.bf16.gmra.mrb[0].mxu0 %v333
  %v466 = vpop.f32.mrb[0].mxu0
  %v467 = vadd.f32 0.0, %v466
  %v468 = vpop.f32.mrb[0].mxu0
  %v469 = vpop.f32.mrb[0].mxu0
  %v470 = vadd.f32 0.0, %v469
  %v471 = vpop.f32.mrb[0].mxu0
  %472 = vmatprep.mubr.bf16.mxu0 0
  %473 = vmatmul.mubr.bf16.gmra.mrb[0].mxu0 %v336
  %v474 = vpop.f32.mrb[0].mxu0
  %v475 = vadd.f32 0.0, %v474
  %v476 = vpop.f32.mrb[0].mxu0
  %v477 = vpop.f32.mrb[0].mxu0
  %v478 = vadd.f32 0.0, %v477
  %v479 = vpop.f32.mrb[0].mxu0
  %480 = vmatprep.mubr.bf16.mxu0 0
  %481 = vmatmul.mubr.bf16.gmra.mrb[0].mxu0 %v339
  %v482 = vpop.f32.mrb[0].mxu0
  %v483 = vadd.f32 0.0, %v482
  %v484 = vpop.f32.mrb[0].mxu0
  %v485 = vpop.f32.mrb[0].mxu0
  %v486 = vadd.f32 0.0, %v485
  %v487 = vpop.f32.mrb[0].mxu0
  %488 = vmatprep.mubr.bf16.mxu0 0
  %489 = vmatmul.mubr.bf16.gmra.mrb[0].mxu0 %v342
  %v490 = vpop.f32.mrb[0].mxu0
  %v491 = vadd.f32 0.0, %v490
  %v492 = vpop.f32.mrb[0].mxu0
  %v493 = vpop.f32.mrb[0].mxu0
  %v494 = vadd.f32 0.0, %v493
  %v495 = vpop.f32.mrb[0].mxu0
  %496 = vmatprep.mubr.bf16.mxu0 0
  %497 = vmatmul.mubr.bf16.gmra.mrb[0].mxu0 %v345
  %v498 = vpop.f32.mrb[0].mxu0
  %v499 = vadd.f32 0.0, %v498
  %v500 = vpop.f32.mrb[0].mxu0
  %v501 = vpop.f32.mrb[0].mxu0
  %v502 = vadd.f32 0.0, %v501
  %v503 = vpop.f32.mrb[0].mxu0
  %504 = vmatprep.mubr.bf16.mxu0 0
  %505 = vmatmul.mubr.bf16.gmra.mrb[0].mxu0 %v348
  %v506 = vpop.f32.mrb[0].mxu0
  %v507 = vadd.f32 0.0, %v506
  %v508 = vpop.f32.mrb[0].mxu0
  %v509 = vpop.f32.mrb[0].mxu0
  %v510 = vadd.f32 0.0, %v509
  %v511 = vpop.f32.mrb[0].mxu0
  %512 = vmatprep.mubr.bf16.mxu0 0
  %513 = vmatmul.mubr.bf16.gmra.mrb[0].mxu0 %v351
  %v514 = vpop.f32.mrb[0].mxu0
  %v515 = vadd.f32 0.0, %v514
  %v516 = vpop.f32.mrb[0].mxu0
  %v517 = vpop.f32.mrb[0].mxu0
  %v518 = vadd.f32 0.0, %v517
  %v519 = vpop.f32.mrb[0].mxu0
  %520 = vmatprep.mubr.bf16.mxu0 0
  %521 = vmatmul.mubr.bf16.gmra.mrb[0].mxu0 %v354
  %v522 = vpop.f32.mrb[0].mxu0
  %v523 = vadd.f32 0.0, %v522
  %v524 = vpop.f32.mrb[0].mxu0
  %v525 = vpop.f32.mrb[0].mxu0
  %v526 = vadd.f32 0.0, %v525
  %v527 = vpop.f32.mrb[0].mxu0
  %528 = vmatprep.mubr.bf16.mxu0 0
  %529 = vmatmul.mubr.bf16.gmra.mrb[0].mxu0 %v357
  %v530 = vpop.f32.mrb[0].mxu0
  %v531 = vadd.f32 0.0, %v530
  %v532 = vpop.f32.mrb[0].mxu0
  %v533 = vpop.f32.mrb[0].mxu0
  %v534 = vadd.f32 0.0, %v533
  %v535 = vpop.f32.mrb[0].mxu0
  %536 = vmatprep.mubr.bf16.mxu0 0
  %537 = vmatmul.mubr.bf16.gmra.mrb[0].mxu0 %v360
  %v538 = vpop.f32.mrb[0].mxu0
  %v539 = vadd.f32 0.0, %v538
  %v540 = vpop.f32.mrb[0].mxu0
  %v541 = vpop.f32.mrb[0].mxu0
  %v542 = vadd.f32 0.0, %v541
  %v543 = vpop.f32.mrb[0].mxu0
  %544 = vmatprep.mubr.bf16.mxu0 0
  %545 = vmatmul.mubr.bf16.gmra.mrb[0].mxu0 %v363
  %v546 = vpop.f32.mrb[0].mxu0
  %v547 = vadd.f32 0.0, %v546
  %v548 = vpop.f32.mrb[0].mxu0
  %v549 = vpop.f32.mrb[0].mxu0
  %v550 = vadd.f32 0.0, %v549
  %v551 = vpop.f32.mrb[0].mxu0
  %552 = vmatprep.mubr.bf16.mxu0 0
  %553 = vmatmul.mubr.bf16.gmra.mrb[0].mxu0 %v366
  %v554 = vpop.f32.mrb[0].mxu0
  %v555 = vadd.f32 0.0, %v554
  %v556 = vpop.f32.mrb[0].mxu0
  %v557 = vpop.f32.mrb[0].mxu0
  %v558 = vadd.f32 0.0, %v557
  %v559 = vpop.f32.mrb[0].mxu0
  %560 = vmatprep.mubr.bf16.mxu0 0
  %561 = vmatmul.mubr.bf16.gmra.mrb[0].mxu0 %v369
  %v562 = vpop.f32.mrb[0].mxu0
  %v563 = vadd.f32 0.0, %v562
  %v564 = vpop.f32.mrb[0].mxu0
  %v565 = vpop.f32.mrb[0].mxu0
  %v566 = vadd.f32 0.0, %v565
  %v567 = vpop.f32.mrb[0].mxu0
  %568 = vmatprep.mubr.bf16.mxu0 0
  %569 = vmatmul.mubr.bf16.gmra.mrb[0].mxu0 %v372
  %v570 = vpop.f32.mrb[0].mxu0
  %v571 = vadd.f32 0.0, %v570
  %v572 = vpop.f32.mrb[0].mxu0
  %v573 = vpop.f32.mrb[0].mxu0
  %v574 = vadd.f32 0.0, %v573
  %v575 = vpop.f32.mrb[0].mxu0
  %576 = vmatprep.mubr.bf16.mxu0 0
  %577 = vmatmul.mubr.bf16.gmra.mrb[0].mxu0 %v375
  %v578 = vpop.f32.mrb[0].mxu0
  %v579 = vadd.f32 0.0, %v578
  %v580 = vpop.f32.mrb[0].mxu0
  %v581 = vpop.f32.mrb[0].mxu0
  %v582 = vadd.f32 0.0, %v581
  %v583 = vpop.f32.mrb[0].mxu0
  %584 = vmatprep.mubr.bf16.mxu0 0
  %585 = vmatmul.mubr.bf16.gmra.mrb[0].mxu0 %v378
  %v586 = vpop.f32.mrb[0].mxu0
  %v587 = vadd.f32 0.0, %v586
  %v588 = vpop.f32.mrb[0].mxu0
  %v589 = vpop.f32.mrb[0].mxu0
  %v590 = vadd.f32 0.0, %v589
  %v591 = vpop.f32.mrb[0].mxu0
  %592 = vmatprep.mubr.bf16.mxu0 0
  %593 = vmatmul.mubr.bf16.gmra.mrb[0].mxu0 %v381
  %v594 = vpop.f32.mrb[0].mxu0
  %v595 = vadd.f32 0.0, %v594
  %v596 = vpop.f32.mrb[0].mxu0
  %v597 = vpop.f32.mrb[0].mxu0
  %v598 = vadd.f32 0.0, %v597
  %v599 = vpop.f32.mrb[0].mxu0
  %600 = vmatprep.mubr.bf16.mxu0 0
  %601 = vmatmul.mubr.bf16.gmra.mrb[0].mxu0 %v384
  %v602 = vpop.f32.mrb[0].mxu0
  %v603 = vadd.f32 0.0, %v602
  %v604 = vpop.f32.mrb[0].mxu0
  %v605 = vpop.f32.mrb[0].mxu0
  %v606 = vadd.f32 0.0, %v605
  %v607 = vpop.f32.mrb[0].mxu0
  %608 = vmatprep.mubr.bf16.mxu0 0
  %609 = vmatmul.mubr.bf16.gmra.mrb[0].mxu0 %v387
  %v610 = vpop.f32.mrb[0].mxu0
  %v611 = vadd.f32 0.0, %v610
  %v612 = vpop.f32.mrb[0].mxu0
  %v613 = vpop.f32.mrb[0].mxu0
  %v614 = vadd.f32 0.0, %v613
  %v615 = vpop.f32.mrb[0].mxu0
  %616 = vmatprep.mubr.bf16.mxu0 0
  %617 = vmatmul.mubr.bf16.gmra.mrb[0].mxu0 %v390
  %v618 = vpop.f32.mrb[0].mxu0
  %v619 = vadd.f32 0.0, %v618
  %v620 = vpop.f32.mrb[0].mxu0
  %v621 = vpop.f32.mrb[0].mxu0
  %v622 = vadd.f32 0.0, %v621
  %v623 = vpop.f32.mrb[0].mxu0
  %624 = vdwg.mxu0
  %v625 = vadd.f32 %v75, %v427
  %v626 = vadd.f32 %v76, %v430
  %v627 = vadd.f32 %v77, %v435
  %v628 = vadd.f32 %v78, %v438
  %v629 = vadd.f32 %v79, %v443
  %v630 = vadd.f32 %v80, %v446
  %v631 = vadd.f32 %v81, %v451
  %v632 = vadd.f32 %v82, %v454
  %v633 = vadd.f32 %v83, %v459
  %v634 = vadd.f32 %v84, %v462
  %v635 = vadd.f32 %v85, %v467
  %v636 = vadd.f32 %v86, %v470
  %v637 = vadd.f32 %v87, %v475
  %v638 = vadd.f32 %v88, %v478
  %v639 = vadd.f32 %v89, %v483
  %v640 = vadd.f32 %v90, %v486
  %v641 = vadd.f32 %v91, %v491
  %v642 = vadd.f32 %v92, %v494
  %v643 = vadd.f32 %v93, %v499
  %v644 = vadd.f32 %v94, %v502
  %v645 = vadd.f32 %v95, %v507
  %v646 = vadd.f32 %v96, %v510
  %v647 = vadd.f32 %v97, %v515
  %v648 = vadd.f32 %v98, %v518
  %v649 = vadd.f32 %v99, %v523
  %v650 = vadd.f32 %v100, %v526
  %v651 = vadd.f32 %v101, %v531
  %v652 = vadd.f32 %v102, %v534
  %v653 = vadd.f32 %v103, %v539
  %v654 = vadd.f32 %v104, %v542
  %v655 = vadd.f32 %v105, %v547
  %v656 = vadd.f32 %v106, %v550
  %v657 = vadd.f32 %v107, %v555
  %v658 = vadd.f32 %v108, %v558
  %v659 = vadd.f32 %v109, %v563
  %v660 = vadd.f32 %v110, %v566
  %v661 = vadd.f32 %v111, %v571
  %v662 = vadd.f32 %v112, %v574
  %v663 = vadd.f32 %v113, %v579
  %v664 = vadd.f32 %v114, %v582
  %v665 = vadd.f32 %v115, %v587
  %v666 = vadd.f32 %v116, %v590
  %v667 = vadd.f32 %v117, %v595
  %v668 = vadd.f32 %v118, %v598
  %v669 = vadd.f32 %v119, %v603
  %v670 = vadd.f32 %v120, %v606
  %v671 = vadd.f32 %v121, %v611
  %v672 = vadd.f32 %v122, %v614
  %v673 = vadd.f32 %v123, %v619
  %v674 = vadd.f32 %v124, %v622
  %675 = vst [vmem:[#allocation2] sm:$0xff] %v625
  %676 = vst [vmem:[#allocation2 + $0x8] sm:$0xff] %v626
  %677 = vst [vmem:[#allocation2 + $0x10] sm:$0xff] %v627
  %678 = vst [vmem:[#allocation2 + $0x18] sm:$0xff] %v628
  %679 = vst [vmem:[#allocation2 + $0x20] sm:$0xff] %v629
  %680 = vst [vmem:[#allocation2 + $0x28] sm:$0xff] %v630
  %681 = vst [vmem:[#allocation2 + $0x30] sm:$0xff] %v631
  %682 = vst [vmem:[#allocation2 + $0x38] sm:$0xff] %v632
  %683 = vst [vmem:[#allocation2 + $0x40] sm:$0xff] %v633
  %684 = vst [vmem:[#allocation2 + $0x48] sm:$0xff] %v634
  %685 = vst [vmem:[#allocation2 + $0x50] sm:$0xff] %v635
  %686 = vst [vmem:[#allocation2 + $0x58] sm:$0xff] %v636
  %687 = vst [vmem:[#allocation2 + $0x60] sm:$0xff] %v637
  %688 = vst [vmem:[#allocation2 + $0x68] sm:$0xff] %v638
  %689 = vst [vmem:[#allocation2 + $0x70] sm:$0xff] %v639
  %690 = vst [vmem:[#allocation2 + $0x78] sm:$0xff] %v640
  %691 = vst [vmem:[#allocation2 + $0x80] sm:$0xff] %v641
  %692 = vst [vmem:[#allocation2 + $0x88] sm:$0xff] %v642
  %693 = vst [vmem:[#allocation2 + $0x90] sm:$0xff] %v643
  %694 = vst [vmem:[#allocation2 + $0x98] sm:$0xff] %v644
  %695 = vst [vmem:[#allocation2 + $0xa0] sm:$0xff] %v645
  %696 = vst [vmem:[#allocation2 + $0xa8] sm:$0xff] %v646
  %697 = vst [vmem:[#allocation2 + $0xb0] sm:$0xff] %v647
  %698 = vst [vmem:[#allocation2 + $0xb8] sm:$0xff] %v648
  %699 = vst [vmem:[#allocation2 + $0xc0] sm:$0xff] %v649
  %700 = vst [vmem:[#allocation2 + $0xc8] sm:$0xff] %v650
  %701 = vst [vmem:[#allocation2 + $0xd0] sm:$0xff] %v651
  %702 = vst [vmem:[#allocation2 + $0xd8] sm:$0xff] %v652
  %703 = vst [vmem:[#allocation2 + $0xe0] sm:$0xff] %v653
  %704 = vst [vmem:[#allocation2 + $0xe8] sm:$0xff] %v654
  %705 = vst [vmem:[#allocation2 + $0xf0] sm:$0xff] %v655
  %706 = vst [vmem:[#allocation2 + $0xf8] sm:$0xff] %v656
  %707 = vst [vmem:[#allocation2 + $0x100] sm:$0xff] %v657
  %708 = vst [vmem:[#allocation2 + $0x108] sm:$0xff] %v658
  %709 = vst [vmem:[#allocation2 + $0x110] sm:$0xff] %v659
  %710 = vst [vmem:[#allocation2 + $0x118] sm:$0xff] %v660
  %711 = vst [vmem:[#allocation2 + $0x120] sm:$0xff] %v661
  %712 = vst [vmem:[#allocation2 + $0x128] sm:$0xff] %v662
  %713 = vst [vmem:[#allocation2 + $0x130] sm:$0xff] %v663
  %714 = vst [vmem:[#allocation2 + $0x138] sm:$0xff] %v664
  %715 = vst [vmem:[#allocation2 + $0x140] sm:$0xff] %v665
  %716 = vst [vmem:[#allocation2 + $0x148] sm:$0xff] %v666
  %717 = vst [vmem:[#allocation2 + $0x150] sm:$0xff] %v667
  %718 = vst [vmem:[#allocation2 + $0x158] sm:$0xff] %v668
  %719 = vst [vmem:[#allocation2 + $0x160] sm:$0xff] %v669
  %720 = vst [vmem:[#allocation2 + $0x168] sm:$0xff] %v670
  %721 = vst [vmem:[#allocation2 + $0x170] sm:$0xff] %v671
  %722 = vst [vmem:[#allocation2 + $0x178] sm:$0xff] %v672
  %723 = vst [vmem:[#allocation2 + $0x180] sm:$0xff] %v673
  %724 = vst [vmem:[#allocation2 + $0x188] sm:$0xff] %v674
  // Predicated region
  $region26: #{stn_mbfn_forward.9} parent=0 // pred_check
    %p725 = pneg %p21
  $region27: #{stn_mbfn_forward.9} parent=0 // pred_check_branch
    %727 = sbr.rel (%p725) target = $region29
  $region28: #{stn_mbfn_forward.9} parent=0 // pred_region
    %v728 = vld [vmem:[#allocation2] sm:$0xff]
    %v729 = vld [vmem:[#allocation2 + $0x8] sm:$0xff]
    %v730 = vld [vmem:[#allocation2 + $0x10] sm:$0xff]
    %v731 = vld [vmem:[#allocation2 + $0x18] sm:$0xff]
    %v732 = vld [vmem:[#allocation2 + $0x20] sm:$0xff]
    %v733 = vld [vmem:[#allocation2 + $0x28] sm:$0xff]
    %v734 = vld [vmem:[#allocation2 + $0x30] sm:$0xff]
    %v735 = vld [vmem:[#allocation2 + $0x38] sm:$0xff]
    %v736 = vld [vmem:[#allocation2 + $0x40] sm:$0xff]
    %v737 = vld [vmem:[#allocation2 + $0x48] sm:$0xff]
    %v738 = vld [vmem:[#allocation2 + $0x50] sm:$0xff]
    %v739 = vld [vmem:[#allocation2 + $0x58] sm:$0xff]
    %v740 = vld [vmem:[#allocation2 + $0x60] sm:$0xff]
    %v741 = vld [vmem:[#allocation2 + $0x68] sm:$0xff]
    %v742 = vld [vmem:[#allocation2 + $0x70] sm:$0xff]
    %v743 = vld [vmem:[#allocation2 + $0x78] sm:$0xff]
    %v744 = vld [vmem:[#allocation2 + $0x80] sm:$0xff]
    %v745 = vld [vmem:[#allocation2 + $0x88] sm:$0xff]
    %v746 = vld [vmem:[#allocation2 + $0x90] sm:$0xff]
    %v747 = vld [vmem:[#allocation2 + $0x98] sm:$0xff]
    %v748 = vld [vmem:[#allocation2 + $0xa0] sm:$0xff]
    %v749 = vld [vmem:[#allocation2 + $0xa8] sm:$0xff]
    %v750 = vld [vmem:[#allocation2 + $0xb0] sm:$0xff]
    %v751 = vld [vmem:[#allocation2 + $0xb8] sm:$0xff]
    %v752 = vld [vmem:[#allocation2 + $0xc0] sm:$0xff]
    %v753 = vld [vmem:[#allocation2 + $0xc8] sm:$0xff]
    %v754 = vld [vmem:[#allocation2 + $0xd0] sm:$0xff]
    %v755 = vld [vmem:[#allocation2 + $0xd8] sm:$0xff]
    %v756 = vld [vmem:[#allocation2 + $0xe0] sm:$0xff]
    %v757 = vld [vmem:[#allocation2 + $0xe8] sm:$0xff]
    %v758 = vld [vmem:[#allocation2 + $0xf0] sm:$0xff]
    %v759 = vld [vmem:[#allocation2 + $0xf8] sm:$0xff]
    %v760 = vld [vmem:[#allocation2 + $0x100] sm:$0xff]
    %v761 = vld [vmem:[#allocation2 + $0x108] sm:$0xff]
    %v762 = vld [vmem:[#allocation2 + $0x110] sm:$0xff]
    %v763 = vld [vmem:[#allocation2 + $0x118] sm:$0xff]
    %v764 = vld [vmem:[#allocation2 + $0x120] sm:$0xff]
    %v765 = vld [vmem:[#allocation2 + $0x128] sm:$0xff]
    %v766 = vld [vmem:[#allocation2 + $0x130] sm:$0xff]
    %v767 = vld [vmem:[#allocation2 + $0x138] sm:$0xff]
    %v768 = vld [vmem:[#allocation2 + $0x140] sm:$0xff]
    %v769 = vld [vmem:[#allocation2 + $0x148] sm:$0xff]
    %v770 = vld [vmem:[#allocation2 + $0x150] sm:$0xff]
    %v771 = vld [vmem:[#allocation2 + $0x158] sm:$0xff]
    %v772 = vld [vmem:[#allocation2 + $0x160] sm:$0xff]
    %v773 = vld [vmem:[#allocation2 + $0x168] sm:$0xff]
    %v774 = vld [vmem:[#allocation2 + $0x170] sm:$0xff]
    %v775 = vld [vmem:[#allocation2 + $0x178] sm:$0xff]
    %v776 = vld [vmem:[#allocation2 + $0x180] sm:$0xff]
    %v777 = vld [vmem:[#allocation2 + $0x188] sm:$0xff]
    %v778 = vld [vmem:[%s2] sm:$0x1]
    %v780 = vlaneseq
    %v781 = vshrl.u32 %v780, 7
    %v782 = vsub.s32 0, %v781
    %v783 = vrot.slane %v778, %v782
    %v785 = vmul.f32 %v728, %v783
    %v786 = vmul.f32 %v729, %v783
    %v787 = vmul.f32 %v730, %v783
    %v788 = vmul.f32 %v731, %v783
    %v789 = vmul.f32 %v732, %v783
    %v790 = vmul.f32 %v733, %v783
    %v791 = vmul.f32 %v734, %v783
    %v792 = vmul.f32 %v735, %v783
    %v793 = vmul.f32 %v736, %v783
    %v794 = vmul.f32 %v737, %v783
    %v795 = vmul.f32 %v738, %v783
    %v796 = vmul.f32 %v739, %v783
    %v797 = vmul.f32 %v740, %v783
    %v798 = vmul.f32 %v741, %v783
    %v799 = vmul.f32 %v742, %v783
    %v800 = vmul.f32 %v743, %v783
    %v801 = vmul.f32 %v744, %v783
    %v802 = vmul.f32 %v745, %v783
    %v803 = vmul.f32 %v746, %v783
    %v804 = vmul.f32 %v747, %v783
    %v805 = vmul.f32 %v748, %v783
    %v806 = vmul.f32 %v749, %v783
    %v807 = vmul.f32 %v750, %v783
    %v808 = vmul.f32 %v751, %v783
    %v809 = vmul.f32 %v752, %v783
    %v810 = vmul.f32 %v753, %v783
    %v811 = vmul.f32 %v754, %v783
    %v812 = vmul.f32 %v755, %v783
    %v813 = vmul.f32 %v756, %v783
    %v814 = vmul.f32 %v757, %v783
    %v815 = vmul.f32 %v758, %v783
    %v816 = vmul.f32 %v759, %v783
    %v817 = vmul.f32 %v760, %v783
    %v818 = vmul.f32 %v761, %v783
    %v819 = vmul.f32 %v762, %v783
    %v820 = vmul.f32 %v763, %v783
    %v821 = vmul.f32 %v764, %v783
    %v822 = vmul.f32 %v765, %v783
    %v823 = vmul.f32 %v766, %v783
    %v824 = vmul.f32 %v767, %v783
    %v825 = vmul.f32 %v768, %v783
    %v826 = vmul.f32 %v769, %v783
    %v827 = vmul.f32 %v770, %v783
    %v828 = vmul.f32 %v771, %v783
    %v829 = vmul.f32 %v772, %v783
    %v830 = vmul.f32 %v773, %v783
    %v831 = vmul.f32 %v774, %v783
    %v832 = vmul.f32 %v775, %v783
    %v833 = vmul.f32 %v776, %v783
    %v834 = vmul.f32 %v777, %v783
    %v835 = vld [vmem:[%s3] sm:$0x1]
    %v837 = vlaneseq
    %v838 = vshrl.u32 %v837, 7
    %v839 = vsub.s32 0, %v838
    %v840 = vrot.slane %v835, %v839
    %v842 = vadd.f32 %v785, %v840
    %v843 = vadd.f32 %v786, %v840
    %v844 = vadd.f32 %v787, %v840
    %v845 = vadd.f32 %v788, %v840
    %v846 = vadd.f32 %v789, %v840
    %v847 = vadd.f32 %v790, %v840
    %v848 = vadd.f32 %v791, %v840
    %v849 = vadd.f32 %v792, %v840
    %v850 = vadd.f32 %v793, %v840
    %v851 = vadd.f32 %v794, %v840
    %v852 = vadd.f32 %v795, %v840
    %v853 = vadd.f32 %v796, %v840
    %v854 = vadd.f32 %v797, %v840
    %v855 = vadd.f32 %v798, %v840
    %v856 = vadd.f32 %v799, %v840
    %v857 = vadd.f32 %v800, %v840
    %v858 = vadd.f32 %v801, %v840
    %v859 = vadd.f32 %v802, %v840
    %v860 = vadd.f32 %v803, %v840
    %v861 = vadd.f32 %v804, %v840
    %v862 = vadd.f32 %v805, %v840
    %v863 = vadd.f32 %v806, %v840
    %v864 = vadd.f32 %v807, %v840
    %v865 = vadd.f32 %v808, %v840
    %v866 = vadd.f32 %v809, %v840
    %v867 = vadd.f32 %v810, %v840
    %v868 = vadd.f32 %v811, %v840
    %v869 = vadd.f32 %v812, %v840
    %v870 = vadd.f32 %v813, %v840
    %v871 = vadd.f32 %v814, %v840
    %v872 = vadd.f32 %v815, %v840
    %v873 = vadd.f32 %v816, %v840
    %v874 = vadd.f32 %v817, %v840
    %v875 = vadd.f32 %v818, %v840
    %v876 = vadd.f32 %v819, %v840
    %v877 = vadd.f32 %v820, %v840
    %v878 = vadd.f32 %v821, %v840
    %v879 = vadd.f32 %v822, %v840
    %v880 = vadd.f32 %v823, %v840
    %v881 = vadd.f32 %v824, %v840
    %v882 = vadd.f32 %v825, %v840
    %v883 = vadd.f32 %v826, %v840
    %v884 = vadd.f32 %v827, %v840
    %v885 = vadd.f32 %v828, %v840
    %v886 = vadd.f32 %v829, %v840
    %v887 = vadd.f32 %v830, %v840
    %v888 = vadd.f32 %v831, %v840
    %v889 = vadd.f32 %v832, %v840
    %v890 = vadd.f32 %v833, %v840
    %v891 = vadd.f32 %v834, %v840
    %vm892 = vcmp.gt.f32.partialorder %v842, 0.0
    %vm893 = vcmp.gt.f32.partialorder %v843, 0.0
    %vm894 = vcmp.gt.f32.partialorder %v844, 0.0
    %vm895 = vcmp.gt.f32.partialorder %v845, 0.0
    %vm896 = vcmp.gt.f32.partialorder %v846, 0.0
    %vm897 = vcmp.gt.f32.partialorder %v847, 0.0
    %vm898 = vcmp.gt.f32.partialorder %v848, 0.0
    %vm899 = vcmp.gt.f32.partialorder %v849, 0.0
    %vm900 = vcmp.gt.f32.partialorder %v850, 0.0
    %vm901 = vcmp.gt.f32.partialorder %v851, 0.0
    %vm902 = vcmp.gt.f32.partialorder %v852, 0.0
    %vm903 = vcmp.gt.f32.partialorder %v853, 0.0
    %vm904 = vcmp.gt.f32.partialorder %v854, 0.0
    %vm905 = vcmp.gt.f32.partialorder %v855, 0.0
    %vm906 = vcmp.gt.f32.partialorder %v856, 0.0
    %vm907 = vcmp.gt.f32.partialorder %v857, 0.0
    %vm908 = vcmp.gt.f32.partialorder %v858, 0.0
    %vm909 = vcmp.gt.f32.partialorder %v859, 0.0
    %vm910 = vcmp.gt.f32.partialorder %v860, 0.0
    %vm911 = vcmp.gt.f32.partialorder %v861, 0.0
    %vm912 = vcmp.gt.f32.partialorder %v862, 0.0
    %vm913 = vcmp.gt.f32.partialorder %v863, 0.0
    %vm914 = vcmp.gt.f32.partialorder %v864, 0.0
    %vm915 = vcmp.gt.f32.partialorder %v865, 0.0
    %vm916 = vcmp.gt.f32.partialorder %v866, 0.0
    %vm917 = vcmp.gt.f32.partialorder %v867, 0.0
    %vm918 = vcmp.gt.f32.partialorder %v868, 0.0
    %vm919 = vcmp.gt.f32.partialorder %v869, 0.0
    %vm920 = vcmp.gt.f32.partialorder %v870, 0.0
    %vm921 = vcmp.gt.f32.partialorder %v871, 0.0
    %vm922 = vcmp.gt.f32.partialorder %v872, 0.0
    %vm923 = vcmp.gt.f32.partialorder %v873, 0.0
    %vm924 = vcmp.gt.f32.partialorder %v874, 0.0
    %vm925 = vcmp.gt.f32.partialorder %v875, 0.0
    %vm926 = vcmp.gt.f32.partialorder %v876, 0.0
    %vm927 = vcmp.gt.f32.partialorder %v877, 0.0
    %vm928 = vcmp.gt.f32.partialorder %v878, 0.0
    %vm929 = vcmp.gt.f32.partialorder %v879, 0.0
    %vm930 = vcmp.gt.f32.partialorder %v880, 0.0
    %vm931 = vcmp.gt.f32.partialorder %v881, 0.0
    %vm932 = vcmp.gt.f32.partialorder %v882, 0.0
    %vm933 = vcmp.gt.f32.partialorder %v883, 0.0
    %vm934 = vcmp.gt.f32.partialorder %v884, 0.0
    %vm935 = vcmp.gt.f32.partialorder %v885, 0.0
    %vm936 = vcmp.gt.f32.partialorder %v886, 0.0
    %vm937 = vcmp.gt.f32.partialorder %v887, 0.0
    %vm938 = vcmp.gt.f32.partialorder %v888, 0.0
    %vm939 = vcmp.gt.f32.partialorder %v889, 0.0
    %vm940 = vcmp.gt.f32.partialorder %v890, 0.0
    %vm941 = vcmp.gt.f32.partialorder %v891, 0.0
    %v942 = vld [vmem:[%s4] sm:$0x1]
    %v944 = vlaneseq
    %v945 = vshrl.u32 %v944, 7
    %v946 = vsub.s32 0, %v945
    %v947 = vrot.slane %v942, %v946
    %v949 = vmul.f32 %v947, %v842
    %v950 = vmul.f32 %v947, %v843
    %v951 = vmul.f32 %v947, %v844
    %v952 = vmul.f32 %v947, %v845
    %v953 = vmul.f32 %v947, %v846
    %v954 = vmul.f32 %v947, %v847
    %v955 = vmul.f32 %v947, %v848
    %v956 = vmul.f32 %v947, %v849
    %v957 = vmul.f32 %v947, %v850
    %v958 = vmul.f32 %v947, %v851
    %v959 = vmul.f32 %v947, %v852
    %v960 = vmul.f32 %v947, %v853
    %v961 = vmul.f32 %v947, %v854
    %v962 = vmul.f32 %v947, %v855
    %v963 = vmul.f32 %v947, %v856
    %v964 = vmul.f32 %v947, %v857
    %v965 = vmul.f32 %v947, %v858
    %v966 = vmul.f32 %v947, %v859
    %v967 = vmul.f32 %v947, %v860
    %v968 = vmul.f32 %v947, %v861
    %v969 = vmul.f32 %v947, %v862
    %v970 = vmul.f32 %v947, %v863
    %v971 = vmul.f32 %v947, %v864
    %v972 = vmul.f32 %v947, %v865
    %v973 = vmul.f32 %v947, %v866
    %v974 = vmul.f32 %v947, %v867
    %v975 = vmul.f32 %v947, %v868
    %v976 = vmul.f32 %v947, %v869
    %v977 = vmul.f32 %v947, %v870
    %v978 = vmul.f32 %v947, %v871
    %v979 = vmul.f32 %v947, %v872
    %v980 = vmul.f32 %v947, %v873
    %v981 = vmul.f32 %v947, %v874
    %v982 = vmul.f32 %v947, %v875
    %v983 = vmul.f32 %v947, %v876
    %v984 = vmul.f32 %v947, %v877
    %v985 = vmul.f32 %v947, %v878
    %v986 = vmul.f32 %v947, %v879
    %v987 = vmul.f32 %v947, %v880
    %v988 = vmul.f32 %v947, %v881
    %v989 = vmul.f32 %v947, %v882
    %v990 = vmul.f32 %v947, %v883
    %v991 = vmul.f32 %v947, %v884
    %v992 = vmul.f32 %v947, %v885
    %v993 = vmul.f32 %v947, %v886
    %v994 = vmul.f32 %v947, %v887
    %v995 = vmul.f32 %v947, %v888
    %v996 = vmul.f32 %v947, %v889
    %v997 = vmul.f32 %v947, %v890
    %v998 = vmul.f32 %v947, %v891
    %v999 = vsel %vm892, %v842, %v949
    %v1000 = vsel %vm893, %v843, %v950
    %v1001 = vsel %vm894, %v844, %v951
    %v1002 = vsel %vm895, %v845, %v952
    %v1003 = vsel %vm896, %v846, %v953
    %v1004 = vsel %vm897, %v847, %v954
    %v1005 = vsel %vm898, %v848, %v955
    %v1006 = vsel %vm899, %v849, %v956
    %v1007 = vsel %vm900, %v850, %v957
    %v1008 = vsel %vm901, %v851, %v958
    %v1009 = vsel %vm902, %v852, %v959
    %v1010 = vsel %vm903, %v853, %v960
    %v1011 = vsel %vm904, %v854, %v961
    %v1012 = vsel %vm905, %v855, %v962
    %v1013 = vsel %vm906, %v856, %v963
    %v1014 = vsel %vm907, %v857, %v964
    %v1015 = vsel %vm908, %v858, %v965
    %v1016 = vsel %vm909, %v859, %v966
    %v1017 = vsel %vm910, %v860, %v967
    %v1018 = vsel %vm911, %v861, %v968
    %v1019 = vsel %vm912, %v862, %v969
    %v1020 = vsel %vm913, %v863, %v970
    %v1021 = vsel %vm914, %v864, %v971
    %v1022 = vsel %vm915, %v865, %v972
    %v1023 = vsel %vm916, %v866, %v973
    %v1024 = vsel %vm917, %v867, %v974
    %v1025 = vsel %vm918, %v868, %v975
    %v1026 = vsel %vm919, %v869, %v976
    %v1027 = vsel %vm920, %v870, %v977
    %v1028 = vsel %vm921, %v871, %v978
    %v1029 = vsel %vm922, %v872, %v979
    %v1030 = vsel %vm923, %v873, %v980
    %v1031 = vsel %vm924, %v874, %v981
    %v1032 = vsel %vm925, %v875, %v982
    %v1033 = vsel %vm926, %v876, %v983
    %v1034 = vsel %vm927, %v877, %v984
    %v1035 = vsel %vm928, %v878, %v985
    %v1036 = vsel %vm929, %v879, %v986
    %v1037 = vsel %vm930, %v880, %v987
    %v1038 = vsel %vm931, %v881, %v988
    %v1039 = vsel %vm932, %v882, %v989
    %v1040 = vsel %vm933, %v883, %v990
    %v1041 = vsel %vm934, %v884, %v991
    %v1042 = vsel %vm935, %v885, %v992
    %v1043 = vsel %vm936, %v886, %v993
    %v1044 = vsel %vm937, %v887, %v994
    %v1045 = vsel %vm938, %v888, %v995
    %v1046 = vsel %vm939, %v889, %v996
    %v1047 = vsel %vm940, %v890, %v997
    %v1048 = vsel %vm941, %v891, %v998
    %1049 = vst [vmem:[%s5] sm:$0xff] %v999
    %1050 = vst [vmem:[%s5 + $0x8] sm:$0xff] %v1000
    %1051 = vst [vmem:[%s5 + $0x10] sm:$0xff] %v1001
    %1052 = vst [vmem:[%s5 + $0x18] sm:$0xff] %v1002
    %1053 = vst [vmem:[%s5 + $0x20] sm:$0xff] %v1003
    %1054 = vst [vmem:[%s5 + $0x28] sm:$0xff] %v1004
    %1055 = vst [vmem:[%s5 + $0x30] sm:$0xff] %v1005
    %1056 = vst [vmem:[%s5 + $0x38] sm:$0xff] %v1006
    %1057 = vst [vmem:[%s5 + $0x40] sm:$0xff] %v1007
    %1058 = vst [vmem:[%s5 + $0x48] sm:$0xff] %v1008
    %1059 = vst [vmem:[%s5 + $0x50] sm:$0xff] %v1009
    %1060 = vst [vmem:[%s5 + $0x58] sm:$0xff] %v1010
    %1061 = vst [vmem:[%s5 + $0x60] sm:$0xff] %v1011
    %1062 = vst [vmem:[%s5 + $0x68] sm:$0xff] %v1012
    %1063 = vst [vmem:[%s5 + $0x70] sm:$0xff] %v1013
    %1064 = vst [vmem:[%s5 + $0x78] sm:$0xff] %v1014
    %1065 = vst [vmem:[%s5 + $0x80] sm:$0xff] %v1015
    %1066 = vst [vmem:[%s5 + $0x88] sm:$0xff] %v1016
    %1067 = vst [vmem:[%s5 + $0x90] sm:$0xff] %v1017
    %1068 = vst [vmem:[%s5 + $0x98] sm:$0xff] %v1018
    %1069 = vst [vmem:[%s5 + $0xa0] sm:$0xff] %v1019
    %1070 = vst [vmem:[%s5 + $0xa8] sm:$0xff] %v1020
    %1071 = vst [vmem:[%s5 + $0xb0] sm:$0xff] %v1021
    %1072 = vst [vmem:[%s5 + $0xb8] sm:$0xff] %v1022
    %1073 = vst [vmem:[%s5 + $0xc0] sm:$0xff] %v1023
    %1074 = vst [vmem:[%s5 + $0xc8] sm:$0xff] %v1024
    %1075 = vst [vmem:[%s5 + $0xd0] sm:$0xff] %v1025
    %1076 = vst [vmem:[%s5 + $0xd8] sm:$0xff] %v1026
    %1077 = vst [vmem:[%s5 + $0xe0] sm:$0xff] %v1027
    %1078 = vst [vmem:[%s5 + $0xe8] sm:$0xff] %v1028
    %1079 = vst [vmem:[%s5 + $0xf0] sm:$0xff] %v1029
    %1080 = vst [vmem:[%s5 + $0xf8] sm:$0xff] %v1030
    %1081 = vst [vmem:[%s5 + $0x100] sm:$0xff] %v1031
    %1082 = vst [vmem:[%s5 + $0x108] sm:$0xff] %v1032
    %1083 = vst [vmem:[%s5 + $0x110] sm:$0xff] %v1033
    %1084 = vst [vmem:[%s5 + $0x118] sm:$0xff] %v1034
    %1085 = vst [vmem:[%s5 + $0x120] sm:$0xff] %v1035
    %1086 = vst [vmem:[%s5 + $0x128] sm:$0xff] %v1036
    %1087 = vst [vmem:[%s5 + $0x130] sm:$0xff] %v1037
    %1088 = vst [vmem:[%s5 + $0x138] sm:$0xff] %v1038
    %1089 = vst [vmem:[%s5 + $0x140] sm:$0xff] %v1039
    %1090 = vst [vmem:[%s5 + $0x148] sm:$0xff] %v1040
    %1091 = vst [vmem:[%s5 + $0x150] sm:$0xff] %v1041
    %1092 = vst [vmem:[%s5 + $0x158] sm:$0xff] %v1042
    %1093 = vst [vmem:[%s5 + $0x160] sm:$0xff] %v1043
    %1094 = vst [vmem:[%s5 + $0x168] sm:$0xff] %v1044
    %1095 = vst [vmem:[%s5 + $0x170] sm:$0xff] %v1045
    %1096 = vst [vmem:[%s5 + $0x178] sm:$0xff] %v1046
    %1097 = vst [vmem:[%s5 + $0x180] sm:$0xff] %v1047
    %1098 = vst [vmem:[%s5 + $0x188] sm:$0xff] %v1048
  $region29: #{stn_mbfn_forward.9} parent=0 // pred_fallthru
    _
  // Predicated region
  $region30: #{stn_mbfn_forward.9} parent=0 // pred_check
    _
  $region31: #{stn_mbfn_forward.9} parent=0 // pred_check_branch
    %1100 = sbr.rel (0) target = $region33
  $region32: #{stn_mbfn_forward.9} parent=0 // pred_region
    _
  $region33: #{stn_mbfn_forward.9} parent=0 // pred_fallthru
    _
  // Predicated region
  $region34: #{stn_mbfn_forward.9} parent=0 // pred_check
    _
  $region35: #{stn_mbfn_forward.9} parent=0 // pred_check_branch
    %1102 = sbr.rel (0) target = $region37
  $region36: #{stn_mbfn_forward.9} parent=0 // pred_region
    _
  $region37: #{stn_mbfn_forward.9} parent=0 // pred_fallthru
    _

// kernel: stn_mbfn_forward.10
$region0: #{stn_mbfn_forward.10}
  #allocation0 [shape = 'u32[]', space=smem, size = 0x4, offset = 0x4, fixed_abs, tag = 'smem constant byte address 0x4 - core index']
  #allocation1 [shape = 'u32[144,128]{1,0:T(1,128)}', space=vmem, size = 0x12000, scoped, tag = 'internal scratch']
  #allocation2 [shape = 'f32[64,128]{1,0:T(8,128)}', space=vmem, size = 0x8000, scoped, tag = 'scratch operand']
  %s0 = inlined_call_operand.vmem [shape: bf16[64,80], index: 0, kind: input, shape index: {}]
  %s1 = inlined_call_operand.vmem [shape: bf16[80,128], index: 1, kind: input, shape index: {}]
  %s2 = inlined_call_operand.vmem [shape: f32[1,128], index: 2, kind: input, shape index: {}]
  %s3 = inlined_call_operand.vmem [shape: f32[1,128], index: 3, kind: input, shape index: {}]
  %s4 = inlined_call_operand.vmem [shape: f32[1,128], index: 4, kind: input, shape index: {}]
  %s5 = inlined_call_operand.vmem [shape: f32[64,128], index: 5, kind: output, shape index: {}]
  %s6 = sld [smem:[#allocation0]]
  $region38: #{stn_mbfn_forward.10} parent=0
    _
  %s8 = ssub.s32 1, %s6
  %s9 = scalar_select 0, %s8, %s6
  // Predicated region
  $region2: #{stn_mbfn_forward.10} parent=0 // pred_check
    _
  $region3: #{stn_mbfn_forward.10} parent=0 // pred_check_branch
    %11 = sbr.rel (0) target = $region5
  $region4: #{stn_mbfn_forward.10} parent=0 // pred_region
    _
  $region5: #{stn_mbfn_forward.10} parent=0 // pred_fallthru
    _
  // Predicated region
  $region6: #{stn_mbfn_forward.10} parent=0 // pred_check
    _
  $region7: #{stn_mbfn_forward.10} parent=0 // pred_check_branch
    %13 = sbr.rel (0) target = $region9
  $region8: #{stn_mbfn_forward.10} parent=0 // pred_region
    _
  $region9: #{stn_mbfn_forward.10} parent=0 // pred_fallthru
    _
  // Predicated region
  $region10: #{stn_mbfn_forward.10} parent=0 // pred_check
    _
  $region11: #{stn_mbfn_forward.10} parent=0 // pred_check_branch
    %15 = sbr.rel (0) target = $region13
  $region12: #{stn_mbfn_forward.10} parent=0 // pred_region
    _
  $region13: #{stn_mbfn_forward.10} parent=0 // pred_fallthru
    _
  // Predicated region
  $region14: #{stn_mbfn_forward.10} parent=0 // pred_check
    _
  $region15: #{stn_mbfn_forward.10} parent=0 // pred_check_branch
    %17 = sbr.rel (0) target = $region17
  $region16: #{stn_mbfn_forward.10} parent=0 // pred_region
    _
  $region17: #{stn_mbfn_forward.10} parent=0 // pred_fallthru
    _
  // Predicated region
  $region18: #{stn_mbfn_forward.10} parent=0 // pred_check
    _
  $region19: #{stn_mbfn_forward.10} parent=0 // pred_check_branch
    %19 = sbr.rel (0) target = $region21
  $region20: #{stn_mbfn_forward.10} parent=0 // pred_region
    _
  $region21: #{stn_mbfn_forward.10} parent=0 // pred_fallthru
    _
  %p21 = scmp.eq.s32.totalorder 0, 0
  // Predicated region
  $region22: #{stn_mbfn_forward.10} parent=0 // pred_check
    %p22 = pneg %p21
  $region23: #{stn_mbfn_forward.10} parent=0 // pred_check_branch
    %24 = sbr.rel (%p22) target = $region25
  $region24: #{stn_mbfn_forward.10} parent=0 // pred_region
    %25 = vst [vmem:[#allocation2] sm:$0xff] 0.0
    %26 = vst [vmem:[#allocation2 + $0x8] sm:$0xff] 0.0
    %27 = vst [vmem:[#allocation2 + $0x10] sm:$0xff] 0.0
    %28 = vst [vmem:[#allocation2 + $0x18] sm:$0xff] 0.0
    %29 = vst [vmem:[#allocation2 + $0x20] sm:$0xff] 0.0
    %30 = vst [vmem:[#allocation2 + $0x28] sm:$0xff] 0.0
    %31 = vst [vmem:[#allocation2 + $0x30] sm:$0xff] 0.0
    %32 = vst [vmem:[#allocation2 + $0x38] sm:$0xff] 0.0
  $region25: #{stn_mbfn_forward.10} parent=0 // pred_fallthru
    _
  %v33 = vld [vmem:[#allocation2] sm:$0xff]
  %v34 = vld [vmem:[#allocation2 + $0x8] sm:$0xff]
  %v35 = vld [vmem:[#allocation2 + $0x10] sm:$0xff]
  %v36 = vld [vmem:[#allocation2 + $0x18] sm:$0xff]
  %v37 = vld [vmem:[#allocation2 + $0x20] sm:$0xff]
  %v38 = vld [vmem:[#allocation2 + $0x28] sm:$0xff]
  %v39 = vld [vmem:[#allocation2 + $0x30] sm:$0xff]
  %v40 = vld [vmem:[#allocation2 + $0x38] sm:$0xff]
  %v41 = vld [vmem:[%s0] sm:$0xf]
  %v42 = vld [vmem:[%s0 + $0x4] sm:$0xf]
  %v43 = vld [vmem:[%s0 + $0x8] sm:$0xf]
  %v44 = vld [vmem:[%s0 + $0xc] sm:$0xf]
  %v45 = vld [vmem:[%s0 + $0x10] sm:$0xf]
  %v46 = vld [vmem:[%s0 + $0x14] sm:$0xf]
  %v47 = vld [vmem:[%s0 + $0x18] sm:$0xf]
  %v48 = vld [vmem:[%s0 + $0x1c] sm:$0xf]
  %v49 = vld [vmem:[%s1] sm:$0xf]
  %v50 = vld [vmem:[%s1 + $0x4] sm:$0xf]
  %v51 = vld [vmem:[%s1 + $0x8] sm:$0xf]
  %v52 = vld [vmem:[%s1 + $0xc] sm:$0xf]
  %v53 = vld [vmem:[%s1 + $0x10] sm:$0xf]
  %v54 = vld [vmem:[%s1 + $0x14] sm:$0xf]
  %v55 = vld [vmem:[%s1 + $0x18] sm:$0xf]
  %v56 = vld [vmem:[%s1 + $0x1c] sm:$0xf]
  %v57 = vld [vmem:[%s1 + $0x20] sm:$0xf]
  %v58 = vld [vmem:[%s1 + $0x24] sm:$0xf]
  %v67 = vunpack.c.l.b16 %v41
  %v68 = vunpack.c.l.b16 %v42
  %v69 = vunpack.c.l.b16 %v43
  %v70 = vunpack.c.l.b16 %v44
  %v71 = vunpack.c.l.b16 %v45
  %v72 = vunpack.c.l.b16 %v46
  %v73 = vunpack.c.l.b16 %v47
  %v74 = vunpack.c.l.b16 %v48
  %v75 = vpack.c.b16 %v68, %v67
  %v76 = vpack.c.b16 %v70, %v69
  %v77 = vpack.c.b16 %v72, %v71
  %v78 = vpack.c.b16 %v74, %v73
  %v89 = vunpack.c.l.b16 %v49
  %v90 = vunpack.c.l.b16 %v50
  %v91 = vunpack.c.l.b16 %v51
  %v92 = vunpack.c.l.b16 %v52
  %v93 = vunpack.c.l.b16 %v53
  %v94 = vunpack.c.l.b16 %v54
  %v95 = vunpack.c.l.b16 %v55
  %v96 = vunpack.c.l.b16 %v56
  %v97 = vunpack.c.l.b16 %v57
  %v98 = vunpack.c.l.b16 %v58
  %v99 = vpack.c.b16 %v90, %v89
  %v100 = vpack.c.b16 %v92, %v91
  %v101 = vpack.c.b16 %v94, %v93
  %v102 = vpack.c.b16 %v96, %v95
  %v103 = vpack.c.b16 %v98, %v97
  %vm109 = vcmask 654336
  %v111 = vsel %vm109, %v75, 0
  %v114 = vsel %vm109, %v76, 0
  %v117 = vsel %vm109, %v77, 0
  %v120 = vsel %vm109, %v78, 0
  %122 = vmatprep.subr.bf16.mxu0 0
  %123 = vmatpush1.bf16.msra.mxu0 %v99
  %124 = vmatprep.subr.bf16.mxu0 0
  %125 = vmatpush1.bf16.msra.mxu0 %v100
  %126 = vmatprep.subr.bf16.mxu0 0
  %127 = vmatpush1.bf16.msra.mxu0 %v101
  %128 = vmatprep.subr.bf16.mxu0 0
  %129 = vmatpush1.bf16.msra.mxu0 %v102
  %130 = vmatprep.subr.bf16.mxu0 0
  %131 = vmatpush1.bf16.msra.mxu0 %v103
  %132 = vmatprep.subr.bf16.mxu0 0
  %133 = vmatpush1.bf16.msra.mxu0 0
  %134 = vmatprep.subr.bf16.mxu0 0
  %135 = vmatpush1.bf16.msra.mxu0 0
  %136 = vmatprep.subr.bf16.mxu0 0
  %137 = vmatpush1.bf16.msra.mxu0 0
  %138 = vmatprep.subr.bf16.mxu0 0
  %139 = vmatpush1.bf16.msra.mxu0 0
  %140 = vmatprep.subr.bf16.mxu0 0
  %141 = vmatpush1.bf16.msra.mxu0 0
  %142 = vmatprep.subr.bf16.mxu0 0
  %143 = vmatpush1.bf16.msra.mxu0 0
  %144 = vmatprep.subr.bf16.mxu0 0
  %145 = vmatpush1.bf16.msra.mxu0 0
  %146 = vmatprep.subr.bf16.mxu0 0
  %147 = vmatpush1.bf16.msra.mxu0 0
  %148 = vmatprep.subr.bf16.mxu0 0
  %149 = vmatpush1.bf16.msra.mxu0 0
  %150 = vmatprep.subr.bf16.mxu0 0
  %151 = vmatpush1.bf16.msra.mxu0 0
  %152 = vmatprep.subr.bf16.mxu0 0
  %153 = vmatpush1.bf16.msra.mxu0 0
  %154 = vmatprep.mubr.bf16.mxu0 0
  %155 = vmatmul.mubr.bf16.gmra.mrb[0].mxu0 %v111
  %v156 = vpop.f32.mrb[0].mxu0
  %v157 = vadd.f32 0.0, %v156
  %v158 = vpop.f32.mrb[0].mxu0
  %v159 = vpop.f32.mrb[0].mxu0
  %v160 = vadd.f32 0.0, %v159
  %v161 = vpop.f32.mrb[0].mxu0
  %162 = vmatprep.mubr.bf16.mxu0 0
  %163 = vmatmul.mubr.bf16.gmra.mrb[0].mxu0 %v114
  %v164 = vpop.f32.mrb[0].mxu0
  %v165 = vadd.f32 0.0, %v164
  %v166 = vpop.f32.mrb[0].mxu0
  %v167 = vpop.f32.mrb[0].mxu0
  %v168 = vadd.f32 0.0, %v167
  %v169 = vpop.f32.mrb[0].mxu0
  %170 = vmatprep.mubr.bf16.mxu0 0
  %171 = vmatmul.mubr.bf16.gmra.mrb[0].mxu0 %v117
  %v172 = vpop.f32.mrb[0].mxu0
  %v173 = vadd.f32 0.0, %v172
  %v174 = vpop.f32.mrb[0].mxu0
  %v175 = vpop.f32.mrb[0].mxu0
  %v176 = vadd.f32 0.0, %v175
  %v177 = vpop.f32.mrb[0].mxu0
  %178 = vmatprep.mubr.bf16.mxu0 0
  %179 = vmatmul.mubr.bf16.gmra.mrb[0].mxu0 %v120
  %v180 = vpop.f32.mrb[0].mxu0
  %v181 = vadd.f32 0.0, %v180
  %v182 = vpop.f32.mrb[0].mxu0
  %v183 = vpop.f32.mrb[0].mxu0
  %v184 = vadd.f32 0.0, %v183
  %v185 = vpop.f32.mrb[0].mxu0
  %186 = vdwg.mxu0
  %v187 = vadd.f32 %v33, %v157
  %v188 = vadd.f32 %v34, %v160
  %v189 = vadd.f32 %v35, %v165
  %v190 = vadd.f32 %v36, %v168
  %v191 = vadd.f32 %v37, %v173
  %v192 = vadd.f32 %v38, %v176
  %v193 = vadd.f32 %v39, %v181
  %v194 = vadd.f32 %v40, %v184
  %195 = vst [vmem:[#allocation2] sm:$0xff] %v187
  %196 = vst [vmem:[#allocation2 + $0x8] sm:$0xff] %v188
  %197 = vst [vmem:[#allocation2 + $0x10] sm:$0xff] %v189
  %198 = vst [vmem:[#allocation2 + $0x18] sm:$0xff] %v190
  %199 = vst [vmem:[#allocation2 + $0x20] sm:$0xff] %v191
  %200 = vst [vmem:[#allocation2 + $0x28] sm:$0xff] %v192
  %201 = vst [vmem:[#allocation2 + $0x30] sm:$0xff] %v193
  %202 = vst [vmem:[#allocation2 + $0x38] sm:$0xff] %v194
  // Predicated region
  $region26: #{stn_mbfn_forward.10} parent=0 // pred_check
    %p203 = pneg %p21
  $region27: #{stn_mbfn_forward.10} parent=0 // pred_check_branch
    %205 = sbr.rel (%p203) target = $region29
  $region28: #{stn_mbfn_forward.10} parent=0 // pred_region
    %v206 = vld [vmem:[#allocation2] sm:$0xff]
    %v207 = vld [vmem:[#allocation2 + $0x8] sm:$0xff]
    %v208 = vld [vmem:[#allocation2 + $0x10] sm:$0xff]
    %v209 = vld [vmem:[#allocation2 + $0x18] sm:$0xff]
    %v210 = vld [vmem:[#allocation2 + $0x20] sm:$0xff]
    %v211 = vld [vmem:[#allocation2 + $0x28] sm:$0xff]
    %v212 = vld [vmem:[#allocation2 + $0x30] sm:$0xff]
    %v213 = vld [vmem:[#allocation2 + $0x38] sm:$0xff]
    %v214 = vld [vmem:[%s2] sm:$0x1]
    %v216 = vlaneseq
    %v217 = vshrl.u32 %v216, 7
    %v218 = vsub.s32 0, %v217
    %v219 = vrot.slane %v214, %v218
    %v221 = vmul.f32 %v206, %v219
    %v222 = vmul.f32 %v207, %v219
    %v223 = vmul.f32 %v208, %v219
    %v224 = vmul.f32 %v209, %v219
    %v225 = vmul.f32 %v210, %v219
    %v226 = vmul.f32 %v211, %v219
    %v227 = vmul.f32 %v212, %v219
    %v228 = vmul.f32 %v213, %v219
    %v229 = vld [vmem:[%s3] sm:$0x1]
    %v231 = vlaneseq
    %v232 = vshrl.u32 %v231, 7
    %v233 = vsub.s32 0, %v232
    %v234 = vrot.slane %v229, %v233
    %v236 = vadd.f32 %v221, %v234
    %v237 = vadd.f32 %v222, %v234
    %v238 = vadd.f32 %v223, %v234
    %v239 = vadd.f32 %v224, %v234
    %v240 = vadd.f32 %v225, %v234
    %v241 = vadd.f32 %v226, %v234
    %v242 = vadd.f32 %v227, %v234
    %v243 = vadd.f32 %v228, %v234
    %vm244 = vcmp.gt.f32.partialorder %v236, 0.0
    %vm245 = vcmp.gt.f32.partialorder %v237, 0.0
    %vm246 = vcmp.gt.f32.partialorder %v238, 0.0
    %vm247 = vcmp.gt.f32.partialorder %v239, 0.0
    %vm248 = vcmp.gt.f32.partialorder %v240, 0.0
    %vm249 = vcmp.gt.f32.partialorder %v241, 0.0
    %vm250 = vcmp.gt.f32.partialorder %v242, 0.0
    %vm251 = vcmp.gt.f32.partialorder %v243, 0.0
    %v252 = vld [vmem:[%s4] sm:$0x1]
    %v254 = vlaneseq
    %v255 = vshrl.u32 %v254, 7
    %v256 = vsub.s32 0, %v255
    %v257 = vrot.slane %v252, %v256
    %v259 = vmul.f32 %v257, %v236
    %v260 = vmul.f32 %v257, %v237
    %v261 = vmul.f32 %v257, %v238
    %v262 = vmul.f32 %v257, %v239
    %v263 = vmul.f32 %v257, %v240
    %v264 = vmul.f32 %v257, %v241
    %v265 = vmul.f32 %v257, %v242
    %v266 = vmul.f32 %v257, %v243
    %v267 = vsel %vm244, %v236, %v259
    %v268 = vsel %vm245, %v237, %v260
    %v269 = vsel %vm246, %v238, %v261
    %v270 = vsel %vm247, %v239, %v262
    %v271 = vsel %vm248, %v240, %v263
    %v272 = vsel %vm249, %v241, %v264
    %v273 = vsel %vm250, %v242, %v265
    %v274 = vsel %vm251, %v243, %v266
    %275 = vst [vmem:[%s5] sm:$0xff] %v267
    %276 = vst [vmem:[%s5 + $0x8] sm:$0xff] %v268
    %277 = vst [vmem:[%s5 + $0x10] sm:$0xff] %v269
    %278 = vst [vmem:[%s5 + $0x18] sm:$0xff] %v270
    %279 = vst [vmem:[%s5 + $0x20] sm:$0xff] %v271
    %280 = vst [vmem:[%s5 + $0x28] sm:$0xff] %v272
    %281 = vst [vmem:[%s5 + $0x30] sm:$0xff] %v273
    %282 = vst [vmem:[%s5 + $0x38] sm:$0xff] %v274
  $region29: #{stn_mbfn_forward.10} parent=0 // pred_fallthru
    _
  // Predicated region
  $region30: #{stn_mbfn_forward.10} parent=0 // pred_check
    _
  $region31: #{stn_mbfn_forward.10} parent=0 // pred_check_branch
    %284 = sbr.rel (0) target = $region33
  $region32: #{stn_mbfn_forward.10} parent=0 // pred_region
    _
  $region33: #{stn_mbfn_forward.10} parent=0 // pred_fallthru
    _
  // Predicated region
  $region34: #{stn_mbfn_forward.10} parent=0 // pred_check
    _
  $region35: #{stn_mbfn_forward.10} parent=0 // pred_check_branch
    %286 = sbr.rel (0) target = $region37
  $region36: #{stn_mbfn_forward.10} parent=0 // pred_region
    _
  $region37: #{stn_mbfn_forward.10} parent=0 // pred_fallthru
    _

// kernel: stn_mbfn_forward.11
$region0: #{stn_mbfn_forward.11}
  #allocation0 [shape = 'u32[]', space=smem, size = 0x4, offset = 0x4, fixed_abs, tag = 'smem constant byte address 0x4 - core index']
  #allocation1 [shape = 'u32[144,128]{1,0:T(1,128)}', space=vmem, size = 0x12000, scoped, tag = 'internal scratch']
  %s0 = inlined_call_operand.vmem [shape: f32[4,512,3], index: 0, kind: input, shape index: {}]
  %s1 = inlined_call_operand.vmem [shape: f32[4,512,1], index: 1, kind: input, shape index: {}]
  %s2 = inlined_call_operand.vmem [shape: f32[512,3], index: 2, kind: output, shape index: {}]
  %s3 = sld [smem:[#allocation0]]
  $region18: #{stn_mbfn_forward.11} parent=0
    _
  %s5 = ssub.s32 1, %s3
  %s6 = scalar_select 0, %s5, %s3
  // Predicated region
  $region2: #{stn_mbfn_forward.11} parent=0 // pred_check
    _
  $region3: #{stn_mbfn_forward.11} parent=0 // pred_check_branch
    %8 = sbr.rel (0) target = $region5
  $region4: #{stn_mbfn_forward.11} parent=0 // pred_region
    _
  $region5: #{stn_mbfn_forward.11} parent=0 // pred_fallthru
    _
  // Predicated region
  $region6: #{stn_mbfn_forward.11} parent=0 // pred_check
    _
  $region7: #{stn_mbfn_forward.11} parent=0 // pred_check_branch
    %10 = sbr.rel (0) target = $region9
  $region8: #{stn_mbfn_forward.11} parent=0 // pred_region
    _
  $region9: #{stn_mbfn_forward.11} parent=0 // pred_fallthru
    _
  %v11 = vld [vmem:[%s0] sm:$0xff]
  %v12 = vld [vmem:[%s0 + $0x8] sm:$0xff]
  %v13 = vld [vmem:[%s0 + $0x10] sm:$0xff]
  %v14 = vld [vmem:[%s0 + $0x18] sm:$0xff]
  %v15 = vld [vmem:[%s0 + $0x20] sm:$0xff]
  %v16 = vld [vmem:[%s0 + $0x28] sm:$0xff]
  %v17 = vld [vmem:[%s0 + $0x30] sm:$0xff]
  %v18 = vld [vmem:[%s0 + $0x38] sm:$0xff]
  %v19 = vld [vmem:[%s0 + $0x40] sm:$0xff]
  %v20 = vld [vmem:[%s0 + $0x48] sm:$0xff]
  %v21 = vld [vmem:[%s0 + $0x50] sm:$0xff]
  %v22 = vld [vmem:[%s0 + $0x58] sm:$0xff]
  %v23 = vld [vmem:[%s0 + $0x60] sm:$0xff]
  %v24 = vld [vmem:[%s0 + $0x68] sm:$0xff]
  %v25 = vld [vmem:[%s0 + $0x70] sm:$0xff]
  %v26 = vld [vmem:[%s0 + $0x78] sm:$0xff]
  %v27 = vld [vmem:[%s0 + $0x80] sm:$0xff]
  %v28 = vld [vmem:[%s0 + $0x88] sm:$0xff]
  %v29 = vld [vmem:[%s0 + $0x90] sm:$0xff]
  %v30 = vld [vmem:[%s0 + $0x98] sm:$0xff]
  %v31 = vld [vmem:[%s0 + $0xa0] sm:$0xff]
  %v32 = vld [vmem:[%s0 + $0xa8] sm:$0xff]
  %v33 = vld [vmem:[%s0 + $0xb0] sm:$0xff]
  %v34 = vld [vmem:[%s0 + $0xb8] sm:$0xff]
  %v35 = vld [vmem:[%s0 + $0xc0] sm:$0xff]
  %v36 = vld [vmem:[%s0 + $0xc8] sm:$0xff]
  %v37 = vld [vmem:[%s0 + $0xd0] sm:$0xff]
  %v38 = vld [vmem:[%s0 + $0xd8] sm:$0xff]
  %v39 = vld [vmem:[%s0 + $0xe0] sm:$0xff]
  %v40 = vld [vmem:[%s0 + $0xe8] sm:$0xff]
  %v41 = vld [vmem:[%s0 + $0xf0] sm:$0xff]
  %v42 = vld [vmem:[%s0 + $0xf8] sm:$0xff]
  %v43 = vld [vmem:[%s0 + $0x100] sm:$0xff]
  %v44 = vld [vmem:[%s0 + $0x108] sm:$0xff]
  %v45 = vld [vmem:[%s0 + $0x110] sm:$0xff]
  %v46 = vld [vmem:[%s0 + $0x118] sm:$0xff]
  %v47 = vld [vmem:[%s0 + $0x120] sm:$0xff]
  %v48 = vld [vmem:[%s0 + $0x128] sm:$0xff]
  %v49 = vld [vmem:[%s0 + $0x130] sm:$0xff]
  %v50 = vld [vmem:[%s0 + $0x138] sm:$0xff]
  %v51 = vld [vmem:[%s0 + $0x140] sm:$0xff]
  %v52 = vld [vmem:[%s0 + $0x148] sm:$0xff]
  %v53 = vld [vmem:[%s0 + $0x150] sm:$0xff]
  %v54 = vld [vmem:[%s0 + $0x158] sm:$0xff]
  %v55 = vld [vmem:[%s0 + $0x160] sm:$0xff]
  %v56 = vld [vmem:[%s0 + $0x168] sm:$0xff]
  %v57 = vld [vmem:[%s0 + $0x170] sm:$0xff]
  %v58 = vld [vmem:[%s0 + $0x178] sm:$0xff]
  %v59 = vld [vmem:[%s0 + $0x180] sm:$0xff]
  %v60 = vld [vmem:[%s0 + $0x188] sm:$0xff]
  %v61 = vld [vmem:[%s0 + $0x190] sm:$0xff]
  %v62 = vld [vmem:[%s0 + $0x198] sm:$0xff]
  %v63 = vld [vmem:[%s0 + $0x1a0] sm:$0xff]
  %v64 = vld [vmem:[%s0 + $0x1a8] sm:$0xff]
  %v65 = vld [vmem:[%s0 + $0x1b0] sm:$0xff]
  %v66 = vld [vmem:[%s0 + $0x1b8] sm:$0xff]
  %v67 = vld [vmem:[%s0 + $0x1c0] sm:$0xff]
  %v68 = vld [vmem:[%s0 + $0x1c8] sm:$0xff]
  %v69 = vld [vmem:[%s0 + $0x1d0] sm:$0xff]
  %v70 = vld [vmem:[%s0 + $0x1d8] sm:$0xff]
  %v71 = vld [vmem:[%s0 + $0x1e0] sm:$0xff]
  %v72 = vld [vmem:[%s0 + $0x1e8] sm:$0xff]
  %v73 = vld [vmem:[%s0 + $0x1f0] sm:$0xff]
  %v74 = vld [vmem:[%s0 + $0x1f8] sm:$0xff]
  %v75 = vld [vmem:[%s0 + $0x200] sm:$0xff]
  %v76 = vld [vmem:[%s0 + $0x208] sm:$0xff]
  %v77 = vld [vmem:[%s0 + $0x210] sm:$0xff]
  %v78 = vld [vmem:[%s0 + $0x218] sm:$0xff]
  %v79 = vld [vmem:[%s0 + $0x220] sm:$0xff]
  %v80 = vld [vmem:[%s0 + $0x228] sm:$0xff]
  %v81 = vld [vmem:[%s0 + $0x230] sm:$0xff]
  %v82 = vld [vmem:[%s0 + $0x238] sm:$0xff]
  %v83 = vld [vmem:[%s0 + $0x240] sm:$0xff]
  %v84 = vld [vmem:[%s0 + $0x248] sm:$0xff]
  %v85 = vld [vmem:[%s0 + $0x250] sm:$0xff]
  %v86 = vld [vmem:[%s0 + $0x258] sm:$0xff]
  %v87 = vld [vmem:[%s0 + $0x260] sm:$0xff]
  %v88 = vld [vmem:[%s0 + $0x268] sm:$0xff]
  %v89 = vld [vmem:[%s0 + $0x270] sm:$0xff]
  %v90 = vld [vmem:[%s0 + $0x278] sm:$0xff]
  %v91 = vld [vmem:[%s0 + $0x280] sm:$0xff]
  %v92 = vld [vmem:[%s0 + $0x288] sm:$0xff]
  %v93 = vld [vmem:[%s0 + $0x290] sm:$0xff]
  %v94 = vld [vmem:[%s0 + $0x298] sm:$0xff]
  %v95 = vld [vmem:[%s0 + $0x2a0] sm:$0xff]
  %v96 = vld [vmem:[%s0 + $0x2a8] sm:$0xff]
  %v97 = vld [vmem:[%s0 + $0x2b0] sm:$0xff]
  %v98 = vld [vmem:[%s0 + $0x2b8] sm:$0xff]
  %v99 = vld [vmem:[%s0 + $0x2c0] sm:$0xff]
  %v100 = vld [vmem:[%s0 + $0x2c8] sm:$0xff]
  %v101 = vld [vmem:[%s0 + $0x2d0] sm:$0xff]
  %v102 = vld [vmem:[%s0 + $0x2d8] sm:$0xff]
  %v103 = vld [vmem:[%s0 + $0x2e0] sm:$0xff]
  %v104 = vld [vmem:[%s0 + $0x2e8] sm:$0xff]
  %v105 = vld [vmem:[%s0 + $0x2f0] sm:$0xff]
  %v106 = vld [vmem:[%s0 + $0x2f8] sm:$0xff]
  %v107 = vld [vmem:[%s0 + $0x300] sm:$0xff]
  %v108 = vld [vmem:[%s0 + $0x308] sm:$0xff]
  %v109 = vld [vmem:[%s0 + $0x310] sm:$0xff]
  %v110 = vld [vmem:[%s0 + $0x318] sm:$0xff]
  %v111 = vld [vmem:[%s0 + $0x320] sm:$0xff]
  %v112 = vld [vmem:[%s0 + $0x328] sm:$0xff]
  %v113 = vld [vmem:[%s0 + $0x330] sm:$0xff]
  %v114 = vld [vmem:[%s0 + $0x338] sm:$0xff]
  %v115 = vld [vmem:[%s0 + $0x340] sm:$0xff]
  %v116 = vld [vmem:[%s0 + $0x348] sm:$0xff]
  %v117 = vld [vmem:[%s0 + $0x350] sm:$0xff]
  %v118 = vld [vmem:[%s0 + $0x358] sm:$0xff]
  %v119 = vld [vmem:[%s0 + $0x360] sm:$0xff]
  %v120 = vld [vmem:[%s0 + $0x368] sm:$0xff]
  %v121 = vld [vmem:[%s0 + $0x370] sm:$0xff]
  %v122 = vld [vmem:[%s0 + $0x378] sm:$0xff]
  %v123 = vld [vmem:[%s0 + $0x380] sm:$0xff]
  %v124 = vld [vmem:[%s0 + $0x388] sm:$0xff]
  %v125 = vld [vmem:[%s0 + $0x390] sm:$0xff]
  %v126 = vld [vmem:[%s0 + $0x398] sm:$0xff]
  %v127 = vld [vmem:[%s0 + $0x3a0] sm:$0xff]
  %v128 = vld [vmem:[%s0 + $0x3a8] sm:$0xff]
  %v129 = vld [vmem:[%s0 + $0x3b0] sm:$0xff]
  %v130 = vld [vmem:[%s0 + $0x3b8] sm:$0xff]
  %v131 = vld [vmem:[%s0 + $0x3c0] sm:$0xff]
  %v132 = vld [vmem:[%s0 + $0x3c8] sm:$0xff]
  %v133 = vld [vmem:[%s0 + $0x3d0] sm:$0xff]
  %v134 = vld [vmem:[%s0 + $0x3d8] sm:$0xff]
  %v135 = vld [vmem:[%s0 + $0x3e0] sm:$0xff]
  %v136 = vld [vmem:[%s0 + $0x3e8] sm:$0xff]
  %v137 = vld [vmem:[%s0 + $0x3f0] sm:$0xff]
  %v138 = vld [vmem:[%s0 + $0x3f8] sm:$0xff]
  %v139 = vld [vmem:[%s0 + $0x400] sm:$0xff]
  %v140 = vld [vmem:[%s0 + $0x408] sm:$0xff]
  %v141 = vld [vmem:[%s0 + $0x410] sm:$0xff]
  %v142 = vld [vmem:[%s0 + $0x418] sm:$0xff]
  %v143 = vld [vmem:[%s0 + $0x420] sm:$0xff]
  %v144 = vld [vmem:[%s0 + $0x428] sm:$0xff]
  %v145 = vld [vmem:[%s0 + $0x430] sm:$0xff]
  %v146 = vld [vmem:[%s0 + $0x438] sm:$0xff]
  %v147 = vld [vmem:[%s0 + $0x440] sm:$0xff]
  %v148 = vld [vmem:[%s0 + $0x448] sm:$0xff]
  %v149 = vld [vmem:[%s0 + $0x450] sm:$0xff]
  %v150 = vld [vmem:[%s0 + $0x458] sm:$0xff]
  %v151 = vld [vmem:[%s0 + $0x460] sm:$0xff]
  %v152 = vld [vmem:[%s0 + $0x468] sm:$0xff]
  %v153 = vld [vmem:[%s0 + $0x470] sm:$0xff]
  %v154 = vld [vmem:[%s0 + $0x478] sm:$0xff]
  %v155 = vld [vmem:[%s0 + $0x480] sm:$0xff]
  %v156 = vld [vmem:[%s0 + $0x488] sm:$0xff]
  %v157 = vld [vmem:[%s0 + $0x490] sm:$0xff]
  %v158 = vld [vmem:[%s0 + $0x498] sm:$0xff]
  %v159 = vld [vmem:[%s0 + $0x4a0] sm:$0xff]
  %v160 = vld [vmem:[%s0 + $0x4a8] sm:$0xff]
  %v161 = vld [vmem:[%s0 + $0x4b0] sm:$0xff]
  %v162 = vld [vmem:[%s0 + $0x4b8] sm:$0xff]
  %v163 = vld [vmem:[%s0 + $0x4c0] sm:$0xff]
  %v164 = vld [vmem:[%s0 + $0x4c8] sm:$0xff]
  %v165 = vld [vmem:[%s0 + $0x4d0] sm:$0xff]
  %v166 = vld [vmem:[%s0 + $0x4d8] sm:$0xff]
  %v167 = vld [vmem:[%s0 + $0x4e0] sm:$0xff]
  %v168 = vld [vmem:[%s0 + $0x4e8] sm:$0xff]
  %v169 = vld [vmem:[%s0 + $0x4f0] sm:$0xff]
  %v170 = vld [vmem:[%s0 + $0x4f8] sm:$0xff]
  %v171 = vld [vmem:[%s0 + $0x500] sm:$0xff]
  %v172 = vld [vmem:[%s0 + $0x508] sm:$0xff]
  %v173 = vld [vmem:[%s0 + $0x510] sm:$0xff]
  %v174 = vld [vmem:[%s0 + $0x518] sm:$0xff]
  %v175 = vld [vmem:[%s0 + $0x520] sm:$0xff]
  %v176 = vld [vmem:[%s0 + $0x528] sm:$0xff]
  %v177 = vld [vmem:[%s0 + $0x530] sm:$0xff]
  %v178 = vld [vmem:[%s0 + $0x538] sm:$0xff]
  %v179 = vld [vmem:[%s0 + $0x540] sm:$0xff]
  %v180 = vld [vmem:[%s0 + $0x548] sm:$0xff]
  %v181 = vld [vmem:[%s0 + $0x550] sm:$0xff]
  %v182 = vld [vmem:[%s0 + $0x558] sm:$0xff]
  %v183 = vld [vmem:[%s0 + $0x560] sm:$0xff]
  %v184 = vld [vmem:[%s0 + $0x568] sm:$0xff]
  %v185 = vld [vmem:[%s0 + $0x570] sm:$0xff]
  %v186 = vld [vmem:[%s0 + $0x578] sm:$0xff]
  %v187 = vld [vmem:[%s0 + $0x580] sm:$0xff]
  %v188 = vld [vmem:[%s0 + $0x588] sm:$0xff]
  %v189 = vld [vmem:[%s0 + $0x590] sm:$0xff]
  %v190 = vld [vmem:[%s0 + $0x598] sm:$0xff]
  %v191 = vld [vmem:[%s0 + $0x5a0] sm:$0xff]
  %v192 = vld [vmem:[%s0 + $0x5a8] sm:$0xff]
  %v193 = vld [vmem:[%s0 + $0x5b0] sm:$0xff]
  %v194 = vld [vmem:[%s0 + $0x5b8] sm:$0xff]
  %v195 = vld [vmem:[%s0 + $0x5c0] sm:$0xff]
  %v196 = vld [vmem:[%s0 + $0x5c8] sm:$0xff]
  %v197 = vld [vmem:[%s0 + $0x5d0] sm:$0xff]
  %v198 = vld [vmem:[%s0 + $0x5d8] sm:$0xff]
  %v199 = vld [vmem:[%s0 + $0x5e0] sm:$0xff]
  %v200 = vld [vmem:[%s0 + $0x5e8] sm:$0xff]
  %v201 = vld [vmem:[%s0 + $0x5f0] sm:$0xff]
  %v202 = vld [vmem:[%s0 + $0x5f8] sm:$0xff]
  %v203 = vld [vmem:[%s0 + $0x600] sm:$0xff]
  %v204 = vld [vmem:[%s0 + $0x608] sm:$0xff]
  %v205 = vld [vmem:[%s0 + $0x610] sm:$0xff]
  %v206 = vld [vmem:[%s0 + $0x618] sm:$0xff]
  %v207 = vld [vmem:[%s0 + $0x620] sm:$0xff]
  %v208 = vld [vmem:[%s0 + $0x628] sm:$0xff]
  %v209 = vld [vmem:[%s0 + $0x630] sm:$0xff]
  %v210 = vld [vmem:[%s0 + $0x638] sm:$0xff]
  %v211 = vld [vmem:[%s0 + $0x640] sm:$0xff]
  %v212 = vld [vmem:[%s0 + $0x648] sm:$0xff]
  %v213 = vld [vmem:[%s0 + $0x650] sm:$0xff]
  %v214 = vld [vmem:[%s0 + $0x658] sm:$0xff]
  %v215 = vld [vmem:[%s0 + $0x660] sm:$0xff]
  %v216 = vld [vmem:[%s0 + $0x668] sm:$0xff]
  %v217 = vld [vmem:[%s0 + $0x670] sm:$0xff]
  %v218 = vld [vmem:[%s0 + $0x678] sm:$0xff]
  %v219 = vld [vmem:[%s0 + $0x680] sm:$0xff]
  %v220 = vld [vmem:[%s0 + $0x688] sm:$0xff]
  %v221 = vld [vmem:[%s0 + $0x690] sm:$0xff]
  %v222 = vld [vmem:[%s0 + $0x698] sm:$0xff]
  %v223 = vld [vmem:[%s0 + $0x6a0] sm:$0xff]
  %v224 = vld [vmem:[%s0 + $0x6a8] sm:$0xff]
  %v225 = vld [vmem:[%s0 + $0x6b0] sm:$0xff]
  %v226 = vld [vmem:[%s0 + $0x6b8] sm:$0xff]
  %v227 = vld [vmem:[%s0 + $0x6c0] sm:$0xff]
  %v228 = vld [vmem:[%s0 + $0x6c8] sm:$0xff]
  %v229 = vld [vmem:[%s0 + $0x6d0] sm:$0xff]
  %v230 = vld [vmem:[%s0 + $0x6d8] sm:$0xff]
  %v231 = vld [vmem:[%s0 + $0x6e0] sm:$0xff]
  %v232 = vld [vmem:[%s0 + $0x6e8] sm:$0xff]
  %v233 = vld [vmem:[%s0 + $0x6f0] sm:$0xff]
  %v234 = vld [vmem:[%s0 + $0x6f8] sm:$0xff]
  %v235 = vld [vmem:[%s0 + $0x700] sm:$0xff]
  %v236 = vld [vmem:[%s0 + $0x708] sm:$0xff]
  %v237 = vld [vmem:[%s0 + $0x710] sm:$0xff]
  %v238 = vld [vmem:[%s0 + $0x718] sm:$0xff]
  %v239 = vld [vmem:[%s0 + $0x720] sm:$0xff]
  %v240 = vld [vmem:[%s0 + $0x728] sm:$0xff]
  %v241 = vld [vmem:[%s0 + $0x730] sm:$0xff]
  %v242 = vld [vmem:[%s0 + $0x738] sm:$0xff]
  %v243 = vld [vmem:[%s0 + $0x740] sm:$0xff]
  %v244 = vld [vmem:[%s0 + $0x748] sm:$0xff]
  %v245 = vld [vmem:[%s0 + $0x750] sm:$0xff]
  %v246 = vld [vmem:[%s0 + $0x758] sm:$0xff]
  %v247 = vld [vmem:[%s0 + $0x760] sm:$0xff]
  %v248 = vld [vmem:[%s0 + $0x768] sm:$0xff]
  %v249 = vld [vmem:[%s0 + $0x770] sm:$0xff]
  %v250 = vld [vmem:[%s0 + $0x778] sm:$0xff]
  %v251 = vld [vmem:[%s0 + $0x780] sm:$0xff]
  %v252 = vld [vmem:[%s0 + $0x788] sm:$0xff]
  %v253 = vld [vmem:[%s0 + $0x790] sm:$0xff]
  %v254 = vld [vmem:[%s0 + $0x798] sm:$0xff]
  %v255 = vld [vmem:[%s0 + $0x7a0] sm:$0xff]
  %v256 = vld [vmem:[%s0 + $0x7a8] sm:$0xff]
  %v257 = vld [vmem:[%s0 + $0x7b0] sm:$0xff]
  %v258 = vld [vmem:[%s0 + $0x7b8] sm:$0xff]
  %v259 = vld [vmem:[%s0 + $0x7c0] sm:$0xff]
  %v260 = vld [vmem:[%s0 + $0x7c8] sm:$0xff]
  %v261 = vld [vmem:[%s0 + $0x7d0] sm:$0xff]
  %v262 = vld [vmem:[%s0 + $0x7d8] sm:$0xff]
  %v263 = vld [vmem:[%s0 + $0x7e0] sm:$0xff]
  %v264 = vld [vmem:[%s0 + $0x7e8] sm:$0xff]
  %v265 = vld [vmem:[%s0 + $0x7f0] sm:$0xff]
  %v266 = vld [vmem:[%s0 + $0x7f8] sm:$0xff]
  %v267 = vld [vmem:[%s1] sm:$0xff]
  %v268 = vld [vmem:[%s1 + $0x8] sm:$0xff]
  %v269 = vld [vmem:[%s1 + $0x10] sm:$0xff]
  %v270 = vld [vmem:[%s1 + $0x18] sm:$0xff]
  %v271 = vld [vmem:[%s1 + $0x20] sm:$0xff]
  %v272 = vld [vmem:[%s1 + $0x28] sm:$0xff]
  %v273 = vld [vmem:[%s1 + $0x30] sm:$0xff]
  %v274 = vld [vmem:[%s1 + $0x38] sm:$0xff]
  %v275 = vld [vmem:[%s1 + $0x40] sm:$0xff]
  %v276 = vld [vmem:[%s1 + $0x48] sm:$0xff]
  %v277 = vld [vmem:[%s1 + $0x50] sm:$0xff]
  %v278 = vld [vmem:[%s1 + $0x58] sm:$0xff]
  %v279 = vld [vmem:[%s1 + $0x60] sm:$0xff]
  %v280 = vld [vmem:[%s1 + $0x68] sm:$0xff]
  %v281 = vld [vmem:[%s1 + $0x70] sm:$0xff]
  %v282 = vld [vmem:[%s1 + $0x78] sm:$0xff]
  %v283 = vld [vmem:[%s1 + $0x80] sm:$0xff]
  %v284 = vld [vmem:[%s1 + $0x88] sm:$0xff]
  %v285 = vld [vmem:[%s1 + $0x90] sm:$0xff]
  %v286 = vld [vmem:[%s1 + $0x98] sm:$0xff]
  %v287 = vld [vmem:[%s1 + $0xa0] sm:$0xff]
  %v288 = vld [vmem:[%s1 + $0xa8] sm:$0xff]
  %v289 = vld [vmem:[%s1 + $0xb0] sm:$0xff]
  %v290 = vld [vmem:[%s1 + $0xb8] sm:$0xff]
  %v291 = vld [vmem:[%s1 + $0xc0] sm:$0xff]
  %v292 = vld [vmem:[%s1 + $0xc8] sm:$0xff]
  %v293 = vld [vmem:[%s1 + $0xd0] sm:$0xff]
  %v294 = vld [vmem:[%s1 + $0xd8] sm:$0xff]
  %v295 = vld [vmem:[%s1 + $0xe0] sm:$0xff]
  %v296 = vld [vmem:[%s1 + $0xe8] sm:$0xff]
  %v297 = vld [vmem:[%s1 + $0xf0] sm:$0xff]
  %v298 = vld [vmem:[%s1 + $0xf8] sm:$0xff]
  %v299 = vld [vmem:[%s1 + $0x100] sm:$0xff]
  %v300 = vld [vmem:[%s1 + $0x108] sm:$0xff]
  %v301 = vld [vmem:[%s1 + $0x110] sm:$0xff]
  %v302 = vld [vmem:[%s1 + $0x118] sm:$0xff]
  %v303 = vld [vmem:[%s1 + $0x120] sm:$0xff]
  %v304 = vld [vmem:[%s1 + $0x128] sm:$0xff]
  %v305 = vld [vmem:[%s1 + $0x130] sm:$0xff]
  %v306 = vld [vmem:[%s1 + $0x138] sm:$0xff]
  %v307 = vld [vmem:[%s1 + $0x140] sm:$0xff]
  %v308 = vld [vmem:[%s1 + $0x148] sm:$0xff]
  %v309 = vld [vmem:[%s1 + $0x150] sm:$0xff]
  %v310 = vld [vmem:[%s1 + $0x158] sm:$0xff]
  %v311 = vld [vmem:[%s1 + $0x160] sm:$0xff]
  %v312 = vld [vmem:[%s1 + $0x168] sm:$0xff]
  %v313 = vld [vmem:[%s1 + $0x170] sm:$0xff]
  %v314 = vld [vmem:[%s1 + $0x178] sm:$0xff]
  %v315 = vld [vmem:[%s1 + $0x180] sm:$0xff]
  %v316 = vld [vmem:[%s1 + $0x188] sm:$0xff]
  %v317 = vld [vmem:[%s1 + $0x190] sm:$0xff]
  %v318 = vld [vmem:[%s1 + $0x198] sm:$0xff]
  %v319 = vld [vmem:[%s1 + $0x1a0] sm:$0xff]
  %v320 = vld [vmem:[%s1 + $0x1a8] sm:$0xff]
  %v321 = vld [vmem:[%s1 + $0x1b0] sm:$0xff]
  %v322 = vld [vmem:[%s1 + $0x1b8] sm:$0xff]
  %v323 = vld [vmem:[%s1 + $0x1c0] sm:$0xff]
  %v324 = vld [vmem:[%s1 + $0x1c8] sm:$0xff]
  %v325 = vld [vmem:[%s1 + $0x1d0] sm:$0xff]
  %v326 = vld [vmem:[%s1 + $0x1d8] sm:$0xff]
  %v327 = vld [vmem:[%s1 + $0x1e0] sm:$0xff]
  %v328 = vld [vmem:[%s1 + $0x1e8] sm:$0xff]
  %v329 = vld [vmem:[%s1 + $0x1f0] sm:$0xff]
  %v330 = vld [vmem:[%s1 + $0x1f8] sm:$0xff]
  %v331 = vld [vmem:[%s1 + $0x200] sm:$0xff]
  %v332 = vld [vmem:[%s1 + $0x208] sm:$0xff]
  %v333 = vld [vmem:[%s1 + $0x210] sm:$0xff]
  %v334 = vld [vmem:[%s1 + $0x218] sm:$0xff]
  %v335 = vld [vmem:[%s1 + $0x220] sm:$0xff]
  %v336 = vld [vmem:[%s1 + $0x228] sm:$0xff]
  %v337 = vld [vmem:[%s1 + $0x230] sm:$0xff]
  %v338 = vld [vmem:[%s1 + $0x238] sm:$0xff]
  %v339 = vld [vmem:[%s1 + $0x240] sm:$0xff]
  %v340 = vld [vmem:[%s1 + $0x248] sm:$0xff]
  %v341 = vld [vmem:[%s1 + $0x250] sm:$0xff]
  %v342 = vld [vmem:[%s1 + $0x258] sm:$0xff]
  %v343 = vld [vmem:[%s1 + $0x260] sm:$0xff]
  %v344 = vld [vmem:[%s1 + $0x268] sm:$0xff]
  %v345 = vld [vmem:[%s1 + $0x270] sm:$0xff]
  %v346 = vld [vmem:[%s1 + $0x278] sm:$0xff]
  %v347 = vld [vmem:[%s1 + $0x280] sm:$0xff]
  %v348 = vld [vmem:[%s1 + $0x288] sm:$0xff]
  %v349 = vld [vmem:[%s1 + $0x290] sm:$0xff]
  %v350 = vld [vmem:[%s1 + $0x298] sm:$0xff]
  %v351 = vld [vmem:[%s1 + $0x2a0] sm:$0xff]
  %v352 = vld [vmem:[%s1 + $0x2a8] sm:$0xff]
  %v353 = vld [vmem:[%s1 + $0x2b0] sm:$0xff]
  %v354 = vld [vmem:[%s1 + $0x2b8] sm:$0xff]
  %v355 = vld [vmem:[%s1 + $0x2c0] sm:$0xff]
  %v356 = vld [vmem:[%s1 + $0x2c8] sm:$0xff]
  %v357 = vld [vmem:[%s1 + $0x2d0] sm:$0xff]
  %v358 = vld [vmem:[%s1 + $0x2d8] sm:$0xff]
  %v359 = vld [vmem:[%s1 + $0x2e0] sm:$0xff]
  %v360 = vld [vmem:[%s1 + $0x2e8] sm:$0xff]
  %v361 = vld [vmem:[%s1 + $0x2f0] sm:$0xff]
  %v362 = vld [vmem:[%s1 + $0x2f8] sm:$0xff]
  %v363 = vld [vmem:[%s1 + $0x300] sm:$0xff]
  %v364 = vld [vmem:[%s1 + $0x308] sm:$0xff]
  %v365 = vld [vmem:[%s1 + $0x310] sm:$0xff]
  %v366 = vld [vmem:[%s1 + $0x318] sm:$0xff]
  %v367 = vld [vmem:[%s1 + $0x320] sm:$0xff]
  %v368 = vld [vmem:[%s1 + $0x328] sm:$0xff]
  %v369 = vld [vmem:[%s1 + $0x330] sm:$0xff]
  %v370 = vld [vmem:[%s1 + $0x338] sm:$0xff]
  %v371 = vld [vmem:[%s1 + $0x340] sm:$0xff]
  %v372 = vld [vmem:[%s1 + $0x348] sm:$0xff]
  %v373 = vld [vmem:[%s1 + $0x350] sm:$0xff]
  %v374 = vld [vmem:[%s1 + $0x358] sm:$0xff]
  %v375 = vld [vmem:[%s1 + $0x360] sm:$0xff]
  %v376 = vld [vmem:[%s1 + $0x368] sm:$0xff]
  %v377 = vld [vmem:[%s1 + $0x370] sm:$0xff]
  %v378 = vld [vmem:[%s1 + $0x378] sm:$0xff]
  %v379 = vld [vmem:[%s1 + $0x380] sm:$0xff]
  %v380 = vld [vmem:[%s1 + $0x388] sm:$0xff]
  %v381 = vld [vmem:[%s1 + $0x390] sm:$0xff]
  %v382 = vld [vmem:[%s1 + $0x398] sm:$0xff]
  %v383 = vld [vmem:[%s1 + $0x3a0] sm:$0xff]
  %v384 = vld [vmem:[%s1 + $0x3a8] sm:$0xff]
  %v385 = vld [vmem:[%s1 + $0x3b0] sm:$0xff]
  %v386 = vld [vmem:[%s1 + $0x3b8] sm:$0xff]
  %v387 = vld [vmem:[%s1 + $0x3c0] sm:$0xff]
  %v388 = vld [vmem:[%s1 + $0x3c8] sm:$0xff]
  %v389 = vld [vmem:[%s1 + $0x3d0] sm:$0xff]
  %v390 = vld [vmem:[%s1 + $0x3d8] sm:$0xff]
  %v391 = vld [vmem:[%s1 + $0x3e0] sm:$0xff]
  %v392 = vld [vmem:[%s1 + $0x3e8] sm:$0xff]
  %v393 = vld [vmem:[%s1 + $0x3f0] sm:$0xff]
  %v394 = vld [vmem:[%s1 + $0x3f8] sm:$0xff]
  %v395 = vld [vmem:[%s1 + $0x400] sm:$0xff]
  %v396 = vld [vmem:[%s1 + $0x408] sm:$0xff]
  %v397 = vld [vmem:[%s1 + $0x410] sm:$0xff]
  %v398 = vld [vmem:[%s1 + $0x418] sm:$0xff]
  %v399 = vld [vmem:[%s1 + $0x420] sm:$0xff]
  %v400 = vld [vmem:[%s1 + $0x428] sm:$0xff]
  %v401 = vld [vmem:[%s1 + $0x430] sm:$0xff]
  %v402 = vld [vmem:[%s1 + $0x438] sm:$0xff]
  %v403 = vld [vmem:[%s1 + $0x440] sm:$0xff]
  %v404 = vld [vmem:[%s1 + $0x448] sm:$0xff]
  %v405 = vld [vmem:[%s1 + $0x450] sm:$0xff]
  %v406 = vld [vmem:[%s1 + $0x458] sm:$0xff]
  %v407 = vld [vmem:[%s1 + $0x460] sm:$0xff]
  %v408 = vld [vmem:[%s1 + $0x468] sm:$0xff]
  %v409 = vld [vmem:[%s1 + $0x470] sm:$0xff]
  %v410 = vld [vmem:[%s1 + $0x478] sm:$0xff]
  %v411 = vld [vmem:[%s1 + $0x480] sm:$0xff]
  %v412 = vld [vmem:[%s1 + $0x488] sm:$0xff]
  %v413 = vld [vmem:[%s1 + $0x490] sm:$0xff]
  %v414 = vld [vmem:[%s1 + $0x498] sm:$0xff]
  %v415 = vld [vmem:[%s1 + $0x4a0] sm:$0xff]
  %v416 = vld [vmem:[%s1 + $0x4a8] sm:$0xff]
  %v417 = vld [vmem:[%s1 + $0x4b0] sm:$0xff]
  %v418 = vld [vmem:[%s1 + $0x4b8] sm:$0xff]
  %v419 = vld [vmem:[%s1 + $0x4c0] sm:$0xff]
  %v420 = vld [vmem:[%s1 + $0x4c8] sm:$0xff]
  %v421 = vld [vmem:[%s1 + $0x4d0] sm:$0xff]
  %v422 = vld [vmem:[%s1 + $0x4d8] sm:$0xff]
  %v423 = vld [vmem:[%s1 + $0x4e0] sm:$0xff]
  %v424 = vld [vmem:[%s1 + $0x4e8] sm:$0xff]
  %v425 = vld [vmem:[%s1 + $0x4f0] sm:$0xff]
  %v426 = vld [vmem:[%s1 + $0x4f8] sm:$0xff]
  %v427 = vld [vmem:[%s1 + $0x500] sm:$0xff]
  %v428 = vld [vmem:[%s1 + $0x508] sm:$0xff]
  %v429 = vld [vmem:[%s1 + $0x510] sm:$0xff]
  %v430 = vld [vmem:[%s1 + $0x518] sm:$0xff]
  %v431 = vld [vmem:[%s1 + $0x520] sm:$0xff]
  %v432 = vld [vmem:[%s1 + $0x528] sm:$0xff]
  %v433 = vld [vmem:[%s1 + $0x530] sm:$0xff]
  %v434 = vld [vmem:[%s1 + $0x538] sm:$0xff]
  %v435 = vld [vmem:[%s1 + $0x540] sm:$0xff]
  %v436 = vld [vmem:[%s1 + $0x548] sm:$0xff]
  %v437 = vld [vmem:[%s1 + $0x550] sm:$0xff]
  %v438 = vld [vmem:[%s1 + $0x558] sm:$0xff]
  %v439 = vld [vmem:[%s1 + $0x560] sm:$0xff]
  %v440 = vld [vmem:[%s1 + $0x568] sm:$0xff]
  %v441 = vld [vmem:[%s1 + $0x570] sm:$0xff]
  %v442 = vld [vmem:[%s1 + $0x578] sm:$0xff]
  %v443 = vld [vmem:[%s1 + $0x580] sm:$0xff]
  %v444 = vld [vmem:[%s1 + $0x588] sm:$0xff]
  %v445 = vld [vmem:[%s1 + $0x590] sm:$0xff]
  %v446 = vld [vmem:[%s1 + $0x598] sm:$0xff]
  %v447 = vld [vmem:[%s1 + $0x5a0] sm:$0xff]
  %v448 = vld [vmem:[%s1 + $0x5a8] sm:$0xff]
  %v449 = vld [vmem:[%s1 + $0x5b0] sm:$0xff]
  %v450 = vld [vmem:[%s1 + $0x5b8] sm:$0xff]
  %v451 = vld [vmem:[%s1 + $0x5c0] sm:$0xff]
  %v452 = vld [vmem:[%s1 + $0x5c8] sm:$0xff]
  %v453 = vld [vmem:[%s1 + $0x5d0] sm:$0xff]
  %v454 = vld [vmem:[%s1 + $0x5d8] sm:$0xff]
  %v455 = vld [vmem:[%s1 + $0x5e0] sm:$0xff]
  %v456 = vld [vmem:[%s1 + $0x5e8] sm:$0xff]
  %v457 = vld [vmem:[%s1 + $0x5f0] sm:$0xff]
  %v458 = vld [vmem:[%s1 + $0x5f8] sm:$0xff]
  %v459 = vld [vmem:[%s1 + $0x600] sm:$0xff]
  %v460 = vld [vmem:[%s1 + $0x608] sm:$0xff]
  %v461 = vld [vmem:[%s1 + $0x610] sm:$0xff]
  %v462 = vld [vmem:[%s1 + $0x618] sm:$0xff]
  %v463 = vld [vmem:[%s1 + $0x620] sm:$0xff]
  %v464 = vld [vmem:[%s1 + $0x628] sm:$0xff]
  %v465 = vld [vmem:[%s1 + $0x630] sm:$0xff]
  %v466 = vld [vmem:[%s1 + $0x638] sm:$0xff]
  %v467 = vld [vmem:[%s1 + $0x640] sm:$0xff]
  %v468 = vld [vmem:[%s1 + $0x648] sm:$0xff]
  %v469 = vld [vmem:[%s1 + $0x650] sm:$0xff]
  %v470 = vld [vmem:[%s1 + $0x658] sm:$0xff]
  %v471 = vld [vmem:[%s1 + $0x660] sm:$0xff]
  %v472 = vld [vmem:[%s1 + $0x668] sm:$0xff]
  %v473 = vld [vmem:[%s1 + $0x670] sm:$0xff]
  %v474 = vld [vmem:[%s1 + $0x678] sm:$0xff]
  %v475 = vld [vmem:[%s1 + $0x680] sm:$0xff]
  %v476 = vld [vmem:[%s1 + $0x688] sm:$0xff]
  %v477 = vld [vmem:[%s1 + $0x690] sm:$0xff]
  %v478 = vld [vmem:[%s1 + $0x698] sm:$0xff]
  %v479 = vld [vmem:[%s1 + $0x6a0] sm:$0xff]
  %v480 = vld [vmem:[%s1 + $0x6a8] sm:$0xff]
  %v481 = vld [vmem:[%s1 + $0x6b0] sm:$0xff]
  %v482 = vld [vmem:[%s1 + $0x6b8] sm:$0xff]
  %v483 = vld [vmem:[%s1 + $0x6c0] sm:$0xff]
  %v484 = vld [vmem:[%s1 + $0x6c8] sm:$0xff]
  %v485 = vld [vmem:[%s1 + $0x6d0] sm:$0xff]
  %v486 = vld [vmem:[%s1 + $0x6d8] sm:$0xff]
  %v487 = vld [vmem:[%s1 + $0x6e0] sm:$0xff]
  %v488 = vld [vmem:[%s1 + $0x6e8] sm:$0xff]
  %v489 = vld [vmem:[%s1 + $0x6f0] sm:$0xff]
  %v490 = vld [vmem:[%s1 + $0x6f8] sm:$0xff]
  %v491 = vld [vmem:[%s1 + $0x700] sm:$0xff]
  %v492 = vld [vmem:[%s1 + $0x708] sm:$0xff]
  %v493 = vld [vmem:[%s1 + $0x710] sm:$0xff]
  %v494 = vld [vmem:[%s1 + $0x718] sm:$0xff]
  %v495 = vld [vmem:[%s1 + $0x720] sm:$0xff]
  %v496 = vld [vmem:[%s1 + $0x728] sm:$0xff]
  %v497 = vld [vmem:[%s1 + $0x730] sm:$0xff]
  %v498 = vld [vmem:[%s1 + $0x738] sm:$0xff]
  %v499 = vld [vmem:[%s1 + $0x740] sm:$0xff]
  %v500 = vld [vmem:[%s1 + $0x748] sm:$0xff]
  %v501 = vld [vmem:[%s1 + $0x750] sm:$0xff]
  %v502 = vld [vmem:[%s1 + $0x758] sm:$0xff]
  %v503 = vld [vmem:[%s1 + $0x760] sm:$0xff]
  %v504 = vld [vmem:[%s1 + $0x768] sm:$0xff]
  %v505 = vld [vmem:[%s1 + $0x770] sm:$0xff]
  %v506 = vld [vmem:[%s1 + $0x778] sm:$0xff]
  %v507 = vld [vmem:[%s1 + $0x780] sm:$0xff]
  %v508 = vld [vmem:[%s1 + $0x788] sm:$0xff]
  %v509 = vld [vmem:[%s1 + $0x790] sm:$0xff]
  %v510 = vld [vmem:[%s1 + $0x798] sm:$0xff]
  %v511 = vld [vmem:[%s1 + $0x7a0] sm:$0xff]
  %v512 = vld [vmem:[%s1 + $0x7a8] sm:$0xff]
  %v513 = vld [vmem:[%s1 + $0x7b0] sm:$0xff]
  %v514 = vld [vmem:[%s1 + $0x7b8] sm:$0xff]
  %v515 = vld [vmem:[%s1 + $0x7c0] sm:$0xff]
  %v516 = vld [vmem:[%s1 + $0x7c8] sm:$0xff]
  %v517 = vld [vmem:[%s1 + $0x7d0] sm:$0xff]
  %v518 = vld [vmem:[%s1 + $0x7d8] sm:$0xff]
  %v519 = vld [vmem:[%s1 + $0x7e0] sm:$0xff]
  %v520 = vld [vmem:[%s1 + $0x7e8] sm:$0xff]
  %v521 = vld [vmem:[%s1 + $0x7f0] sm:$0xff]
  %v522 = vld [vmem:[%s1 + $0x7f8] sm:$0xff]
  %524 = vset.pattern.permute.xlu0 0
  %525 = vperm.xlu0 %524, %v267
  %v526 = vpop.permute.xlu0 %525
  %529 = vset.pattern.permute.xlu0 0
  %530 = vperm.xlu0 %529, %v268
  %v531 = vpop.permute.xlu0 %530
  %534 = vset.pattern.permute.xlu0 0
  %535 = vperm.xlu0 %534, %v269
  %v536 = vpop.permute.xlu0 %535
  %539 = vset.pattern.permute.xlu0 0
  %540 = vperm.xlu0 %539, %v270
  %v541 = vpop.permute.xlu0 %540
  %544 = vset.pattern.permute.xlu0 0
  %545 = vperm.xlu0 %544, %v271
  %v546 = vpop.permute.xlu0 %545
  %549 = vset.pattern.permute.xlu0 0
  %550 = vperm.xlu0 %549, %v272
  %v551 = vpop.permute.xlu0 %550
  %554 = vset.pattern.permute.xlu0 0
  %555 = vperm.xlu0 %554, %v273
  %v556 = vpop.permute.xlu0 %555
  %559 = vset.pattern.permute.xlu0 0
  %560 = vperm.xlu0 %559, %v274
  %v561 = vpop.permute.xlu0 %560
  %564 = vset.pattern.permute.xlu0 0
  %565 = vperm.xlu0 %564, %v275
  %v566 = vpop.permute.xlu0 %565
  %569 = vset.pattern.permute.xlu0 0
  %570 = vperm.xlu0 %569, %v276
  %v571 = vpop.permute.xlu0 %570
  %574 = vset.pattern.permute.xlu0 0
  %575 = vperm.xlu0 %574, %v277
  %v576 = vpop.permute.xlu0 %575
  %579 = vset.pattern.permute.xlu0 0
  %580 = vperm.xlu0 %579, %v278
  %v581 = vpop.permute.xlu0 %580
  %584 = vset.pattern.permute.xlu0 0
  %585 = vperm.xlu0 %584, %v279
  %v586 = vpop.permute.xlu0 %585
  %589 = vset.pattern.permute.xlu0 0
  %590 = vperm.xlu0 %589, %v280
  %v591 = vpop.permute.xlu0 %590
  %594 = vset.pattern.permute.xlu0 0
  %595 = vperm.xlu0 %594, %v281
  %v596 = vpop.permute.xlu0 %595
  %599 = vset.pattern.permute.xlu0 0
  %600 = vperm.xlu0 %599, %v282
  %v601 = vpop.permute.xlu0 %600
  %604 = vset.pattern.permute.xlu0 0
  %605 = vperm.xlu0 %604, %v283
  %v606 = vpop.permute.xlu0 %605
  %609 = vset.pattern.permute.xlu0 0
  %610 = vperm.xlu0 %609, %v284
  %v611 = vpop.permute.xlu0 %610
  %614 = vset.pattern.permute.xlu0 0
  %615 = vperm.xlu0 %614, %v285
  %v616 = vpop.permute.xlu0 %615
  %619 = vset.pattern.permute.xlu0 0
  %620 = vperm.xlu0 %619, %v286
  %v621 = vpop.permute.xlu0 %620
  %624 = vset.pattern.permute.xlu0 0
  %625 = vperm.xlu0 %624, %v287
  %v626 = vpop.permute.xlu0 %625
  %629 = vset.pattern.permute.xlu0 0
  %630 = vperm.xlu0 %629, %v288
  %v631 = vpop.permute.xlu0 %630
  %634 = vset.pattern.permute.xlu0 0
  %635 = vperm.xlu0 %634, %v289
  %v636 = vpop.permute.xlu0 %635
  %639 = vset.pattern.permute.xlu0 0
  %640 = vperm.xlu0 %639, %v290
  %v641 = vpop.permute.xlu0 %640
  %644 = vset.pattern.permute.xlu0 0
  %645 = vperm.xlu0 %644, %v291
  %v646 = vpop.permute.xlu0 %645
  %649 = vset.pattern.permute.xlu0 0
  %650 = vperm.xlu0 %649, %v292
  %v651 = vpop.permute.xlu0 %650
  %654 = vset.pattern.permute.xlu0 0
  %655 = vperm.xlu0 %654, %v293
  %v656 = vpop.permute.xlu0 %655
  %659 = vset.pattern.permute.xlu0 0
  %660 = vperm.xlu0 %659, %v294
  %v661 = vpop.permute.xlu0 %660
  %664 = vset.pattern.permute.xlu0 0
  %665 = vperm.xlu0 %664, %v295
  %v666 = vpop.permute.xlu0 %665
  %669 = vset.pattern.permute.xlu0 0
  %670 = vperm.xlu0 %669, %v296
  %v671 = vpop.permute.xlu0 %670
  %674 = vset.pattern.permute.xlu0 0
  %675 = vperm.xlu0 %674, %v297
  %v676 = vpop.permute.xlu0 %675
  %679 = vset.pattern.permute.xlu0 0
  %680 = vperm.xlu0 %679, %v298
  %v681 = vpop.permute.xlu0 %680
  %684 = vset.pattern.permute.xlu0 0
  %685 = vperm.xlu0 %684, %v299
  %v686 = vpop.permute.xlu0 %685
  %689 = vset.pattern.permute.xlu0 0
  %690 = vperm.xlu0 %689, %v300
  %v691 = vpop.permute.xlu0 %690
  %694 = vset.pattern.permute.xlu0 0
  %695 = vperm.xlu0 %694, %v301
  %v696 = vpop.permute.xlu0 %695
  %699 = vset.pattern.permute.xlu0 0
  %700 = vperm.xlu0 %699, %v302
  %v701 = vpop.permute.xlu0 %700
  %704 = vset.pattern.permute.xlu0 0
  %705 = vperm.xlu0 %704, %v303
  %v706 = vpop.permute.xlu0 %705
  %709 = vset.pattern.permute.xlu0 0
  %710 = vperm.xlu0 %709, %v304
  %v711 = vpop.permute.xlu0 %710
  %714 = vset.pattern.permute.xlu0 0
  %715 = vperm.xlu0 %714, %v305
  %v716 = vpop.permute.xlu0 %715
  %719 = vset.pattern.permute.xlu0 0
  %720 = vperm.xlu0 %719, %v306
  %v721 = vpop.permute.xlu0 %720
  %724 = vset.pattern.permute.xlu0 0
  %725 = vperm.xlu0 %724, %v307
  %v726 = vpop.permute.xlu0 %725
  %729 = vset.pattern.permute.xlu0 0
  %730 = vperm.xlu0 %729, %v308
  %v731 = vpop.permute.xlu0 %730
  %734 = vset.pattern.permute.xlu0 0
  %735 = vperm.xlu0 %734, %v309
  %v736 = vpop.permute.xlu0 %735
  %739 = vset.pattern.permute.xlu0 0
  %740 = vperm.xlu0 %739, %v310
  %v741 = vpop.permute.xlu0 %740
  %744 = vset.pattern.permute.xlu0 0
  %745 = vperm.xlu0 %744, %v311
  %v746 = vpop.permute.xlu0 %745
  %749 = vset.pattern.permute.xlu0 0
  %750 = vperm.xlu0 %749, %v312
  %v751 = vpop.permute.xlu0 %750
  %754 = vset.pattern.permute.xlu0 0
  %755 = vperm.xlu0 %754, %v313
  %v756 = vpop.permute.xlu0 %755
  %759 = vset.pattern.permute.xlu0 0
  %760 = vperm.xlu0 %759, %v314
  %v761 = vpop.permute.xlu0 %760
  %764 = vset.pattern.permute.xlu0 0
  %765 = vperm.xlu0 %764, %v315
  %v766 = vpop.permute.xlu0 %765
  %769 = vset.pattern.permute.xlu0 0
  %770 = vperm.xlu0 %769, %v316
  %v771 = vpop.permute.xlu0 %770
  %774 = vset.pattern.permute.xlu0 0
  %775 = vperm.xlu0 %774, %v317
  %v776 = vpop.permute.xlu0 %775
  %779 = vset.pattern.permute.xlu0 0
  %780 = vperm.xlu0 %779, %v318
  %v781 = vpop.permute.xlu0 %780
  %784 = vset.pattern.permute.xlu0 0
  %785 = vperm.xlu0 %784, %v319
  %v786 = vpop.permute.xlu0 %785
  %789 = vset.pattern.permute.xlu0 0
  %790 = vperm.xlu0 %789, %v320
  %v791 = vpop.permute.xlu0 %790
  %794 = vset.pattern.permute.xlu0 0
  %795 = vperm.xlu0 %794, %v321
  %v796 = vpop.permute.xlu0 %795
  %799 = vset.pattern.permute.xlu0 0
  %800 = vperm.xlu0 %799, %v322
  %v801 = vpop.permute.xlu0 %800
  %804 = vset.pattern.permute.xlu0 0
  %805 = vperm.xlu0 %804, %v323
  %v806 = vpop.permute.xlu0 %805
  %809 = vset.pattern.permute.xlu0 0
  %810 = vperm.xlu0 %809, %v324
  %v811 = vpop.permute.xlu0 %810
  %814 = vset.pattern.permute.xlu0 0
  %815 = vperm.xlu0 %814, %v325
  %v816 = vpop.permute.xlu0 %815
  %819 = vset.pattern.permute.xlu0 0
  %820 = vperm.xlu0 %819, %v326
  %v821 = vpop.permute.xlu0 %820
  %824 = vset.pattern.permute.xlu0 0
  %825 = vperm.xlu0 %824, %v327
  %v826 = vpop.permute.xlu0 %825
  %829 = vset.pattern.permute.xlu0 0
  %830 = vperm.xlu0 %829, %v328
  %v831 = vpop.permute.xlu0 %830
  %834 = vset.pattern.permute.xlu0 0
  %835 = vperm.xlu0 %834, %v329
  %v836 = vpop.permute.xlu0 %835
  %839 = vset.pattern.permute.xlu0 0
  %840 = vperm.xlu0 %839, %v330
  %v841 = vpop.permute.xlu0 %840
  %844 = vset.pattern.permute.xlu0 0
  %845 = vperm.xlu0 %844, %v331
  %v846 = vpop.permute.xlu0 %845
  %849 = vset.pattern.permute.xlu0 0
  %850 = vperm.xlu0 %849, %v332
  %v851 = vpop.permute.xlu0 %850
  %854 = vset.pattern.permute.xlu0 0
  %855 = vperm.xlu0 %854, %v333
  %v856 = vpop.permute.xlu0 %855
  %859 = vset.pattern.permute.xlu0 0
  %860 = vperm.xlu0 %859, %v334
  %v861 = vpop.permute.xlu0 %860
  %864 = vset.pattern.permute.xlu0 0
  %865 = vperm.xlu0 %864, %v335
  %v866 = vpop.permute.xlu0 %865
  %869 = vset.pattern.permute.xlu0 0
  %870 = vperm.xlu0 %869, %v336
  %v871 = vpop.permute.xlu0 %870
  %874 = vset.pattern.permute.xlu0 0
  %875 = vperm.xlu0 %874, %v337
  %v876 = vpop.permute.xlu0 %875
  %879 = vset.pattern.permute.xlu0 0
  %880 = vperm.xlu0 %879, %v338
  %v881 = vpop.permute.xlu0 %880
  %884 = vset.pattern.permute.xlu0 0
  %885 = vperm.xlu0 %884, %v339
  %v886 = vpop.permute.xlu0 %885
  %889 = vset.pattern.permute.xlu0 0
  %890 = vperm.xlu0 %889, %v340
  %v891 = vpop.permute.xlu0 %890
  %894 = vset.pattern.permute.xlu0 0
  %895 = vperm.xlu0 %894, %v341
  %v896 = vpop.permute.xlu0 %895
  %899 = vset.pattern.permute.xlu0 0
  %900 = vperm.xlu0 %899, %v342
  %v901 = vpop.permute.xlu0 %900
  %904 = vset.pattern.permute.xlu0 0
  %905 = vperm.xlu0 %904, %v343
  %v906 = vpop.permute.xlu0 %905
  %909 = vset.pattern.permute.xlu0 0
  %910 = vperm.xlu0 %909, %v344
  %v911 = vpop.permute.xlu0 %910
  %914 = vset.pattern.permute.xlu0 0
  %915 = vperm.xlu0 %914, %v345
  %v916 = vpop.permute.xlu0 %915
  %919 = vset.pattern.permute.xlu0 0
  %920 = vperm.xlu0 %919, %v346
  %v921 = vpop.permute.xlu0 %920
  %924 = vset.pattern.permute.xlu0 0
  %925 = vperm.xlu0 %924, %v347
  %v926 = vpop.permute.xlu0 %925
  %929 = vset.pattern.permute.xlu0 0
  %930 = vperm.xlu0 %929, %v348
  %v931 = vpop.permute.xlu0 %930
  %934 = vset.pattern.permute.xlu0 0
  %935 = vperm.xlu0 %934, %v349
  %v936 = vpop.permute.xlu0 %935
  %939 = vset.pattern.permute.xlu0 0
  %940 = vperm.xlu0 %939, %v350
  %v941 = vpop.permute.xlu0 %940
  %944 = vset.pattern.permute.xlu0 0
  %945 = vperm.xlu0 %944, %v351
  %v946 = vpop.permute.xlu0 %945
  %949 = vset.pattern.permute.xlu0 0
  %950 = vperm.xlu0 %949, %v352
  %v951 = vpop.permute.xlu0 %950
  %954 = vset.pattern.permute.xlu0 0
  %955 = vperm.xlu0 %954, %v353
  %v956 = vpop.permute.xlu0 %955
  %959 = vset.pattern.permute.xlu0 0
  %960 = vperm.xlu0 %959, %v354
  %v961 = vpop.permute.xlu0 %960
  %964 = vset.pattern.permute.xlu0 0
  %965 = vperm.xlu0 %964, %v355
  %v966 = vpop.permute.xlu0 %965
  %969 = vset.pattern.permute.xlu0 0
  %970 = vperm.xlu0 %969, %v356
  %v971 = vpop.permute.xlu0 %970
  %974 = vset.pattern.permute.xlu0 0
  %975 = vperm.xlu0 %974, %v357
  %v976 = vpop.permute.xlu0 %975
  %979 = vset.pattern.permute.xlu0 0
  %980 = vperm.xlu0 %979, %v358
  %v981 = vpop.permute.xlu0 %980
  %984 = vset.pattern.permute.xlu0 0
  %985 = vperm.xlu0 %984, %v359
  %v986 = vpop.permute.xlu0 %985
  %989 = vset.pattern.permute.xlu0 0
  %990 = vperm.xlu0 %989, %v360
  %v991 = vpop.permute.xlu0 %990
  %994 = vset.pattern.permute.xlu0 0
  %995 = vperm.xlu0 %994, %v361
  %v996 = vpop.permute.xlu0 %995
  %999 = vset.pattern.permute.xlu0 0
  %1000 = vperm.xlu0 %999, %v362
  %v1001 = vpop.permute.xlu0 %1000
  %1004 = vset.pattern.permute.xlu0 0
  %1005 = vperm.xlu0 %1004, %v363
  %v1006 = vpop.permute.xlu0 %1005
  %1009 = vset.pattern.permute.xlu0 0
  %1010 = vperm.xlu0 %1009, %v364
  %v1011 = vpop.permute.xlu0 %1010
  %1014 = vset.pattern.permute.xlu0 0
  %1015 = vperm.xlu0 %1014, %v365
  %v1016 = vpop.permute.xlu0 %1015
  %1019 = vset.pattern.permute.xlu0 0
  %1020 = vperm.xlu0 %1019, %v366
  %v1021 = vpop.permute.xlu0 %1020
  %1024 = vset.pattern.permute.xlu0 0
  %1025 = vperm.xlu0 %1024, %v367
  %v1026 = vpop.permute.xlu0 %1025
  %1029 = vset.pattern.permute.xlu0 0
  %1030 = vperm.xlu0 %1029, %v368
  %v1031 = vpop.permute.xlu0 %1030
  %1034 = vset.pattern.permute.xlu0 0
  %1035 = vperm.xlu0 %1034, %v369
  %v1036 = vpop.permute.xlu0 %1035
  %1039 = vset.pattern.permute.xlu0 0
  %1040 = vperm.xlu0 %1039, %v370
  %v1041 = vpop.permute.xlu0 %1040
  %1044 = vset.pattern.permute.xlu0 0
  %1045 = vperm.xlu0 %1044, %v371
  %v1046 = vpop.permute.xlu0 %1045
  %1049 = vset.pattern.permute.xlu0 0
  %1050 = vperm.xlu0 %1049, %v372
  %v1051 = vpop.permute.xlu0 %1050
  %1054 = vset.pattern.permute.xlu0 0
  %1055 = vperm.xlu0 %1054, %v373
  %v1056 = vpop.permute.xlu0 %1055
  %1059 = vset.pattern.permute.xlu0 0
  %1060 = vperm.xlu0 %1059, %v374
  %v1061 = vpop.permute.xlu0 %1060
  %1064 = vset.pattern.permute.xlu0 0
  %1065 = vperm.xlu0 %1064, %v375
  %v1066 = vpop.permute.xlu0 %1065
  %1069 = vset.pattern.permute.xlu0 0
  %1070 = vperm.xlu0 %1069, %v376
  %v1071 = vpop.permute.xlu0 %1070
  %1074 = vset.pattern.permute.xlu0 0
  %1075 = vperm.xlu0 %1074, %v377
  %v1076 = vpop.permute.xlu0 %1075
  %1079 = vset.pattern.permute.xlu0 0
  %1080 = vperm.xlu0 %1079, %v378
  %v1081 = vpop.permute.xlu0 %1080
  %1084 = vset.pattern.permute.xlu0 0
  %1085 = vperm.xlu0 %1084, %v379
  %v1086 = vpop.permute.xlu0 %1085
  %1089 = vset.pattern.permute.xlu0 0
  %1090 = vperm.xlu0 %1089, %v380
  %v1091 = vpop.permute.xlu0 %1090
  %1094 = vset.pattern.permute.xlu0 0
  %1095 = vperm.xlu0 %1094, %v381
  %v1096 = vpop.permute.xlu0 %1095
  %1099 = vset.pattern.permute.xlu0 0
  %1100 = vperm.xlu0 %1099, %v382
  %v1101 = vpop.permute.xlu0 %1100
  %1104 = vset.pattern.permute.xlu0 0
  %1105 = vperm.xlu0 %1104, %v383
  %v1106 = vpop.permute.xlu0 %1105
  %1109 = vset.pattern.permute.xlu0 0
  %1110 = vperm.xlu0 %1109, %v384
  %v1111 = vpop.permute.xlu0 %1110
  %1114 = vset.pattern.permute.xlu0 0
  %1115 = vperm.xlu0 %1114, %v385
  %v1116 = vpop.permute.xlu0 %1115
  %1119 = vset.pattern.permute.xlu0 0
  %1120 = vperm.xlu0 %1119, %v386
  %v1121 = vpop.permute.xlu0 %1120
  %1124 = vset.pattern.permute.xlu0 0
  %1125 = vperm.xlu0 %1124, %v387
  %v1126 = vpop.permute.xlu0 %1125
  %1129 = vset.pattern.permute.xlu0 0
  %1130 = vperm.xlu0 %1129, %v388
  %v1131 = vpop.permute.xlu0 %1130
  %1134 = vset.pattern.permute.xlu0 0
  %1135 = vperm.xlu0 %1134, %v389
  %v1136 = vpop.permute.xlu0 %1135
  %1139 = vset.pattern.permute.xlu0 0
  %1140 = vperm.xlu0 %1139, %v390
  %v1141 = vpop.permute.xlu0 %1140
  %1144 = vset.pattern.permute.xlu0 0
  %1145 = vperm.xlu0 %1144, %v391
  %v1146 = vpop.permute.xlu0 %1145
  %1149 = vset.pattern.permute.xlu0 0
  %1150 = vperm.xlu0 %1149, %v392
  %v1151 = vpop.permute.xlu0 %1150
  %1154 = vset.pattern.permute.xlu0 0
  %1155 = vperm.xlu0 %1154, %v393
  %v1156 = vpop.permute.xlu0 %1155
  %1159 = vset.pattern.permute.xlu0 0
  %1160 = vperm.xlu0 %1159, %v394
  %v1161 = vpop.permute.xlu0 %1160
  %1164 = vset.pattern.permute.xlu0 0
  %1165 = vperm.xlu0 %1164, %v395
  %v1166 = vpop.permute.xlu0 %1165
  %1169 = vset.pattern.permute.xlu0 0
  %1170 = vperm.xlu0 %1169, %v396
  %v1171 = vpop.permute.xlu0 %1170
  %1174 = vset.pattern.permute.xlu0 0
  %1175 = vperm.xlu0 %1174, %v397
  %v1176 = vpop.permute.xlu0 %1175
  %1179 = vset.pattern.permute.xlu0 0
  %1180 = vperm.xlu0 %1179, %v398
  %v1181 = vpop.permute.xlu0 %1180
  %1184 = vset.pattern.permute.xlu0 0
  %1185 = vperm.xlu0 %1184, %v399
  %v1186 = vpop.permute.xlu0 %1185
  %1189 = vset.pattern.permute.xlu0 0
  %1190 = vperm.xlu0 %1189, %v400
  %v1191 = vpop.permute.xlu0 %1190
  %1194 = vset.pattern.permute.xlu0 0
  %1195 = vperm.xlu0 %1194, %v401
  %v1196 = vpop.permute.xlu0 %1195
  %1199 = vset.pattern.permute.xlu0 0
  %1200 = vperm.xlu0 %1199, %v402
  %v1201 = vpop.permute.xlu0 %1200
  %1204 = vset.pattern.permute.xlu0 0
  %1205 = vperm.xlu0 %1204, %v403
  %v1206 = vpop.permute.xlu0 %1205
  %1209 = vset.pattern.permute.xlu0 0
  %1210 = vperm.xlu0 %1209, %v404
  %v1211 = vpop.permute.xlu0 %1210
  %1214 = vset.pattern.permute.xlu0 0
  %1215 = vperm.xlu0 %1214, %v405
  %v1216 = vpop.permute.xlu0 %1215
  %1219 = vset.pattern.permute.xlu0 0
  %1220 = vperm.xlu0 %1219, %v406
  %v1221 = vpop.permute.xlu0 %1220
  %1224 = vset.pattern.permute.xlu0 0
  %1225 = vperm.xlu0 %1224, %v407
  %v1226 = vpop.permute.xlu0 %1225
  %1229 = vset.pattern.permute.xlu0 0
  %1230 = vperm.xlu0 %1229, %v408
  %v1231 = vpop.permute.xlu0 %1230
  %1234 = vset.pattern.permute.xlu0 0
  %1235 = vperm.xlu0 %1234, %v409
  %v1236 = vpop.permute.xlu0 %1235
  %1239 = vset.pattern.permute.xlu0 0
  %1240 = vperm.xlu0 %1239, %v410
  %v1241 = vpop.permute.xlu0 %1240
  %1244 = vset.pattern.permute.xlu0 0
  %1245 = vperm.xlu0 %1244, %v411
  %v1246 = vpop.permute.xlu0 %1245
  %1249 = vset.pattern.permute.xlu0 0
  %1250 = vperm.xlu0 %1249, %v412
  %v1251 = vpop.permute.xlu0 %1250
  %1254 = vset.pattern.permute.xlu0 0
  %1255 = vperm.xlu0 %1254, %v413
  %v1256 = vpop.permute.xlu0 %1255
  %1259 = vset.pattern.permute.xlu0 0
  %1260 = vperm.xlu0 %1259, %v414
  %v1261 = vpop.permute.xlu0 %1260
  %1264 = vset.pattern.permute.xlu0 0
  %1265 = vperm.xlu0 %1264, %v415
  %v1266 = vpop.permute.xlu0 %1265
  %1269 = vset.pattern.permute.xlu0 0
  %1270 = vperm.xlu0 %1269, %v416
  %v1271 = vpop.permute.xlu0 %1270
  %1274 = vset.pattern.permute.xlu0 0
  %1275 = vperm.xlu0 %1274, %v417
  %v1276 = vpop.permute.xlu0 %1275
  %1279 = vset.pattern.permute.xlu0 0
  %1280 = vperm.xlu0 %1279, %v418
  %v1281 = vpop.permute.xlu0 %1280
  %1284 = vset.pattern.permute.xlu0 0
  %1285 = vperm.xlu0 %1284, %v419
  %v1286 = vpop.permute.xlu0 %1285
  %1289 = vset.pattern.permute.xlu0 0
  %1290 = vperm.xlu0 %1289, %v420
  %v1291 = vpop.permute.xlu0 %1290
  %1294 = vset.pattern.permute.xlu0 0
  %1295 = vperm.xlu0 %1294, %v421
  %v1296 = vpop.permute.xlu0 %1295
  %1299 = vset.pattern.permute.xlu0 0
  %1300 = vperm.xlu0 %1299, %v422
  %v1301 = vpop.permute.xlu0 %1300
  %1304 = vset.pattern.permute.xlu0 0
  %1305 = vperm.xlu0 %1304, %v423
  %v1306 = vpop.permute.xlu0 %1305
  %1309 = vset.pattern.permute.xlu0 0
  %1310 = vperm.xlu0 %1309, %v424
  %v1311 = vpop.permute.xlu0 %1310
  %1314 = vset.pattern.permute.xlu0 0
  %1315 = vperm.xlu0 %1314, %v425
  %v1316 = vpop.permute.xlu0 %1315
  %1319 = vset.pattern.permute.xlu0 0
  %1320 = vperm.xlu0 %1319, %v426
  %v1321 = vpop.permute.xlu0 %1320
  %1324 = vset.pattern.permute.xlu0 0
  %1325 = vperm.xlu0 %1324, %v427
  %v1326 = vpop.permute.xlu0 %1325
  %1329 = vset.pattern.permute.xlu0 0
  %1330 = vperm.xlu0 %1329, %v428
  %v1331 = vpop.permute.xlu0 %1330
  %1334 = vset.pattern.permute.xlu0 0
  %1335 = vperm.xlu0 %1334, %v429
  %v1336 = vpop.permute.xlu0 %1335
  %1339 = vset.pattern.permute.xlu0 0
  %1340 = vperm.xlu0 %1339, %v430
  %v1341 = vpop.permute.xlu0 %1340
  %1344 = vset.pattern.permute.xlu0 0
  %1345 = vperm.xlu0 %1344, %v431
  %v1346 = vpop.permute.xlu0 %1345
  %1349 = vset.pattern.permute.xlu0 0
  %1350 = vperm.xlu0 %1349, %v432
  %v1351 = vpop.permute.xlu0 %1350
  %1354 = vset.pattern.permute.xlu0 0
  %1355 = vperm.xlu0 %1354, %v433
  %v1356 = vpop.permute.xlu0 %1355
  %1359 = vset.pattern.permute.xlu0 0
  %1360 = vperm.xlu0 %1359, %v434
  %v1361 = vpop.permute.xlu0 %1360
  %1364 = vset.pattern.permute.xlu0 0
  %1365 = vperm.xlu0 %1364, %v435
  %v1366 = vpop.permute.xlu0 %1365
  %1369 = vset.pattern.permute.xlu0 0
  %1370 = vperm.xlu0 %1369, %v436
  %v1371 = vpop.permute.xlu0 %1370
  %1374 = vset.pattern.permute.xlu0 0
  %1375 = vperm.xlu0 %1374, %v437
  %v1376 = vpop.permute.xlu0 %1375
  %1379 = vset.pattern.permute.xlu0 0
  %1380 = vperm.xlu0 %1379, %v438
  %v1381 = vpop.permute.xlu0 %1380
  %1384 = vset.pattern.permute.xlu0 0
  %1385 = vperm.xlu0 %1384, %v439
  %v1386 = vpop.permute.xlu0 %1385
  %1389 = vset.pattern.permute.xlu0 0
  %1390 = vperm.xlu0 %1389, %v440
  %v1391 = vpop.permute.xlu0 %1390
  %1394 = vset.pattern.permute.xlu0 0
  %1395 = vperm.xlu0 %1394, %v441
  %v1396 = vpop.permute.xlu0 %1395
  %1399 = vset.pattern.permute.xlu0 0
  %1400 = vperm.xlu0 %1399, %v442
  %v1401 = vpop.permute.xlu0 %1400
  %1404 = vset.pattern.permute.xlu0 0
  %1405 = vperm.xlu0 %1404, %v443
  %v1406 = vpop.permute.xlu0 %1405
  %1409 = vset.pattern.permute.xlu0 0
  %1410 = vperm.xlu0 %1409, %v444
  %v1411 = vpop.permute.xlu0 %1410
  %1414 = vset.pattern.permute.xlu0 0
  %1415 = vperm.xlu0 %1414, %v445
  %v1416 = vpop.permute.xlu0 %1415
  %1419 = vset.pattern.permute.xlu0 0
  %1420 = vperm.xlu0 %1419, %v446
  %v1421 = vpop.permute.xlu0 %1420
  %1424 = vset.pattern.permute.xlu0 0
  %1425 = vperm.xlu0 %1424, %v447
  %v1426 = vpop.permute.xlu0 %1425
  %1429 = vset.pattern.permute.xlu0 0
  %1430 = vperm.xlu0 %1429, %v448
  %v1431 = vpop.permute.xlu0 %1430
  %1434 = vset.pattern.permute.xlu0 0
  %1435 = vperm.xlu0 %1434, %v449
  %v1436 = vpop.permute.xlu0 %1435
  %1439 = vset.pattern.permute.xlu0 0
  %1440 = vperm.xlu0 %1439, %v450
  %v1441 = vpop.permute.xlu0 %1440
  %1444 = vset.pattern.permute.xlu0 0
  %1445 = vperm.xlu0 %1444, %v451
  %v1446 = vpop.permute.xlu0 %1445
  %1449 = vset.pattern.permute.xlu0 0
  %1450 = vperm.xlu0 %1449, %v452
  %v1451 = vpop.permute.xlu0 %1450
  %1454 = vset.pattern.permute.xlu0 0
  %1455 = vperm.xlu0 %1454, %v453
  %v1456 = vpop.permute.xlu0 %1455
  %1459 = vset.pattern.permute.xlu0 0
  %1460 = vperm.xlu0 %1459, %v454
  %v1461 = vpop.permute.xlu0 %1460
  %1464 = vset.pattern.permute.xlu0 0
  %1465 = vperm.xlu0 %1464, %v455
  %v1466 = vpop.permute.xlu0 %1465
  %1469 = vset.pattern.permute.xlu0 0
  %1470 = vperm.xlu0 %1469, %v456
  %v1471 = vpop.permute.xlu0 %1470
  %1474 = vset.pattern.permute.xlu0 0
  %1475 = vperm.xlu0 %1474, %v457
  %v1476 = vpop.permute.xlu0 %1475
  %1479 = vset.pattern.permute.xlu0 0
  %1480 = vperm.xlu0 %1479, %v458
  %v1481 = vpop.permute.xlu0 %1480
  %1484 = vset.pattern.permute.xlu0 0
  %1485 = vperm.xlu0 %1484, %v459
  %v1486 = vpop.permute.xlu0 %1485
  %1489 = vset.pattern.permute.xlu0 0
  %1490 = vperm.xlu0 %1489, %v460
  %v1491 = vpop.permute.xlu0 %1490
  %1494 = vset.pattern.permute.xlu0 0
  %1495 = vperm.xlu0 %1494, %v461
  %v1496 = vpop.permute.xlu0 %1495
  %1499 = vset.pattern.permute.xlu0 0
  %1500 = vperm.xlu0 %1499, %v462
  %v1501 = vpop.permute.xlu0 %1500
  %1504 = vset.pattern.permute.xlu0 0
  %1505 = vperm.xlu0 %1504, %v463
  %v1506 = vpop.permute.xlu0 %1505
  %1509 = vset.pattern.permute.xlu0 0
  %1510 = vperm.xlu0 %1509, %v464
  %v1511 = vpop.permute.xlu0 %1510
  %1514 = vset.pattern.permute.xlu0 0
  %1515 = vperm.xlu0 %1514, %v465
  %v1516 = vpop.permute.xlu0 %1515
  %1519 = vset.pattern.permute.xlu0 0
  %1520 = vperm.xlu0 %1519, %v466
  %v1521 = vpop.permute.xlu0 %1520
  %1524 = vset.pattern.permute.xlu0 0
  %1525 = vperm.xlu0 %1524, %v467
  %v1526 = vpop.permute.xlu0 %1525
  %1529 = vset.pattern.permute.xlu0 0
  %1530 = vperm.xlu0 %1529, %v468
  %v1531 = vpop.permute.xlu0 %1530
  %1534 = vset.pattern.permute.xlu0 0
  %1535 = vperm.xlu0 %1534, %v469
  %v1536 = vpop.permute.xlu0 %1535
  %1539 = vset.pattern.permute.xlu0 0
  %1540 = vperm.xlu0 %1539, %v470
  %v1541 = vpop.permute.xlu0 %1540
  %1544 = vset.pattern.permute.xlu0 0
  %1545 = vperm.xlu0 %1544, %v471
  %v1546 = vpop.permute.xlu0 %1545
  %1549 = vset.pattern.permute.xlu0 0
  %1550 = vperm.xlu0 %1549, %v472
  %v1551 = vpop.permute.xlu0 %1550
  %1554 = vset.pattern.permute.xlu0 0
  %1555 = vperm.xlu0 %1554, %v473
  %v1556 = vpop.permute.xlu0 %1555
  %1559 = vset.pattern.permute.xlu0 0
  %1560 = vperm.xlu0 %1559, %v474
  %v1561 = vpop.permute.xlu0 %1560
  %1564 = vset.pattern.permute.xlu0 0
  %1565 = vperm.xlu0 %1564, %v475
  %v1566 = vpop.permute.xlu0 %1565
  %1569 = vset.pattern.permute.xlu0 0
  %1570 = vperm.xlu0 %1569, %v476
  %v1571 = vpop.permute.xlu0 %1570
  %1574 = vset.pattern.permute.xlu0 0
  %1575 = vperm.xlu0 %1574, %v477
  %v1576 = vpop.permute.xlu0 %1575
  %1579 = vset.pattern.permute.xlu0 0
  %1580 = vperm.xlu0 %1579, %v478
  %v1581 = vpop.permute.xlu0 %1580
  %1584 = vset.pattern.permute.xlu0 0
  %1585 = vperm.xlu0 %1584, %v479
  %v1586 = vpop.permute.xlu0 %1585
  %1589 = vset.pattern.permute.xlu0 0
  %1590 = vperm.xlu0 %1589, %v480
  %v1591 = vpop.permute.xlu0 %1590
  %1594 = vset.pattern.permute.xlu0 0
  %1595 = vperm.xlu0 %1594, %v481
  %v1596 = vpop.permute.xlu0 %1595
  %1599 = vset.pattern.permute.xlu0 0
  %1600 = vperm.xlu0 %1599, %v482
  %v1601 = vpop.permute.xlu0 %1600
  %1604 = vset.pattern.permute.xlu0 0
  %1605 = vperm.xlu0 %1604, %v483
  %v1606 = vpop.permute.xlu0 %1605
  %1609 = vset.pattern.permute.xlu0 0
  %1610 = vperm.xlu0 %1609, %v484
  %v1611 = vpop.permute.xlu0 %1610
  %1614 = vset.pattern.permute.xlu0 0
  %1615 = vperm.xlu0 %1614, %v485
  %v1616 = vpop.permute.xlu0 %1615
  %1619 = vset.pattern.permute.xlu0 0
  %1620 = vperm.xlu0 %1619, %v486
  %v1621 = vpop.permute.xlu0 %1620
  %1624 = vset.pattern.permute.xlu0 0
  %1625 = vperm.xlu0 %1624, %v487
  %v1626 = vpop.permute.xlu0 %1625
  %1629 = vset.pattern.permute.xlu0 0
  %1630 = vperm.xlu0 %1629, %v488
  %v1631 = vpop.permute.xlu0 %1630
  %1634 = vset.pattern.permute.xlu0 0
  %1635 = vperm.xlu0 %1634, %v489
  %v1636 = vpop.permute.xlu0 %1635
  %1639 = vset.pattern.permute.xlu0 0
  %1640 = vperm.xlu0 %1639, %v490
  %v1641 = vpop.permute.xlu0 %1640
  %1644 = vset.pattern.permute.xlu0 0
  %1645 = vperm.xlu0 %1644, %v491
  %v1646 = vpop.permute.xlu0 %1645
  %1649 = vset.pattern.permute.xlu0 0
  %1650 = vperm.xlu0 %1649, %v492
  %v1651 = vpop.permute.xlu0 %1650
  %1654 = vset.pattern.permute.xlu0 0
  %1655 = vperm.xlu0 %1654, %v493
  %v1656 = vpop.permute.xlu0 %1655
  %1659 = vset.pattern.permute.xlu0 0
  %1660 = vperm.xlu0 %1659, %v494
  %v1661 = vpop.permute.xlu0 %1660
  %1664 = vset.pattern.permute.xlu0 0
  %1665 = vperm.xlu0 %1664, %v495
  %v1666 = vpop.permute.xlu0 %1665
  %1669 = vset.pattern.permute.xlu0 0
  %1670 = vperm.xlu0 %1669, %v496
  %v1671 = vpop.permute.xlu0 %1670
  %1674 = vset.pattern.permute.xlu0 0
  %1675 = vperm.xlu0 %1674, %v497
  %v1676 = vpop.permute.xlu0 %1675
  %1679 = vset.pattern.permute.xlu0 0
  %1680 = vperm.xlu0 %1679, %v498
  %v1681 = vpop.permute.xlu0 %1680
  %1684 = vset.pattern.permute.xlu0 0
  %1685 = vperm.xlu0 %1684, %v499
  %v1686 = vpop.permute.xlu0 %1685
  %1689 = vset.pattern.permute.xlu0 0
  %1690 = vperm.xlu0 %1689, %v500
  %v1691 = vpop.permute.xlu0 %1690
  %1694 = vset.pattern.permute.xlu0 0
  %1695 = vperm.xlu0 %1694, %v501
  %v1696 = vpop.permute.xlu0 %1695
  %1699 = vset.pattern.permute.xlu0 0
  %1700 = vperm.xlu0 %1699, %v502
  %v1701 = vpop.permute.xlu0 %1700
  %1704 = vset.pattern.permute.xlu0 0
  %1705 = vperm.xlu0 %1704, %v503
  %v1706 = vpop.permute.xlu0 %1705
  %1709 = vset.pattern.permute.xlu0 0
  %1710 = vperm.xlu0 %1709, %v504
  %v1711 = vpop.permute.xlu0 %1710
  %1714 = vset.pattern.permute.xlu0 0
  %1715 = vperm.xlu0 %1714, %v505
  %v1716 = vpop.permute.xlu0 %1715
  %1719 = vset.pattern.permute.xlu0 0
  %1720 = vperm.xlu0 %1719, %v506
  %v1721 = vpop.permute.xlu0 %1720
  %1724 = vset.pattern.permute.xlu0 0
  %1725 = vperm.xlu0 %1724, %v507
  %v1726 = vpop.permute.xlu0 %1725
  %1729 = vset.pattern.permute.xlu0 0
  %1730 = vperm.xlu0 %1729, %v508
  %v1731 = vpop.permute.xlu0 %1730
  %1734 = vset.pattern.permute.xlu0 0
  %1735 = vperm.xlu0 %1734, %v509
  %v1736 = vpop.permute.xlu0 %1735
  %1739 = vset.pattern.permute.xlu0 0
  %1740 = vperm.xlu0 %1739, %v510
  %v1741 = vpop.permute.xlu0 %1740
  %1744 = vset.pattern.permute.xlu0 0
  %1745 = vperm.xlu0 %1744, %v511
  %v1746 = vpop.permute.xlu0 %1745
  %1749 = vset.pattern.permute.xlu0 0
  %1750 = vperm.xlu0 %1749, %v512
  %v1751 = vpop.permute.xlu0 %1750
  %1754 = vset.pattern.permute.xlu0 0
  %1755 = vperm.xlu0 %1754, %v513
  %v1756 = vpop.permute.xlu0 %1755
  %1759 = vset.pattern.permute.xlu0 0
  %1760 = vperm.xlu0 %1759, %v514
  %v1761 = vpop.permute.xlu0 %1760
  %1764 = vset.pattern.permute.xlu0 0
  %1765 = vperm.xlu0 %1764, %v515
  %v1766 = vpop.permute.xlu0 %1765
  %1769 = vset.pattern.permute.xlu0 0
  %1770 = vperm.xlu0 %1769, %v516
  %v1771 = vpop.permute.xlu0 %1770
  %1774 = vset.pattern.permute.xlu0 0
  %1775 = vperm.xlu0 %1774, %v517
  %v1776 = vpop.permute.xlu0 %1775
  %1779 = vset.pattern.permute.xlu0 0
  %1780 = vperm.xlu0 %1779, %v518
  %v1781 = vpop.permute.xlu0 %1780
  %1784 = vset.pattern.permute.xlu0 0
  %1785 = vperm.xlu0 %1784, %v519
  %v1786 = vpop.permute.xlu0 %1785
  %1789 = vset.pattern.permute.xlu0 0
  %1790 = vperm.xlu0 %1789, %v520
  %v1791 = vpop.permute.xlu0 %1790
  %1794 = vset.pattern.permute.xlu0 0
  %1795 = vperm.xlu0 %1794, %v521
  %v1796 = vpop.permute.xlu0 %1795
  %1799 = vset.pattern.permute.xlu0 0
  %1800 = vperm.xlu0 %1799, %v522
  %v1801 = vpop.permute.xlu0 %1800
  %v1803 = vmul.f32 %v11, %v526
  %v1804 = vmul.f32 %v12, %v531
  %v1805 = vmul.f32 %v13, %v536
  %v1806 = vmul.f32 %v14, %v541
  %v1807 = vmul.f32 %v15, %v546
  %v1808 = vmul.f32 %v16, %v551
  %v1809 = vmul.f32 %v17, %v556
  %v1810 = vmul.f32 %v18, %v561
  %v1811 = vmul.f32 %v19, %v566
  %v1812 = vmul.f32 %v20, %v571
  %v1813 = vmul.f32 %v21, %v576
  %v1814 = vmul.f32 %v22, %v581
  %v1815 = vmul.f32 %v23, %v586
  %v1816 = vmul.f32 %v24, %v591
  %v1817 = vmul.f32 %v25, %v596
  %v1818 = vmul.f32 %v26, %v601
  %v1819 = vmul.f32 %v27, %v606
  %v1820 = vmul.f32 %v28, %v611
  %v1821 = vmul.f32 %v29, %v616
  %v1822 = vmul.f32 %v30, %v621
  %v1823 = vmul.f32 %v31, %v626
  %v1824 = vmul.f32 %v32, %v631
  %v1825 = vmul.f32 %v33, %v636
  %v1826 = vmul.f32 %v34, %v641
  %v1827 = vmul.f32 %v35, %v646
  %v1828 = vmul.f32 %v36, %v651
  %v1829 = vmul.f32 %v37, %v656
  %v1830 = vmul.f32 %v38, %v661
  %v1831 = vmul.f32 %v39, %v666
  %v1832 = vmul.f32 %v40, %v671
  %v1833 = vmul.f32 %v41, %v676
  %v1834 = vmul.f32 %v42, %v681
  %v1835 = vmul.f32 %v43, %v686
  %v1836 = vmul.f32 %v44, %v691
  %v1837 = vmul.f32 %v45, %v696
  %v1838 = vmul.f32 %v46, %v701
  %v1839 = vmul.f32 %v47, %v706
  %v1840 = vmul.f32 %v48, %v711
  %v1841 = vmul.f32 %v49, %v716
  %v1842 = vmul.f32 %v50, %v721
  %v1843 = vmul.f32 %v51, %v726
  %v1844 = vmul.f32 %v52, %v731
  %v1845 = vmul.f32 %v53, %v736
  %v1846 = vmul.f32 %v54, %v741
  %v1847 = vmul.f32 %v55, %v746
  %v1848 = vmul.f32 %v56, %v751
  %v1849 = vmul.f32 %v57, %v756
  %v1850 = vmul.f32 %v58, %v761
  %v1851 = vmul.f32 %v59, %v766
  %v1852 = vmul.f32 %v60, %v771
  %v1853 = vmul.f32 %v61, %v776
  %v1854 = vmul.f32 %v62, %v781
  %v1855 = vmul.f32 %v63, %v786
  %v1856 = vmul.f32 %v64, %v791
  %v1857 = vmul.f32 %v65, %v796
  %v1858 = vmul.f32 %v66, %v801
  %v1859 = vmul.f32 %v67, %v806
  %v1860 = vmul.f32 %v68, %v811
  %v1861 = vmul.f32 %v69, %v816
  %v1862 = vmul.f32 %v70, %v821
  %v1863 = vmul.f32 %v71, %v826
  %v1864 = vmul.f32 %v72, %v831
  %v1865 = vmul.f32 %v73, %v836
  %v1866 = vmul.f32 %v74, %v841
  %v1867 = vmul.f32 %v75, %v846
  %v1868 = vmul.f32 %v76, %v851
  %v1869 = vmul.f32 %v77, %v856
  %v1870 = vmul.f32 %v78, %v861
  %v1871 = vmul.f32 %v79, %v866
  %v1872 = vmul.f32 %v80, %v871
  %v1873 = vmul.f32 %v81, %v876
  %v1874 = vmul.f32 %v82, %v881
  %v1875 = vmul.f32 %v83, %v886
  %v1876 = vmul.f32 %v84, %v891
  %v1877 = vmul.f32 %v85, %v896
  %v1878 = vmul.f32 %v86, %v901
  %v1879 = vmul.f32 %v87, %v906
  %v1880 = vmul.f32 %v88, %v911
  %v1881 = vmul.f32 %v89, %v916
  %v1882 = vmul.f32 %v90, %v921
  %v1883 = vmul.f32 %v91, %v926
  %v1884 = vmul.f32 %v92, %v931
  %v1885 = vmul.f32 %v93, %v936
  %v1886 = vmul.f32 %v94, %v941
  %v1887 = vmul.f32 %v95, %v946
  %v1888 = vmul.f32 %v96, %v951
  %v1889 = vmul.f32 %v97, %v956
  %v1890 = vmul.f32 %v98, %v961
  %v1891 = vmul.f32 %v99, %v966
  %v1892 = vmul.f32 %v100, %v971
  %v1893 = vmul.f32 %v101, %v976
  %v1894 = vmul.f32 %v102, %v981
  %v1895 = vmul.f32 %v103, %v986
  %v1896 = vmul.f32 %v104, %v991
  %v1897 = vmul.f32 %v105, %v996
  %v1898 = vmul.f32 %v106, %v1001
  %v1899 = vmul.f32 %v107, %v1006
  %v1900 = vmul.f32 %v108, %v1011
  %v1901 = vmul.f32 %v109, %v1016
  %v1902 = vmul.f32 %v110, %v1021
  %v1903 = vmul.f32 %v111, %v1026
  %v1904 = vmul.f32 %v112, %v1031
  %v1905 = vmul.f32 %v113, %v1036
  %v1906 = vmul.f32 %v114, %v1041
  %v1907 = vmul.f32 %v115, %v1046
  %v1908 = vmul.f32 %v116, %v1051
  %v1909 = vmul.f32 %v117, %v1056
  %v1910 = vmul.f32 %v118, %v1061
  %v1911 = vmul.f32 %v119, %v1066
  %v1912 = vmul.f32 %v120, %v1071
  %v1913 = vmul.f32 %v121, %v1076
  %v1914 = vmul.f32 %v122, %v1081
  %v1915 = vmul.f32 %v123, %v1086
  %v1916 = vmul.f32 %v124, %v1091
  %v1917 = vmul.f32 %v125, %v1096
  %v1918 = vmul.f32 %v126, %v1101
  %v1919 = vmul.f32 %v127, %v1106
  %v1920 = vmul.f32 %v128, %v1111
  %v1921 = vmul.f32 %v129, %v1116
  %v1922 = vmul.f32 %v130, %v1121
  %v1923 = vmul.f32 %v131, %v1126
  %v1924 = vmul.f32 %v132, %v1131
  %v1925 = vmul.f32 %v133, %v1136
  %v1926 = vmul.f32 %v134, %v1141
  %v1927 = vmul.f32 %v135, %v1146
  %v1928 = vmul.f32 %v136, %v1151
  %v1929 = vmul.f32 %v137, %v1156
  %v1930 = vmul.f32 %v138, %v1161
  %v1931 = vmul.f32 %v139, %v1166
  %v1932 = vmul.f32 %v140, %v1171
  %v1933 = vmul.f32 %v141, %v1176
  %v1934 = vmul.f32 %v142, %v1181
  %v1935 = vmul.f32 %v143, %v1186
  %v1936 = vmul.f32 %v144, %v1191
  %v1937 = vmul.f32 %v145, %v1196
  %v1938 = vmul.f32 %v146, %v1201
  %v1939 = vmul.f32 %v147, %v1206
  %v1940 = vmul.f32 %v148, %v1211
  %v1941 = vmul.f32 %v149, %v1216
  %v1942 = vmul.f32 %v150, %v1221
  %v1943 = vmul.f32 %v151, %v1226
  %v1944 = vmul.f32 %v152, %v1231
  %v1945 = vmul.f32 %v153, %v1236
  %v1946 = vmul.f32 %v154, %v1241
  %v1947 = vmul.f32 %v155, %v1246
  %v1948 = vmul.f32 %v156, %v1251
  %v1949 = vmul.f32 %v157, %v1256
  %v1950 = vmul.f32 %v158, %v1261
  %v1951 = vmul.f32 %v159, %v1266
  %v1952 = vmul.f32 %v160, %v1271
  %v1953 = vmul.f32 %v161, %v1276
  %v1954 = vmul.f32 %v162, %v1281
  %v1955 = vmul.f32 %v163, %v1286
  %v1956 = vmul.f32 %v164, %v1291
  %v1957 = vmul.f32 %v165, %v1296
  %v1958 = vmul.f32 %v166, %v1301
  %v1959 = vmul.f32 %v167, %v1306
  %v1960 = vmul.f32 %v168, %v1311
  %v1961 = vmul.f32 %v169, %v1316
  %v1962 = vmul.f32 %v170, %v1321
  %v1963 = vmul.f32 %v171, %v1326
  %v1964 = vmul.f32 %v172, %v1331
  %v1965 = vmul.f32 %v173, %v1336
  %v1966 = vmul.f32 %v174, %v1341
  %v1967 = vmul.f32 %v175, %v1346
  %v1968 = vmul.f32 %v176, %v1351
  %v1969 = vmul.f32 %v177, %v1356
  %v1970 = vmul.f32 %v178, %v1361
  %v1971 = vmul.f32 %v179, %v1366
  %v1972 = vmul.f32 %v180, %v1371
  %v1973 = vmul.f32 %v181, %v1376
  %v1974 = vmul.f32 %v182, %v1381
  %v1975 = vmul.f32 %v183, %v1386
  %v1976 = vmul.f32 %v184, %v1391
  %v1977 = vmul.f32 %v185, %v1396
  %v1978 = vmul.f32 %v186, %v1401
  %v1979 = vmul.f32 %v187, %v1406
  %v1980 = vmul.f32 %v188, %v1411
  %v1981 = vmul.f32 %v189, %v1416
  %v1982 = vmul.f32 %v190, %v1421
  %v1983 = vmul.f32 %v191, %v1426
  %v1984 = vmul.f32 %v192, %v1431
  %v1985 = vmul.f32 %v193, %v1436
  %v1986 = vmul.f32 %v194, %v1441
  %v1987 = vmul.f32 %v195, %v1446
  %v1988 = vmul.f32 %v196, %v1451
  %v1989 = vmul.f32 %v197, %v1456
  %v1990 = vmul.f32 %v198, %v1461
  %v1991 = vmul.f32 %v199, %v1466
  %v1992 = vmul.f32 %v200, %v1471
  %v1993 = vmul.f32 %v201, %v1476
  %v1994 = vmul.f32 %v202, %v1481
  %v1995 = vmul.f32 %v203, %v1486
  %v1996 = vmul.f32 %v204, %v1491
  %v1997 = vmul.f32 %v205, %v1496
  %v1998 = vmul.f32 %v206, %v1501
  %v1999 = vmul.f32 %v207, %v1506
  %v2000 = vmul.f32 %v208, %v1511
  %v2001 = vmul.f32 %v209, %v1516
  %v2002 = vmul.f32 %v210, %v1521
  %v2003 = vmul.f32 %v211, %v1526
  %v2004 = vmul.f32 %v212, %v1531
  %v2005 = vmul.f32 %v213, %v1536
  %v2006 = vmul.f32 %v214, %v1541
  %v2007 = vmul.f32 %v215, %v1546
  %v2008 = vmul.f32 %v216, %v1551
  %v2009 = vmul.f32 %v217, %v1556
  %v2010 = vmul.f32 %v218, %v1561
  %v2011 = vmul.f32 %v219, %v1566
  %v2012 = vmul.f32 %v220, %v1571
  %v2013 = vmul.f32 %v221, %v1576
  %v2014 = vmul.f32 %v222, %v1581
  %v2015 = vmul.f32 %v223, %v1586
  %v2016 = vmul.f32 %v224, %v1591
  %v2017 = vmul.f32 %v225, %v1596
  %v2018 = vmul.f32 %v226, %v1601
  %v2019 = vmul.f32 %v227, %v1606
  %v2020 = vmul.f32 %v228, %v1611
  %v2021 = vmul.f32 %v229, %v1616
  %v2022 = vmul.f32 %v230, %v1621
  %v2023 = vmul.f32 %v231, %v1626
  %v2024 = vmul.f32 %v232, %v1631
  %v2025 = vmul.f32 %v233, %v1636
  %v2026 = vmul.f32 %v234, %v1641
  %v2027 = vmul.f32 %v235, %v1646
  %v2028 = vmul.f32 %v236, %v1651
  %v2029 = vmul.f32 %v237, %v1656
  %v2030 = vmul.f32 %v238, %v1661
  %v2031 = vmul.f32 %v239, %v1666
  %v2032 = vmul.f32 %v240, %v1671
  %v2033 = vmul.f32 %v241, %v1676
  %v2034 = vmul.f32 %v242, %v1681
  %v2035 = vmul.f32 %v243, %v1686
  %v2036 = vmul.f32 %v244, %v1691
  %v2037 = vmul.f32 %v245, %v1696
  %v2038 = vmul.f32 %v246, %v1701
  %v2039 = vmul.f32 %v247, %v1706
  %v2040 = vmul.f32 %v248, %v1711
  %v2041 = vmul.f32 %v249, %v1716
  %v2042 = vmul.f32 %v250, %v1721
  %v2043 = vmul.f32 %v251, %v1726
  %v2044 = vmul.f32 %v252, %v1731
  %v2045 = vmul.f32 %v253, %v1736
  %v2046 = vmul.f32 %v254, %v1741
  %v2047 = vmul.f32 %v255, %v1746
  %v2048 = vmul.f32 %v256, %v1751
  %v2049 = vmul.f32 %v257, %v1756
  %v2050 = vmul.f32 %v258, %v1761
  %v2051 = vmul.f32 %v259, %v1766
  %v2052 = vmul.f32 %v260, %v1771
  %v2053 = vmul.f32 %v261, %v1776
  %v2054 = vmul.f32 %v262, %v1781
  %v2055 = vmul.f32 %v263, %v1786
  %v2056 = vmul.f32 %v264, %v1791
  %v2057 = vmul.f32 %v265, %v1796
  %v2058 = vmul.f32 %v266, %v1801
  %vm2059 = vcmask 23552
  %v2060 = vsel %vm2059, %v1803, 0.0
  %v2061 = vsel %vm2059, %v1867, 0.0
  %v2062 = vadd.f32 %v2060, %v2061
  %v2063 = vsel %vm2059, %v1931, 0.0
  %v2064 = vadd.f32 %v2062, %v2063
  %v2065 = vsel %vm2059, %v1995, 0.0
  %v2066 = vadd.f32 %v2064, %v2065
  %v2067 = vsel %vm2059, %v1804, 0.0
  %v2068 = vsel %vm2059, %v1868, 0.0
  %v2069 = vadd.f32 %v2067, %v2068
  %v2070 = vsel %vm2059, %v1932, 0.0
  %v2071 = vadd.f32 %v2069, %v2070
  %v2072 = vsel %vm2059, %v1996, 0.0
  %v2073 = vadd.f32 %v2071, %v2072
  %v2074 = vsel %vm2059, %v1805, 0.0
  %v2075 = vsel %vm2059, %v1869, 0.0
  %v2076 = vadd.f32 %v2074, %v2075
  %v2077 = vsel %vm2059, %v1933, 0.0
  %v2078 = vadd.f32 %v2076, %v2077
  %v2079 = vsel %vm2059, %v1997, 0.0
  %v2080 = vadd.f32 %v2078, %v2079
  %v2081 = vsel %vm2059, %v1806, 0.0
  %v2082 = vsel %vm2059, %v1870, 0.0
  %v2083 = vadd.f32 %v2081, %v2082
  %v2084 = vsel %vm2059, %v1934, 0.0
  %v2085 = vadd.f32 %v2083, %v2084
  %v2086 = vsel %vm2059, %v1998, 0.0
  %v2087 = vadd.f32 %v2085, %v2086
  %v2088 = vsel %vm2059, %v1807, 0.0
  %v2089 = vsel %vm2059, %v1871, 0.0
  %v2090 = vadd.f32 %v2088, %v2089
  %v2091 = vsel %vm2059, %v1935, 0.0
  %v2092 = vadd.f32 %v2090, %v2091
  %v2093 = vsel %vm2059, %v1999, 0.0
  %v2094 = vadd.f32 %v2092, %v2093
  %v2095 = vsel %vm2059, %v1808, 0.0
  %v2096 = vsel %vm2059, %v1872, 0.0
  %v2097 = vadd.f32 %v2095, %v2096
  %v2098 = vsel %vm2059, %v1936, 0.0
  %v2099 = vadd.f32 %v2097, %v2098
  %v2100 = vsel %vm2059, %v2000, 0.0
  %v2101 = vadd.f32 %v2099, %v2100
  %v2102 = vsel %vm2059, %v1809, 0.0
  %v2103 = vsel %vm2059, %v1873, 0.0
  %v2104 = vadd.f32 %v2102, %v2103
  %v2105 = vsel %vm2059, %v1937, 0.0
  %v2106 = vadd.f32 %v2104, %v2105
  %v2107 = vsel %vm2059, %v2001, 0.0
  %v2108 = vadd.f32 %v2106, %v2107
  %v2109 = vsel %vm2059, %v1810, 0.0
  %v2110 = vsel %vm2059, %v1874, 0.0
  %v2111 = vadd.f32 %v2109, %v2110
  %v2112 = vsel %vm2059, %v1938, 0.0
  %v2113 = vadd.f32 %v2111, %v2112
  %v2114 = vsel %vm2059, %v2002, 0.0
  %v2115 = vadd.f32 %v2113, %v2114
  %v2116 = vsel %vm2059, %v1811, 0.0
  %v2117 = vsel %vm2059, %v1875, 0.0
  %v2118 = vadd.f32 %v2116, %v2117
  %v2119 = vsel %vm2059, %v1939, 0.0
  %v2120 = vadd.f32 %v2118, %v2119
  %v2121 = vsel %vm2059, %v2003, 0.0
  %v2122 = vadd.f32 %v2120, %v2121
  %v2123 = vsel %vm2059, %v1812, 0.0
  %v2124 = vsel %vm2059, %v1876, 0.0
  %v2125 = vadd.f32 %v2123, %v2124
  %v2126 = vsel %vm2059, %v1940, 0.0
  %v2127 = vadd.f32 %v2125, %v2126
  %v2128 = vsel %vm2059, %v2004, 0.0
  %v2129 = vadd.f32 %v2127, %v2128
  %v2130 = vsel %vm2059, %v1813, 0.0
  %v2131 = vsel %vm2059, %v1877, 0.0
  %v2132 = vadd.f32 %v2130, %v2131
  %v2133 = vsel %vm2059, %v1941, 0.0
  %v2134 = vadd.f32 %v2132, %v2133
  %v2135 = vsel %vm2059, %v2005, 0.0
  %v2136 = vadd.f32 %v2134, %v2135
  %v2137 = vsel %vm2059, %v1814, 0.0
  %v2138 = vsel %vm2059, %v1878, 0.0
  %v2139 = vadd.f32 %v2137, %v2138
  %v2140 = vsel %vm2059, %v1942, 0.0
  %v2141 = vadd.f32 %v2139, %v2140
  %v2142 = vsel %vm2059, %v2006, 0.0
  %v2143 = vadd.f32 %v2141, %v2142
  %v2144 = vsel %vm2059, %v1815, 0.0
  %v2145 = vsel %vm2059, %v1879, 0.0
  %v2146 = vadd.f32 %v2144, %v2145
  %v2147 = vsel %vm2059, %v1943, 0.0
  %v2148 = vadd.f32 %v2146, %v2147
  %v2149 = vsel %vm2059, %v2007, 0.0
  %v2150 = vadd.f32 %v2148, %v2149
  %v2151 = vsel %vm2059, %v1816, 0.0
  %v2152 = vsel %vm2059, %v1880, 0.0
  %v2153 = vadd.f32 %v2151, %v2152
  %v2154 = vsel %vm2059, %v1944, 0.0
  %v2155 = vadd.f32 %v2153, %v2154
  %v2156 = vsel %vm2059, %v2008, 0.0
  %v2157 = vadd.f32 %v2155, %v2156
  %v2158 = vsel %vm2059, %v1817, 0.0
  %v2159 = vsel %vm2059, %v1881, 0.0
  %v2160 = vadd.f32 %v2158, %v2159
  %v2161 = vsel %vm2059, %v1945, 0.0
  %v2162 = vadd.f32 %v2160, %v2161
  %v2163 = vsel %vm2059, %v2009, 0.0
  %v2164 = vadd.f32 %v2162, %v2163
  %v2165 = vsel %vm2059, %v1818, 0.0
  %v2166 = vsel %vm2059, %v1882, 0.0
  %v2167 = vadd.f32 %v2165, %v2166
  %v2168 = vsel %vm2059, %v1946, 0.0
  %v2169 = vadd.f32 %v2167, %v2168
  %v2170 = vsel %vm2059, %v2010, 0.0
  %v2171 = vadd.f32 %v2169, %v2170
  %v2172 = vsel %vm2059, %v1819, 0.0
  %v2173 = vsel %vm2059, %v1883, 0.0
  %v2174 = vadd.f32 %v2172, %v2173
  %v2175 = vsel %vm2059, %v1947, 0.0
  %v2176 = vadd.f32 %v2174, %v2175
  %v2177 = vsel %vm2059, %v2011, 0.0
  %v2178 = vadd.f32 %v2176, %v2177
  %v2179 = vsel %vm2059, %v1820, 0.0
  %v2180 = vsel %vm2059, %v1884, 0.0
  %v2181 = vadd.f32 %v2179, %v2180
  %v2182 = vsel %vm2059, %v1948, 0.0
  %v2183 = vadd.f32 %v2181, %v2182
  %v2184 = vsel %vm2059, %v2012, 0.0
  %v2185 = vadd.f32 %v2183, %v2184
  %v2186 = vsel %vm2059, %v1821, 0.0
  %v2187 = vsel %vm2059, %v1885, 0.0
  %v2188 = vadd.f32 %v2186, %v2187
  %v2189 = vsel %vm2059, %v1949, 0.0
  %v2190 = vadd.f32 %v2188, %v2189
  %v2191 = vsel %vm2059, %v2013, 0.0
  %v2192 = vadd.f32 %v2190, %v2191
  %v2193 = vsel %vm2059, %v1822, 0.0
  %v2194 = vsel %vm2059, %v1886, 0.0
  %v2195 = vadd.f32 %v2193, %v2194
  %v2196 = vsel %vm2059, %v1950, 0.0
  %v2197 = vadd.f32 %v2195, %v2196
  %v2198 = vsel %vm2059, %v2014, 0.0
  %v2199 = vadd.f32 %v2197, %v2198
  %v2200 = vsel %vm2059, %v1823, 0.0
  %v2201 = vsel %vm2059, %v1887, 0.0
  %v2202 = vadd.f32 %v2200, %v2201
  %v2203 = vsel %vm2059, %v1951, 0.0
  %v2204 = vadd.f32 %v2202, %v2203
  %v2205 = vsel %vm2059, %v2015, 0.0
  %v2206 = vadd.f32 %v2204, %v2205
  %v2207 = vsel %vm2059, %v1824, 0.0
  %v2208 = vsel %vm2059, %v1888, 0.0
  %v2209 = vadd.f32 %v2207, %v2208
  %v2210 = vsel %vm2059, %v1952, 0.0
  %v2211 = vadd.f32 %v2209, %v2210
  %v2212 = vsel %vm2059, %v2016, 0.0
  %v2213 = vadd.f32 %v2211, %v2212
  %v2214 = vsel %vm2059, %v1825, 0.0
  %v2215 = vsel %vm2059, %v1889, 0.0
  %v2216 = vadd.f32 %v2214, %v2215
  %v2217 = vsel %vm2059, %v1953, 0.0
  %v2218 = vadd.f32 %v2216, %v2217
  %v2219 = vsel %vm2059, %v2017, 0.0
  %v2220 = vadd.f32 %v2218, %v2219
  %v2221 = vsel %vm2059, %v1826, 0.0
  %v2222 = vsel %vm2059, %v1890, 0.0
  %v2223 = vadd.f32 %v2221, %v2222
  %v2224 = vsel %vm2059, %v1954, 0.0
  %v2225 = vadd.f32 %v2223, %v2224
  %v2226 = vsel %vm2059, %v2018, 0.0
  %v2227 = vadd.f32 %v2225, %v2226
  %v2228 = vsel %vm2059, %v1827, 0.0
  %v2229 = vsel %vm2059, %v1891, 0.0
  %v2230 = vadd.f32 %v2228, %v2229
  %v2231 = vsel %vm2059, %v1955, 0.0
  %v2232 = vadd.f32 %v2230, %v2231
  %v2233 = vsel %vm2059, %v2019, 0.0
  %v2234 = vadd.f32 %v2232, %v2233
  %v2235 = vsel %vm2059, %v1828, 0.0
  %v2236 = vsel %vm2059, %v1892, 0.0
  %v2237 = vadd.f32 %v2235, %v2236
  %v2238 = vsel %vm2059, %v1956, 0.0
  %v2239 = vadd.f32 %v2237, %v2238
  %v2240 = vsel %vm2059, %v2020, 0.0
  %v2241 = vadd.f32 %v2239, %v2240
  %v2242 = vsel %vm2059, %v1829, 0.0
  %v2243 = vsel %vm2059, %v1893, 0.0
  %v2244 = vadd.f32 %v2242, %v2243
  %v2245 = vsel %vm2059, %v1957, 0.0
  %v2246 = vadd.f32 %v2244, %v2245
  %v2247 = vsel %vm2059, %v2021, 0.0
  %v2248 = vadd.f32 %v2246, %v2247
  %v2249 = vsel %vm2059, %v1830, 0.0
  %v2250 = vsel %vm2059, %v1894, 0.0
  %v2251 = vadd.f32 %v2249, %v2250
  %v2252 = vsel %vm2059, %v1958, 0.0
  %v2253 = vadd.f32 %v2251, %v2252
  %v2254 = vsel %vm2059, %v2022, 0.0
  %v2255 = vadd.f32 %v2253, %v2254
  %v2256 = vsel %vm2059, %v1831, 0.0
  %v2257 = vsel %vm2059, %v1895, 0.0
  %v2258 = vadd.f32 %v2256, %v2257
  %v2259 = vsel %vm2059, %v1959, 0.0
  %v2260 = vadd.f32 %v2258, %v2259
  %v2261 = vsel %vm2059, %v2023, 0.0
  %v2262 = vadd.f32 %v2260, %v2261
  %v2263 = vsel %vm2059, %v1832, 0.0
  %v2264 = vsel %vm2059, %v1896, 0.0
  %v2265 = vadd.f32 %v2263, %v2264
  %v2266 = vsel %vm2059, %v1960, 0.0
  %v2267 = vadd.f32 %v2265, %v2266
  %v2268 = vsel %vm2059, %v2024, 0.0
  %v2269 = vadd.f32 %v2267, %v2268
  %v2270 = vsel %vm2059, %v1833, 0.0
  %v2271 = vsel %vm2059, %v1897, 0.0
  %v2272 = vadd.f32 %v2270, %v2271
  %v2273 = vsel %vm2059, %v1961, 0.0
  %v2274 = vadd.f32 %v2272, %v2273
  %v2275 = vsel %vm2059, %v2025, 0.0
  %v2276 = vadd.f32 %v2274, %v2275
  %v2277 = vsel %vm2059, %v1834, 0.0
  %v2278 = vsel %vm2059, %v1898, 0.0
  %v2279 = vadd.f32 %v2277, %v2278
  %v2280 = vsel %vm2059, %v1962, 0.0
  %v2281 = vadd.f32 %v2279, %v2280
  %v2282 = vsel %vm2059, %v2026, 0.0
  %v2283 = vadd.f32 %v2281, %v2282
  %v2284 = vsel %vm2059, %v1835, 0.0
  %v2285 = vsel %vm2059, %v1899, 0.0
  %v2286 = vadd.f32 %v2284, %v2285
  %v2287 = vsel %vm2059, %v1963, 0.0
  %v2288 = vadd.f32 %v2286, %v2287
  %v2289 = vsel %vm2059, %v2027, 0.0
  %v2290 = vadd.f32 %v2288, %v2289
  %v2291 = vsel %vm2059, %v1836, 0.0
  %v2292 = vsel %vm2059, %v1900, 0.0
  %v2293 = vadd.f32 %v2291, %v2292
  %v2294 = vsel %vm2059, %v1964, 0.0
  %v2295 = vadd.f32 %v2293, %v2294
  %v2296 = vsel %vm2059, %v2028, 0.0
  %v2297 = vadd.f32 %v2295, %v2296
  %v2298 = vsel %vm2059, %v1837, 0.0
  %v2299 = vsel %vm2059, %v1901, 0.0
  %v2300 = vadd.f32 %v2298, %v2299
  %v2301 = vsel %vm2059, %v1965, 0.0
  %v2302 = vadd.f32 %v2300, %v2301
  %v2303 = vsel %vm2059, %v2029, 0.0
  %v2304 = vadd.f32 %v2302, %v2303
  %v2305 = vsel %vm2059, %v1838, 0.0
  %v2306 = vsel %vm2059, %v1902, 0.0
  %v2307 = vadd.f32 %v2305, %v2306
  %v2308 = vsel %vm2059, %v1966, 0.0
  %v2309 = vadd.f32 %v2307, %v2308
  %v2310 = vsel %vm2059, %v2030, 0.0
  %v2311 = vadd.f32 %v2309, %v2310
  %v2312 = vsel %vm2059, %v1839, 0.0
  %v2313 = vsel %vm2059, %v1903, 0.0
  %v2314 = vadd.f32 %v2312, %v2313
  %v2315 = vsel %vm2059, %v1967, 0.0
  %v2316 = vadd.f32 %v2314, %v2315
  %v2317 = vsel %vm2059, %v2031, 0.0
  %v2318 = vadd.f32 %v2316, %v2317
  %v2319 = vsel %vm2059, %v1840, 0.0
  %v2320 = vsel %vm2059, %v1904, 0.0
  %v2321 = vadd.f32 %v2319, %v2320
  %v2322 = vsel %vm2059, %v1968, 0.0
  %v2323 = vadd.f32 %v2321, %v2322
  %v2324 = vsel %vm2059, %v2032, 0.0
  %v2325 = vadd.f32 %v2323, %v2324
  %v2326 = vsel %vm2059, %v1841, 0.0
  %v2327 = vsel %vm2059, %v1905, 0.0
  %v2328 = vadd.f32 %v2326, %v2327
  %v2329 = vsel %vm2059, %v1969, 0.0
  %v2330 = vadd.f32 %v2328, %v2329
  %v2331 = vsel %vm2059, %v2033, 0.0
  %v2332 = vadd.f32 %v2330, %v2331
  %v2333 = vsel %vm2059, %v1842, 0.0
  %v2334 = vsel %vm2059, %v1906, 0.0
  %v2335 = vadd.f32 %v2333, %v2334
  %v2336 = vsel %vm2059, %v1970, 0.0
  %v2337 = vadd.f32 %v2335, %v2336
  %v2338 = vsel %vm2059, %v2034, 0.0
  %v2339 = vadd.f32 %v2337, %v2338
  %v2340 = vsel %vm2059, %v1843, 0.0
  %v2341 = vsel %vm2059, %v1907, 0.0
  %v2342 = vadd.f32 %v2340, %v2341
  %v2343 = vsel %vm2059, %v1971, 0.0
  %v2344 = vadd.f32 %v2342, %v2343
  %v2345 = vsel %vm2059, %v2035, 0.0
  %v2346 = vadd.f32 %v2344, %v2345
  %v2347 = vsel %vm2059, %v1844, 0.0
  %v2348 = vsel %vm2059, %v1908, 0.0
  %v2349 = vadd.f32 %v2347, %v2348
  %v2350 = vsel %vm2059, %v1972, 0.0
  %v2351 = vadd.f32 %v2349, %v2350
  %v2352 = vsel %vm2059, %v2036, 0.0
  %v2353 = vadd.f32 %v2351, %v2352
  %v2354 = vsel %vm2059, %v1845, 0.0
  %v2355 = vsel %vm2059, %v1909, 0.0
  %v2356 = vadd.f32 %v2354, %v2355
  %v2357 = vsel %vm2059, %v1973, 0.0
  %v2358 = vadd.f32 %v2356, %v2357
  %v2359 = vsel %vm2059, %v2037, 0.0
  %v2360 = vadd.f32 %v2358, %v2359
  %v2361 = vsel %vm2059, %v1846, 0.0
  %v2362 = vsel %vm2059, %v1910, 0.0
  %v2363 = vadd.f32 %v2361, %v2362
  %v2364 = vsel %vm2059, %v1974, 0.0
  %v2365 = vadd.f32 %v2363, %v2364
  %v2366 = vsel %vm2059, %v2038, 0.0
  %v2367 = vadd.f32 %v2365, %v2366
  %v2368 = vsel %vm2059, %v1847, 0.0
  %v2369 = vsel %vm2059, %v1911, 0.0
  %v2370 = vadd.f32 %v2368, %v2369
  %v2371 = vsel %vm2059, %v1975, 0.0
  %v2372 = vadd.f32 %v2370, %v2371
  %v2373 = vsel %vm2059, %v2039, 0.0
  %v2374 = vadd.f32 %v2372, %v2373
  %v2375 = vsel %vm2059, %v1848, 0.0
  %v2376 = vsel %vm2059, %v1912, 0.0
  %v2377 = vadd.f32 %v2375, %v2376
  %v2378 = vsel %vm2059, %v1976, 0.0
  %v2379 = vadd.f32 %v2377, %v2378
  %v2380 = vsel %vm2059, %v2040, 0.0
  %v2381 = vadd.f32 %v2379, %v2380
  %v2382 = vsel %vm2059, %v1849, 0.0
  %v2383 = vsel %vm2059, %v1913, 0.0
  %v2384 = vadd.f32 %v2382, %v2383
  %v2385 = vsel %vm2059, %v1977, 0.0
  %v2386 = vadd.f32 %v2384, %v2385
  %v2387 = vsel %vm2059, %v2041, 0.0
  %v2388 = vadd.f32 %v2386, %v2387
  %v2389 = vsel %vm2059, %v1850, 0.0
  %v2390 = vsel %vm2059, %v1914, 0.0
  %v2391 = vadd.f32 %v2389, %v2390
  %v2392 = vsel %vm2059, %v1978, 0.0
  %v2393 = vadd.f32 %v2391, %v2392
  %v2394 = vsel %vm2059, %v2042, 0.0
  %v2395 = vadd.f32 %v2393, %v2394
  %v2396 = vsel %vm2059, %v1851, 0.0
  %v2397 = vsel %vm2059, %v1915, 0.0
  %v2398 = vadd.f32 %v2396, %v2397
  %v2399 = vsel %vm2059, %v1979, 0.0
  %v2400 = vadd.f32 %v2398, %v2399
  %v2401 = vsel %vm2059, %v2043, 0.0
  %v2402 = vadd.f32 %v2400, %v2401
  %v2403 = vsel %vm2059, %v1852, 0.0
  %v2404 = vsel %vm2059, %v1916, 0.0
  %v2405 = vadd.f32 %v2403, %v2404
  %v2406 = vsel %vm2059, %v1980, 0.0
  %v2407 = vadd.f32 %v2405, %v2406
  %v2408 = vsel %vm2059, %v2044, 0.0
  %v2409 = vadd.f32 %v2407, %v2408
  %v2410 = vsel %vm2059, %v1853, 0.0
  %v2411 = vsel %vm2059, %v1917, 0.0
  %v2412 = vadd.f32 %v2410, %v2411
  %v2413 = vsel %vm2059, %v1981, 0.0
  %v2414 = vadd.f32 %v2412, %v2413
  %v2415 = vsel %vm2059, %v2045, 0.0
  %v2416 = vadd.f32 %v2414, %v2415
  %v2417 = vsel %vm2059, %v1854, 0.0
  %v2418 = vsel %vm2059, %v1918, 0.0
  %v2419 = vadd.f32 %v2417, %v2418
  %v2420 = vsel %vm2059, %v1982, 0.0
  %v2421 = vadd.f32 %v2419, %v2420
  %v2422 = vsel %vm2059, %v2046, 0.0
  %v2423 = vadd.f32 %v2421, %v2422
  %v2424 = vsel %vm2059, %v1855, 0.0
  %v2425 = vsel %vm2059, %v1919, 0.0
  %v2426 = vadd.f32 %v2424, %v2425
  %v2427 = vsel %vm2059, %v1983, 0.0
  %v2428 = vadd.f32 %v2426, %v2427
  %v2429 = vsel %vm2059, %v2047, 0.0
  %v2430 = vadd.f32 %v2428, %v2429
  %v2431 = vsel %vm2059, %v1856, 0.0
  %v2432 = vsel %vm2059, %v1920, 0.0
  %v2433 = vadd.f32 %v2431, %v2432
  %v2434 = vsel %vm2059, %v1984, 0.0
  %v2435 = vadd.f32 %v2433, %v2434
  %v2436 = vsel %vm2059, %v2048, 0.0
  %v2437 = vadd.f32 %v2435, %v2436
  %v2438 = vsel %vm2059, %v1857, 0.0
  %v2439 = vsel %vm2059, %v1921, 0.0
  %v2440 = vadd.f32 %v2438, %v2439
  %v2441 = vsel %vm2059, %v1985, 0.0
  %v2442 = vadd.f32 %v2440, %v2441
  %v2443 = vsel %vm2059, %v2049, 0.0
  %v2444 = vadd.f32 %v2442, %v2443
  %v2445 = vsel %vm2059, %v1858, 0.0
  %v2446 = vsel %vm2059, %v1922, 0.0
  %v2447 = vadd.f32 %v2445, %v2446
  %v2448 = vsel %vm2059, %v1986, 0.0
  %v2449 = vadd.f32 %v2447, %v2448
  %v2450 = vsel %vm2059, %v2050, 0.0
  %v2451 = vadd.f32 %v2449, %v2450
  %v2452 = vsel %vm2059, %v1859, 0.0
  %v2453 = vsel %vm2059, %v1923, 0.0
  %v2454 = vadd.f32 %v2452, %v2453
  %v2455 = vsel %vm2059, %v1987, 0.0
  %v2456 = vadd.f32 %v2454, %v2455
  %v2457 = vsel %vm2059, %v2051, 0.0
  %v2458 = vadd.f32 %v2456, %v2457
  %v2459 = vsel %vm2059, %v1860, 0.0
  %v2460 = vsel %vm2059, %v1924, 0.0
  %v2461 = vadd.f32 %v2459, %v2460
  %v2462 = vsel %vm2059, %v1988, 0.0
  %v2463 = vadd.f32 %v2461, %v2462
  %v2464 = vsel %vm2059, %v2052, 0.0
  %v2465 = vadd.f32 %v2463, %v2464
  %v2466 = vsel %vm2059, %v1861, 0.0
  %v2467 = vsel %vm2059, %v1925, 0.0
  %v2468 = vadd.f32 %v2466, %v2467
  %v2469 = vsel %vm2059, %v1989, 0.0
  %v2470 = vadd.f32 %v2468, %v2469
  %v2471 = vsel %vm2059, %v2053, 0.0
  %v2472 = vadd.f32 %v2470, %v2471
  %v2473 = vsel %vm2059, %v1862, 0.0
  %v2474 = vsel %vm2059, %v1926, 0.0
  %v2475 = vadd.f32 %v2473, %v2474
  %v2476 = vsel %vm2059, %v1990, 0.0
  %v2477 = vadd.f32 %v2475, %v2476
  %v2478 = vsel %vm2059, %v2054, 0.0
  %v2479 = vadd.f32 %v2477, %v2478
  %v2480 = vsel %vm2059, %v1863, 0.0
  %v2481 = vsel %vm2059, %v1927, 0.0
  %v2482 = vadd.f32 %v2480, %v2481
  %v2483 = vsel %vm2059, %v1991, 0.0
  %v2484 = vadd.f32 %v2482, %v2483
  %v2485 = vsel %vm2059, %v2055, 0.0
  %v2486 = vadd.f32 %v2484, %v2485
  %v2487 = vsel %vm2059, %v1864, 0.0
  %v2488 = vsel %vm2059, %v1928, 0.0
  %v2489 = vadd.f32 %v2487, %v2488
  %v2490 = vsel %vm2059, %v1992, 0.0
  %v2491 = vadd.f32 %v2489, %v2490
  %v2492 = vsel %vm2059, %v2056, 0.0
  %v2493 = vadd.f32 %v2491, %v2492
  %v2494 = vsel %vm2059, %v1865, 0.0
  %v2495 = vsel %vm2059, %v1929, 0.0
  %v2496 = vadd.f32 %v2494, %v2495
  %v2497 = vsel %vm2059, %v1993, 0.0
  %v2498 = vadd.f32 %v2496, %v2497
  %v2499 = vsel %vm2059, %v2057, 0.0
  %v2500 = vadd.f32 %v2498, %v2499
  %v2501 = vsel %vm2059, %v1866, 0.0
  %v2502 = vsel %vm2059, %v1930, 0.0
  %v2503 = vadd.f32 %v2501, %v2502
  %v2504 = vsel %vm2059, %v1994, 0.0
  %v2505 = vadd.f32 %v2503, %v2504
  %v2506 = vsel %vm2059, %v2058, 0.0
  %v2507 = vadd.f32 %v2505, %v2506
  %2508 = vst.msk [vmem:[%s2] sm:$0xff] %vm2059, %v2066
  %2509 = vst.msk [vmem:[%s2 + $0x8] sm:$0xff] %vm2059, %v2073
  %2510 = vst.msk [vmem:[%s2 + $0x10] sm:$0xff] %vm2059, %v2080
  %2511 = vst.msk [vmem:[%s2 + $0x18] sm:$0xff] %vm2059, %v2087
  %2512 = vst.msk [vmem:[%s2 + $0x20] sm:$0xff] %vm2059, %v2094
  %2513 = vst.msk [vmem:[%s2 + $0x28] sm:$0xff] %vm2059, %v2101
  %2514 = vst.msk [vmem:[%s2 + $0x30] sm:$0xff] %vm2059, %v2108
  %2515 = vst.msk [vmem:[%s2 + $0x38] sm:$0xff] %vm2059, %v2115
  %2516 = vst.msk [vmem:[%s2 + $0x40] sm:$0xff] %vm2059, %v2122
  %2517 = vst.msk [vmem:[%s2 + $0x48] sm:$0xff] %vm2059, %v2129
  %2518 = vst.msk [vmem:[%s2 + $0x50] sm:$0xff] %vm2059, %v2136
  %2519 = vst.msk [vmem:[%s2 + $0x58] sm:$0xff] %vm2059, %v2143
  %2520 = vst.msk [vmem:[%s2 + $0x60] sm:$0xff] %vm2059, %v2150
  %2521 = vst.msk [vmem:[%s2 + $0x68] sm:$0xff] %vm2059, %v2157
  %2522 = vst.msk [vmem:[%s2 + $0x70] sm:$0xff] %vm2059, %v2164
  %2523 = vst.msk [vmem:[%s2 + $0x78] sm:$0xff] %vm2059, %v2171
  %2524 = vst.msk [vmem:[%s2 + $0x80] sm:$0xff] %vm2059, %v2178
  %2525 = vst.msk [vmem:[%s2 + $0x88] sm:$0xff] %vm2059, %v2185
  %2526 = vst.msk [vmem:[%s2 + $0x90] sm:$0xff] %vm2059, %v2192
  %2527 = vst.msk [vmem:[%s2 + $0x98] sm:$0xff] %vm2059, %v2199
  %2528 = vst.msk [vmem:[%s2 + $0xa0] sm:$0xff] %vm2059, %v2206
  %2529 = vst.msk [vmem:[%s2 + $0xa8] sm:$0xff] %vm2059, %v2213
  %2530 = vst.msk [vmem:[%s2 + $0xb0] sm:$0xff] %vm2059, %v2220
  %2531 = vst.msk [vmem:[%s2 + $0xb8] sm:$0xff] %vm2059, %v2227
  %2532 = vst.msk [vmem:[%s2 + $0xc0] sm:$0xff] %vm2059, %v2234
  %2533 = vst.msk [vmem:[%s2 + $0xc8] sm:$0xff] %vm2059, %v2241
  %2534 = vst.msk [vmem:[%s2 + $0xd0] sm:$0xff] %vm2059, %v2248
  %2535 = vst.msk [vmem:[%s2 + $0xd8] sm:$0xff] %vm2059, %v2255
  %2536 = vst.msk [vmem:[%s2 + $0xe0] sm:$0xff] %vm2059, %v2262
  %2537 = vst.msk [vmem:[%s2 + $0xe8] sm:$0xff] %vm2059, %v2269
  %2538 = vst.msk [vmem:[%s2 + $0xf0] sm:$0xff] %vm2059, %v2276
  %2539 = vst.msk [vmem:[%s2 + $0xf8] sm:$0xff] %vm2059, %v2283
  %2540 = vst.msk [vmem:[%s2 + $0x100] sm:$0xff] %vm2059, %v2290
  %2541 = vst.msk [vmem:[%s2 + $0x108] sm:$0xff] %vm2059, %v2297
  %2542 = vst.msk [vmem:[%s2 + $0x110] sm:$0xff] %vm2059, %v2304
  %2543 = vst.msk [vmem:[%s2 + $0x118] sm:$0xff] %vm2059, %v2311
  %2544 = vst.msk [vmem:[%s2 + $0x120] sm:$0xff] %vm2059, %v2318
  %2545 = vst.msk [vmem:[%s2 + $0x128] sm:$0xff] %vm2059, %v2325
  %2546 = vst.msk [vmem:[%s2 + $0x130] sm:$0xff] %vm2059, %v2332
  %2547 = vst.msk [vmem:[%s2 + $0x138] sm:$0xff] %vm2059, %v2339
  %2548 = vst.msk [vmem:[%s2 + $0x140] sm:$0xff] %vm2059, %v2346
  %2549 = vst.msk [vmem:[%s2 + $0x148] sm:$0xff] %vm2059, %v2353
  %2550 = vst.msk [vmem:[%s2 + $0x150] sm:$0xff] %vm2059, %v2360
  %2551 = vst.msk [vmem:[%s2 + $0x158] sm:$0xff] %vm2059, %v2367
  %2552 = vst.msk [vmem:[%s2 + $0x160] sm:$0xff] %vm2059, %v2374
  %2553 = vst.msk [vmem:[%s2 + $0x168] sm:$0xff] %vm2059, %v2381
  %2554 = vst.msk [vmem:[%s2 + $0x170] sm:$0xff] %vm2059, %v2388
  %2555 = vst.msk [vmem:[%s2 + $0x178] sm:$0xff] %vm2059, %v2395
  %2556 = vst.msk [vmem:[%s2 + $0x180] sm:$0xff] %vm2059, %v2402
  %2557 = vst.msk [vmem:[%s2 + $0x188] sm:$0xff] %vm2059, %v2409
  %2558 = vst.msk [vmem:[%s2 + $0x190] sm:$0xff] %vm2059, %v2416
  %2559 = vst.msk [vmem:[%s2 + $0x198] sm:$0xff] %vm2059, %v2423
  %2560 = vst.msk [vmem:[%s2 + $0x1a0] sm:$0xff] %vm2059, %v2430
  %2561 = vst.msk [vmem:[%s2 + $0x1a8] sm:$0xff] %vm2059, %v2437
  %2562 = vst.msk [vmem:[%s2 + $0x1b0] sm:$0xff] %vm2059, %v2444
  %2563 = vst.msk [vmem:[%s2 + $0x1b8] sm:$0xff] %vm2059, %v2451
  %2564 = vst.msk [vmem:[%s2 + $0x1c0] sm:$0xff] %vm2059, %v2458
  %2565 = vst.msk [vmem:[%s2 + $0x1c8] sm:$0xff] %vm2059, %v2465
  %2566 = vst.msk [vmem:[%s2 + $0x1d0] sm:$0xff] %vm2059, %v2472
  %2567 = vst.msk [vmem:[%s2 + $0x1d8] sm:$0xff] %vm2059, %v2479
  %2568 = vst.msk [vmem:[%s2 + $0x1e0] sm:$0xff] %vm2059, %v2486
  %2569 = vst.msk [vmem:[%s2 + $0x1e8] sm:$0xff] %vm2059, %v2493
  %2570 = vst.msk [vmem:[%s2 + $0x1f0] sm:$0xff] %vm2059, %v2500
  %2571 = vst.msk [vmem:[%s2 + $0x1f8] sm:$0xff] %vm2059, %v2507
  // Predicated region
  $region10: #{stn_mbfn_forward.11} parent=0 // pred_check
    _
  $region11: #{stn_mbfn_forward.11} parent=0 // pred_check_branch
    %2573 = sbr.rel (0) target = $region13
  $region12: #{stn_mbfn_forward.11} parent=0 // pred_region
    _
  $region13: #{stn_mbfn_forward.11} parent=0 // pred_fallthru
    _
  // Predicated region
  $region14: #{stn_mbfn_forward.11} parent=0 // pred_check
    _
  $region15: #{stn_mbfn_forward.11} parent=0 // pred_check_branch
    %2575 = sbr.rel (0) target = $region17
  $region16: #{stn_mbfn_forward.11} parent=0 // pred_region
    _
  $region17: #{stn_mbfn_forward.11} parent=0 // pred_fallthru
    _

// kernel: stn_mbfn_forward.12
$region0: #{stn_mbfn_forward.12}
  #allocation0 [shape = 'u32[]', space=smem, size = 0x4, offset = 0x4, fixed_abs, tag = 'smem constant byte address 0x4 - core index']
  #allocation1 [shape = 'u32[144,128]{1,0:T(1,128)}', space=vmem, size = 0x12000, scoped, tag = 'internal scratch']
  #allocation2 [shape = 'f32[128,128]{1,0:T(8,128)}', space=vmem, size = 0x10000, scoped, tag = 'scratch operand']
  %s0 = inlined_call_operand.vmem [shape: bf16[128,32], index: 0, kind: input, shape index: {}]
  %s1 = inlined_call_operand.vmem [shape: bf16[32,128], index: 1, kind: input, shape index: {}]
  %s2 = inlined_call_operand.vmem [shape: f32[1,128], index: 2, kind: input, shape index: {}]
  %s3 = inlined_call_operand.vmem [shape: f32[1,128], index: 3, kind: input, shape index: {}]
  %s4 = inlined_call_operand.vmem [shape: f32[1,128], index: 4, kind: input, shape index: {}]
  %s5 = inlined_call_operand.vmem [shape: f32[128,128], index: 5, kind: output, shape index: {}]
  %s6 = sld [smem:[#allocation0]]
  $region38: #{stn_mbfn_forward.12} parent=0
    _
  %s8 = ssub.s32 1, %s6
  %s9 = scalar_select 0, %s8, %s6
  // Predicated region
  $region2: #{stn_mbfn_forward.12} parent=0 // pred_check
    _
  $region3: #{stn_mbfn_forward.12} parent=0 // pred_check_branch
    %11 = sbr.rel (0) target = $region5
  $region4: #{stn_mbfn_forward.12} parent=0 // pred_region
    _
  $region5: #{stn_mbfn_forward.12} parent=0 // pred_fallthru
    _
  // Predicated region
  $region6: #{stn_mbfn_forward.12} parent=0 // pred_check
    _
  $region7: #{stn_mbfn_forward.12} parent=0 // pred_check_branch
    %13 = sbr.rel (0) target = $region9
  $region8: #{stn_mbfn_forward.12} parent=0 // pred_region
    _
  $region9: #{stn_mbfn_forward.12} parent=0 // pred_fallthru
    _
  // Predicated region
  $region10: #{stn_mbfn_forward.12} parent=0 // pred_check
    _
  $region11: #{stn_mbfn_forward.12} parent=0 // pred_check_branch
    %15 = sbr.rel (0) target = $region13
  $region12: #{stn_mbfn_forward.12} parent=0 // pred_region
    _
  $region13: #{stn_mbfn_forward.12} parent=0 // pred_fallthru
    _
  // Predicated region
  $region14: #{stn_mbfn_forward.12} parent=0 // pred_check
    _
  $region15: #{stn_mbfn_forward.12} parent=0 // pred_check_branch
    %17 = sbr.rel (0) target = $region17
  $region16: #{stn_mbfn_forward.12} parent=0 // pred_region
    _
  $region17: #{stn_mbfn_forward.12} parent=0 // pred_fallthru
    _
  // Predicated region
  $region18: #{stn_mbfn_forward.12} parent=0 // pred_check
    _
  $region19: #{stn_mbfn_forward.12} parent=0 // pred_check_branch
    %19 = sbr.rel (0) target = $region21
  $region20: #{stn_mbfn_forward.12} parent=0 // pred_region
    _
  $region21: #{stn_mbfn_forward.12} parent=0 // pred_fallthru
    _
  %p21 = scmp.eq.s32.totalorder 0, 0
  // Predicated region
  $region22: #{stn_mbfn_forward.12} parent=0 // pred_check
    %p22 = pneg %p21
  $region23: #{stn_mbfn_forward.12} parent=0 // pred_check_branch
    %24 = sbr.rel (%p22) target = $region25
  $region24: #{stn_mbfn_forward.12} parent=0 // pred_region
    %25 = vst [vmem:[#allocation2] sm:$0xff] 0.0
    %26 = vst [vmem:[#allocation2 + $0x8] sm:$0xff] 0.0
    %27 = vst [vmem:[#allocation2 + $0x10] sm:$0xff] 0.0
    %28 = vst [vmem:[#allocation2 + $0x18] sm:$0xff] 0.0
    %29 = vst [vmem:[#allocation2 + $0x20] sm:$0xff] 0.0
    %30 = vst [vmem:[#allocation2 + $0x28] sm:$0xff] 0.0
    %31 = vst [vmem:[#allocation2 + $0x30] sm:$0xff] 0.0
    %32 = vst [vmem:[#allocation2 + $0x38] sm:$0xff] 0.0
    %33 = vst [vmem:[#allocation2 + $0x40] sm:$0xff] 0.0
    %34 = vst [vmem:[#allocation2 + $0x48] sm:$0xff] 0.0
    %35 = vst [vmem:[#allocation2 + $0x50] sm:$0xff] 0.0
    %36 = vst [vmem:[#allocation2 + $0x58] sm:$0xff] 0.0
    %37 = vst [vmem:[#allocation2 + $0x60] sm:$0xff] 0.0
    %38 = vst [vmem:[#allocation2 + $0x68] sm:$0xff] 0.0
    %39 = vst [vmem:[#allocation2 + $0x70] sm:$0xff] 0.0
    %40 = vst [vmem:[#allocation2 + $0x78] sm:$0xff] 0.0
  $region25: #{stn_mbfn_forward.12} parent=0 // pred_fallthru
    _
  %v41 = vld [vmem:[#allocation2] sm:$0xff]
  %v42 = vld [vmem:[#allocation2 + $0x8] sm:$0xff]
  %v43 = vld [vmem:[#allocation2 + $0x10] sm:$0xff]
  %v44 = vld [vmem:[#allocation2 + $0x18] sm:$0xff]
  %v45 = vld [vmem:[#allocation2 + $0x20] sm:$0xff]
  %v46 = vld [vmem:[#allocation2 + $0x28] sm:$0xff]
  %v47 = vld [vmem:[#allocation2 + $0x30] sm:$0xff]
  %v48 = vld [vmem:[#allocation2 + $0x38] sm:$0xff]
  %v49 = vld [vmem:[#allocation2 + $0x40] sm:$0xff]
  %v50 = vld [vmem:[#allocation2 + $0x48] sm:$0xff]
  %v51 = vld [vmem:[#allocation2 + $0x50] sm:$0xff]
  %v52 = vld [vmem:[#allocation2 + $0x58] sm:$0xff]
  %v53 = vld [vmem:[#allocation2 + $0x60] sm:$0xff]
  %v54 = vld [vmem:[#allocation2 + $0x68] sm:$0xff]
  %v55 = vld [vmem:[#allocation2 + $0x70] sm:$0xff]
  %v56 = vld [vmem:[#allocation2 + $0x78] sm:$0xff]
  %v57 = vld [vmem:[%s0] sm:$0xf]
  %v58 = vld [vmem:[%s0 + $0x4] sm:$0xf]
  %v59 = vld [vmem:[%s0 + $0x8] sm:$0xf]
  %v60 = vld [vmem:[%s0 + $0xc] sm:$0xf]
  %v61 = vld [vmem:[%s0 + $0x10] sm:$0xf]
  %v62 = vld [vmem:[%s0 + $0x14] sm:$0xf]
  %v63 = vld [vmem:[%s0 + $0x18] sm:$0xf]
  %v64 = vld [vmem:[%s0 + $0x1c] sm:$0xf]
  %v65 = vld [vmem:[%s0 + $0x20] sm:$0xf]
  %v66 = vld [vmem:[%s0 + $0x24] sm:$0xf]
  %v67 = vld [vmem:[%s0 + $0x28] sm:$0xf]
  %v68 = vld [vmem:[%s0 + $0x2c] sm:$0xf]
  %v69 = vld [vmem:[%s0 + $0x30] sm:$0xf]
  %v70 = vld [vmem:[%s0 + $0x34] sm:$0xf]
  %v71 = vld [vmem:[%s0 + $0x38] sm:$0xf]
  %v72 = vld [vmem:[%s0 + $0x3c] sm:$0xf]
  %v73 = vld [vmem:[%s1] sm:$0xf]
  %v74 = vld [vmem:[%s1 + $0x4] sm:$0xf]
  %v75 = vld [vmem:[%s1 + $0x8] sm:$0xf]
  %v76 = vld [vmem:[%s1 + $0xc] sm:$0xf]
  %v93 = vunpack.c.l.b16 %v57
  %v94 = vunpack.c.l.b16 %v58
  %v95 = vunpack.c.l.b16 %v59
  %v96 = vunpack.c.l.b16 %v60
  %v97 = vunpack.c.l.b16 %v61
  %v98 = vunpack.c.l.b16 %v62
  %v99 = vunpack.c.l.b16 %v63
  %v100 = vunpack.c.l.b16 %v64
  %v101 = vunpack.c.l.b16 %v65
  %v102 = vunpack.c.l.b16 %v66
  %v103 = vunpack.c.l.b16 %v67
  %v104 = vunpack.c.l.b16 %v68
  %v105 = vunpack.c.l.b16 %v69
  %v106 = vunpack.c.l.b16 %v70
  %v107 = vunpack.c.l.b16 %v71
  %v108 = vunpack.c.l.b16 %v72
  %v109 = vpack.c.b16 %v94, %v93
  %v110 = vpack.c.b16 %v96, %v95
  %v111 = vpack.c.b16 %v98, %v97
  %v112 = vpack.c.b16 %v100, %v99
  %v113 = vpack.c.b16 %v102, %v101
  %v114 = vpack.c.b16 %v104, %v103
  %v115 = vpack.c.b16 %v106, %v105
  %v116 = vpack.c.b16 %v108, %v107
  %v121 = vunpack.c.l.b16 %v73
  %v122 = vunpack.c.l.b16 %v74
  %v123 = vunpack.c.l.b16 %v75
  %v124 = vunpack.c.l.b16 %v76
  %v125 = vpack.c.b16 %v122, %v121
  %v126 = vpack.c.b16 %v124, %v123
  %vm129 = vcmask 261120
  %v131 = vsel %vm129, %v109, 0
  %v134 = vsel %vm129, %v110, 0
  %v137 = vsel %vm129, %v111, 0
  %v140 = vsel %vm129, %v112, 0
  %v143 = vsel %vm129, %v113, 0
  %v146 = vsel %vm129, %v114, 0
  %v149 = vsel %vm129, %v115, 0
  %v152 = vsel %vm129, %v116, 0
  %154 = vmatprep.subr.bf16.mxu0 0
  %155 = vmatpush1.bf16.msra.mxu0 %v125
  %156 = vmatprep.subr.bf16.mxu0 0
  %157 = vmatpush1.bf16.msra.mxu0 %v126
  %158 = vmatprep.subr.bf16.mxu0 0
  %159 = vmatpush1.bf16.msra.mxu0 0
  %160 = vmatprep.subr.bf16.mxu0 0
  %161 = vmatpush1.bf16.msra.mxu0 0
  %162 = vmatprep.subr.bf16.mxu0 0
  %163 = vmatpush1.bf16.msra.mxu0 0
  %164 = vmatprep.subr.bf16.mxu0 0
  %165 = vmatpush1.bf16.msra.mxu0 0
  %166 = vmatprep.subr.bf16.mxu0 0
  %167 = vmatpush1.bf16.msra.mxu0 0
  %168 = vmatprep.subr.bf16.mxu0 0
  %169 = vmatpush1.bf16.msra.mxu0 0
  %170 = vmatprep.subr.bf16.mxu0 0
  %171 = vmatpush1.bf16.msra.mxu0 0
  %172 = vmatprep.subr.bf16.mxu0 0
  %173 = vmatpush1.bf16.msra.mxu0 0
  %174 = vmatprep.subr.bf16.mxu0 0
  %175 = vmatpush1.bf16.msra.mxu0 0
  %176 = vmatprep.subr.bf16.mxu0 0
  %177 = vmatpush1.bf16.msra.mxu0 0
  %178 = vmatprep.subr.bf16.mxu0 0
  %179 = vmatpush1.bf16.msra.mxu0 0
  %180 = vmatprep.subr.bf16.mxu0 0
  %181 = vmatpush1.bf16.msra.mxu0 0
  %182 = vmatprep.subr.bf16.mxu0 0
  %183 = vmatpush1.bf16.msra.mxu0 0
  %184 = vmatprep.subr.bf16.mxu0 0
  %185 = vmatpush1.bf16.msra.mxu0 0
  %186 = vmatprep.mubr.bf16.mxu0 0
  %187 = vmatmul.mubr.bf16.gmra.mrb[0].mxu0 %v131
  %v188 = vpop.f32.mrb[0].mxu0
  %v189 = vadd.f32 0.0, %v188
  %v190 = vpop.f32.mrb[0].mxu0
  %v191 = vpop.f32.mrb[0].mxu0
  %v192 = vadd.f32 0.0, %v191
  %v193 = vpop.f32.mrb[0].mxu0
  %194 = vmatprep.mubr.bf16.mxu0 0
  %195 = vmatmul.mubr.bf16.gmra.mrb[0].mxu0 %v134
  %v196 = vpop.f32.mrb[0].mxu0
  %v197 = vadd.f32 0.0, %v196
  %v198 = vpop.f32.mrb[0].mxu0
  %v199 = vpop.f32.mrb[0].mxu0
  %v200 = vadd.f32 0.0, %v199
  %v201 = vpop.f32.mrb[0].mxu0
  %202 = vmatprep.mubr.bf16.mxu0 0
  %203 = vmatmul.mubr.bf16.gmra.mrb[0].mxu0 %v137
  %v204 = vpop.f32.mrb[0].mxu0
  %v205 = vadd.f32 0.0, %v204
  %v206 = vpop.f32.mrb[0].mxu0
  %v207 = vpop.f32.mrb[0].mxu0
  %v208 = vadd.f32 0.0, %v207
  %v209 = vpop.f32.mrb[0].mxu0
  %210 = vmatprep.mubr.bf16.mxu0 0
  %211 = vmatmul.mubr.bf16.gmra.mrb[0].mxu0 %v140
  %v212 = vpop.f32.mrb[0].mxu0
  %v213 = vadd.f32 0.0, %v212
  %v214 = vpop.f32.mrb[0].mxu0
  %v215 = vpop.f32.mrb[0].mxu0
  %v216 = vadd.f32 0.0, %v215
  %v217 = vpop.f32.mrb[0].mxu0
  %218 = vmatprep.mubr.bf16.mxu0 0
  %219 = vmatmul.mubr.bf16.gmra.mrb[0].mxu0 %v143
  %v220 = vpop.f32.mrb[0].mxu0
  %v221 = vadd.f32 0.0, %v220
  %v222 = vpop.f32.mrb[0].mxu0
  %v223 = vpop.f32.mrb[0].mxu0
  %v224 = vadd.f32 0.0, %v223
  %v225 = vpop.f32.mrb[0].mxu0
  %226 = vmatprep.mubr.bf16.mxu0 0
  %227 = vmatmul.mubr.bf16.gmra.mrb[0].mxu0 %v146
  %v228 = vpop.f32.mrb[0].mxu0
  %v229 = vadd.f32 0.0, %v228
  %v230 = vpop.f32.mrb[0].mxu0
  %v231 = vpop.f32.mrb[0].mxu0
  %v232 = vadd.f32 0.0, %v231
  %v233 = vpop.f32.mrb[0].mxu0
  %234 = vmatprep.mubr.bf16.mxu0 0
  %235 = vmatmul.mubr.bf16.gmra.mrb[0].mxu0 %v149
  %v236 = vpop.f32.mrb[0].mxu0
  %v237 = vadd.f32 0.0, %v236
  %v238 = vpop.f32.mrb[0].mxu0
  %v239 = vpop.f32.mrb[0].mxu0
  %v240 = vadd.f32 0.0, %v239
  %v241 = vpop.f32.mrb[0].mxu0
  %242 = vmatprep.mubr.bf16.mxu0 0
  %243 = vmatmul.mubr.bf16.gmra.mrb[0].mxu0 %v152
  %v244 = vpop.f32.mrb[0].mxu0
  %v245 = vadd.f32 0.0, %v244
  %v246 = vpop.f32.mrb[0].mxu0
  %v247 = vpop.f32.mrb[0].mxu0
  %v248 = vadd.f32 0.0, %v247
  %v249 = vpop.f32.mrb[0].mxu0
  %250 = vdwg.mxu0
  %v251 = vadd.f32 %v41, %v189
  %v252 = vadd.f32 %v42, %v192
  %v253 = vadd.f32 %v43, %v197
  %v254 = vadd.f32 %v44, %v200
  %v255 = vadd.f32 %v45, %v205
  %v256 = vadd.f32 %v46, %v208
  %v257 = vadd.f32 %v47, %v213
  %v258 = vadd.f32 %v48, %v216
  %v259 = vadd.f32 %v49, %v221
  %v260 = vadd.f32 %v50, %v224
  %v261 = vadd.f32 %v51, %v229
  %v262 = vadd.f32 %v52, %v232
  %v263 = vadd.f32 %v53, %v237
  %v264 = vadd.f32 %v54, %v240
  %v265 = vadd.f32 %v55, %v245
  %v266 = vadd.f32 %v56, %v248
  %267 = vst [vmem:[#allocation2] sm:$0xff] %v251
  %268 = vst [vmem:[#allocation2 + $0x8] sm:$0xff] %v252
  %269 = vst [vmem:[#allocation2 + $0x10] sm:$0xff] %v253
  %270 = vst [vmem:[#allocation2 + $0x18] sm:$0xff] %v254
  %271 = vst [vmem:[#allocation2 + $0x20] sm:$0xff] %v255
  %272 = vst [vmem:[#allocation2 + $0x28] sm:$0xff] %v256
  %273 = vst [vmem:[#allocation2 + $0x30] sm:$0xff] %v257
  %274 = vst [vmem:[#allocation2 + $0x38] sm:$0xff] %v258
  %275 = vst [vmem:[#allocation2 + $0x40] sm:$0xff] %v259
  %276 = vst [vmem:[#allocation2 + $0x48] sm:$0xff] %v260
  %277 = vst [vmem:[#allocation2 + $0x50] sm:$0xff] %v261
  %278 = vst [vmem:[#allocation2 + $0x58] sm:$0xff] %v262
  %279 = vst [vmem:[#allocation2 + $0x60] sm:$0xff] %v263
  %280 = vst [vmem:[#allocation2 + $0x68] sm:$0xff] %v264
  %281 = vst [vmem:[#allocation2 + $0x70] sm:$0xff] %v265
  %282 = vst [vmem:[#allocation2 + $0x78] sm:$0xff] %v266
  // Predicated region
  $region26: #{stn_mbfn_forward.12} parent=0 // pred_check
    %p283 = pneg %p21
  $region27: #{stn_mbfn_forward.12} parent=0 // pred_check_branch
    %285 = sbr.rel (%p283) target = $region29
  $region28: #{stn_mbfn_forward.12} parent=0 // pred_region
    %v286 = vld [vmem:[#allocation2] sm:$0xff]
    %v287 = vld [vmem:[#allocation2 + $0x8] sm:$0xff]
    %v288 = vld [vmem:[#allocation2 + $0x10] sm:$0xff]
    %v289 = vld [vmem:[#allocation2 + $0x18] sm:$0xff]
    %v290 = vld [vmem:[#allocation2 + $0x20] sm:$0xff]
    %v291 = vld [vmem:[#allocation2 + $0x28] sm:$0xff]
    %v292 = vld [vmem:[#allocation2 + $0x30] sm:$0xff]
    %v293 = vld [vmem:[#allocation2 + $0x38] sm:$0xff]
    %v294 = vld [vmem:[#allocation2 + $0x40] sm:$0xff]
    %v295 = vld [vmem:[#allocation2 + $0x48] sm:$0xff]
    %v296 = vld [vmem:[#allocation2 + $0x50] sm:$0xff]
    %v297 = vld [vmem:[#allocation2 + $0x58] sm:$0xff]
    %v298 = vld [vmem:[#allocation2 + $0x60] sm:$0xff]
    %v299 = vld [vmem:[#allocation2 + $0x68] sm:$0xff]
    %v300 = vld [vmem:[#allocation2 + $0x70] sm:$0xff]
    %v301 = vld [vmem:[#allocation2 + $0x78] sm:$0xff]
    %v302 = vld [vmem:[%s2] sm:$0x1]
    %v304 = vlaneseq
    %v305 = vshrl.u32 %v304, 7
    %v306 = vsub.s32 0, %v305
    %v307 = vrot.slane %v302, %v306
    %v309 = vmul.f32 %v286, %v307
    %v310 = vmul.f32 %v287, %v307
    %v311 = vmul.f32 %v288, %v307
    %v312 = vmul.f32 %v289, %v307
    %v313 = vmul.f32 %v290, %v307
    %v314 = vmul.f32 %v291, %v307
    %v315 = vmul.f32 %v292, %v307
    %v316 = vmul.f32 %v293, %v307
    %v317 = vmul.f32 %v294, %v307
    %v318 = vmul.f32 %v295, %v307
    %v319 = vmul.f32 %v296, %v307
    %v320 = vmul.f32 %v297, %v307
    %v321 = vmul.f32 %v298, %v307
    %v322 = vmul.f32 %v299, %v307
    %v323 = vmul.f32 %v300, %v307
    %v324 = vmul.f32 %v301, %v307
    %v325 = vld [vmem:[%s3] sm:$0x1]
    %v327 = vlaneseq
    %v328 = vshrl.u32 %v327, 7
    %v329 = vsub.s32 0, %v328
    %v330 = vrot.slane %v325, %v329
    %v332 = vadd.f32 %v309, %v330
    %v333 = vadd.f32 %v310, %v330
    %v334 = vadd.f32 %v311, %v330
    %v335 = vadd.f32 %v312, %v330
    %v336 = vadd.f32 %v313, %v330
    %v337 = vadd.f32 %v314, %v330
    %v338 = vadd.f32 %v315, %v330
    %v339 = vadd.f32 %v316, %v330
    %v340 = vadd.f32 %v317, %v330
    %v341 = vadd.f32 %v318, %v330
    %v342 = vadd.f32 %v319, %v330
    %v343 = vadd.f32 %v320, %v330
    %v344 = vadd.f32 %v321, %v330
    %v345 = vadd.f32 %v322, %v330
    %v346 = vadd.f32 %v323, %v330
    %v347 = vadd.f32 %v324, %v330
    %vm348 = vcmp.gt.f32.partialorder %v332, 0.0
    %vm349 = vcmp.gt.f32.partialorder %v333, 0.0
    %vm350 = vcmp.gt.f32.partialorder %v334, 0.0
    %vm351 = vcmp.gt.f32.partialorder %v335, 0.0
    %vm352 = vcmp.gt.f32.partialorder %v336, 0.0
    %vm353 = vcmp.gt.f32.partialorder %v337, 0.0
    %vm354 = vcmp.gt.f32.partialorder %v338, 0.0
    %vm355 = vcmp.gt.f32.partialorder %v339, 0.0
    %vm356 = vcmp.gt.f32.partialorder %v340, 0.0
    %vm357 = vcmp.gt.f32.partialorder %v341, 0.0
    %vm358 = vcmp.gt.f32.partialorder %v342, 0.0
    %vm359 = vcmp.gt.f32.partialorder %v343, 0.0
    %vm360 = vcmp.gt.f32.partialorder %v344, 0.0
    %vm361 = vcmp.gt.f32.partialorder %v345, 0.0
    %vm362 = vcmp.gt.f32.partialorder %v346, 0.0
    %vm363 = vcmp.gt.f32.partialorder %v347, 0.0
    %v364 = vld [vmem:[%s4] sm:$0x1]
    %v366 = vlaneseq
    %v367 = vshrl.u32 %v366, 7
    %v368 = vsub.s32 0, %v367
    %v369 = vrot.slane %v364, %v368
    %v371 = vmul.f32 %v369, %v332
    %v372 = vmul.f32 %v369, %v333
    %v373 = vmul.f32 %v369, %v334
    %v374 = vmul.f32 %v369, %v335
    %v375 = vmul.f32 %v369, %v336
    %v376 = vmul.f32 %v369, %v337
    %v377 = vmul.f32 %v369, %v338
    %v378 = vmul.f32 %v369, %v339
    %v379 = vmul.f32 %v369, %v340
    %v380 = vmul.f32 %v369, %v341
    %v381 = vmul.f32 %v369, %v342
    %v382 = vmul.f32 %v369, %v343
    %v383 = vmul.f32 %v369, %v344
    %v384 = vmul.f32 %v369, %v345
    %v385 = vmul.f32 %v369, %v346
    %v386 = vmul.f32 %v369, %v347
    %v387 = vsel %vm348, %v332, %v371
    %v388 = vsel %vm349, %v333, %v372
    %v389 = vsel %vm350, %v334, %v373
    %v390 = vsel %vm351, %v335, %v374
    %v391 = vsel %vm352, %v336, %v375
    %v392 = vsel %vm353, %v337, %v376
    %v393 = vsel %vm354, %v338, %v377
    %v394 = vsel %vm355, %v339, %v378
    %v395 = vsel %vm356, %v340, %v379
    %v396 = vsel %vm357, %v341, %v380
    %v397 = vsel %vm358, %v342, %v381
    %v398 = vsel %vm359, %v343, %v382
    %v399 = vsel %vm360, %v344, %v383
    %v400 = vsel %vm361, %v345, %v384
    %v401 = vsel %vm362, %v346, %v385
    %v402 = vsel %vm363, %v347, %v386
    %403 = vst [vmem:[%s5] sm:$0xff] %v387
    %404 = vst [vmem:[%s5 + $0x8] sm:$0xff] %v388
    %405 = vst [vmem:[%s5 + $0x10] sm:$0xff] %v389
    %406 = vst [vmem:[%s5 + $0x18] sm:$0xff] %v390
    %407 = vst [vmem:[%s5 + $0x20] sm:$0xff] %v391
    %408 = vst [vmem:[%s5 + $0x28] sm:$0xff] %v392
    %409 = vst [vmem:[%s5 + $0x30] sm:$0xff] %v393
    %410 = vst [vmem:[%s5 + $0x38] sm:$0xff] %v394
    %411 = vst [vmem:[%s5 + $0x40] sm:$0xff] %v395
    %412 = vst [vmem:[%s5 + $0x48] sm:$0xff] %v396
    %413 = vst [vmem:[%s5 + $0x50] sm:$0xff] %v397
    %414 = vst [vmem:[%s5 + $0x58] sm:$0xff] %v398
    %415 = vst [vmem:[%s5 + $0x60] sm:$0xff] %v399
    %416 = vst [vmem:[%s5 + $0x68] sm:$0xff] %v400
    %417 = vst [vmem:[%s5 + $0x70] sm:$0xff] %v401
    %418 = vst [vmem:[%s5 + $0x78] sm:$0xff] %v402
  $region29: #{stn_mbfn_forward.12} parent=0 // pred_fallthru
    _
  // Predicated region
  $region30: #{stn_mbfn_forward.12} parent=0 // pred_check
    _
  $region31: #{stn_mbfn_forward.12} parent=0 // pred_check_branch
    %420 = sbr.rel (0) target = $region33
  $region32: #{stn_mbfn_forward.12} parent=0 // pred_region
    _
  $region33: #{stn_mbfn_forward.12} parent=0 // pred_fallthru
    _
  // Predicated region
  $region34: #{stn_mbfn_forward.12} parent=0 // pred_check
    _
  $region35: #{stn_mbfn_forward.12} parent=0 // pred_check_branch
    %422 = sbr.rel (0) target = $region37
  $region36: #{stn_mbfn_forward.12} parent=0 // pred_region
    _
  $region37: #{stn_mbfn_forward.12} parent=0 // pred_fallthru
    _

// kernel: stn_mbfn_forward.14
$region0: #{stn_mbfn_forward.14}
  #allocation0 [shape = 'u32[]', space=smem, size = 0x4, offset = 0x4, fixed_abs, tag = 'smem constant byte address 0x4 - core index']
  #allocation1 [shape = 'u32[144,128]{1,0:T(1,128)}', space=vmem, size = 0x12000, scoped, tag = 'internal scratch']
  #allocation2 [shape = 'f32[128,128]{1,0:T(8,128)}', space=vmem, size = 0x10000, scoped, tag = 'scratch operand']
  %s0 = inlined_call_operand.vmem [shape: bf16[128,128], index: 0, kind: input, shape index: {}]
  %s1 = inlined_call_operand.vmem [shape: bf16[128,128], index: 1, kind: input, shape index: {}]
  %s2 = inlined_call_operand.vmem [shape: f32[1,128], index: 2, kind: input, shape index: {}]
  %s3 = inlined_call_operand.vmem [shape: f32[1,128], index: 3, kind: input, shape index: {}]
  %s4 = inlined_call_operand.vmem [shape: f32[1,128], index: 4, kind: input, shape index: {}]
  %s5 = inlined_call_operand.vmem [shape: f32[128,128], index: 5, kind: output, shape index: {}]
  %s6 = sld [smem:[#allocation0]]
  $region38: #{stn_mbfn_forward.14} parent=0
    _
  %s8 = ssub.s32 1, %s6
  %s9 = scalar_select 0, %s8, %s6
  // Predicated region
  $region2: #{stn_mbfn_forward.14} parent=0 // pred_check
    _
  $region3: #{stn_mbfn_forward.14} parent=0 // pred_check_branch
    %11 = sbr.rel (0) target = $region5
  $region4: #{stn_mbfn_forward.14} parent=0 // pred_region
    _
  $region5: #{stn_mbfn_forward.14} parent=0 // pred_fallthru
    _
  // Predicated region
  $region6: #{stn_mbfn_forward.14} parent=0 // pred_check
    _
  $region7: #{stn_mbfn_forward.14} parent=0 // pred_check_branch
    %13 = sbr.rel (0) target = $region9
  $region8: #{stn_mbfn_forward.14} parent=0 // pred_region
    _
  $region9: #{stn_mbfn_forward.14} parent=0 // pred_fallthru
    _
  // Predicated region
  $region10: #{stn_mbfn_forward.14} parent=0 // pred_check
    _
  $region11: #{stn_mbfn_forward.14} parent=0 // pred_check_branch
    %15 = sbr.rel (0) target = $region13
  $region12: #{stn_mbfn_forward.14} parent=0 // pred_region
    _
  $region13: #{stn_mbfn_forward.14} parent=0 // pred_fallthru
    _
  // Predicated region
  $region14: #{stn_mbfn_forward.14} parent=0 // pred_check
    _
  $region15: #{stn_mbfn_forward.14} parent=0 // pred_check_branch
    %17 = sbr.rel (0) target = $region17
  $region16: #{stn_mbfn_forward.14} parent=0 // pred_region
    _
  $region17: #{stn_mbfn_forward.14} parent=0 // pred_fallthru
    _
  // Predicated region
  $region18: #{stn_mbfn_forward.14} parent=0 // pred_check
    _
  $region19: #{stn_mbfn_forward.14} parent=0 // pred_check_branch
    %19 = sbr.rel (0) target = $region21
  $region20: #{stn_mbfn_forward.14} parent=0 // pred_region
    _
  $region21: #{stn_mbfn_forward.14} parent=0 // pred_fallthru
    _
  %p21 = scmp.eq.s32.totalorder 0, 0
  // Predicated region
  $region22: #{stn_mbfn_forward.14} parent=0 // pred_check
    %p22 = pneg %p21
  $region23: #{stn_mbfn_forward.14} parent=0 // pred_check_branch
    %24 = sbr.rel (%p22) target = $region25
  $region24: #{stn_mbfn_forward.14} parent=0 // pred_region
    %25 = vst [vmem:[#allocation2] sm:$0xff] 0.0
    %26 = vst [vmem:[#allocation2 + $0x8] sm:$0xff] 0.0
    %27 = vst [vmem:[#allocation2 + $0x10] sm:$0xff] 0.0
    %28 = vst [vmem:[#allocation2 + $0x18] sm:$0xff] 0.0
    %29 = vst [vmem:[#allocation2 + $0x20] sm:$0xff] 0.0
    %30 = vst [vmem:[#allocation2 + $0x28] sm:$0xff] 0.0
    %31 = vst [vmem:[#allocation2 + $0x30] sm:$0xff] 0.0
    %32 = vst [vmem:[#allocation2 + $0x38] sm:$0xff] 0.0
    %33 = vst [vmem:[#allocation2 + $0x40] sm:$0xff] 0.0
    %34 = vst [vmem:[#allocation2 + $0x48] sm:$0xff] 0.0
    %35 = vst [vmem:[#allocation2 + $0x50] sm:$0xff] 0.0
    %36 = vst [vmem:[#allocation2 + $0x58] sm:$0xff] 0.0
    %37 = vst [vmem:[#allocation2 + $0x60] sm:$0xff] 0.0
    %38 = vst [vmem:[#allocation2 + $0x68] sm:$0xff] 0.0
    %39 = vst [vmem:[#allocation2 + $0x70] sm:$0xff] 0.0
    %40 = vst [vmem:[#allocation2 + $0x78] sm:$0xff] 0.0
  $region25: #{stn_mbfn_forward.14} parent=0 // pred_fallthru
    _
  %v41 = vld [vmem:[#allocation2] sm:$0xff]
  %v42 = vld [vmem:[#allocation2 + $0x8] sm:$0xff]
  %v43 = vld [vmem:[#allocation2 + $0x10] sm:$0xff]
  %v44 = vld [vmem:[#allocation2 + $0x18] sm:$0xff]
  %v45 = vld [vmem:[#allocation2 + $0x20] sm:$0xff]
  %v46 = vld [vmem:[#allocation2 + $0x28] sm:$0xff]
  %v47 = vld [vmem:[#allocation2 + $0x30] sm:$0xff]
  %v48 = vld [vmem:[#allocation2 + $0x38] sm:$0xff]
  %v49 = vld [vmem:[#allocation2 + $0x40] sm:$0xff]
  %v50 = vld [vmem:[#allocation2 + $0x48] sm:$0xff]
  %v51 = vld [vmem:[#allocation2 + $0x50] sm:$0xff]
  %v52 = vld [vmem:[#allocation2 + $0x58] sm:$0xff]
  %v53 = vld [vmem:[#allocation2 + $0x60] sm:$0xff]
  %v54 = vld [vmem:[#allocation2 + $0x68] sm:$0xff]
  %v55 = vld [vmem:[#allocation2 + $0x70] sm:$0xff]
  %v56 = vld [vmem:[#allocation2 + $0x78] sm:$0xff]
  %v57 = vld [vmem:[%s0] sm:$0xf]
  %v58 = vld [vmem:[%s0 + $0x4] sm:$0xf]
  %v59 = vld [vmem:[%s0 + $0x8] sm:$0xf]
  %v60 = vld [vmem:[%s0 + $0xc] sm:$0xf]
  %v61 = vld [vmem:[%s0 + $0x10] sm:$0xf]
  %v62 = vld [vmem:[%s0 + $0x14] sm:$0xf]
  %v63 = vld [vmem:[%s0 + $0x18] sm:$0xf]
  %v64 = vld [vmem:[%s0 + $0x1c] sm:$0xf]
  %v65 = vld [vmem:[%s0 + $0x20] sm:$0xf]
  %v66 = vld [vmem:[%s0 + $0x24] sm:$0xf]
  %v67 = vld [vmem:[%s0 + $0x28] sm:$0xf]
  %v68 = vld [vmem:[%s0 + $0x2c] sm:$0xf]
  %v69 = vld [vmem:[%s0 + $0x30] sm:$0xf]
  %v70 = vld [vmem:[%s0 + $0x34] sm:$0xf]
  %v71 = vld [vmem:[%s0 + $0x38] sm:$0xf]
  %v72 = vld [vmem:[%s0 + $0x3c] sm:$0xf]
  %v73 = vld [vmem:[%s1] sm:$0xf]
  %v74 = vld [vmem:[%s1 + $0x4] sm:$0xf]
  %v75 = vld [vmem:[%s1 + $0x8] sm:$0xf]
  %v76 = vld [vmem:[%s1 + $0xc] sm:$0xf]
  %v77 = vld [vmem:[%s1 + $0x10] sm:$0xf]
  %v78 = vld [vmem:[%s1 + $0x14] sm:$0xf]
  %v79 = vld [vmem:[%s1 + $0x18] sm:$0xf]
  %v80 = vld [vmem:[%s1 + $0x1c] sm:$0xf]
  %v81 = vld [vmem:[%s1 + $0x20] sm:$0xf]
  %v82 = vld [vmem:[%s1 + $0x24] sm:$0xf]
  %v83 = vld [vmem:[%s1 + $0x28] sm:$0xf]
  %v84 = vld [vmem:[%s1 + $0x2c] sm:$0xf]
  %v85 = vld [vmem:[%s1 + $0x30] sm:$0xf]
  %v86 = vld [vmem:[%s1 + $0x34] sm:$0xf]
  %v87 = vld [vmem:[%s1 + $0x38] sm:$0xf]
  %v88 = vld [vmem:[%s1 + $0x3c] sm:$0xf]
  %v105 = vunpack.c.l.b16 %v57
  %v106 = vunpack.c.l.b16 %v58
  %v107 = vunpack.c.l.b16 %v59
  %v108 = vunpack.c.l.b16 %v60
  %v109 = vunpack.c.l.b16 %v61
  %v110 = vunpack.c.l.b16 %v62
  %v111 = vunpack.c.l.b16 %v63
  %v112 = vunpack.c.l.b16 %v64
  %v113 = vunpack.c.l.b16 %v65
  %v114 = vunpack.c.l.b16 %v66
  %v115 = vunpack.c.l.b16 %v67
  %v116 = vunpack.c.l.b16 %v68
  %v117 = vunpack.c.l.b16 %v69
  %v118 = vunpack.c.l.b16 %v70
  %v119 = vunpack.c.l.b16 %v71
  %v120 = vunpack.c.l.b16 %v72
  %v121 = vpack.c.b16 %v106, %v105
  %v122 = vpack.c.b16 %v108, %v107
  %v123 = vpack.c.b16 %v110, %v109
  %v124 = vpack.c.b16 %v112, %v111
  %v125 = vpack.c.b16 %v114, %v113
  %v126 = vpack.c.b16 %v116, %v115
  %v127 = vpack.c.b16 %v118, %v117
  %v128 = vpack.c.b16 %v120, %v119
  %v153 = vunpack.c.l.b16 %v73
  %v154 = vunpack.c.l.b16 %v74
  %v155 = vunpack.c.l.b16 %v75
  %v156 = vunpack.c.l.b16 %v76
  %v157 = vunpack.c.l.b16 %v77
  %v158 = vunpack.c.l.b16 %v78
  %v159 = vunpack.c.l.b16 %v79
  %v160 = vunpack.c.l.b16 %v80
  %v161 = vunpack.c.l.b16 %v81
  %v162 = vunpack.c.l.b16 %v82
  %v163 = vunpack.c.l.b16 %v83
  %v164 = vunpack.c.l.b16 %v84
  %v165 = vunpack.c.l.b16 %v85
  %v166 = vunpack.c.l.b16 %v86
  %v167 = vunpack.c.l.b16 %v87
  %v168 = vunpack.c.l.b16 %v88
  %v169 = vpack.c.b16 %v154, %v153
  %v170 = vpack.c.b16 %v156, %v155
  %v171 = vpack.c.b16 %v158, %v157
  %v172 = vpack.c.b16 %v160, %v159
  %v173 = vpack.c.b16 %v162, %v161
  %v174 = vpack.c.b16 %v164, %v163
  %v175 = vpack.c.b16 %v166, %v165
  %v176 = vpack.c.b16 %v168, %v167
  %185 = vmatprep.subr.bf16.mxu0 0
  %186 = vmatpush1.bf16.msra.mxu0 %v169
  %187 = vmatprep.subr.bf16.mxu0 0
  %188 = vmatpush1.bf16.msra.mxu0 %v170
  %189 = vmatprep.subr.bf16.mxu0 0
  %190 = vmatpush1.bf16.msra.mxu0 %v171
  %191 = vmatprep.subr.bf16.mxu0 0
  %192 = vmatpush1.bf16.msra.mxu0 %v172
  %193 = vmatprep.subr.bf16.mxu0 0
  %194 = vmatpush1.bf16.msra.mxu0 %v173
  %195 = vmatprep.subr.bf16.mxu0 0
  %196 = vmatpush1.bf16.msra.mxu0 %v174
  %197 = vmatprep.subr.bf16.mxu0 0
  %198 = vmatpush1.bf16.msra.mxu0 %v175
  %199 = vmatprep.subr.bf16.mxu0 0
  %200 = vmatpush1.bf16.msra.mxu0 %v176
  %201 = vmatprep.subr.bf16.mxu0 0
  %202 = vmatpush1.bf16.msra.mxu0 0
  %203 = vmatprep.subr.bf16.mxu0 0
  %204 = vmatpush1.bf16.msra.mxu0 0
  %205 = vmatprep.subr.bf16.mxu0 0
  %206 = vmatpush1.bf16.msra.mxu0 0
  %207 = vmatprep.subr.bf16.mxu0 0
  %208 = vmatpush1.bf16.msra.mxu0 0
  %209 = vmatprep.subr.bf16.mxu0 0
  %210 = vmatpush1.bf16.msra.mxu0 0
  %211 = vmatprep.subr.bf16.mxu0 0
  %212 = vmatpush1.bf16.msra.mxu0 0
  %213 = vmatprep.subr.bf16.mxu0 0
  %214 = vmatpush1.bf16.msra.mxu0 0
  %215 = vmatprep.subr.bf16.mxu0 0
  %216 = vmatpush1.bf16.msra.mxu0 0
  %217 = vmatprep.mubr.bf16.mxu0 0
  %218 = vmatmul.mubr.bf16.gmra.mrb[0].mxu0 %v121
  %v219 = vpop.f32.mrb[0].mxu0
  %v220 = vadd.f32 0.0, %v219
  %v221 = vpop.f32.mrb[0].mxu0
  %v222 = vpop.f32.mrb[0].mxu0
  %v223 = vadd.f32 0.0, %v222
  %v224 = vpop.f32.mrb[0].mxu0
  %225 = vmatprep.mubr.bf16.mxu0 0
  %226 = vmatmul.mubr.bf16.gmra.mrb[0].mxu0 %v122
  %v227 = vpop.f32.mrb[0].mxu0
  %v228 = vadd.f32 0.0, %v227
  %v229 = vpop.f32.mrb[0].mxu0
  %v230 = vpop.f32.mrb[0].mxu0
  %v231 = vadd.f32 0.0, %v230
  %v232 = vpop.f32.mrb[0].mxu0
  %233 = vmatprep.mubr.bf16.mxu0 0
  %234 = vmatmul.mubr.bf16.gmra.mrb[0].mxu0 %v123
  %v235 = vpop.f32.mrb[0].mxu0
  %v236 = vadd.f32 0.0, %v235
  %v237 = vpop.f32.mrb[0].mxu0
  %v238 = vpop.f32.mrb[0].mxu0
  %v239 = vadd.f32 0.0, %v238
  %v240 = vpop.f32.mrb[0].mxu0
  %241 = vmatprep.mubr.bf16.mxu0 0
  %242 = vmatmul.mubr.bf16.gmra.mrb[0].mxu0 %v124
  %v243 = vpop.f32.mrb[0].mxu0
  %v244 = vadd.f32 0.0, %v243
  %v245 = vpop.f32.mrb[0].mxu0
  %v246 = vpop.f32.mrb[0].mxu0
  %v247 = vadd.f32 0.0, %v246
  %v248 = vpop.f32.mrb[0].mxu0
  %249 = vmatprep.mubr.bf16.mxu0 0
  %250 = vmatmul.mubr.bf16.gmra.mrb[0].mxu0 %v125
  %v251 = vpop.f32.mrb[0].mxu0
  %v252 = vadd.f32 0.0, %v251
  %v253 = vpop.f32.mrb[0].mxu0
  %v254 = vpop.f32.mrb[0].mxu0
  %v255 = vadd.f32 0.0, %v254
  %v256 = vpop.f32.mrb[0].mxu0
  %257 = vmatprep.mubr.bf16.mxu0 0
  %258 = vmatmul.mubr.bf16.gmra.mrb[0].mxu0 %v126
  %v259 = vpop.f32.mrb[0].mxu0
  %v260 = vadd.f32 0.0, %v259
  %v261 = vpop.f32.mrb[0].mxu0
  %v262 = vpop.f32.mrb[0].mxu0
  %v263 = vadd.f32 0.0, %v262
  %v264 = vpop.f32.mrb[0].mxu0
  %265 = vmatprep.mubr.bf16.mxu0 0
  %266 = vmatmul.mubr.bf16.gmra.mrb[0].mxu0 %v127
  %v267 = vpop.f32.mrb[0].mxu0
  %v268 = vadd.f32 0.0, %v267
  %v269 = vpop.f32.mrb[0].mxu0
  %v270 = vpop.f32.mrb[0].mxu0
  %v271 = vadd.f32 0.0, %v270
  %v272 = vpop.f32.mrb[0].mxu0
  %273 = vmatprep.mubr.bf16.mxu0 0
  %274 = vmatmul.mubr.bf16.gmra.mrb[0].mxu0 %v128
  %v275 = vpop.f32.mrb[0].mxu0
  %v276 = vadd.f32 0.0, %v275
  %v277 = vpop.f32.mrb[0].mxu0
  %v278 = vpop.f32.mrb[0].mxu0
  %v279 = vadd.f32 0.0, %v278
  %v280 = vpop.f32.mrb[0].mxu0
  %281 = vdwg.mxu0
  %v282 = vadd.f32 %v41, %v220
  %v283 = vadd.f32 %v42, %v223
  %v284 = vadd.f32 %v43, %v228
  %v285 = vadd.f32 %v44, %v231
  %v286 = vadd.f32 %v45, %v236
  %v287 = vadd.f32 %v46, %v239
  %v288 = vadd.f32 %v47, %v244
  %v289 = vadd.f32 %v48, %v247
  %v290 = vadd.f32 %v49, %v252
  %v291 = vadd.f32 %v50, %v255
  %v292 = vadd.f32 %v51, %v260
  %v293 = vadd.f32 %v52, %v263
  %v294 = vadd.f32 %v53, %v268
  %v295 = vadd.f32 %v54, %v271
  %v296 = vadd.f32 %v55, %v276
  %v297 = vadd.f32 %v56, %v279
  %298 = vst [vmem:[#allocation2] sm:$0xff] %v282
  %299 = vst [vmem:[#allocation2 + $0x8] sm:$0xff] %v283
  %300 = vst [vmem:[#allocation2 + $0x10] sm:$0xff] %v284
  %301 = vst [vmem:[#allocation2 + $0x18] sm:$0xff] %v285
  %302 = vst [vmem:[#allocation2 + $0x20] sm:$0xff] %v286
  %303 = vst [vmem:[#allocation2 + $0x28] sm:$0xff] %v287
  %304 = vst [vmem:[#allocation2 + $0x30] sm:$0xff] %v288
  %305 = vst [vmem:[#allocation2 + $0x38] sm:$0xff] %v289
  %306 = vst [vmem:[#allocation2 + $0x40] sm:$0xff] %v290
  %307 = vst [vmem:[#allocation2 + $0x48] sm:$0xff] %v291
  %308 = vst [vmem:[#allocation2 + $0x50] sm:$0xff] %v292
  %309 = vst [vmem:[#allocation2 + $0x58] sm:$0xff] %v293
  %310 = vst [vmem:[#allocation2 + $0x60] sm:$0xff] %v294
  %311 = vst [vmem:[#allocation2 + $0x68] sm:$0xff] %v295
  %312 = vst [vmem:[#allocation2 + $0x70] sm:$0xff] %v296
  %313 = vst [vmem:[#allocation2 + $0x78] sm:$0xff] %v297
  // Predicated region
  $region26: #{stn_mbfn_forward.14} parent=0 // pred_check
    %p314 = pneg %p21
  $region27: #{stn_mbfn_forward.14} parent=0 // pred_check_branch
    %316 = sbr.rel (%p314) target = $region29
  $region28: #{stn_mbfn_forward.14} parent=0 // pred_region
    %v317 = vld [vmem:[#allocation2] sm:$0xff]
    %v318 = vld [vmem:[#allocation2 + $0x8] sm:$0xff]
    %v319 = vld [vmem:[#allocation2 + $0x10] sm:$0xff]
    %v320 = vld [vmem:[#allocation2 + $0x18] sm:$0xff]
    %v321 = vld [vmem:[#allocation2 + $0x20] sm:$0xff]
    %v322 = vld [vmem:[#allocation2 + $0x28] sm:$0xff]
    %v323 = vld [vmem:[#allocation2 + $0x30] sm:$0xff]
    %v324 = vld [vmem:[#allocation2 + $0x38] sm:$0xff]
    %v325 = vld [vmem:[#allocation2 + $0x40] sm:$0xff]
    %v326 = vld [vmem:[#allocation2 + $0x48] sm:$0xff]
    %v327 = vld [vmem:[#allocation2 + $0x50] sm:$0xff]
    %v328 = vld [vmem:[#allocation2 + $0x58] sm:$0xff]
    %v329 = vld [vmem:[#allocation2 + $0x60] sm:$0xff]
    %v330 = vld [vmem:[#allocation2 + $0x68] sm:$0xff]
    %v331 = vld [vmem:[#allocation2 + $0x70] sm:$0xff]
    %v332 = vld [vmem:[#allocation2 + $0x78] sm:$0xff]
    %v333 = vld [vmem:[%s2] sm:$0x1]
    %v335 = vlaneseq
    %v336 = vshrl.u32 %v335, 7
    %v337 = vsub.s32 0, %v336
    %v338 = vrot.slane %v333, %v337
    %v340 = vmul.f32 %v317, %v338
    %v341 = vmul.f32 %v318, %v338
    %v342 = vmul.f32 %v319, %v338
    %v343 = vmul.f32 %v320, %v338
    %v344 = vmul.f32 %v321, %v338
    %v345 = vmul.f32 %v322, %v338
    %v346 = vmul.f32 %v323, %v338
    %v347 = vmul.f32 %v324, %v338
    %v348 = vmul.f32 %v325, %v338
    %v349 = vmul.f32 %v326, %v338
    %v350 = vmul.f32 %v327, %v338
    %v351 = vmul.f32 %v328, %v338
    %v352 = vmul.f32 %v329, %v338
    %v353 = vmul.f32 %v330, %v338
    %v354 = vmul.f32 %v331, %v338
    %v355 = vmul.f32 %v332, %v338
    %v356 = vld [vmem:[%s3] sm:$0x1]
    %v358 = vlaneseq
    %v359 = vshrl.u32 %v358, 7
    %v360 = vsub.s32 0, %v359
    %v361 = vrot.slane %v356, %v360
    %v363 = vadd.f32 %v340, %v361
    %v364 = vadd.f32 %v341, %v361
    %v365 = vadd.f32 %v342, %v361
    %v366 = vadd.f32 %v343, %v361
    %v367 = vadd.f32 %v344, %v361
    %v368 = vadd.f32 %v345, %v361
    %v369 = vadd.f32 %v346, %v361
    %v370 = vadd.f32 %v347, %v361
    %v371 = vadd.f32 %v348, %v361
    %v372 = vadd.f32 %v349, %v361
    %v373 = vadd.f32 %v350, %v361
    %v374 = vadd.f32 %v351, %v361
    %v375 = vadd.f32 %v352, %v361
    %v376 = vadd.f32 %v353, %v361
    %v377 = vadd.f32 %v354, %v361
    %v378 = vadd.f32 %v355, %v361
    %vm379 = vcmp.gt.f32.partialorder %v363, 0.0
    %vm380 = vcmp.gt.f32.partialorder %v364, 0.0
    %vm381 = vcmp.gt.f32.partialorder %v365, 0.0
    %vm382 = vcmp.gt.f32.partialorder %v366, 0.0
    %vm383 = vcmp.gt.f32.partialorder %v367, 0.0
    %vm384 = vcmp.gt.f32.partialorder %v368, 0.0
    %vm385 = vcmp.gt.f32.partialorder %v369, 0.0
    %vm386 = vcmp.gt.f32.partialorder %v370, 0.0
    %vm387 = vcmp.gt.f32.partialorder %v371, 0.0
    %vm388 = vcmp.gt.f32.partialorder %v372, 0.0
    %vm389 = vcmp.gt.f32.partialorder %v373, 0.0
    %vm390 = vcmp.gt.f32.partialorder %v374, 0.0
    %vm391 = vcmp.gt.f32.partialorder %v375, 0.0
    %vm392 = vcmp.gt.f32.partialorder %v376, 0.0
    %vm393 = vcmp.gt.f32.partialorder %v377, 0.0
    %vm394 = vcmp.gt.f32.partialorder %v378, 0.0
    %v395 = vld [vmem:[%s4] sm:$0x1]
    %v397 = vlaneseq
    %v398 = vshrl.u32 %v397, 7
    %v399 = vsub.s32 0, %v398
    %v400 = vrot.slane %v395, %v399
    %v402 = vmul.f32 %v400, %v363
    %v403 = vmul.f32 %v400, %v364
    %v404 = vmul.f32 %v400, %v365
    %v405 = vmul.f32 %v400, %v366
    %v406 = vmul.f32 %v400, %v367
    %v407 = vmul.f32 %v400, %v368
    %v408 = vmul.f32 %v400, %v369
    %v409 = vmul.f32 %v400, %v370
    %v410 = vmul.f32 %v400, %v371
    %v411 = vmul.f32 %v400, %v372
    %v412 = vmul.f32 %v400, %v373
    %v413 = vmul.f32 %v400, %v374
    %v414 = vmul.f32 %v400, %v375
    %v415 = vmul.f32 %v400, %v376
    %v416 = vmul.f32 %v400, %v377
    %v417 = vmul.f32 %v400, %v378
    %v418 = vsel %vm379, %v363, %v402
    %v419 = vsel %vm380, %v364, %v403
    %v420 = vsel %vm381, %v365, %v404
    %v421 = vsel %vm382, %v366, %v405
    %v422 = vsel %vm383, %v367, %v406
    %v423 = vsel %vm384, %v368, %v407
    %v424 = vsel %vm385, %v369, %v408
    %v425 = vsel %vm386, %v370, %v409
    %v426 = vsel %vm387, %v371, %v410
    %v427 = vsel %vm388, %v372, %v411
    %v428 = vsel %vm389, %v373, %v412
    %v429 = vsel %vm390, %v374, %v413
    %v430 = vsel %vm391, %v375, %v414
    %v431 = vsel %vm392, %v376, %v415
    %v432 = vsel %vm393, %v377, %v416
    %v433 = vsel %vm394, %v378, %v417
    %434 = vst [vmem:[%s5] sm:$0xff] %v418
    %435 = vst [vmem:[%s5 + $0x8] sm:$0xff] %v419
    %436 = vst [vmem:[%s5 + $0x10] sm:$0xff] %v420
    %437 = vst [vmem:[%s5 + $0x18] sm:$0xff] %v421
    %438 = vst [vmem:[%s5 + $0x20] sm:$0xff] %v422
    %439 = vst [vmem:[%s5 + $0x28] sm:$0xff] %v423
    %440 = vst [vmem:[%s5 + $0x30] sm:$0xff] %v424
    %441 = vst [vmem:[%s5 + $0x38] sm:$0xff] %v425
    %442 = vst [vmem:[%s5 + $0x40] sm:$0xff] %v426
    %443 = vst [vmem:[%s5 + $0x48] sm:$0xff] %v427
    %444 = vst [vmem:[%s5 + $0x50] sm:$0xff] %v428
    %445 = vst [vmem:[%s5 + $0x58] sm:$0xff] %v429
    %446 = vst [vmem:[%s5 + $0x60] sm:$0xff] %v430
    %447 = vst [vmem:[%s5 + $0x68] sm:$0xff] %v431
    %448 = vst [vmem:[%s5 + $0x70] sm:$0xff] %v432
    %449 = vst [vmem:[%s5 + $0x78] sm:$0xff] %v433
  $region29: #{stn_mbfn_forward.14} parent=0 // pred_fallthru
    _
  // Predicated region
  $region30: #{stn_mbfn_forward.14} parent=0 // pred_check
    _
  $region31: #{stn_mbfn_forward.14} parent=0 // pred_check_branch
    %451 = sbr.rel (0) target = $region33
  $region32: #{stn_mbfn_forward.14} parent=0 // pred_region
    _
  $region33: #{stn_mbfn_forward.14} parent=0 // pred_fallthru
    _
  // Predicated region
  $region34: #{stn_mbfn_forward.14} parent=0 // pred_check
    _
  $region35: #{stn_mbfn_forward.14} parent=0 // pred_check_branch
    %453 = sbr.rel (0) target = $region37
  $region36: #{stn_mbfn_forward.14} parent=0 // pred_region
    _
  $region37: #{stn_mbfn_forward.14} parent=0 // pred_fallthru
    _

// kernel: stn_mbfn_forward.13
$region0: #{stn_mbfn_forward.13}
  #allocation0 [shape = 'u32[]', space=smem, size = 0x4, offset = 0x4, fixed_abs, tag = 'smem constant byte address 0x4 - core index']
  #allocation1 [shape = 'u32[144,128]{1,0:T(1,128)}', space=vmem, size = 0x12000, scoped, tag = 'internal scratch']
  %s0 = inlined_call_operand.vmem [shape: bf16[9,128,128], index: 0, kind: input, shape index: {}]
  %s1 = inlined_call_operand.vmem [shape: f32[9,1,128], index: 1, kind: input, shape index: {}]
  %s2 = inlined_call_operand.vmem [shape: f32[1,128], index: 2, kind: input, shape index: {}]
  %s3 = inlined_call_operand.vmem [shape: f32[1,128], index: 3, kind: input, shape index: {}]
  %s4 = inlined_call_operand.vmem [shape: f32[1,128], index: 4, kind: input, shape index: {}]
  %s5 = inlined_call_operand.vmem [shape: f32[128,128], index: 5, kind: output, shape index: {}]
  %s6 = sld [smem:[#allocation0]]
  $region30: #{stn_mbfn_forward.13} parent=0
    _
  %s8 = ssub.s32 1, %s6
  %s9 = scalar_select 0, %s8, %s6
  // Predicated region
  $region2: #{stn_mbfn_forward.13} parent=0 // pred_check
    _
  $region3: #{stn_mbfn_forward.13} parent=0 // pred_check_branch
    %11 = sbr.rel (0) target = $region5
  $region4: #{stn_mbfn_forward.13} parent=0 // pred_region
    _
  $region5: #{stn_mbfn_forward.13} parent=0 // pred_fallthru
    _
  // Predicated region
  $region6: #{stn_mbfn_forward.13} parent=0 // pred_check
    _
  $region7: #{stn_mbfn_forward.13} parent=0 // pred_check_branch
    %13 = sbr.rel (0) target = $region9
  $region8: #{stn_mbfn_forward.13} parent=0 // pred_region
    _
  $region9: #{stn_mbfn_forward.13} parent=0 // pred_fallthru
    _
  // Predicated region
  $region10: #{stn_mbfn_forward.13} parent=0 // pred_check
    _
  $region11: #{stn_mbfn_forward.13} parent=0 // pred_check_branch
    %15 = sbr.rel (0) target = $region13
  $region12: #{stn_mbfn_forward.13} parent=0 // pred_region
    _
  $region13: #{stn_mbfn_forward.13} parent=0 // pred_fallthru
    _
  // Predicated region
  $region14: #{stn_mbfn_forward.13} parent=0 // pred_check
    _
  $region15: #{stn_mbfn_forward.13} parent=0 // pred_check_branch
    %17 = sbr.rel (0) target = $region17
  $region16: #{stn_mbfn_forward.13} parent=0 // pred_region
    _
  $region17: #{stn_mbfn_forward.13} parent=0 // pred_fallthru
    _
  // Predicated region
  $region18: #{stn_mbfn_forward.13} parent=0 // pred_check
    _
  $region19: #{stn_mbfn_forward.13} parent=0 // pred_check_branch
    %19 = sbr.rel (0) target = $region21
  $region20: #{stn_mbfn_forward.13} parent=0 // pred_region
    _
  $region21: #{stn_mbfn_forward.13} parent=0 // pred_fallthru
    _
  %v20 = vld [vmem:[%s0] sm:$0xf]
  %v21 = vld [vmem:[%s0 + $0x4] sm:$0xf]
  %v22 = vld [vmem:[%s0 + $0x8] sm:$0xf]
  %v23 = vld [vmem:[%s0 + $0xc] sm:$0xf]
  %v24 = vld [vmem:[%s0 + $0x10] sm:$0xf]
  %v25 = vld [vmem:[%s0 + $0x14] sm:$0xf]
  %v26 = vld [vmem:[%s0 + $0x18] sm:$0xf]
  %v27 = vld [vmem:[%s0 + $0x1c] sm:$0xf]
  %v28 = vld [vmem:[%s0 + $0x20] sm:$0xf]
  %v29 = vld [vmem:[%s0 + $0x24] sm:$0xf]
  %v30 = vld [vmem:[%s0 + $0x28] sm:$0xf]
  %v31 = vld [vmem:[%s0 + $0x2c] sm:$0xf]
  %v32 = vld [vmem:[%s0 + $0x30] sm:$0xf]
  %v33 = vld [vmem:[%s0 + $0x34] sm:$0xf]
  %v34 = vld [vmem:[%s0 + $0x38] sm:$0xf]
  %v35 = vld [vmem:[%s0 + $0x3c] sm:$0xf]
  %v36 = vld [vmem:[%s0 + $0x40] sm:$0xf]
  %v37 = vld [vmem:[%s0 + $0x44] sm:$0xf]
  %v38 = vld [vmem:[%s0 + $0x48] sm:$0xf]
  %v39 = vld [vmem:[%s0 + $0x4c] sm:$0xf]
  %v40 = vld [vmem:[%s0 + $0x50] sm:$0xf]
  %v41 = vld [vmem:[%s0 + $0x54] sm:$0xf]
  %v42 = vld [vmem:[%s0 + $0x58] sm:$0xf]
  %v43 = vld [vmem:[%s0 + $0x5c] sm:$0xf]
  %v44 = vld [vmem:[%s0 + $0x60] sm:$0xf]
  %v45 = vld [vmem:[%s0 + $0x64] sm:$0xf]
  %v46 = vld [vmem:[%s0 + $0x68] sm:$0xf]
  %v47 = vld [vmem:[%s0 + $0x6c] sm:$0xf]
  %v48 = vld [vmem:[%s0 + $0x70] sm:$0xf]
  %v49 = vld [vmem:[%s0 + $0x74] sm:$0xf]
  %v50 = vld [vmem:[%s0 + $0x78] sm:$0xf]
  %v51 = vld [vmem:[%s0 + $0x7c] sm:$0xf]
  %v52 = vld [vmem:[%s0 + $0x80] sm:$0xf]
  %v53 = vld [vmem:[%s0 + $0x84] sm:$0xf]
  %v54 = vld [vmem:[%s0 + $0x88] sm:$0xf]
  %v55 = vld [vmem:[%s0 + $0x8c] sm:$0xf]
  %v56 = vld [vmem:[%s0 + $0x90] sm:$0xf]
  %v57 = vld [vmem:[%s0 + $0x94] sm:$0xf]
  %v58 = vld [vmem:[%s0 + $0x98] sm:$0xf]
  %v59 = vld [vmem:[%s0 + $0x9c] sm:$0xf]
  %v60 = vld [vmem:[%s0 + $0xa0] sm:$0xf]
  %v61 = vld [vmem:[%s0 + $0xa4] sm:$0xf]
  %v62 = vld [vmem:[%s0 + $0xa8] sm:$0xf]
  %v63 = vld [vmem:[%s0 + $0xac] sm:$0xf]
  %v64 = vld [vmem:[%s0 + $0xb0] sm:$0xf]
  %v65 = vld [vmem:[%s0 + $0xb4] sm:$0xf]
  %v66 = vld [vmem:[%s0 + $0xb8] sm:$0xf]
  %v67 = vld [vmem:[%s0 + $0xbc] sm:$0xf]
  %v68 = vld [vmem:[%s0 + $0xc0] sm:$0xf]
  %v69 = vld [vmem:[%s0 + $0xc4] sm:$0xf]
  %v70 = vld [vmem:[%s0 + $0xc8] sm:$0xf]
  %v71 = vld [vmem:[%s0 + $0xcc] sm:$0xf]
  %v72 = vld [vmem:[%s0 + $0xd0] sm:$0xf]
  %v73 = vld [vmem:[%s0 + $0xd4] sm:$0xf]
  %v74 = vld [vmem:[%s0 + $0xd8] sm:$0xf]
  %v75 = vld [vmem:[%s0 + $0xdc] sm:$0xf]
  %v76 = vld [vmem:[%s0 + $0xe0] sm:$0xf]
  %v77 = vld [vmem:[%s0 + $0xe4] sm:$0xf]
  %v78 = vld [vmem:[%s0 + $0xe8] sm:$0xf]
  %v79 = vld [vmem:[%s0 + $0xec] sm:$0xf]
  %v80 = vld [vmem:[%s0 + $0xf0] sm:$0xf]
  %v81 = vld [vmem:[%s0 + $0xf4] sm:$0xf]
  %v82 = vld [vmem:[%s0 + $0xf8] sm:$0xf]
  %v83 = vld [vmem:[%s0 + $0xfc] sm:$0xf]
  %v84 = vld [vmem:[%s0 + $0x100] sm:$0xf]
  %v85 = vld [vmem:[%s0 + $0x104] sm:$0xf]
  %v86 = vld [vmem:[%s0 + $0x108] sm:$0xf]
  %v87 = vld [vmem:[%s0 + $0x10c] sm:$0xf]
  %v88 = vld [vmem:[%s0 + $0x110] sm:$0xf]
  %v89 = vld [vmem:[%s0 + $0x114] sm:$0xf]
  %v90 = vld [vmem:[%s0 + $0x118] sm:$0xf]
  %v91 = vld [vmem:[%s0 + $0x11c] sm:$0xf]
  %v92 = vld [vmem:[%s0 + $0x120] sm:$0xf]
  %v93 = vld [vmem:[%s0 + $0x124] sm:$0xf]
  %v94 = vld [vmem:[%s0 + $0x128] sm:$0xf]
  %v95 = vld [vmem:[%s0 + $0x12c] sm:$0xf]
  %v96 = vld [vmem:[%s0 + $0x130] sm:$0xf]
  %v97 = vld [vmem:[%s0 + $0x134] sm:$0xf]
  %v98 = vld [vmem:[%s0 + $0x138] sm:$0xf]
  %v99 = vld [vmem:[%s0 + $0x13c] sm:$0xf]
  %v100 = vld [vmem:[%s0 + $0x140] sm:$0xf]
  %v101 = vld [vmem:[%s0 + $0x144] sm:$0xf]
  %v102 = vld [vmem:[%s0 + $0x148] sm:$0xf]
  %v103 = vld [vmem:[%s0 + $0x14c] sm:$0xf]
  %v104 = vld [vmem:[%s0 + $0x150] sm:$0xf]
  %v105 = vld [vmem:[%s0 + $0x154] sm:$0xf]
  %v106 = vld [vmem:[%s0 + $0x158] sm:$0xf]
  %v107 = vld [vmem:[%s0 + $0x15c] sm:$0xf]
  %v108 = vld [vmem:[%s0 + $0x160] sm:$0xf]
  %v109 = vld [vmem:[%s0 + $0x164] sm:$0xf]
  %v110 = vld [vmem:[%s0 + $0x168] sm:$0xf]
  %v111 = vld [vmem:[%s0 + $0x16c] sm:$0xf]
  %v112 = vld [vmem:[%s0 + $0x170] sm:$0xf]
  %v113 = vld [vmem:[%s0 + $0x174] sm:$0xf]
  %v114 = vld [vmem:[%s0 + $0x178] sm:$0xf]
  %v115 = vld [vmem:[%s0 + $0x17c] sm:$0xf]
  %v116 = vld [vmem:[%s0 + $0x180] sm:$0xf]
  %v117 = vld [vmem:[%s0 + $0x184] sm:$0xf]
  %v118 = vld [vmem:[%s0 + $0x188] sm:$0xf]
  %v119 = vld [vmem:[%s0 + $0x18c] sm:$0xf]
  %v120 = vld [vmem:[%s0 + $0x190] sm:$0xf]
  %v121 = vld [vmem:[%s0 + $0x194] sm:$0xf]
  %v122 = vld [vmem:[%s0 + $0x198] sm:$0xf]
  %v123 = vld [vmem:[%s0 + $0x19c] sm:$0xf]
  %v124 = vld [vmem:[%s0 + $0x1a0] sm:$0xf]
  %v125 = vld [vmem:[%s0 + $0x1a4] sm:$0xf]
  %v126 = vld [vmem:[%s0 + $0x1a8] sm:$0xf]
  %v127 = vld [vmem:[%s0 + $0x1ac] sm:$0xf]
  %v128 = vld [vmem:[%s0 + $0x1b0] sm:$0xf]
  %v129 = vld [vmem:[%s0 + $0x1b4] sm:$0xf]
  %v130 = vld [vmem:[%s0 + $0x1b8] sm:$0xf]
  %v131 = vld [vmem:[%s0 + $0x1bc] sm:$0xf]
  %v132 = vld [vmem:[%s0 + $0x1c0] sm:$0xf]
  %v133 = vld [vmem:[%s0 + $0x1c4] sm:$0xf]
  %v134 = vld [vmem:[%s0 + $0x1c8] sm:$0xf]
  %v135 = vld [vmem:[%s0 + $0x1cc] sm:$0xf]
  %v136 = vld [vmem:[%s0 + $0x1d0] sm:$0xf]
  %v137 = vld [vmem:[%s0 + $0x1d4] sm:$0xf]
  %v138 = vld [vmem:[%s0 + $0x1d8] sm:$0xf]
  %v139 = vld [vmem:[%s0 + $0x1dc] sm:$0xf]
  %v140 = vld [vmem:[%s0 + $0x1e0] sm:$0xf]
  %v141 = vld [vmem:[%s0 + $0x1e4] sm:$0xf]
  %v142 = vld [vmem:[%s0 + $0x1e8] sm:$0xf]
  %v143 = vld [vmem:[%s0 + $0x1ec] sm:$0xf]
  %v144 = vld [vmem:[%s0 + $0x1f0] sm:$0xf]
  %v145 = vld [vmem:[%s0 + $0x1f4] sm:$0xf]
  %v146 = vld [vmem:[%s0 + $0x1f8] sm:$0xf]
  %v147 = vld [vmem:[%s0 + $0x1fc] sm:$0xf]
  %v148 = vld [vmem:[%s0 + $0x200] sm:$0xf]
  %v149 = vld [vmem:[%s0 + $0x204] sm:$0xf]
  %v150 = vld [vmem:[%s0 + $0x208] sm:$0xf]
  %v151 = vld [vmem:[%s0 + $0x20c] sm:$0xf]
  %v152 = vld [vmem:[%s0 + $0x210] sm:$0xf]
  %v153 = vld [vmem:[%s0 + $0x214] sm:$0xf]
  %v154 = vld [vmem:[%s0 + $0x218] sm:$0xf]
  %v155 = vld [vmem:[%s0 + $0x21c] sm:$0xf]
  %v156 = vld [vmem:[%s0 + $0x220] sm:$0xf]
  %v157 = vld [vmem:[%s0 + $0x224] sm:$0xf]
  %v158 = vld [vmem:[%s0 + $0x228] sm:$0xf]
  %v159 = vld [vmem:[%s0 + $0x22c] sm:$0xf]
  %v160 = vld [vmem:[%s0 + $0x230] sm:$0xf]
  %v161 = vld [vmem:[%s0 + $0x234] sm:$0xf]
  %v162 = vld [vmem:[%s0 + $0x238] sm:$0xf]
  %v163 = vld [vmem:[%s0 + $0x23c] sm:$0xf]
  %v164 = vunpack.c.l.bf16 %v20
  %v165 = vunpack.c.l.bf16 %v21
  %v166 = vunpack.c.l.bf16 %v22
  %v167 = vunpack.c.l.bf16 %v23
  %v168 = vunpack.c.l.bf16 %v24
  %v169 = vunpack.c.l.bf16 %v25
  %v170 = vunpack.c.l.bf16 %v26
  %v171 = vunpack.c.l.bf16 %v27
  %v172 = vunpack.c.l.bf16 %v28
  %v173 = vunpack.c.l.bf16 %v29
  %v174 = vunpack.c.l.bf16 %v30
  %v175 = vunpack.c.l.bf16 %v31
  %v176 = vunpack.c.l.bf16 %v32
  %v177 = vunpack.c.l.bf16 %v33
  %v178 = vunpack.c.l.bf16 %v34
  %v179 = vunpack.c.l.bf16 %v35
  %v180 = vunpack.c.l.bf16 %v36
  %v181 = vunpack.c.l.bf16 %v37
  %v182 = vunpack.c.l.bf16 %v38
  %v183 = vunpack.c.l.bf16 %v39
  %v184 = vunpack.c.l.bf16 %v40
  %v185 = vunpack.c.l.bf16 %v41
  %v186 = vunpack.c.l.bf16 %v42
  %v187 = vunpack.c.l.bf16 %v43
  %v188 = vunpack.c.l.bf16 %v44
  %v189 = vunpack.c.l.bf16 %v45
  %v190 = vunpack.c.l.bf16 %v46
  %v191 = vunpack.c.l.bf16 %v47
  %v192 = vunpack.c.l.bf16 %v48
  %v193 = vunpack.c.l.bf16 %v49
  %v194 = vunpack.c.l.bf16 %v50
  %v195 = vunpack.c.l.bf16 %v51
  %v196 = vunpack.c.l.bf16 %v52
  %v197 = vunpack.c.l.bf16 %v53
  %v198 = vunpack.c.l.bf16 %v54
  %v199 = vunpack.c.l.bf16 %v55
  %v200 = vunpack.c.l.bf16 %v56
  %v201 = vunpack.c.l.bf16 %v57
  %v202 = vunpack.c.l.bf16 %v58
  %v203 = vunpack.c.l.bf16 %v59
  %v204 = vunpack.c.l.bf16 %v60
  %v205 = vunpack.c.l.bf16 %v61
  %v206 = vunpack.c.l.bf16 %v62
  %v207 = vunpack.c.l.bf16 %v63
  %v208 = vunpack.c.l.bf16 %v64
  %v209 = vunpack.c.l.bf16 %v65
  %v210 = vunpack.c.l.bf16 %v66
  %v211 = vunpack.c.l.bf16 %v67
  %v212 = vunpack.c.l.bf16 %v68
  %v213 = vunpack.c.l.bf16 %v69
  %v214 = vunpack.c.l.bf16 %v70
  %v215 = vunpack.c.l.bf16 %v71
  %v216 = vunpack.c.l.bf16 %v72
  %v217 = vunpack.c.l.bf16 %v73
  %v218 = vunpack.c.l.bf16 %v74
  %v219 = vunpack.c.l.bf16 %v75
  %v220 = vunpack.c.l.bf16 %v76
  %v221 = vunpack.c.l.bf16 %v77
  %v222 = vunpack.c.l.bf16 %v78
  %v223 = vunpack.c.l.bf16 %v79
  %v224 = vunpack.c.l.bf16 %v80
  %v225 = vunpack.c.l.bf16 %v81
  %v226 = vunpack.c.l.bf16 %v82
  %v227 = vunpack.c.l.bf16 %v83
  %v228 = vunpack.c.l.bf16 %v84
  %v229 = vunpack.c.l.bf16 %v85
  %v230 = vunpack.c.l.bf16 %v86
  %v231 = vunpack.c.l.bf16 %v87
  %v232 = vunpack.c.l.bf16 %v88
  %v233 = vunpack.c.l.bf16 %v89
  %v234 = vunpack.c.l.bf16 %v90
  %v235 = vunpack.c.l.bf16 %v91
  %v236 = vunpack.c.l.bf16 %v92
  %v237 = vunpack.c.l.bf16 %v93
  %v238 = vunpack.c.l.bf16 %v94
  %v239 = vunpack.c.l.bf16 %v95
  %v240 = vunpack.c.l.bf16 %v96
  %v241 = vunpack.c.l.bf16 %v97
  %v242 = vunpack.c.l.bf16 %v98
  %v243 = vunpack.c.l.bf16 %v99
  %v244 = vunpack.c.l.bf16 %v100
  %v245 = vunpack.c.l.bf16 %v101
  %v246 = vunpack.c.l.bf16 %v102
  %v247 = vunpack.c.l.bf16 %v103
  %v248 = vunpack.c.l.bf16 %v104
  %v249 = vunpack.c.l.bf16 %v105
  %v250 = vunpack.c.l.bf16 %v106
  %v251 = vunpack.c.l.bf16 %v107
  %v252 = vunpack.c.l.bf16 %v108
  %v253 = vunpack.c.l.bf16 %v109
  %v254 = vunpack.c.l.bf16 %v110
  %v255 = vunpack.c.l.bf16 %v111
  %v256 = vunpack.c.l.bf16 %v112
  %v257 = vunpack.c.l.bf16 %v113
  %v258 = vunpack.c.l.bf16 %v114
  %v259 = vunpack.c.l.bf16 %v115
  %v260 = vunpack.c.l.bf16 %v116
  %v261 = vunpack.c.l.bf16 %v117
  %v262 = vunpack.c.l.bf16 %v118
  %v263 = vunpack.c.l.bf16 %v119
  %v264 = vunpack.c.l.bf16 %v120
  %v265 = vunpack.c.l.bf16 %v121
  %v266 = vunpack.c.l.bf16 %v122
  %v267 = vunpack.c.l.bf16 %v123
  %v268 = vunpack.c.l.bf16 %v124
  %v269 = vunpack.c.l.bf16 %v125
  %v270 = vunpack.c.l.bf16 %v126
  %v271 = vunpack.c.l.bf16 %v127
  %v272 = vunpack.c.l.bf16 %v128
  %v273 = vunpack.c.l.bf16 %v129
  %v274 = vunpack.c.l.bf16 %v130
  %v275 = vunpack.c.l.bf16 %v131
  %v276 = vunpack.c.l.bf16 %v132
  %v277 = vunpack.c.l.bf16 %v133
  %v278 = vunpack.c.l.bf16 %v134
  %v279 = vunpack.c.l.bf16 %v135
  %v280 = vunpack.c.l.bf16 %v136
  %v281 = vunpack.c.l.bf16 %v137
  %v282 = vunpack.c.l.bf16 %v138
  %v283 = vunpack.c.l.bf16 %v139
  %v284 = vunpack.c.l.bf16 %v140
  %v285 = vunpack.c.l.bf16 %v141
  %v286 = vunpack.c.l.bf16 %v142
  %v287 = vunpack.c.l.bf16 %v143
  %v288 = vunpack.c.l.bf16 %v144
  %v289 = vunpack.c.l.bf16 %v145
  %v290 = vunpack.c.l.bf16 %v146
  %v291 = vunpack.c.l.bf16 %v147
  %v292 = vunpack.c.l.bf16 %v148
  %v293 = vunpack.c.l.bf16 %v149
  %v294 = vunpack.c.l.bf16 %v150
  %v295 = vunpack.c.l.bf16 %v151
  %v296 = vunpack.c.l.bf16 %v152
  %v297 = vunpack.c.l.bf16 %v153
  %v298 = vunpack.c.l.bf16 %v154
  %v299 = vunpack.c.l.bf16 %v155
  %v300 = vunpack.c.l.bf16 %v156
  %v301 = vunpack.c.l.bf16 %v157
  %v302 = vunpack.c.l.bf16 %v158
  %v303 = vunpack.c.l.bf16 %v159
  %v304 = vunpack.c.l.bf16 %v160
  %v305 = vunpack.c.l.bf16 %v161
  %v306 = vunpack.c.l.bf16 %v162
  %v307 = vunpack.c.l.bf16 %v163
  %v308 = vld [vmem:[%s1] sm:$0x1]
  %v309 = vld [vmem:[%s1 + $0x1] sm:$0x1]
  %v310 = vld [vmem:[%s1 + $0x2] sm:$0x1]
  %v311 = vld [vmem:[%s1 + $0x3] sm:$0x1]
  %v312 = vld [vmem:[%s1 + $0x4] sm:$0x1]
  %v313 = vld [vmem:[%s1 + $0x5] sm:$0x1]
  %v314 = vld [vmem:[%s1 + $0x6] sm:$0x1]
  %v315 = vld [vmem:[%s1 + $0x7] sm:$0x1]
  %v316 = vld [vmem:[%s1 + $0x8] sm:$0x1]
  %v326 = vlaneseq
  %v327 = vshrl.u32 %v326, 7
  %v328 = vsub.s32 0, %v327
  %v329 = vrot.slane %v308, %v328
  %v330 = vlaneseq
  %v331 = vshrl.u32 %v330, 7
  %v332 = vsub.s32 0, %v331
  %v333 = vrot.slane %v309, %v332
  %v334 = vlaneseq
  %v335 = vshrl.u32 %v334, 7
  %v336 = vsub.s32 0, %v335
  %v337 = vrot.slane %v310, %v336
  %v338 = vlaneseq
  %v339 = vshrl.u32 %v338, 7
  %v340 = vsub.s32 0, %v339
  %v341 = vrot.slane %v311, %v340
  %v342 = vlaneseq
  %v343 = vshrl.u32 %v342, 7
  %v344 = vsub.s32 0, %v343
  %v345 = vrot.slane %v312, %v344
  %v346 = vlaneseq
  %v347 = vshrl.u32 %v346, 7
  %v348 = vsub.s32 0, %v347
  %v349 = vrot.slane %v313, %v348
  %v350 = vlaneseq
  %v351 = vshrl.u32 %v350, 7
  %v352 = vsub.s32 0, %v351
  %v353 = vrot.slane %v314, %v352
  %v354 = vlaneseq
  %v355 = vshrl.u32 %v354, 7
  %v356 = vsub.s32 0, %v355
  %v357 = vrot.slane %v315, %v356
  %v358 = vlaneseq
  %v359 = vshrl.u32 %v358, 7
  %v360 = vsub.s32 0, %v359
  %v361 = vrot.slane %v316, %v360
  %v371 = vmul.f32 %v164, %v329
  %v372 = vmul.f32 %v165, %v329
  %v373 = vmul.f32 %v166, %v329
  %v374 = vmul.f32 %v167, %v329
  %v375 = vmul.f32 %v168, %v329
  %v376 = vmul.f32 %v169, %v329
  %v377 = vmul.f32 %v170, %v329
  %v378 = vmul.f32 %v171, %v329
  %v379 = vmul.f32 %v172, %v329
  %v380 = vmul.f32 %v173, %v329
  %v381 = vmul.f32 %v174, %v329
  %v382 = vmul.f32 %v175, %v329
  %v383 = vmul.f32 %v176, %v329
  %v384 = vmul.f32 %v177, %v329
  %v385 = vmul.f32 %v178, %v329
  %v386 = vmul.f32 %v179, %v329
  %v387 = vmul.f32 %v180, %v333
  %v388 = vmul.f32 %v181, %v333
  %v389 = vmul.f32 %v182, %v333
  %v390 = vmul.f32 %v183, %v333
  %v391 = vmul.f32 %v184, %v333
  %v392 = vmul.f32 %v185, %v333
  %v393 = vmul.f32 %v186, %v333
  %v394 = vmul.f32 %v187, %v333
  %v395 = vmul.f32 %v188, %v333
  %v396 = vmul.f32 %v189, %v333
  %v397 = vmul.f32 %v190, %v333
  %v398 = vmul.f32 %v191, %v333
  %v399 = vmul.f32 %v192, %v333
  %v400 = vmul.f32 %v193, %v333
  %v401 = vmul.f32 %v194, %v333
  %v402 = vmul.f32 %v195, %v333
  %v403 = vmul.f32 %v196, %v337
  %v404 = vmul.f32 %v197, %v337
  %v405 = vmul.f32 %v198, %v337
  %v406 = vmul.f32 %v199, %v337
  %v407 = vmul.f32 %v200, %v337
  %v408 = vmul.f32 %v201, %v337
  %v409 = vmul.f32 %v202, %v337
  %v410 = vmul.f32 %v203, %v337
  %v411 = vmul.f32 %v204, %v337
  %v412 = vmul.f32 %v205, %v337
  %v413 = vmul.f32 %v206, %v337
  %v414 = vmul.f32 %v207, %v337
  %v415 = vmul.f32 %v208, %v337
  %v416 = vmul.f32 %v209, %v337
  %v417 = vmul.f32 %v210, %v337
  %v418 = vmul.f32 %v211, %v337
  %v419 = vmul.f32 %v212, %v341
  %v420 = vmul.f32 %v213, %v341
  %v421 = vmul.f32 %v214, %v341
  %v422 = vmul.f32 %v215, %v341
  %v423 = vmul.f32 %v216, %v341
  %v424 = vmul.f32 %v217, %v341
  %v425 = vmul.f32 %v218, %v341
  %v426 = vmul.f32 %v219, %v341
  %v427 = vmul.f32 %v220, %v341
  %v428 = vmul.f32 %v221, %v341
  %v429 = vmul.f32 %v222, %v341
  %v430 = vmul.f32 %v223, %v341
  %v431 = vmul.f32 %v224, %v341
  %v432 = vmul.f32 %v225, %v341
  %v433 = vmul.f32 %v226, %v341
  %v434 = vmul.f32 %v227, %v341
  %v435 = vmul.f32 %v228, %v345
  %v436 = vmul.f32 %v229, %v345
  %v437 = vmul.f32 %v230, %v345
  %v438 = vmul.f32 %v231, %v345
  %v439 = vmul.f32 %v232, %v345
  %v440 = vmul.f32 %v233, %v345
  %v441 = vmul.f32 %v234, %v345
  %v442 = vmul.f32 %v235, %v345
  %v443 = vmul.f32 %v236, %v345
  %v444 = vmul.f32 %v237, %v345
  %v445 = vmul.f32 %v238, %v345
  %v446 = vmul.f32 %v239, %v345
  %v447 = vmul.f32 %v240, %v345
  %v448 = vmul.f32 %v241, %v345
  %v449 = vmul.f32 %v242, %v345
  %v450 = vmul.f32 %v243, %v345
  %v451 = vmul.f32 %v244, %v349
  %v452 = vmul.f32 %v245, %v349
  %v453 = vmul.f32 %v246, %v349
  %v454 = vmul.f32 %v247, %v349
  %v455 = vmul.f32 %v248, %v349
  %v456 = vmul.f32 %v249, %v349
  %v457 = vmul.f32 %v250, %v349
  %v458 = vmul.f32 %v251, %v349
  %v459 = vmul.f32 %v252, %v349
  %v460 = vmul.f32 %v253, %v349
  %v461 = vmul.f32 %v254, %v349
  %v462 = vmul.f32 %v255, %v349
  %v463 = vmul.f32 %v256, %v349
  %v464 = vmul.f32 %v257, %v349
  %v465 = vmul.f32 %v258, %v349
  %v466 = vmul.f32 %v259, %v349
  %v467 = vmul.f32 %v260, %v353
  %v468 = vmul.f32 %v261, %v353
  %v469 = vmul.f32 %v262, %v353
  %v470 = vmul.f32 %v263, %v353
  %v471 = vmul.f32 %v264, %v353
  %v472 = vmul.f32 %v265, %v353
  %v473 = vmul.f32 %v266, %v353
  %v474 = vmul.f32 %v267, %v353
  %v475 = vmul.f32 %v268, %v353
  %v476 = vmul.f32 %v269, %v353
  %v477 = vmul.f32 %v270, %v353
  %v478 = vmul.f32 %v271, %v353
  %v479 = vmul.f32 %v272, %v353
  %v480 = vmul.f32 %v273, %v353
  %v481 = vmul.f32 %v274, %v353
  %v482 = vmul.f32 %v275, %v353
  %v483 = vmul.f32 %v276, %v357
  %v484 = vmul.f32 %v277, %v357
  %v485 = vmul.f32 %v278, %v357
  %v486 = vmul.f32 %v279, %v357
  %v487 = vmul.f32 %v280, %v357
  %v488 = vmul.f32 %v281, %v357
  %v489 = vmul.f32 %v282, %v357
  %v490 = vmul.f32 %v283, %v357
  %v491 = vmul.f32 %v284, %v357
  %v492 = vmul.f32 %v285, %v357
  %v493 = vmul.f32 %v286, %v357
  %v494 = vmul.f32 %v287, %v357
  %v495 = vmul.f32 %v288, %v357
  %v496 = vmul.f32 %v289, %v357
  %v497 = vmul.f32 %v290, %v357
  %v498 = vmul.f32 %v291, %v357
  %v499 = vmul.f32 %v292, %v361
  %v500 = vmul.f32 %v293, %v361
  %v501 = vmul.f32 %v294, %v361
  %v502 = vmul.f32 %v295, %v361
  %v503 = vmul.f32 %v296, %v361
  %v504 = vmul.f32 %v297, %v361
  %v505 = vmul.f32 %v298, %v361
  %v506 = vmul.f32 %v299, %v361
  %v507 = vmul.f32 %v300, %v361
  %v508 = vmul.f32 %v301, %v361
  %v509 = vmul.f32 %v302, %v361
  %v510 = vmul.f32 %v303, %v361
  %v511 = vmul.f32 %v304, %v361
  %v512 = vmul.f32 %v305, %v361
  %v513 = vmul.f32 %v306, %v361
  %v514 = vmul.f32 %v307, %v361
  %v515 = vadd.f32 %v371, %v387
  %v516 = vadd.f32 %v515, %v403
  %v517 = vadd.f32 %v516, %v419
  %v518 = vadd.f32 %v517, %v435
  %v519 = vadd.f32 %v518, %v451
  %v520 = vadd.f32 %v519, %v467
  %v521 = vadd.f32 %v520, %v483
  %v522 = vadd.f32 %v521, %v499
  %v523 = vadd.f32 %v372, %v388
  %v524 = vadd.f32 %v523, %v404
  %v525 = vadd.f32 %v524, %v420
  %v526 = vadd.f32 %v525, %v436
  %v527 = vadd.f32 %v526, %v452
  %v528 = vadd.f32 %v527, %v468
  %v529 = vadd.f32 %v528, %v484
  %v530 = vadd.f32 %v529, %v500
  %v531 = vadd.f32 %v373, %v389
  %v532 = vadd.f32 %v531, %v405
  %v533 = vadd.f32 %v532, %v421
  %v534 = vadd.f32 %v533, %v437
  %v535 = vadd.f32 %v534, %v453
  %v536 = vadd.f32 %v535, %v469
  %v537 = vadd.f32 %v536, %v485
  %v538 = vadd.f32 %v537, %v501
  %v539 = vadd.f32 %v374, %v390
  %v540 = vadd.f32 %v539, %v406
  %v541 = vadd.f32 %v540, %v422
  %v542 = vadd.f32 %v541, %v438
  %v543 = vadd.f32 %v542, %v454
  %v544 = vadd.f32 %v543, %v470
  %v545 = vadd.f32 %v544, %v486
  %v546 = vadd.f32 %v545, %v502
  %v547 = vadd.f32 %v375, %v391
  %v548 = vadd.f32 %v547, %v407
  %v549 = vadd.f32 %v548, %v423
  %v550 = vadd.f32 %v549, %v439
  %v551 = vadd.f32 %v550, %v455
  %v552 = vadd.f32 %v551, %v471
  %v553 = vadd.f32 %v552, %v487
  %v554 = vadd.f32 %v553, %v503
  %v555 = vadd.f32 %v376, %v392
  %v556 = vadd.f32 %v555, %v408
  %v557 = vadd.f32 %v556, %v424
  %v558 = vadd.f32 %v557, %v440
  %v559 = vadd.f32 %v558, %v456
  %v560 = vadd.f32 %v559, %v472
  %v561 = vadd.f32 %v560, %v488
  %v562 = vadd.f32 %v561, %v504
  %v563 = vadd.f32 %v377, %v393
  %v564 = vadd.f32 %v563, %v409
  %v565 = vadd.f32 %v564, %v425
  %v566 = vadd.f32 %v565, %v441
  %v567 = vadd.f32 %v566, %v457
  %v568 = vadd.f32 %v567, %v473
  %v569 = vadd.f32 %v568, %v489
  %v570 = vadd.f32 %v569, %v505
  %v571 = vadd.f32 %v378, %v394
  %v572 = vadd.f32 %v571, %v410
  %v573 = vadd.f32 %v572, %v426
  %v574 = vadd.f32 %v573, %v442
  %v575 = vadd.f32 %v574, %v458
  %v576 = vadd.f32 %v575, %v474
  %v577 = vadd.f32 %v576, %v490
  %v578 = vadd.f32 %v577, %v506
  %v579 = vadd.f32 %v379, %v395
  %v580 = vadd.f32 %v579, %v411
  %v581 = vadd.f32 %v580, %v427
  %v582 = vadd.f32 %v581, %v443
  %v583 = vadd.f32 %v582, %v459
  %v584 = vadd.f32 %v583, %v475
  %v585 = vadd.f32 %v584, %v491
  %v586 = vadd.f32 %v585, %v507
  %v587 = vadd.f32 %v380, %v396
  %v588 = vadd.f32 %v587, %v412
  %v589 = vadd.f32 %v588, %v428
  %v590 = vadd.f32 %v589, %v444
  %v591 = vadd.f32 %v590, %v460
  %v592 = vadd.f32 %v591, %v476
  %v593 = vadd.f32 %v592, %v492
  %v594 = vadd.f32 %v593, %v508
  %v595 = vadd.f32 %v381, %v397
  %v596 = vadd.f32 %v595, %v413
  %v597 = vadd.f32 %v596, %v429
  %v598 = vadd.f32 %v597, %v445
  %v599 = vadd.f32 %v598, %v461
  %v600 = vadd.f32 %v599, %v477
  %v601 = vadd.f32 %v600, %v493
  %v602 = vadd.f32 %v601, %v509
  %v603 = vadd.f32 %v382, %v398
  %v604 = vadd.f32 %v603, %v414
  %v605 = vadd.f32 %v604, %v430
  %v606 = vadd.f32 %v605, %v446
  %v607 = vadd.f32 %v606, %v462
  %v608 = vadd.f32 %v607, %v478
  %v609 = vadd.f32 %v608, %v494
  %v610 = vadd.f32 %v609, %v510
  %v611 = vadd.f32 %v383, %v399
  %v612 = vadd.f32 %v611, %v415
  %v613 = vadd.f32 %v612, %v431
  %v614 = vadd.f32 %v613, %v447
  %v615 = vadd.f32 %v614, %v463
  %v616 = vadd.f32 %v615, %v479
  %v617 = vadd.f32 %v616, %v495
  %v618 = vadd.f32 %v617, %v511
  %v619 = vadd.f32 %v384, %v400
  %v620 = vadd.f32 %v619, %v416
  %v621 = vadd.f32 %v620, %v432
  %v622 = vadd.f32 %v621, %v448
  %v623 = vadd.f32 %v622, %v464
  %v624 = vadd.f32 %v623, %v480
  %v625 = vadd.f32 %v624, %v496
  %v626 = vadd.f32 %v625, %v512
  %v627 = vadd.f32 %v385, %v401
  %v628 = vadd.f32 %v627, %v417
  %v629 = vadd.f32 %v628, %v433
  %v630 = vadd.f32 %v629, %v449
  %v631 = vadd.f32 %v630, %v465
  %v632 = vadd.f32 %v631, %v481
  %v633 = vadd.f32 %v632, %v497
  %v634 = vadd.f32 %v633, %v513
  %v635 = vadd.f32 %v386, %v402
  %v636 = vadd.f32 %v635, %v418
  %v637 = vadd.f32 %v636, %v434
  %v638 = vadd.f32 %v637, %v450
  %v639 = vadd.f32 %v638, %v466
  %v640 = vadd.f32 %v639, %v482
  %v641 = vadd.f32 %v640, %v498
  %v642 = vadd.f32 %v641, %v514
  %v643 = vld [vmem:[%s2] sm:$0x1]
  %v645 = vlaneseq
  %v646 = vshrl.u32 %v645, 7
  %v647 = vsub.s32 0, %v646
  %v648 = vrot.slane %v643, %v647
  %v650 = vmul.f32 %v522, %v648
  %v651 = vmul.f32 %v530, %v648
  %v652 = vmul.f32 %v538, %v648
  %v653 = vmul.f32 %v546, %v648
  %v654 = vmul.f32 %v554, %v648
  %v655 = vmul.f32 %v562, %v648
  %v656 = vmul.f32 %v570, %v648
  %v657 = vmul.f32 %v578, %v648
  %v658 = vmul.f32 %v586, %v648
  %v659 = vmul.f32 %v594, %v648
  %v660 = vmul.f32 %v602, %v648
  %v661 = vmul.f32 %v610, %v648
  %v662 = vmul.f32 %v618, %v648
  %v663 = vmul.f32 %v626, %v648
  %v664 = vmul.f32 %v634, %v648
  %v665 = vmul.f32 %v642, %v648
  %v666 = vld [vmem:[%s3] sm:$0x1]
  %v668 = vlaneseq
  %v669 = vshrl.u32 %v668, 7
  %v670 = vsub.s32 0, %v669
  %v671 = vrot.slane %v666, %v670
  %v673 = vadd.f32 %v650, %v671
  %v674 = vadd.f32 %v651, %v671
  %v675 = vadd.f32 %v652, %v671
  %v676 = vadd.f32 %v653, %v671
  %v677 = vadd.f32 %v654, %v671
  %v678 = vadd.f32 %v655, %v671
  %v679 = vadd.f32 %v656, %v671
  %v680 = vadd.f32 %v657, %v671
  %v681 = vadd.f32 %v658, %v671
  %v682 = vadd.f32 %v659, %v671
  %v683 = vadd.f32 %v660, %v671
  %v684 = vadd.f32 %v661, %v671
  %v685 = vadd.f32 %v662, %v671
  %v686 = vadd.f32 %v663, %v671
  %v687 = vadd.f32 %v664, %v671
  %v688 = vadd.f32 %v665, %v671
  %vm689 = vcmp.gt.f32.partialorder %v673, 0.0
  %vm690 = vcmp.gt.f32.partialorder %v674, 0.0
  %vm691 = vcmp.gt.f32.partialorder %v675, 0.0
  %vm692 = vcmp.gt.f32.partialorder %v676, 0.0
  %vm693 = vcmp.gt.f32.partialorder %v677, 0.0
  %vm694 = vcmp.gt.f32.partialorder %v678, 0.0
  %vm695 = vcmp.gt.f32.partialorder %v679, 0.0
  %vm696 = vcmp.gt.f32.partialorder %v680, 0.0
  %vm697 = vcmp.gt.f32.partialorder %v681, 0.0
  %vm698 = vcmp.gt.f32.partialorder %v682, 0.0
  %vm699 = vcmp.gt.f32.partialorder %v683, 0.0
  %vm700 = vcmp.gt.f32.partialorder %v684, 0.0
  %vm701 = vcmp.gt.f32.partialorder %v685, 0.0
  %vm702 = vcmp.gt.f32.partialorder %v686, 0.0
  %vm703 = vcmp.gt.f32.partialorder %v687, 0.0
  %vm704 = vcmp.gt.f32.partialorder %v688, 0.0
  %v705 = vld [vmem:[%s4] sm:$0x1]
  %v707 = vlaneseq
  %v708 = vshrl.u32 %v707, 7
  %v709 = vsub.s32 0, %v708
  %v710 = vrot.slane %v705, %v709
  %v712 = vmul.f32 %v710, %v673
  %v713 = vmul.f32 %v710, %v674
  %v714 = vmul.f32 %v710, %v675
  %v715 = vmul.f32 %v710, %v676
  %v716 = vmul.f32 %v710, %v677
  %v717 = vmul.f32 %v710, %v678
  %v718 = vmul.f32 %v710, %v679
  %v719 = vmul.f32 %v710, %v680
  %v720 = vmul.f32 %v710, %v681
  %v721 = vmul.f32 %v710, %v682
  %v722 = vmul.f32 %v710, %v683
  %v723 = vmul.f32 %v710, %v684
  %v724 = vmul.f32 %v710, %v685
  %v725 = vmul.f32 %v710, %v686
  %v726 = vmul.f32 %v710, %v687
  %v727 = vmul.f32 %v710, %v688
  %v728 = vsel %vm689, %v673, %v712
  %v729 = vsel %vm690, %v674, %v713
  %v730 = vsel %vm691, %v675, %v714
  %v731 = vsel %vm692, %v676, %v715
  %v732 = vsel %vm693, %v677, %v716
  %v733 = vsel %vm694, %v678, %v717
  %v734 = vsel %vm695, %v679, %v718
  %v735 = vsel %vm696, %v680, %v719
  %v736 = vsel %vm697, %v681, %v720
  %v737 = vsel %vm698, %v682, %v721
  %v738 = vsel %vm699, %v683, %v722
  %v739 = vsel %vm700, %v684, %v723
  %v740 = vsel %vm701, %v685, %v724
  %v741 = vsel %vm702, %v686, %v725
  %v742 = vsel %vm703, %v687, %v726
  %v743 = vsel %vm704, %v688, %v727
  %744 = vst [vmem:[%s5] sm:$0xff] %v728
  %745 = vst [vmem:[%s5 + $0x8] sm:$0xff] %v729
  %746 = vst [vmem:[%s5 + $0x10] sm:$0xff] %v730
  %747 = vst [vmem:[%s5 + $0x18] sm:$0xff] %v731
  %748 = vst [vmem:[%s5 + $0x20] sm:$0xff] %v732
  %749 = vst [vmem:[%s5 + $0x28] sm:$0xff] %v733
  %750 = vst [vmem:[%s5 + $0x30] sm:$0xff] %v734
  %751 = vst [vmem:[%s5 + $0x38] sm:$0xff] %v735
  %752 = vst [vmem:[%s5 + $0x40] sm:$0xff] %v736
  %753 = vst [vmem:[%s5 + $0x48] sm:$0xff] %v737
  %754 = vst [vmem:[%s5 + $0x50] sm:$0xff] %v738
  %755 = vst [vmem:[%s5 + $0x58] sm:$0xff] %v739
  %756 = vst [vmem:[%s5 + $0x60] sm:$0xff] %v740
  %757 = vst [vmem:[%s5 + $0x68] sm:$0xff] %v741
  %758 = vst [vmem:[%s5 + $0x70] sm:$0xff] %v742
  %759 = vst [vmem:[%s5 + $0x78] sm:$0xff] %v743
  // Predicated region
  $region22: #{stn_mbfn_forward.13} parent=0 // pred_check
    _
  $region23: #{stn_mbfn_forward.13} parent=0 // pred_check_branch
    %761 = sbr.rel (0) target = $region25
  $region24: #{stn_mbfn_forward.13} parent=0 // pred_region
    _
  $region25: #{stn_mbfn_forward.13} parent=0 // pred_fallthru
    _
  // Predicated region
  $region26: #{stn_mbfn_forward.13} parent=0 // pred_check
    _
  $region27: #{stn_mbfn_forward.13} parent=0 // pred_check_branch
    %763 = sbr.rel (0) target = $region29
  $region28: #{stn_mbfn_forward.13} parent=0 // pred_region
    _
  $region29: #{stn_mbfn_forward.13} parent=0 // pred_fallthru
    _

// kernel: stn_mbfn_forward.16
$region0: #{stn_mbfn_forward.16}
  #allocation0 [shape = 'u32[]', space=smem, size = 0x4, offset = 0x4, fixed_abs, tag = 'smem constant byte address 0x4 - core index']
  #allocation1 [shape = 'u32[144,128]{1,0:T(1,128)}', space=vmem, size = 0x12000, scoped, tag = 'internal scratch']
  #allocation2 [shape = 'f32[128,128]{1,0:T(8,128)}', space=vmem, size = 0x10000, scoped, tag = 'scratch operand']
  %s0 = inlined_call_operand.vmem [shape: bf16[128,128], index: 0, kind: input, shape index: {}]
  %s1 = inlined_call_operand.vmem [shape: bf16[128,128], index: 1, kind: input, shape index: {}]
  %s2 = inlined_call_operand.vmem [shape: f32[1,128], index: 2, kind: input, shape index: {}]
  %s3 = inlined_call_operand.vmem [shape: f32[1,128], index: 3, kind: input, shape index: {}]
  %s4 = inlined_call_operand.vmem [shape: f32[1,128], index: 4, kind: input, shape index: {}]
  %s5 = inlined_call_operand.vmem [shape: f32[128,128], index: 5, kind: input, shape index: {}]
  %s6 = inlined_call_operand.vmem [shape: f32[128,128], index: 6, kind: output, shape index: {}]
  %s7 = sld [smem:[#allocation0]]
  $region42: #{stn_mbfn_forward.16} parent=0
    _
  %s9 = ssub.s32 1, %s7
  %s10 = scalar_select 0, %s9, %s7
  // Predicated region
  $region2: #{stn_mbfn_forward.16} parent=0 // pred_check
    _
  $region3: #{stn_mbfn_forward.16} parent=0 // pred_check_branch
    %12 = sbr.rel (0) target = $region5
  $region4: #{stn_mbfn_forward.16} parent=0 // pred_region
    _
  $region5: #{stn_mbfn_forward.16} parent=0 // pred_fallthru
    _
  // Predicated region
  $region6: #{stn_mbfn_forward.16} parent=0 // pred_check
    _
  $region7: #{stn_mbfn_forward.16} parent=0 // pred_check_branch
    %14 = sbr.rel (0) target = $region9
  $region8: #{stn_mbfn_forward.16} parent=0 // pred_region
    _
  $region9: #{stn_mbfn_forward.16} parent=0 // pred_fallthru
    _
  // Predicated region
  $region10: #{stn_mbfn_forward.16} parent=0 // pred_check
    _
  $region11: #{stn_mbfn_forward.16} parent=0 // pred_check_branch
    %16 = sbr.rel (0) target = $region13
  $region12: #{stn_mbfn_forward.16} parent=0 // pred_region
    _
  $region13: #{stn_mbfn_forward.16} parent=0 // pred_fallthru
    _
  // Predicated region
  $region14: #{stn_mbfn_forward.16} parent=0 // pred_check
    _
  $region15: #{stn_mbfn_forward.16} parent=0 // pred_check_branch
    %18 = sbr.rel (0) target = $region17
  $region16: #{stn_mbfn_forward.16} parent=0 // pred_region
    _
  $region17: #{stn_mbfn_forward.16} parent=0 // pred_fallthru
    _
  // Predicated region
  $region18: #{stn_mbfn_forward.16} parent=0 // pred_check
    _
  $region19: #{stn_mbfn_forward.16} parent=0 // pred_check_branch
    %20 = sbr.rel (0) target = $region21
  $region20: #{stn_mbfn_forward.16} parent=0 // pred_region
    _
  $region21: #{stn_mbfn_forward.16} parent=0 // pred_fallthru
    _
  // Predicated region
  $region22: #{stn_mbfn_forward.16} parent=0 // pred_check
    _
  $region23: #{stn_mbfn_forward.16} parent=0 // pred_check_branch
    %22 = sbr.rel (0) target = $region25
  $region24: #{stn_mbfn_forward.16} parent=0 // pred_region
    _
  $region25: #{stn_mbfn_forward.16} parent=0 // pred_fallthru
    _
  %p24 = scmp.eq.s32.totalorder 0, 0
  // Predicated region
  $region26: #{stn_mbfn_forward.16} parent=0 // pred_check
    %p25 = pneg %p24
  $region27: #{stn_mbfn_forward.16} parent=0 // pred_check_branch
    %27 = sbr.rel (%p25) target = $region29
  $region28: #{stn_mbfn_forward.16} parent=0 // pred_region
    %28 = vst [vmem:[#allocation2] sm:$0xff] 0.0
    %29 = vst [vmem:[#allocation2 + $0x8] sm:$0xff] 0.0
    %30 = vst [vmem:[#allocation2 + $0x10] sm:$0xff] 0.0
    %31 = vst [vmem:[#allocation2 + $0x18] sm:$0xff] 0.0
    %32 = vst [vmem:[#allocation2 + $0x20] sm:$0xff] 0.0
    %33 = vst [vmem:[#allocation2 + $0x28] sm:$0xff] 0.0
    %34 = vst [vmem:[#allocation2 + $0x30] sm:$0xff] 0.0
    %35 = vst [vmem:[#allocation2 + $0x38] sm:$0xff] 0.0
    %36 = vst [vmem:[#allocation2 + $0x40] sm:$0xff] 0.0
    %37 = vst [vmem:[#allocation2 + $0x48] sm:$0xff] 0.0
    %38 = vst [vmem:[#allocation2 + $0x50] sm:$0xff] 0.0
    %39 = vst [vmem:[#allocation2 + $0x58] sm:$0xff] 0.0
    %40 = vst [vmem:[#allocation2 + $0x60] sm:$0xff] 0.0
    %41 = vst [vmem:[#allocation2 + $0x68] sm:$0xff] 0.0
    %42 = vst [vmem:[#allocation2 + $0x70] sm:$0xff] 0.0
    %43 = vst [vmem:[#allocation2 + $0x78] sm:$0xff] 0.0
  $region29: #{stn_mbfn_forward.16} parent=0 // pred_fallthru
    _
  %v44 = vld [vmem:[#allocation2] sm:$0xff]
  %v45 = vld [vmem:[#allocation2 + $0x8] sm:$0xff]
  %v46 = vld [vmem:[#allocation2 + $0x10] sm:$0xff]
  %v47 = vld [vmem:[#allocation2 + $0x18] sm:$0xff]
  %v48 = vld [vmem:[#allocation2 + $0x20] sm:$0xff]
  %v49 = vld [vmem:[#allocation2 + $0x28] sm:$0xff]
  %v50 = vld [vmem:[#allocation2 + $0x30] sm:$0xff]
  %v51 = vld [vmem:[#allocation2 + $0x38] sm:$0xff]
  %v52 = vld [vmem:[#allocation2 + $0x40] sm:$0xff]
  %v53 = vld [vmem:[#allocation2 + $0x48] sm:$0xff]
  %v54 = vld [vmem:[#allocation2 + $0x50] sm:$0xff]
  %v55 = vld [vmem:[#allocation2 + $0x58] sm:$0xff]
  %v56 = vld [vmem:[#allocation2 + $0x60] sm:$0xff]
  %v57 = vld [vmem:[#allocation2 + $0x68] sm:$0xff]
  %v58 = vld [vmem:[#allocation2 + $0x70] sm:$0xff]
  %v59 = vld [vmem:[#allocation2 + $0x78] sm:$0xff]
  %v60 = vld [vmem:[%s0] sm:$0xf]
  %v61 = vld [vmem:[%s0 + $0x4] sm:$0xf]
  %v62 = vld [vmem:[%s0 + $0x8] sm:$0xf]
  %v63 = vld [vmem:[%s0 + $0xc] sm:$0xf]
  %v64 = vld [vmem:[%s0 + $0x10] sm:$0xf]
  %v65 = vld [vmem:[%s0 + $0x14] sm:$0xf]
  %v66 = vld [vmem:[%s0 + $0x18] sm:$0xf]
  %v67 = vld [vmem:[%s0 + $0x1c] sm:$0xf]
  %v68 = vld [vmem:[%s0 + $0x20] sm:$0xf]
  %v69 = vld [vmem:[%s0 + $0x24] sm:$0xf]
  %v70 = vld [vmem:[%s0 + $0x28] sm:$0xf]
  %v71 = vld [vmem:[%s0 + $0x2c] sm:$0xf]
  %v72 = vld [vmem:[%s0 + $0x30] sm:$0xf]
  %v73 = vld [vmem:[%s0 + $0x34] sm:$0xf]
  %v74 = vld [vmem:[%s0 + $0x38] sm:$0xf]
  %v75 = vld [vmem:[%s0 + $0x3c] sm:$0xf]
  %v76 = vld [vmem:[%s1] sm:$0xf]
  %v77 = vld [vmem:[%s1 + $0x4] sm:$0xf]
  %v78 = vld [vmem:[%s1 + $0x8] sm:$0xf]
  %v79 = vld [vmem:[%s1 + $0xc] sm:$0xf]
  %v80 = vld [vmem:[%s1 + $0x10] sm:$0xf]
  %v81 = vld [vmem:[%s1 + $0x14] sm:$0xf]
  %v82 = vld [vmem:[%s1 + $0x18] sm:$0xf]
  %v83 = vld [vmem:[%s1 + $0x1c] sm:$0xf]
  %v84 = vld [vmem:[%s1 + $0x20] sm:$0xf]
  %v85 = vld [vmem:[%s1 + $0x24] sm:$0xf]
  %v86 = vld [vmem:[%s1 + $0x28] sm:$0xf]
  %v87 = vld [vmem:[%s1 + $0x2c] sm:$0xf]
  %v88 = vld [vmem:[%s1 + $0x30] sm:$0xf]
  %v89 = vld [vmem:[%s1 + $0x34] sm:$0xf]
  %v90 = vld [vmem:[%s1 + $0x38] sm:$0xf]
  %v91 = vld [vmem:[%s1 + $0x3c] sm:$0xf]
  %v108 = vunpack.c.l.b16 %v60
  %v109 = vunpack.c.l.b16 %v61
  %v110 = vunpack.c.l.b16 %v62
  %v111 = vunpack.c.l.b16 %v63
  %v112 = vunpack.c.l.b16 %v64
  %v113 = vunpack.c.l.b16 %v65
  %v114 = vunpack.c.l.b16 %v66
  %v115 = vunpack.c.l.b16 %v67
  %v116 = vunpack.c.l.b16 %v68
  %v117 = vunpack.c.l.b16 %v69
  %v118 = vunpack.c.l.b16 %v70
  %v119 = vunpack.c.l.b16 %v71
  %v120 = vunpack.c.l.b16 %v72
  %v121 = vunpack.c.l.b16 %v73
  %v122 = vunpack.c.l.b16 %v74
  %v123 = vunpack.c.l.b16 %v75
  %v124 = vpack.c.b16 %v109, %v108
  %v125 = vpack.c.b16 %v111, %v110
  %v126 = vpack.c.b16 %v113, %v112
  %v127 = vpack.c.b16 %v115, %v114
  %v128 = vpack.c.b16 %v117, %v116
  %v129 = vpack.c.b16 %v119, %v118
  %v130 = vpack.c.b16 %v121, %v120
  %v131 = vpack.c.b16 %v123, %v122
  %v156 = vunpack.c.l.b16 %v76
  %v157 = vunpack.c.l.b16 %v77
  %v158 = vunpack.c.l.b16 %v78
  %v159 = vunpack.c.l.b16 %v79
  %v160 = vunpack.c.l.b16 %v80
  %v161 = vunpack.c.l.b16 %v81
  %v162 = vunpack.c.l.b16 %v82
  %v163 = vunpack.c.l.b16 %v83
  %v164 = vunpack.c.l.b16 %v84
  %v165 = vunpack.c.l.b16 %v85
  %v166 = vunpack.c.l.b16 %v86
  %v167 = vunpack.c.l.b16 %v87
  %v168 = vunpack.c.l.b16 %v88
  %v169 = vunpack.c.l.b16 %v89
  %v170 = vunpack.c.l.b16 %v90
  %v171 = vunpack.c.l.b16 %v91
  %v172 = vpack.c.b16 %v157, %v156
  %v173 = vpack.c.b16 %v159, %v158
  %v174 = vpack.c.b16 %v161, %v160
  %v175 = vpack.c.b16 %v163, %v162
  %v176 = vpack.c.b16 %v165, %v164
  %v177 = vpack.c.b16 %v167, %v166
  %v178 = vpack.c.b16 %v169, %v168
  %v179 = vpack.c.b16 %v171, %v170
  %188 = vmatprep.subr.bf16.mxu0 0
  %189 = vmatpush1.bf16.msra.mxu0 %v172
  %190 = vmatprep.subr.bf16.mxu0 0
  %191 = vmatpush1.bf16.msra.mxu0 %v173
  %192 = vmatprep.subr.bf16.mxu0 0
  %193 = vmatpush1.bf16.msra.mxu0 %v174
  %194 = vmatprep.subr.bf16.mxu0 0
  %195 = vmatpush1.bf16.msra.mxu0 %v175
  %196 = vmatprep.subr.bf16.mxu0 0
  %197 = vmatpush1.bf16.msra.mxu0 %v176
  %198 = vmatprep.subr.bf16.mxu0 0
  %199 = vmatpush1.bf16.msra.mxu0 %v177
  %200 = vmatprep.subr.bf16.mxu0 0
  %201 = vmatpush1.bf16.msra.mxu0 %v178
  %202 = vmatprep.subr.bf16.mxu0 0
  %203 = vmatpush1.bf16.msra.mxu0 %v179
  %204 = vmatprep.subr.bf16.mxu0 0
  %205 = vmatpush1.bf16.msra.mxu0 0
  %206 = vmatprep.subr.bf16.mxu0 0
  %207 = vmatpush1.bf16.msra.mxu0 0
  %208 = vmatprep.subr.bf16.mxu0 0
  %209 = vmatpush1.bf16.msra.mxu0 0
  %210 = vmatprep.subr.bf16.mxu0 0
  %211 = vmatpush1.bf16.msra.mxu0 0
  %212 = vmatprep.subr.bf16.mxu0 0
  %213 = vmatpush1.bf16.msra.mxu0 0
  %214 = vmatprep.subr.bf16.mxu0 0
  %215 = vmatpush1.bf16.msra.mxu0 0
  %216 = vmatprep.subr.bf16.mxu0 0
  %217 = vmatpush1.bf16.msra.mxu0 0
  %218 = vmatprep.subr.bf16.mxu0 0
  %219 = vmatpush1.bf16.msra.mxu0 0
  %220 = vmatprep.mubr.bf16.mxu0 0
  %221 = vmatmul.mubr.bf16.gmra.mrb[0].mxu0 %v124
  %v222 = vpop.f32.mrb[0].mxu0
  %v223 = vadd.f32 0.0, %v222
  %v224 = vpop.f32.mrb[0].mxu0
  %v225 = vpop.f32.mrb[0].mxu0
  %v226 = vadd.f32 0.0, %v225
  %v227 = vpop.f32.mrb[0].mxu0
  %228 = vmatprep.mubr.bf16.mxu0 0
  %229 = vmatmul.mubr.bf16.gmra.mrb[0].mxu0 %v125
  %v230 = vpop.f32.mrb[0].mxu0
  %v231 = vadd.f32 0.0, %v230
  %v232 = vpop.f32.mrb[0].mxu0
  %v233 = vpop.f32.mrb[0].mxu0
  %v234 = vadd.f32 0.0, %v233
  %v235 = vpop.f32.mrb[0].mxu0
  %236 = vmatprep.mubr.bf16.mxu0 0
  %237 = vmatmul.mubr.bf16.gmra.mrb[0].mxu0 %v126
  %v238 = vpop.f32.mrb[0].mxu0
  %v239 = vadd.f32 0.0, %v238
  %v240 = vpop.f32.mrb[0].mxu0
  %v241 = vpop.f32.mrb[0].mxu0
  %v242 = vadd.f32 0.0, %v241
  %v243 = vpop.f32.mrb[0].mxu0
  %244 = vmatprep.mubr.bf16.mxu0 0
  %245 = vmatmul.mubr.bf16.gmra.mrb[0].mxu0 %v127
  %v246 = vpop.f32.mrb[0].mxu0
  %v247 = vadd.f32 0.0, %v246
  %v248 = vpop.f32.mrb[0].mxu0
  %v249 = vpop.f32.mrb[0].mxu0
  %v250 = vadd.f32 0.0, %v249
  %v251 = vpop.f32.mrb[0].mxu0
  %252 = vmatprep.mubr.bf16.mxu0 0
  %253 = vmatmul.mubr.bf16.gmra.mrb[0].mxu0 %v128
  %v254 = vpop.f32.mrb[0].mxu0
  %v255 = vadd.f32 0.0, %v254
  %v256 = vpop.f32.mrb[0].mxu0
  %v257 = vpop.f32.mrb[0].mxu0
  %v258 = vadd.f32 0.0, %v257
  %v259 = vpop.f32.mrb[0].mxu0
  %260 = vmatprep.mubr.bf16.mxu0 0
  %261 = vmatmul.mubr.bf16.gmra.mrb[0].mxu0 %v129
  %v262 = vpop.f32.mrb[0].mxu0
  %v263 = vadd.f32 0.0, %v262
  %v264 = vpop.f32.mrb[0].mxu0
  %v265 = vpop.f32.mrb[0].mxu0
  %v266 = vadd.f32 0.0, %v265
  %v267 = vpop.f32.mrb[0].mxu0
  %268 = vmatprep.mubr.bf16.mxu0 0
  %269 = vmatmul.mubr.bf16.gmra.mrb[0].mxu0 %v130
  %v270 = vpop.f32.mrb[0].mxu0
  %v271 = vadd.f32 0.0, %v270
  %v272 = vpop.f32.mrb[0].mxu0
  %v273 = vpop.f32.mrb[0].mxu0
  %v274 = vadd.f32 0.0, %v273
  %v275 = vpop.f32.mrb[0].mxu0
  %276 = vmatprep.mubr.bf16.mxu0 0
  %277 = vmatmul.mubr.bf16.gmra.mrb[0].mxu0 %v131
  %v278 = vpop.f32.mrb[0].mxu0
  %v279 = vadd.f32 0.0, %v278
  %v280 = vpop.f32.mrb[0].mxu0
  %v281 = vpop.f32.mrb[0].mxu0
  %v282 = vadd.f32 0.0, %v281
  %v283 = vpop.f32.mrb[0].mxu0
  %284 = vdwg.mxu0
  %v285 = vadd.f32 %v44, %v223
  %v286 = vadd.f32 %v45, %v226
  %v287 = vadd.f32 %v46, %v231
  %v288 = vadd.f32 %v47, %v234
  %v289 = vadd.f32 %v48, %v239
  %v290 = vadd.f32 %v49, %v242
  %v291 = vadd.f32 %v50, %v247
  %v292 = vadd.f32 %v51, %v250
  %v293 = vadd.f32 %v52, %v255
  %v294 = vadd.f32 %v53, %v258
  %v295 = vadd.f32 %v54, %v263
  %v296 = vadd.f32 %v55, %v266
  %v297 = vadd.f32 %v56, %v271
  %v298 = vadd.f32 %v57, %v274
  %v299 = vadd.f32 %v58, %v279
  %v300 = vadd.f32 %v59, %v282
  %301 = vst [vmem:[#allocation2] sm:$0xff] %v285
  %302 = vst [vmem:[#allocation2 + $0x8] sm:$0xff] %v286
  %303 = vst [vmem:[#allocation2 + $0x10] sm:$0xff] %v287
  %304 = vst [vmem:[#allocation2 + $0x18] sm:$0xff] %v288
  %305 = vst [vmem:[#allocation2 + $0x20] sm:$0xff] %v289
  %306 = vst [vmem:[#allocation2 + $0x28] sm:$0xff] %v290
  %307 = vst [vmem:[#allocation2 + $0x30] sm:$0xff] %v291
  %308 = vst [vmem:[#allocation2 + $0x38] sm:$0xff] %v292
  %309 = vst [vmem:[#allocation2 + $0x40] sm:$0xff] %v293
  %310 = vst [vmem:[#allocation2 + $0x48] sm:$0xff] %v294
  %311 = vst [vmem:[#allocation2 + $0x50] sm:$0xff] %v295
  %312 = vst [vmem:[#allocation2 + $0x58] sm:$0xff] %v296
  %313 = vst [vmem:[#allocation2 + $0x60] sm:$0xff] %v297
  %314 = vst [vmem:[#allocation2 + $0x68] sm:$0xff] %v298
  %315 = vst [vmem:[#allocation2 + $0x70] sm:$0xff] %v299
  %316 = vst [vmem:[#allocation2 + $0x78] sm:$0xff] %v300
  // Predicated region
  $region30: #{stn_mbfn_forward.16} parent=0 // pred_check
    %p317 = pneg %p24
  $region31: #{stn_mbfn_forward.16} parent=0 // pred_check_branch
    %319 = sbr.rel (%p317) target = $region33
  $region32: #{stn_mbfn_forward.16} parent=0 // pred_region
    %v320 = vld [vmem:[#allocation2] sm:$0xff]
    %v321 = vld [vmem:[#allocation2 + $0x8] sm:$0xff]
    %v322 = vld [vmem:[#allocation2 + $0x10] sm:$0xff]
    %v323 = vld [vmem:[#allocation2 + $0x18] sm:$0xff]
    %v324 = vld [vmem:[#allocation2 + $0x20] sm:$0xff]
    %v325 = vld [vmem:[#allocation2 + $0x28] sm:$0xff]
    %v326 = vld [vmem:[#allocation2 + $0x30] sm:$0xff]
    %v327 = vld [vmem:[#allocation2 + $0x38] sm:$0xff]
    %v328 = vld [vmem:[#allocation2 + $0x40] sm:$0xff]
    %v329 = vld [vmem:[#allocation2 + $0x48] sm:$0xff]
    %v330 = vld [vmem:[#allocation2 + $0x50] sm:$0xff]
    %v331 = vld [vmem:[#allocation2 + $0x58] sm:$0xff]
    %v332 = vld [vmem:[#allocation2 + $0x60] sm:$0xff]
    %v333 = vld [vmem:[#allocation2 + $0x68] sm:$0xff]
    %v334 = vld [vmem:[#allocation2 + $0x70] sm:$0xff]
    %v335 = vld [vmem:[#allocation2 + $0x78] sm:$0xff]
    %v336 = vld [vmem:[%s2] sm:$0x1]
    %v338 = vlaneseq
    %v339 = vshrl.u32 %v338, 7
    %v340 = vsub.s32 0, %v339
    %v341 = vrot.slane %v336, %v340
    %v343 = vmul.f32 %v320, %v341
    %v344 = vmul.f32 %v321, %v341
    %v345 = vmul.f32 %v322, %v341
    %v346 = vmul.f32 %v323, %v341
    %v347 = vmul.f32 %v324, %v341
    %v348 = vmul.f32 %v325, %v341
    %v349 = vmul.f32 %v326, %v341
    %v350 = vmul.f32 %v327, %v341
    %v351 = vmul.f32 %v328, %v341
    %v352 = vmul.f32 %v329, %v341
    %v353 = vmul.f32 %v330, %v341
    %v354 = vmul.f32 %v331, %v341
    %v355 = vmul.f32 %v332, %v341
    %v356 = vmul.f32 %v333, %v341
    %v357 = vmul.f32 %v334, %v341
    %v358 = vmul.f32 %v335, %v341
    %v359 = vld [vmem:[%s3] sm:$0x1]
    %v361 = vlaneseq
    %v362 = vshrl.u32 %v361, 7
    %v363 = vsub.s32 0, %v362
    %v364 = vrot.slane %v359, %v363
    %v366 = vadd.f32 %v343, %v364
    %v367 = vadd.f32 %v344, %v364
    %v368 = vadd.f32 %v345, %v364
    %v369 = vadd.f32 %v346, %v364
    %v370 = vadd.f32 %v347, %v364
    %v371 = vadd.f32 %v348, %v364
    %v372 = vadd.f32 %v349, %v364
    %v373 = vadd.f32 %v350, %v364
    %v374 = vadd.f32 %v351, %v364
    %v375 = vadd.f32 %v352, %v364
    %v376 = vadd.f32 %v353, %v364
    %v377 = vadd.f32 %v354, %v364
    %v378 = vadd.f32 %v355, %v364
    %v379 = vadd.f32 %v356, %v364
    %v380 = vadd.f32 %v357, %v364
    %v381 = vadd.f32 %v358, %v364
    %vm382 = vcmp.gt.f32.partialorder %v366, 0.0
    %vm383 = vcmp.gt.f32.partialorder %v367, 0.0
    %vm384 = vcmp.gt.f32.partialorder %v368, 0.0
    %vm385 = vcmp.gt.f32.partialorder %v369, 0.0
    %vm386 = vcmp.gt.f32.partialorder %v370, 0.0
    %vm387 = vcmp.gt.f32.partialorder %v371, 0.0
    %vm388 = vcmp.gt.f32.partialorder %v372, 0.0
    %vm389 = vcmp.gt.f32.partialorder %v373, 0.0
    %vm390 = vcmp.gt.f32.partialorder %v374, 0.0
    %vm391 = vcmp.gt.f32.partialorder %v375, 0.0
    %vm392 = vcmp.gt.f32.partialorder %v376, 0.0
    %vm393 = vcmp.gt.f32.partialorder %v377, 0.0
    %vm394 = vcmp.gt.f32.partialorder %v378, 0.0
    %vm395 = vcmp.gt.f32.partialorder %v379, 0.0
    %vm396 = vcmp.gt.f32.partialorder %v380, 0.0
    %vm397 = vcmp.gt.f32.partialorder %v381, 0.0
    %v398 = vld [vmem:[%s4] sm:$0x1]
    %v400 = vlaneseq
    %v401 = vshrl.u32 %v400, 7
    %v402 = vsub.s32 0, %v401
    %v403 = vrot.slane %v398, %v402
    %v405 = vmul.f32 %v403, %v366
    %v406 = vmul.f32 %v403, %v367
    %v407 = vmul.f32 %v403, %v368
    %v408 = vmul.f32 %v403, %v369
    %v409 = vmul.f32 %v403, %v370
    %v410 = vmul.f32 %v403, %v371
    %v411 = vmul.f32 %v403, %v372
    %v412 = vmul.f32 %v403, %v373
    %v413 = vmul.f32 %v403, %v374
    %v414 = vmul.f32 %v403, %v375
    %v415 = vmul.f32 %v403, %v376
    %v416 = vmul.f32 %v403, %v377
    %v417 = vmul.f32 %v403, %v378
    %v418 = vmul.f32 %v403, %v379
    %v419 = vmul.f32 %v403, %v380
    %v420 = vmul.f32 %v403, %v381
    %v421 = vsel %vm382, %v366, %v405
    %v422 = vsel %vm383, %v367, %v406
    %v423 = vsel %vm384, %v368, %v407
    %v424 = vsel %vm385, %v369, %v408
    %v425 = vsel %vm386, %v370, %v409
    %v426 = vsel %vm387, %v371, %v410
    %v427 = vsel %vm388, %v372, %v411
    %v428 = vsel %vm389, %v373, %v412
    %v429 = vsel %vm390, %v374, %v413
    %v430 = vsel %vm391, %v375, %v414
    %v431 = vsel %vm392, %v376, %v415
    %v432 = vsel %vm393, %v377, %v416
    %v433 = vsel %vm394, %v378, %v417
    %v434 = vsel %vm395, %v379, %v418
    %v435 = vsel %vm396, %v380, %v419
    %v436 = vsel %vm397, %v381, %v420
    %v437 = vld [vmem:[%s5] sm:$0xff]
    %v438 = vld [vmem:[%s5 + $0x8] sm:$0xff]
    %v439 = vld [vmem:[%s5 + $0x10] sm:$0xff]
    %v440 = vld [vmem:[%s5 + $0x18] sm:$0xff]
    %v441 = vld [vmem:[%s5 + $0x20] sm:$0xff]
    %v442 = vld [vmem:[%s5 + $0x28] sm:$0xff]
    %v443 = vld [vmem:[%s5 + $0x30] sm:$0xff]
    %v444 = vld [vmem:[%s5 + $0x38] sm:$0xff]
    %v445 = vld [vmem:[%s5 + $0x40] sm:$0xff]
    %v446 = vld [vmem:[%s5 + $0x48] sm:$0xff]
    %v447 = vld [vmem:[%s5 + $0x50] sm:$0xff]
    %v448 = vld [vmem:[%s5 + $0x58] sm:$0xff]
    %v449 = vld [vmem:[%s5 + $0x60] sm:$0xff]
    %v450 = vld [vmem:[%s5 + $0x68] sm:$0xff]
    %v451 = vld [vmem:[%s5 + $0x70] sm:$0xff]
    %v452 = vld [vmem:[%s5 + $0x78] sm:$0xff]
    %v453 = vadd.f32 %v421, %v437
    %v454 = vadd.f32 %v422, %v438
    %v455 = vadd.f32 %v423, %v439
    %v456 = vadd.f32 %v424, %v440
    %v457 = vadd.f32 %v425, %v441
    %v458 = vadd.f32 %v426, %v442
    %v459 = vadd.f32 %v427, %v443
    %v460 = vadd.f32 %v428, %v444
    %v461 = vadd.f32 %v429, %v445
    %v462 = vadd.f32 %v430, %v446
    %v463 = vadd.f32 %v431, %v447
    %v464 = vadd.f32 %v432, %v448
    %v465 = vadd.f32 %v433, %v449
    %v466 = vadd.f32 %v434, %v450
    %v467 = vadd.f32 %v435, %v451
    %v468 = vadd.f32 %v436, %v452
    %469 = vst [vmem:[%s6] sm:$0xff] %v453
    %470 = vst [vmem:[%s6 + $0x8] sm:$0xff] %v454
    %471 = vst [vmem:[%s6 + $0x10] sm:$0xff] %v455
    %472 = vst [vmem:[%s6 + $0x18] sm:$0xff] %v456
    %473 = vst [vmem:[%s6 + $0x20] sm:$0xff] %v457
    %474 = vst [vmem:[%s6 + $0x28] sm:$0xff] %v458
    %475 = vst [vmem:[%s6 + $0x30] sm:$0xff] %v459
    %476 = vst [vmem:[%s6 + $0x38] sm:$0xff] %v460
    %477 = vst [vmem:[%s6 + $0x40] sm:$0xff] %v461
    %478 = vst [vmem:[%s6 + $0x48] sm:$0xff] %v462
    %479 = vst [vmem:[%s6 + $0x50] sm:$0xff] %v463
    %480 = vst [vmem:[%s6 + $0x58] sm:$0xff] %v464
    %481 = vst [vmem:[%s6 + $0x60] sm:$0xff] %v465
    %482 = vst [vmem:[%s6 + $0x68] sm:$0xff] %v466
    %483 = vst [vmem:[%s6 + $0x70] sm:$0xff] %v467
    %484 = vst [vmem:[%s6 + $0x78] sm:$0xff] %v468
  $region33: #{stn_mbfn_forward.16} parent=0 // pred_fallthru
    _
  // Predicated region
  $region34: #{stn_mbfn_forward.16} parent=0 // pred_check
    _
  $region35: #{stn_mbfn_forward.16} parent=0 // pred_check_branch
    %486 = sbr.rel (0) target = $region37
  $region36: #{stn_mbfn_forward.16} parent=0 // pred_region
    _
  $region37: #{stn_mbfn_forward.16} parent=0 // pred_fallthru
    _
  // Predicated region
  $region38: #{stn_mbfn_forward.16} parent=0 // pred_check
    _
  $region39: #{stn_mbfn_forward.16} parent=0 // pred_check_branch
    %488 = sbr.rel (0) target = $region41
  $region40: #{stn_mbfn_forward.16} parent=0 // pred_region
    _
  $region41: #{stn_mbfn_forward.16} parent=0 // pred_fallthru
    _

// kernel: stn_mbfn_forward.17
$region0: #{stn_mbfn_forward.17}
  #allocation0 [shape = 'u32[]', space=smem, size = 0x4, offset = 0x4, fixed_abs, tag = 'smem constant byte address 0x4 - core index']
  #allocation1 [shape = 'u32[144,128]{1,0:T(1,128)}', space=vmem, size = 0x12000, scoped, tag = 'internal scratch']
  #allocation2 [shape = 'f32[2,128]{1,0:T(2,128)}', space=vmem, size = 0x400, scoped, tag = 'scratch operand']
  %s0 = inlined_call_operand.vmem [shape: bf16[2,64,128], index: 0, kind: input, shape index: {}]
  %s1 = inlined_call_operand.vmem [shape: bf16[128,128], index: 1, kind: input, shape index: {}]
  %s2 = inlined_call_operand.vmem [shape: f32[1,128], index: 2, kind: input, shape index: {}]
  %s3 = inlined_call_operand.vmem [shape: f32[1,128], index: 3, kind: input, shape index: {}]
  %s4 = inlined_call_operand.vmem [shape: f32[1,128], index: 4, kind: input, shape index: {}]
  %s5 = inlined_call_operand.vmem [shape: f32[64,128], index: 5, kind: input, shape index: {}]
  %s6 = inlined_call_operand.vmem [shape: f32[1,128], index: 6, kind: input, shape index: {}]
  %s7 = inlined_call_operand.vmem [shape: f32[1,128], index: 7, kind: input, shape index: {}]
  %s8 = inlined_call_operand.vmem [shape: bf16[128,128], index: 8, kind: input, shape index: {}]
  %s9 = inlined_call_operand.vmem [shape: f32[1,128], index: 9, kind: input, shape index: {}]
  %s10 = inlined_call_operand.vmem [shape: f32[1,128], index: 10, kind: input, shape index: {}]
  %s11 = inlined_call_operand.hbm [shape: f32[2,128], index: 11, kind: output, shape index: {}]
  %s12 = sld [smem:[#allocation0]]
  $region62: #{stn_mbfn_forward.17} parent=0
    _
  %s14 = ssub.s32 1, %s12
  %s15 = scalar_select 0, %s14, %s12
  $region1: #{stn_mbfn_forward.17} parent=0
    #allocation3 [shape = 'u8[1024]{0}', space=vmem, size = 0x400, scoped, tag = 'output window, operand 0, single buffered']
    #allocation4 [shape = 's32[1]{0}', space=sflag, size = 0x4, scoped, tag = 'scoped memory for stn_mbfn_forward.17']
    %16 = vsyncpa [#allocation4], 0
    // Predicated region
    $region2: #{stn_mbfn_forward.17} parent=1 // pred_check
      _
    $region3: #{stn_mbfn_forward.17} parent=1 // pred_check_branch
      %18 = sbr.rel (0) target = $region5
    $region4: #{stn_mbfn_forward.17} parent=1 // pred_region
      _
    $region5: #{stn_mbfn_forward.17} parent=1 // pred_fallthru
      _
    // Predicated region
    $region6: #{stn_mbfn_forward.17} parent=1 // pred_check
      _
    $region7: #{stn_mbfn_forward.17} parent=1 // pred_check_branch
      %20 = sbr.rel (0) target = $region9
    $region8: #{stn_mbfn_forward.17} parent=1 // pred_region
      _
    $region9: #{stn_mbfn_forward.17} parent=1 // pred_fallthru
      _
    // Predicated region
    $region10: #{stn_mbfn_forward.17} parent=1 // pred_check
      _
    $region11: #{stn_mbfn_forward.17} parent=1 // pred_check_branch
      %22 = sbr.rel (0) target = $region13
    $region12: #{stn_mbfn_forward.17} parent=1 // pred_region
      _
    $region13: #{stn_mbfn_forward.17} parent=1 // pred_fallthru
      _
    // Predicated region
    $region14: #{stn_mbfn_forward.17} parent=1 // pred_check
      _
    $region15: #{stn_mbfn_forward.17} parent=1 // pred_check_branch
      %24 = sbr.rel (0) target = $region17
    $region16: #{stn_mbfn_forward.17} parent=1 // pred_region
      _
    $region17: #{stn_mbfn_forward.17} parent=1 // pred_fallthru
      _
    // Predicated region
    $region18: #{stn_mbfn_forward.17} parent=1 // pred_check
      _
    $region19: #{stn_mbfn_forward.17} parent=1 // pred_check_branch
      %26 = sbr.rel (0) target = $region21
    $region20: #{stn_mbfn_forward.17} parent=1 // pred_region
      _
    $region21: #{stn_mbfn_forward.17} parent=1 // pred_fallthru
      _
    // Predicated region
    $region22: #{stn_mbfn_forward.17} parent=1 // pred_check
      _
    $region23: #{stn_mbfn_forward.17} parent=1 // pred_check_branch
      %28 = sbr.rel (0) target = $region25
    $region24: #{stn_mbfn_forward.17} parent=1 // pred_region
      _
    $region25: #{stn_mbfn_forward.17} parent=1 // pred_fallthru
      _
    // Predicated region
    $region26: #{stn_mbfn_forward.17} parent=1 // pred_check
      _
    $region27: #{stn_mbfn_forward.17} parent=1 // pred_check_branch
      %30 = sbr.rel (0) target = $region29
    $region28: #{stn_mbfn_forward.17} parent=1 // pred_region
      _
    $region29: #{stn_mbfn_forward.17} parent=1 // pred_fallthru
      _
    // Predicated region
    $region30: #{stn_mbfn_forward.17} parent=1 // pred_check
      _
    $region31: #{stn_mbfn_forward.17} parent=1 // pred_check_branch
      %32 = sbr.rel (0) target = $region33
    $region32: #{stn_mbfn_forward.17} parent=1 // pred_region
      _
    $region33: #{stn_mbfn_forward.17} parent=1 // pred_fallthru
      _
    // Predicated region
    $region34: #{stn_mbfn_forward.17} parent=1 // pred_check
      _
    $region35: #{stn_mbfn_forward.17} parent=1 // pred_check_branch
      %34 = sbr.rel (0) target = $region37
    $region36: #{stn_mbfn_forward.17} parent=1 // pred_region
      _
    $region37: #{stn_mbfn_forward.17} parent=1 // pred_fallthru
      _
    // Predicated region
    $region38: #{stn_mbfn_forward.17} parent=1 // pred_check
      _
    $region39: #{stn_mbfn_forward.17} parent=1 // pred_check_branch
      %36 = sbr.rel (0) target = $region41
    $region40: #{stn_mbfn_forward.17} parent=1 // pred_region
      _
    $region41: #{stn_mbfn_forward.17} parent=1 // pred_fallthru
      _
    // Predicated region
    $region42: #{stn_mbfn_forward.17} parent=1 // pred_check
      _
    $region43: #{stn_mbfn_forward.17} parent=1 // pred_check_branch
      %38 = sbr.rel (0) target = $region45
    $region44: #{stn_mbfn_forward.17} parent=1 // pred_region
      _
    $region45: #{stn_mbfn_forward.17} parent=1 // pred_fallthru
      _
    %p40 = scmp.eq.s32.totalorder 0, 0
    // Predicated region
    $region46: #{stn_mbfn_forward.17} parent=1 // pred_check
      %p41 = pneg %p40
    $region47: #{stn_mbfn_forward.17} parent=1 // pred_check_branch
      %43 = sbr.rel (%p41) target = $region49
    $region48: #{stn_mbfn_forward.17} parent=1 // pred_region
      %44 = vst [vmem:[#allocation2] sm:$0x3] 0.0
    $region49: #{stn_mbfn_forward.17} parent=1 // pred_fallthru
      _
    %v45 = vld [vmem:[%s0] sm:$0xf]
    %v46 = vld [vmem:[%s0 + $0x4] sm:$0xf]
    %v47 = vld [vmem:[%s0 + $0x8] sm:$0xf]
    %v48 = vld [vmem:[%s0 + $0xc] sm:$0xf]
    %v49 = vld [vmem:[%s0 + $0x10] sm:$0xf]
    %v50 = vld [vmem:[%s0 + $0x14] sm:$0xf]
    %v51 = vld [vmem:[%s0 + $0x18] sm:$0xf]
    %v52 = vld [vmem:[%s0 + $0x1c] sm:$0xf]
    %v53 = vld [vmem:[%s0 + $0x20] sm:$0xf]
    %v54 = vld [vmem:[%s0 + $0x24] sm:$0xf]
    %v55 = vld [vmem:[%s0 + $0x28] sm:$0xf]
    %v56 = vld [vmem:[%s0 + $0x2c] sm:$0xf]
    %v57 = vld [vmem:[%s0 + $0x30] sm:$0xf]
    %v58 = vld [vmem:[%s0 + $0x34] sm:$0xf]
    %v59 = vld [vmem:[%s0 + $0x38] sm:$0xf]
    %v60 = vld [vmem:[%s0 + $0x3c] sm:$0xf]
    %v61 = vld [vmem:[%s1] sm:$0xf]
    %v62 = vld [vmem:[%s1 + $0x4] sm:$0xf]
    %v63 = vld [vmem:[%s1 + $0x8] sm:$0xf]
    %v64 = vld [vmem:[%s1 + $0xc] sm:$0xf]
    %v65 = vld [vmem:[%s1 + $0x10] sm:$0xf]
    %v66 = vld [vmem:[%s1 + $0x14] sm:$0xf]
    %v67 = vld [vmem:[%s1 + $0x18] sm:$0xf]
    %v68 = vld [vmem:[%s1 + $0x1c] sm:$0xf]
    %v69 = vld [vmem:[%s1 + $0x20] sm:$0xf]
    %v70 = vld [vmem:[%s1 + $0x24] sm:$0xf]
    %v71 = vld [vmem:[%s1 + $0x28] sm:$0xf]
    %v72 = vld [vmem:[%s1 + $0x2c] sm:$0xf]
    %v73 = vld [vmem:[%s1 + $0x30] sm:$0xf]
    %v74 = vld [vmem:[%s1 + $0x34] sm:$0xf]
    %v75 = vld [vmem:[%s1 + $0x38] sm:$0xf]
    %v76 = vld [vmem:[%s1 + $0x3c] sm:$0xf]
    %v93 = vunpack.c.l.b16 %v45
    %v94 = vunpack.c.l.b16 %v46
    %v95 = vunpack.c.l.b16 %v47
    %v96 = vunpack.c.l.b16 %v48
    %v97 = vunpack.c.l.b16 %v49
    %v98 = vunpack.c.l.b16 %v50
    %v99 = vunpack.c.l.b16 %v51
    %v100 = vunpack.c.l.b16 %v52
    %v101 = vunpack.c.l.b16 %v53
    %v102 = vunpack.c.l.b16 %v54
    %v103 = vunpack.c.l.b16 %v55
    %v104 = vunpack.c.l.b16 %v56
    %v105 = vunpack.c.l.b16 %v57
    %v106 = vunpack.c.l.b16 %v58
    %v107 = vunpack.c.l.b16 %v59
    %v108 = vunpack.c.l.b16 %v60
    %v109 = vpack.c.b16 %v94, %v93
    %v110 = vpack.c.b16 %v96, %v95
    %v111 = vpack.c.b16 %v98, %v97
    %v112 = vpack.c.b16 %v100, %v99
    %v113 = vpack.c.b16 %v102, %v101
    %v114 = vpack.c.b16 %v104, %v103
    %v115 = vpack.c.b16 %v106, %v105
    %v116 = vpack.c.b16 %v108, %v107
    %v141 = vunpack.c.l.b16 %v61
    %v142 = vunpack.c.l.b16 %v62
    %v143 = vunpack.c.l.b16 %v63
    %v144 = vunpack.c.l.b16 %v64
    %v145 = vunpack.c.l.b16 %v65
    %v146 = vunpack.c.l.b16 %v66
    %v147 = vunpack.c.l.b16 %v67
    %v148 = vunpack.c.l.b16 %v68
    %v149 = vunpack.c.l.b16 %v69
    %v150 = vunpack.c.l.b16 %v70
    %v151 = vunpack.c.l.b16 %v71
    %v152 = vunpack.c.l.b16 %v72
    %v153 = vunpack.c.l.b16 %v73
    %v154 = vunpack.c.l.b16 %v74
    %v155 = vunpack.c.l.b16 %v75
    %v156 = vunpack.c.l.b16 %v76
    %v157 = vpack.c.b16 %v142, %v141
    %v158 = vpack.c.b16 %v144, %v143
    %v159 = vpack.c.b16 %v146, %v145
    %v160 = vpack.c.b16 %v148, %v147
    %v161 = vpack.c.b16 %v150, %v149
    %v162 = vpack.c.b16 %v152, %v151
    %v163 = vpack.c.b16 %v154, %v153
    %v164 = vpack.c.b16 %v156, %v155
    %173 = vmatprep.subr.bf16.mxu0 0
    %174 = vmatpush1.bf16.msra.mxu0 %v157
    %175 = vmatprep.subr.bf16.mxu0 0
    %176 = vmatpush1.bf16.msra.mxu0 %v158
    %177 = vmatprep.subr.bf16.mxu0 0
    %178 = vmatpush1.bf16.msra.mxu0 %v159
    %179 = vmatprep.subr.bf16.mxu0 0
    %180 = vmatpush1.bf16.msra.mxu0 %v160
    %181 = vmatprep.subr.bf16.mxu0 0
    %182 = vmatpush1.bf16.msra.mxu0 %v161
    %183 = vmatprep.subr.bf16.mxu0 0
    %184 = vmatpush1.bf16.msra.mxu0 %v162
    %185 = vmatprep.subr.bf16.mxu0 0
    %186 = vmatpush1.bf16.msra.mxu0 %v163
    %187 = vmatprep.subr.bf16.mxu0 0
    %188 = vmatpush1.bf16.msra.mxu0 %v164
    %189 = vmatprep.subr.bf16.mxu0 0
    %190 = vmatpush1.bf16.msra.mxu0 0
    %191 = vmatprep.subr.bf16.mxu0 0
    %192 = vmatpush1.bf16.msra.mxu0 0
    %193 = vmatprep.subr.bf16.mxu0 0
    %194 = vmatpush1.bf16.msra.mxu0 0
    %195 = vmatprep.subr.bf16.mxu0 0
    %196 = vmatpush1.bf16.msra.mxu0 0
    %197 = vmatprep.subr.bf16.mxu0 0
    %198 = vmatpush1.bf16.msra.mxu0 0
    %199 = vmatprep.subr.bf16.mxu0 0
    %200 = vmatpush1.bf16.msra.mxu0 0
    %201 = vmatprep.subr.bf16.mxu0 0
    %202 = vmatpush1.bf16.msra.mxu0 0
    %203 = vmatprep.subr.bf16.mxu0 0
    %204 = vmatpush1.bf16.msra.mxu0 0
    %205 = vmatprep.mubr.bf16.mxu0 0
    %206 = vmatmul.mubr.bf16.gmra.mrb[0].mxu0 %v109
    %v207 = vpop.f32.mrb[0].mxu0
    %v208 = vadd.f32 0.0, %v207
    %v209 = vpop.f32.mrb[0].mxu0
    %v210 = vpop.f32.mrb[0].mxu0
    %v211 = vadd.f32 0.0, %v210
    %v212 = vpop.f32.mrb[0].mxu0
    %213 = vmatprep.mubr.bf16.mxu0 0
    %214 = vmatmul.mubr.bf16.gmra.mrb[0].mxu0 %v110
    %v215 = vpop.f32.mrb[0].mxu0
    %v216 = vadd.f32 0.0, %v215
    %v217 = vpop.f32.mrb[0].mxu0
    %v218 = vpop.f32.mrb[0].mxu0
    %v219 = vadd.f32 0.0, %v218
    %v220 = vpop.f32.mrb[0].mxu0
    %221 = vmatprep.mubr.bf16.mxu0 0
    %222 = vmatmul.mubr.bf16.gmra.mrb[0].mxu0 %v111
    %v223 = vpop.f32.mrb[0].mxu0
    %v224 = vadd.f32 0.0, %v223
    %v225 = vpop.f32.mrb[0].mxu0
    %v226 = vpop.f32.mrb[0].mxu0
    %v227 = vadd.f32 0.0, %v226
    %v228 = vpop.f32.mrb[0].mxu0
    %229 = vmatprep.mubr.bf16.mxu0 0
    %230 = vmatmul.mubr.bf16.gmra.mrb[0].mxu0 %v112
    %v231 = vpop.f32.mrb[0].mxu0
    %v232 = vadd.f32 0.0, %v231
    %v233 = vpop.f32.mrb[0].mxu0
    %v234 = vpop.f32.mrb[0].mxu0
    %v235 = vadd.f32 0.0, %v234
    %v236 = vpop.f32.mrb[0].mxu0
    %237 = vmatprep.mubr.bf16.mxu0 0
    %238 = vmatmul.mubr.bf16.gmra.mrb[0].mxu0 %v113
    %v239 = vpop.f32.mrb[0].mxu0
    %v240 = vadd.f32 0.0, %v239
    %v241 = vpop.f32.mrb[0].mxu0
    %v242 = vpop.f32.mrb[0].mxu0
    %v243 = vadd.f32 0.0, %v242
    %v244 = vpop.f32.mrb[0].mxu0
    %245 = vmatprep.mubr.bf16.mxu0 0
    %246 = vmatmul.mubr.bf16.gmra.mrb[0].mxu0 %v114
    %v247 = vpop.f32.mrb[0].mxu0
    %v248 = vadd.f32 0.0, %v247
    %v249 = vpop.f32.mrb[0].mxu0
    %v250 = vpop.f32.mrb[0].mxu0
    %v251 = vadd.f32 0.0, %v250
    %v252 = vpop.f32.mrb[0].mxu0
    %253 = vmatprep.mubr.bf16.mxu0 0
    %254 = vmatmul.mubr.bf16.gmra.mrb[0].mxu0 %v115
    %v255 = vpop.f32.mrb[0].mxu0
    %v256 = vadd.f32 0.0, %v255
    %v257 = vpop.f32.mrb[0].mxu0
    %v258 = vpop.f32.mrb[0].mxu0
    %v259 = vadd.f32 0.0, %v258
    %v260 = vpop.f32.mrb[0].mxu0
    %261 = vmatprep.mubr.bf16.mxu0 0
    %262 = vmatmul.mubr.bf16.gmra.mrb[0].mxu0 %v116
    %v263 = vpop.f32.mrb[0].mxu0
    %v264 = vadd.f32 0.0, %v263
    %v265 = vpop.f32.mrb[0].mxu0
    %v266 = vpop.f32.mrb[0].mxu0
    %v267 = vadd.f32 0.0, %v266
    %v268 = vpop.f32.mrb[0].mxu0
    %269 = vdwg.mxu0
    %v270 = vld [vmem:[%s2] sm:$0x1]
    %v272 = vlaneseq
    %v273 = vshrl.u32 %v272, 7
    %v274 = vsub.s32 0, %v273
    %v275 = vrot.slane %v270, %v274
    %v277 = vmul.f32 %v208, %v275
    %v278 = vmul.f32 %v211, %v275
    %v279 = vmul.f32 %v216, %v275
    %v280 = vmul.f32 %v219, %v275
    %v281 = vmul.f32 %v224, %v275
    %v282 = vmul.f32 %v227, %v275
    %v283 = vmul.f32 %v232, %v275
    %v284 = vmul.f32 %v235, %v275
    %v285 = vmul.f32 %v240, %v275
    %v286 = vmul.f32 %v243, %v275
    %v287 = vmul.f32 %v248, %v275
    %v288 = vmul.f32 %v251, %v275
    %v289 = vmul.f32 %v256, %v275
    %v290 = vmul.f32 %v259, %v275
    %v291 = vmul.f32 %v264, %v275
    %v292 = vmul.f32 %v267, %v275
    %v293 = vld [vmem:[%s3] sm:$0x1]
    %v295 = vlaneseq
    %v296 = vshrl.u32 %v295, 7
    %v297 = vsub.s32 0, %v296
    %v298 = vrot.slane %v293, %v297
    %v300 = vadd.f32 %v277, %v298
    %v301 = vadd.f32 %v278, %v298
    %v302 = vadd.f32 %v279, %v298
    %v303 = vadd.f32 %v280, %v298
    %v304 = vadd.f32 %v281, %v298
    %v305 = vadd.f32 %v282, %v298
    %v306 = vadd.f32 %v283, %v298
    %v307 = vadd.f32 %v284, %v298
    %v308 = vadd.f32 %v285, %v298
    %v309 = vadd.f32 %v286, %v298
    %v310 = vadd.f32 %v287, %v298
    %v311 = vadd.f32 %v288, %v298
    %v312 = vadd.f32 %v289, %v298
    %v313 = vadd.f32 %v290, %v298
    %v314 = vadd.f32 %v291, %v298
    %v315 = vadd.f32 %v292, %v298
    %vm316 = vcmp.gt.f32.partialorder %v300, 0.0
    %vm317 = vcmp.gt.f32.partialorder %v301, 0.0
    %vm318 = vcmp.gt.f32.partialorder %v302, 0.0
    %vm319 = vcmp.gt.f32.partialorder %v303, 0.0
    %vm320 = vcmp.gt.f32.partialorder %v304, 0.0
    %vm321 = vcmp.gt.f32.partialorder %v305, 0.0
    %vm322 = vcmp.gt.f32.partialorder %v306, 0.0
    %vm323 = vcmp.gt.f32.partialorder %v307, 0.0
    %vm324 = vcmp.gt.f32.partialorder %v308, 0.0
    %vm325 = vcmp.gt.f32.partialorder %v309, 0.0
    %vm326 = vcmp.gt.f32.partialorder %v310, 0.0
    %vm327 = vcmp.gt.f32.partialorder %v311, 0.0
    %vm328 = vcmp.gt.f32.partialorder %v312, 0.0
    %vm329 = vcmp.gt.f32.partialorder %v313, 0.0
    %vm330 = vcmp.gt.f32.partialorder %v314, 0.0
    %vm331 = vcmp.gt.f32.partialorder %v315, 0.0
    %v332 = vld [vmem:[%s4] sm:$0x1]
    %v334 = vlaneseq
    %v335 = vshrl.u32 %v334, 7
    %v336 = vsub.s32 0, %v335
    %v337 = vrot.slane %v332, %v336
    %v339 = vmul.f32 %v337, %v300
    %v340 = vmul.f32 %v337, %v301
    %v341 = vmul.f32 %v337, %v302
    %v342 = vmul.f32 %v337, %v303
    %v343 = vmul.f32 %v337, %v304
    %v344 = vmul.f32 %v337, %v305
    %v345 = vmul.f32 %v337, %v306
    %v346 = vmul.f32 %v337, %v307
    %v347 = vmul.f32 %v337, %v308
    %v348 = vmul.f32 %v337, %v309
    %v349 = vmul.f32 %v337, %v310
    %v350 = vmul.f32 %v337, %v311
    %v351 = vmul.f32 %v337, %v312
    %v352 = vmul.f32 %v337, %v313
    %v353 = vmul.f32 %v337, %v314
    %v354 = vmul.f32 %v337, %v315
    %v355 = vsel %vm316, %v300, %v339
    %v356 = vsel %vm317, %v301, %v340
    %v357 = vsel %vm318, %v302, %v341
    %v358 = vsel %vm319, %v303, %v342
    %v359 = vsel %vm320, %v304, %v343
    %v360 = vsel %vm321, %v305, %v344
    %v361 = vsel %vm322, %v306, %v345
    %v362 = vsel %vm323, %v307, %v346
    %v363 = vsel %vm324, %v308, %v347
    %v364 = vsel %vm325, %v309, %v348
    %v365 = vsel %vm326, %v310, %v349
    %v366 = vsel %vm327, %v311, %v350
    %v367 = vsel %vm328, %v312, %v351
    %v368 = vsel %vm329, %v313, %v352
    %v369 = vsel %vm330, %v314, %v353
    %v370 = vsel %vm331, %v315, %v354
    %v371 = vld [vmem:[#allocation2] sm:$0x3]
    %v372 = vld [vmem:[%s5] sm:$0xff]
    %v373 = vld [vmem:[%s5 + $0x8] sm:$0xff]
    %v374 = vld [vmem:[%s5 + $0x10] sm:$0xff]
    %v375 = vld [vmem:[%s5 + $0x18] sm:$0xff]
    %v376 = vld [vmem:[%s5 + $0x20] sm:$0xff]
    %v377 = vld [vmem:[%s5 + $0x28] sm:$0xff]
    %v378 = vld [vmem:[%s5 + $0x30] sm:$0xff]
    %v379 = vld [vmem:[%s5 + $0x38] sm:$0xff]
    %v380 = vmul.f32 %v355, %v372
    %v381 = vmul.f32 %v356, %v373
    %v382 = vmul.f32 %v357, %v374
    %v383 = vmul.f32 %v358, %v375
    %v384 = vmul.f32 %v359, %v376
    %v385 = vmul.f32 %v360, %v377
    %v386 = vmul.f32 %v361, %v378
    %v387 = vmul.f32 %v362, %v379
    %v388 = vmul.f32 %v363, %v372
    %v389 = vmul.f32 %v364, %v373
    %v390 = vmul.f32 %v365, %v374
    %v391 = vmul.f32 %v366, %v375
    %v392 = vmul.f32 %v367, %v376
    %v393 = vmul.f32 %v368, %v377
    %v394 = vmul.f32 %v369, %v378
    %v395 = vmul.f32 %v370, %v379
    %v396 = vadd.f32 %v380, %v381
    %v397 = vadd.f32 %v396, %v382
    %v398 = vadd.f32 %v397, %v383
    %v399 = vadd.f32 %v398, %v384
    %v400 = vadd.f32 %v399, %v385
    %v401 = vadd.f32 %v400, %v386
    %v402 = vadd.f32 %v401, %v387
    %v403 = vrot.slane %v402, 4
    %v404 = vadd.f32 %v402, %v403
    %v405 = vrot.slane %v404, 2
    %v406 = vadd.f32 %v404, %v405
    %v407 = vrot.slane %v406, 1
    %v408 = vadd.f32 %v406, %v407
    %v409 = vadd.f32 %v388, %v389
    %v410 = vadd.f32 %v409, %v390
    %v411 = vadd.f32 %v410, %v391
    %v412 = vadd.f32 %v411, %v392
    %v413 = vadd.f32 %v412, %v393
    %v414 = vadd.f32 %v413, %v394
    %v415 = vadd.f32 %v414, %v395
    %v416 = vrot.slane %v415, 4
    %v417 = vadd.f32 %v415, %v416
    %v418 = vrot.slane %v417, 2
    %v419 = vadd.f32 %v417, %v418
    %v420 = vrot.slane %v419, 1
    %v421 = vadd.f32 %v419, %v420
    %vm424 = vcmask 1041409
    %v425 = vsel %vm424, %v421, %v408
    %v427 = vadd.f32 %v371, %v425
    %428 = vst [vmem:[#allocation2] sm:$0x3] %v427
    // Predicated region
    $region50: #{stn_mbfn_forward.17} parent=1 // pred_check
      %p429 = pneg %p40
    $region51: #{stn_mbfn_forward.17} parent=1 // pred_check_branch
      %431 = sbr.rel (%p429) target = $region53
    $region52: #{stn_mbfn_forward.17} parent=1 // pred_region
      %v432 = vld [vmem:[#allocation2] sm:$0x3]
      %v433 = vld [vmem:[%s6] sm:$0x1]
      %v435 = vlaneseq
      %v436 = vshrl.u32 %v435, 7
      %v437 = vsub.s32 0, %v436
      %v438 = vrot.slane %v433, %v437
      %v440 = vmul.f32 %v432, %v438
      %v441 = vld [vmem:[%s7] sm:$0x1]
      %v443 = vlaneseq
      %v444 = vshrl.u32 %v443, 7
      %v445 = vsub.s32 0, %v444
      %v446 = vrot.slane %v441, %v445
      %v448 = vadd.f32 %v440, %v446
      %v449 = vpack.c.bf16 %v448, %v448
      %v450 = vld [vmem:[%s8] sm:$0xf]
      %v451 = vld [vmem:[%s8 + $0x4] sm:$0xf]
      %v452 = vld [vmem:[%s8 + $0x8] sm:$0xf]
      %v453 = vld [vmem:[%s8 + $0xc] sm:$0xf]
      %v454 = vld [vmem:[%s8 + $0x10] sm:$0xf]
      %v455 = vld [vmem:[%s8 + $0x14] sm:$0xf]
      %v456 = vld [vmem:[%s8 + $0x18] sm:$0xf]
      %v457 = vld [vmem:[%s8 + $0x1c] sm:$0xf]
      %v458 = vld [vmem:[%s8 + $0x20] sm:$0xf]
      %v459 = vld [vmem:[%s8 + $0x24] sm:$0xf]
      %v460 = vld [vmem:[%s8 + $0x28] sm:$0xf]
      %v461 = vld [vmem:[%s8 + $0x2c] sm:$0xf]
      %v462 = vld [vmem:[%s8 + $0x30] sm:$0xf]
      %v463 = vld [vmem:[%s8 + $0x34] sm:$0xf]
      %v464 = vld [vmem:[%s8 + $0x38] sm:$0xf]
      %v465 = vld [vmem:[%s8 + $0x3c] sm:$0xf]
      %v482 = vunpack.c.l.b16 %v450
      %v483 = vunpack.c.l.b16 %v451
      %v484 = vunpack.c.l.b16 %v452
      %v485 = vunpack.c.l.b16 %v453
      %v486 = vunpack.c.l.b16 %v454
      %v487 = vunpack.c.l.b16 %v455
      %v488 = vunpack.c.l.b16 %v456
      %v489 = vunpack.c.l.b16 %v457
      %v490 = vunpack.c.l.b16 %v458
      %v491 = vunpack.c.l.b16 %v459
      %v492 = vunpack.c.l.b16 %v460
      %v493 = vunpack.c.l.b16 %v461
      %v494 = vunpack.c.l.b16 %v462
      %v495 = vunpack.c.l.b16 %v463
      %v496 = vunpack.c.l.b16 %v464
      %v497 = vunpack.c.l.b16 %v465
      %v498 = vpack.c.b16 %v483, %v482
      %v499 = vpack.c.b16 %v485, %v484
      %v500 = vpack.c.b16 %v487, %v486
      %v501 = vpack.c.b16 %v489, %v488
      %v502 = vpack.c.b16 %v491, %v490
      %v503 = vpack.c.b16 %v493, %v492
      %v504 = vpack.c.b16 %v495, %v494
      %v505 = vpack.c.b16 %v497, %v496
      %514 = vmatprep.subr.bf16.mxu0 0
      %515 = vmatpush1.bf16.msra.mxu0 %v498
      %516 = vmatprep.subr.bf16.mxu0 0
      %517 = vmatpush1.bf16.msra.mxu0 %v499
      %518 = vmatprep.subr.bf16.mxu0 0
      %519 = vmatpush1.bf16.msra.mxu0 %v500
      %520 = vmatprep.subr.bf16.mxu0 0
      %521 = vmatpush1.bf16.msra.mxu0 %v501
      %522 = vmatprep.subr.bf16.mxu0 0
      %523 = vmatpush1.bf16.msra.mxu0 %v502
      %524 = vmatprep.subr.bf16.mxu0 0
      %525 = vmatpush1.bf16.msra.mxu0 %v503
      %526 = vmatprep.subr.bf16.mxu0 0
      %527 = vmatpush1.bf16.msra.mxu0 %v504
      %528 = vmatprep.subr.bf16.mxu0 0
      %529 = vmatpush1.bf16.msra.mxu0 %v505
      %530 = vmatprep.subr.bf16.mxu0 0
      %531 = vmatpush1.bf16.msra.mxu0 0
      %532 = vmatprep.subr.bf16.mxu0 0
      %533 = vmatpush1.bf16.msra.mxu0 0
      %534 = vmatprep.subr.bf16.mxu0 0
      %535 = vmatpush1.bf16.msra.mxu0 0
      %536 = vmatprep.subr.bf16.mxu0 0
      %537 = vmatpush1.bf16.msra.mxu0 0
      %538 = vmatprep.subr.bf16.mxu0 0
      %539 = vmatpush1.bf16.msra.mxu0 0
      %540 = vmatprep.subr.bf16.mxu0 0
      %541 = vmatpush1.bf16.msra.mxu0 0
      %542 = vmatprep.subr.bf16.mxu0 0
      %543 = vmatpush1.bf16.msra.mxu0 0
      %544 = vmatprep.subr.bf16.mxu0 0
      %545 = vmatpush1.bf16.msra.mxu0 0
      %546 = vmatprep.mubr.bf16.mxu0 0
      %547 = vmatmul.mubr.bf16.gmra.mrb[0].mxu0 %v449
      %v548 = vpop.f32.mrb[0].mxu0
      %v549 = vadd.f32 0.0, %v548
      %v550 = vpop.f32.mrb[0].mxu0
      %v551 = vpop.f32.mrb[0].mxu0
      %v552 = vpop.f32.mrb[0].mxu0
      %553 = vdwg.mxu0
      %v554 = vld [vmem:[%s9] sm:$0x1]
      %v556 = vlaneseq
      %v557 = vshrl.u32 %v556, 7
      %v558 = vsub.s32 0, %v557
      %v559 = vrot.slane %v554, %v558
      %v561 = vmul.f32 %v549, %v559
      %v562 = vld [vmem:[%s10] sm:$0x1]
      %v564 = vlaneseq
      %v565 = vshrl.u32 %v564, 7
      %v566 = vsub.s32 0, %v565
      %v567 = vrot.slane %v562, %v566
      %v569 = vadd.f32 %v561, %v567
      %570 = vst [vmem:[#allocation3] sm:$0x3] %v569
    $region53: #{stn_mbfn_forward.17} parent=1 // pred_fallthru
      _
    // Predicated region
    $region54: #{stn_mbfn_forward.17} parent=1 // pred_check
      _
    $region55: #{stn_mbfn_forward.17} parent=1 // pred_check_branch
      %572 = sbr.rel (0) target = $region57
    $region56: #{stn_mbfn_forward.17} parent=1 // pred_region
      %s574 = ssub.s32 32, 32
      %575 = vsyncadd [#allocation4], %s574
      %s577 = sshll.u32 [#allocation3], 4
      %s578 = int_to_ptr.vmem [resolvable:$true] %s577
      %580 = dma.vmem_to_hbm [thread:$0]  %s578, 32, %s11, [#allocation4]
    $region57: #{stn_mbfn_forward.17} parent=1 // pred_fallthru
      _
    // Predicated region
    $region58: #{stn_mbfn_forward.17} parent=1 // pred_check
      _
    $region59: #{stn_mbfn_forward.17} parent=1 // pred_check_branch
      %582 = sbr.rel (0) target = $region61
    $region60: #{stn_mbfn_forward.17} parent=1 // pred_region
      %583 = dma.done [#allocation4], 32
    $region61: #{stn_mbfn_forward.17} parent=1 // pred_fallthru
      _
    %584 = vsyncpa [#allocation4], 1

</llo_original>
